<compile_context>
chip_gen: v6e
topology: v6e:2x2x1
jax: 0.10.0
libtpu: 0.0.40
codegen_flags: <defaults>
</compile_context>

<pallas_src>
import math
from functools import partial

import jax
import jax.numpy as jnp
from jax.experimental import pallas as pl
from jax.experimental.pallas import tpu as pltpu


# ----------------------------- in-kernel helpers -----------------------------

def _layernorm(x, gamma, beta, eps=1e-12):
    mean = jnp.mean(x, axis=-1, keepdims=True)
    var = jnp.mean((x - mean) ** 2, axis=-1, keepdims=True)
    return (x - mean) * jax.lax.rsqrt(var + eps) * gamma + beta


def _gelu_tanh(x):
    # TODO(synk): BERT uses exact erf-GELU; tanh approximation used for TPU-friendly lowering.
    c = math.sqrt(2.0 / math.pi)
    return 0.5 * x * (1.0 + jnp.tanh(c * (x + 0.044715 * x * x * x)))


# --------------------------------- kernel ------------------------------------

def bert_layer_kernel(*refs, num_heads, tq, apply_input_ln, acc_mode, ffn_chunks):
    """One BERT encoder layer for a (batch b, query tile qi) grid point.

    Inputs : x [S, H] (full sequence for this batch element; the query tile is
             sliced in-kernel), optional acc tile [TQ, H] (f32, aliased),
             then 18 weight/bias/LN tensors (resident across the grid).
    Outputs: y tile [TQ, H] (bf16), optional acc_out tile [TQ, H] (f32).
    Scratch: ctx [TQ, H] bf16 per-head context buffer.

    acc_mode: "none" -> no accumulator in/out,
              "init" -> acc_out = y (no acc input),
              "add"  -> acc_out = acc_in + y (aliased buffer).
    """
    n_in = 1 + (1 if acc_mode == "add" else 0) + 18
    n_out = 1 if acc_mode == "none" else 2
    in_refs = refs[:n_in]
    out_refs = refs[n_in:n_in + n_out]
    ctx_scratch = refs[-1]

    pos = 0
    xf_ref = in_refs[pos]; pos += 1
    acc_ref = None
    if acc_mode == "add":
        acc_ref = in_refs[pos]; pos += 1
    (wq_ref, bq_ref, wk_ref, bk_ref, wv_ref, bv_ref,
     wo_ref, bo_ref, g1_ref, be1_ref,
     w1_ref, b1_ref, w2_ref, b2_ref, g2_ref, be2_ref,
     ing_ref, inb_ref) = in_refs[pos:]
    y_ref = out_refs[0]
    acc_out_ref = out_refs[1] if n_out == 2 else None

    S, H = xf_ref.shape
    hd = H // num_heads

    # Query tile: sliced from the single full-sequence input (no second DMA).
    xf_raw = xf_ref[...]                                   # [S, H]
    if tq == S:
        xq_raw = xf_raw
    else:
        q0 = pl.multiple_of(pl.program_id(1) * tq, tq)
        xq_raw = xf_ref[pl.ds(q0, tq), :]                  # [TQ, H]

    if apply_input_ln:
        # Fused embedding LayerNorm (layer 0 only); LN is per-row over H.
        g, b = ing_ref[...], inb_ref[...]
        xq_f = _layernorm(xq_raw.astype(jnp.float32), g, b)      # f32, residual
        xf_b = _layernorm(xf_raw.astype(jnp.float32), g, b).astype(jnp.bfloat16)
        xq_b = xq_f.astype(jnp.bfloat16)
    else:
        xq_f = xq_raw.astype(jnp.float32)                        # f32, residual
        xq_b = xq_raw.astype(jnp.bfloat16)
        xf_b = xf_raw.astype(jnp.bfloat16)

    # Q/K/V projections: full-width MXU matmuls, bf16 in / f32 accumulate.
    # (1/sqrt(hd) is folded into wq/bq at init time, so no per-head scaling.)
    q = jnp.dot(xq_b, wq_ref[...], preferred_element_type=jnp.float32) + bq_ref[...]
    k = jnp.dot(xf_b, wk_ref[...], preferred_element_type=jnp.float32) + bk_ref[...]
    v = jnp.dot(xf_b, wv_ref[...], preferred_element_type=jnp.float32) + bv_ref[...]

    # Single full-width bf16 casts, hoisted out of the per-head loop.
    q_b = q.astype(jnp.bfloat16)
    k_b = k.astype(jnp.bfloat16)
    v_b = v.astype(jnp.bfloat16)

    # TODO(synk): per-head static loop kept for robust Mosaic lowering; a fully
    # head-batched einsum would need an in-kernel [TQ,NH,hd]->[NH,TQ,hd]
    # relayout.  The loop body is now matmuls + softmax only (no casts/scales).
    for h in range(num_heads):
        sl = slice(h * hd, (h + 1) * hd)
        s = jnp.einsum('qd,kd->qk', q_b[:, sl], k_b[:, sl],
                       preferred_element_type=jnp.float32)        # [TQ, S]
        s = s - jnp.max(s, axis=-1, keepdims=True)
        p = jnp.exp(s)
        p = p * pl.reciprocal(jnp.sum(p, axis=-1, keepdims=True), approx=True)
        ctx_scratch[:, sl] = jnp.dot(
            p.astype(jnp.bfloat16), v_b[:, sl],
            preferred_element_type=jnp.float32).astype(jnp.bfloat16)

    # Single full-width output projection straight from the bf16 context.
    attn = jnp.dot(ctx_scratch[...], wo_ref[...],
                   preferred_element_type=jnp.float32) + bo_ref[...]

    # Residual + LayerNorm 1 (f32).
    h1 = _layernorm(xq_f + attn, g1_ref[...], be1_ref[...])
    h1_b = h1.astype(jnp.bfloat16)

    # Feed-forward.  Chunking only when [TQ, I] f32 would be large.
    inter = w1_ref.shape[1]
    if ffn_chunks == 1:
        t = jnp.dot(h1_b, w1_ref[...],
                    preferred_element_type=jnp.float32) + b1_ref[...]
        t = _gelu_tanh(t)
        ff = jnp.dot(t.astype(jnp.bfloat16), w2_ref[...],
                     preferred_element_type=jnp.float32)
    else:
        ic = inter // ffn_chunks
        ff = None
        for c in range(ffn_chunks):
            csl = slice(c * ic, (c + 1) * ic)
            t = jnp.dot(h1_b, w1_ref[:, csl],
                        preferred_element_type=jnp.float32) + b1_ref[:, csl]
            t = _gelu_tanh(t)
            part = jnp.dot(t.astype(jnp.bfloat16), w2_ref[csl, :],
                           preferred_element_type=jnp.float32)
            ff = part if ff is None else ff + part
    ff = ff + b2_ref[...]

    # Residual + LayerNorm 2 (f32).
    y = _layernorm(h1 + ff, g2_ref[...], be2_ref[...])
    y_ref[...] = y.astype(y_ref.dtype)          # bf16 inter-layer activation

    # Fused "sum of last 4 layers" accumulation in f32 (skipped entirely for
    # earlier layers; first accumulating layer never reads a zero buffer).
    if acc_mode == "init":
        acc_out_ref[...] = y
    elif acc_mode == "add":
        acc_out_ref[...] = acc_ref[...] + y


# ------------------------------ pallas wrapper --------------------------------

def _tpu_vmem_capacity_bytes():
    try:
        fn = getattr(pltpu, "get_tpu_info", None)
        if fn is None:
            return None
        cap = getattr(fn(), "vmem_capacity_bytes", None)
        return int(cap) if cap else None
    except Exception:
        return None


def _vmem_limit_bytes():
    cap = _tpu_vmem_capacity_bytes()
    if cap is None:
        return 64 * 1024 * 1024          # conservative fallback (worked before)
    # Leave headroom for Mosaic internal scratch: ~54 MiB on 64-MiB v7x,
    # ~108 MiB on 128-MiB v5e/v6e.
    return int(cap * 0.85)


def _pick_tq(S, B, vmem_limit):
    """Query-tile size: big tiles on big-VMEM chips, but always try to give the
    (batch, query-tile) grid >= 2 points so both v7x TensorCores get work."""
    big_vmem = vmem_limit is not None and vmem_limit >= 96 * 1024 * 1024
    cap = 256 if big_vmem else 128
    cands = [t for t in (256, 128, 64, 32, 16) if t <= min(S, cap) and S % t == 0]
    if not cands:
        return S                          # small/odd S: one full-sequence tile
    tq = cands[0]
    if B * (S // tq) < 2:
        for t in cands:
            if B * (S // t) >= 2:
                tq = t
                break
    return tq


def pallas_bert_layer(x, acc, lp, emb_ln, *, num_heads, apply_input_ln,
                      acc_mode, tq, vmem_limit):
    B, S, H = x.shape
    inter = lp['w1'].shape[1]
    assert S % tq == 0, (S, tq)
    n_qt = S // tq

    # Chunk the FFN intermediate only when the [TQ, I] f32 activation is big.
    ffn_chunks = 1
    while (tq * (inter // ffn_chunks) * 4 > 4 * 1024 * 1024
           and inter % (ffn_chunks * 2) == 0):
        ffn_chunks *= 2

    # Activations: batch dim squeezed; single full-S view per batch element.
    xf_spec = pl.BlockSpec((None, S, H), lambda b, qi: (b, 0, 0))
    tile_spec = pl.BlockSpec((None, tq, H), lambda b, qi: (b, qi, 0))

    # Weights / biases: constant index_map -> resident across the whole grid.
    def wspec(shape):
        return pl.BlockSpec(shape, lambda b, qi: (0, 0))

    weight_args = (lp['wq'], lp['bq'], lp['wk'], lp['bk'], lp['wv'], lp['bv'],
                   lp['wo'], lp['bo'], lp['ln1_g'], lp['ln1_b'],
                   lp['w1'], lp['b1'], lp['w2'], lp['b2'],
                   lp['ln2_g'], lp['ln2_b'], emb_ln[0], emb_ln[1])
    weight_specs = [
        wspec((H, H)), wspec((1, H)),          # wq, bq
        wspec((H, H)), wspec((1, H)),          # wk, bk
        wspec((H, H)), wspec((1, H)),          # wv, bv
        wspec((H, H)), wspec((1, H)),          # wo, bo
        wspec((1, H)), wspec((1, H)),          # ln1 gamma, beta
        wspec((H, inter)), wspec((1, inter)),  # w1, b1
        wspec((inter, H)), wspec((1, H)),      # w2, b2
        wspec((1, H)), wspec((1, H)),          # ln2 gamma, beta
        wspec((1, H)), wspec((1, H)),          # embedding-LN gamma, beta
    ]

    if acc_mode == "add":
        args = (x, acc) + weight_args
        in_specs = [xf_spec, tile_spec] + weight_specs
        aliases = {1: 1}                       # acc input reuses acc_out buffer
    else:
        args = (x,) + weight_args
        in_specs = [xf_spec] + weight_specs
        aliases = {}

    out_shapes = [jax.ShapeDtypeStruct((B, S, H), jnp.bfloat16)]   # y (bf16)
    out_specs = [tile_spec]
    if acc_mode != "none":
        out_shapes.append(jax.ShapeDtypeStruct((B, S, H), jnp.float32))  # acc
        out_specs.append(tile_spec)

    outs = pl.pallas_call(
        partial(bert_layer_kernel, num_heads=num_heads, tq=tq,
                apply_input_ln=apply_input_ln, acc_mode=acc_mode,
                ffn_chunks=ffn_chunks),
        grid=(B, n_qt),
        in_specs=in_specs,
        out_specs=tuple(out_specs),
        out_shape=tuple(out_shapes),
        scratch_shapes=[pltpu.VMEM((tq, H), jnp.bfloat16)],
        input_output_aliases=aliases,
        compiler_params=pltpu.CompilerParams(
            dimension_semantics=("parallel", "parallel"),
            vmem_limit_bytes=vmem_limit),
    )(*args)

    if acc_mode == "none":
        (y,) = outs
        return y, None
    y, acc_out = outs
    return y, acc_out


# ------------------------------- model glue -----------------------------------

def init_params(key, vocab, max_pos, hidden, inter, num_layers, num_heads):
    def nrm(k, shape):
        return 0.02 * jax.random.normal(k, shape, jnp.float32)

    bf = jnp.bfloat16
    scale = 1.0 / math.sqrt(hidden // num_heads)     # folded into wq/bq (free)
    keys = jax.random.split(key, 3 + num_layers)
    params = {
        'word_emb': nrm(keys[0], (vocab, hidden)),
        'pos_emb': nrm(keys[1], (max_pos, hidden)),
        'type_emb': nrm(keys[2], (2, hidden)),
        'emb_ln_g': jnp.ones((1, hidden), jnp.float32),
        'emb_ln_b': jnp.zeros((1, hidden), jnp.float32),
        'layers': [],
    }
    for i in range(num_layers):
        sub = jax.random.split(keys[3 + i], 6)
        params['layers'].append({
            'wq': (nrm(sub[0], (hidden, hidden)) * scale).astype(bf),
            'bq': jnp.zeros((1, hidden), jnp.float32) * scale,
            'wk': nrm(sub[1], (hidden, hidden)).astype(bf),
            'bk': jnp.zeros((1, hidden), jnp.float32),
            'wv': nrm(sub[2], (hidden, hidden)).astype(bf),
            'bv': jnp.zeros((1, hidden), jnp.float32),
            'wo': nrm(sub[3], (hidden, hidden)).astype(bf),
            'bo': jnp.zeros((1, hidden), jnp.float32),
            'ln1_g': jnp.ones((1, hidden), jnp.float32),
            'ln1_b': jnp.zeros((1, hidden), jnp.float32),
            'w1': nrm(sub[4], (hidden, inter)).astype(bf),
            'b1': jnp.zeros((1, inter), jnp.float32),
            'w2': nrm(sub[5], (inter, hidden)).astype(bf),
            'b2': jnp.zeros((1, hidden), jnp.float32),
            'ln2_g': jnp.ones((1, hidden), jnp.float32),
            'ln2_b': jnp.zeros((1, hidden), jnp.float32),
        })
    return params


def bert_embeddings_forward(token_ids, params, num_heads):
    """Equivalent of Bert_Embeddings.forward: [B,S] int ids -> [B,S,H] f32."""
    B, S = token_ids.shape

    # Embedding gathers are glue (plain JAX); the embedding LayerNorm is fused
    # into the first layer kernel.
    # TODO(synk): no attention mask / token_type_ids, matching all-ones mask
    # and all-zero types (no padding) in the reference path.
    word = params['word_emb'][token_ids]                      # [B, S, H]
    pos = params['pos_emb'][:S][None, :, :]                   # [1, S, H]
    typ = params['type_emb'][0][None, None, :]                # [1, 1, H]
    x = (word + pos + typ).astype(jnp.float32)

    nl = len(params['layers'])
    assert nl >= 4, "sum-of-last-4 fusion assumes >= 4 transformer layers"

    vmem_limit = _vmem_limit_bytes()
    tq = _pick_tq(S, B, vmem_limit)
    emb_ln = (params['emb_ln_g'], params['emb_ln_b'])

    acc = None
    for li, lp in enumerate(params['layers']):
        if li < nl - 4:
            acc_mode = "none"
        elif li == nl - 4:
            acc_mode = "init"
        else:
            acc_mode = "add"
        x, acc_new = pallas_bert_layer(
            x, acc, lp, emb_ln,
            num_heads=num_heads,
            apply_input_ln=(li == 0),
            acc_mode=acc_mode,
            tq=tq,
            vmem_limit=vmem_limit)
        if acc_new is not None:
            acc = acc_new

    # acc == sum of the last 4 hidden layers per token -> [B, S, H] float32.
    return acc


# ---------------------------------- main ---------------------------------------

if __name__ == "__main__":
    B, S, H, I, NH, NL, V, P = 2, 8, 32, 64, 4, 4, 100, 16

    key = jax.random.PRNGKey(0)
    pkey, xkey = jax.random.split(key)
    params = init_params(pkey, V, P, H, I, NL, NH)
    token_ids = jax.random.randint(xkey, (B, S), 0, V, dtype=jnp.int32)

    fwd = jax.jit(partial(bert_embeddings_forward, num_heads=NH))
    out = jax.block_until_ready(fwd(token_ids, params))

    assert out.shape == (B, S, H), out.shape
    assert out.dtype == jnp.float32, out.dtype
    print("KERNEL_OK")
</pallas_src>

<mosaic_0001>
module attributes {stable_mosaic.version = 11 : i64} {
  func.func @bert_layer_kernel(%arg0: i32, %arg1: i32, %arg2: memref<1x8x32xbf16, #tpu.memory_space<vmem>>, %arg3: memref<1x8x32xf32, #tpu.memory_space<vmem>>, %arg4: memref<32x32xbf16, #tpu.memory_space<vmem>>, %arg5: memref<1x32xf32, #tpu.memory_space<vmem>>, %arg6: memref<32x32xbf16, #tpu.memory_space<vmem>>, %arg7: memref<1x32xf32, #tpu.memory_space<vmem>>, %arg8: memref<32x32xbf16, #tpu.memory_space<vmem>>, %arg9: memref<1x32xf32, #tpu.memory_space<vmem>>, %arg10: memref<32x32xbf16, #tpu.memory_space<vmem>>, %arg11: memref<1x32xf32, #tpu.memory_space<vmem>>, %arg12: memref<1x32xf32, #tpu.memory_space<vmem>>, %arg13: memref<1x32xf32, #tpu.memory_space<vmem>>, %arg14: memref<32x64xbf16, #tpu.memory_space<vmem>>, %arg15: memref<1x64xf32, #tpu.memory_space<vmem>>, %arg16: memref<64x32xbf16, #tpu.memory_space<vmem>>, %arg17: memref<1x32xf32, #tpu.memory_space<vmem>>, %arg18: memref<1x32xf32, #tpu.memory_space<vmem>>, %arg19: memref<1x32xf32, #tpu.memory_space<vmem>>, %arg20: memref<1x32xf32, #tpu.memory_space<vmem>>, %arg21: memref<1x32xf32, #tpu.memory_space<vmem>>, %arg22: memref<1x8x32xbf16, #tpu.memory_space<vmem>>, %arg23: memref<1x8x32xf32, #tpu.memory_space<vmem>>, %arg24: memref<8x32xbf16, #tpu.memory_space<vmem>>) attributes {dimension_semantics = [#tpu.dimension_semantics<parallel>, #tpu.dimension_semantics<parallel>], iteration_bounds = array<i64: 2, 1>, scalar_prefetch = 0 : i64, scratch_operands = 1 : i64, tpu.core_type = #tpu.core_type<tc>, window_params = [{transform_indices = @transform_0, window_bounds = array<i64: 1, 8, 32>}, {transform_indices = @transform_1, window_bounds = array<i64: 1, 8, 32>}, {pipeline_mode = #tpu.pipeline_mode<synchronous>, transform_indices = @transform_2, window_bounds = array<i64: 32, 32>}, {pipeline_mode = #tpu.pipeline_mode<synchronous>, transform_indices = @transform_3, window_bounds = array<i64: 1, 32>}, {pipeline_mode = #tpu.pipeline_mode<synchronous>, transform_indices = @transform_4, window_bounds = array<i64: 32, 32>}, {pipeline_mode = #tpu.pipeline_mode<synchronous>, transform_indices = @transform_5, window_bounds = array<i64: 1, 32>}, {pipeline_mode = #tpu.pipeline_mode<synchronous>, transform_indices = @transform_6, window_bounds = array<i64: 32, 32>}, {pipeline_mode = #tpu.pipeline_mode<synchronous>, transform_indices = @transform_7, window_bounds = array<i64: 1, 32>}, {pipeline_mode = #tpu.pipeline_mode<synchronous>, transform_indices = @transform_8, window_bounds = array<i64: 32, 32>}, {pipeline_mode = #tpu.pipeline_mode<synchronous>, transform_indices = @transform_9, window_bounds = array<i64: 1, 32>}, {pipeline_mode = #tpu.pipeline_mode<synchronous>, transform_indices = @transform_10, window_bounds = array<i64: 1, 32>}, {pipeline_mode = #tpu.pipeline_mode<synchronous>, transform_indices = @transform_11, window_bounds = array<i64: 1, 32>}, {pipeline_mode = #tpu.pipeline_mode<synchronous>, transform_indices = @transform_12, window_bounds = array<i64: 32, 64>}, {pipeline_mode = #tpu.pipeline_mode<synchronous>, transform_indices = @transform_13, window_bounds = array<i64: 1, 64>}, {pipeline_mode = #tpu.pipeline_mode<synchronous>, transform_indices = @transform_14, window_bounds = array<i64: 64, 32>}, {pipeline_mode = #tpu.pipeline_mode<synchronous>, transform_indices = @transform_15, window_bounds = array<i64: 1, 32>}, {pipeline_mode = #tpu.pipeline_mode<synchronous>, transform_indices = @transform_16, window_bounds = array<i64: 1, 32>}, {pipeline_mode = #tpu.pipeline_mode<synchronous>, transform_indices = @transform_17, window_bounds = array<i64: 1, 32>}, {pipeline_mode = #tpu.pipeline_mode<synchronous>, transform_indices = @transform_18, window_bounds = array<i64: 1, 32>}, {pipeline_mode = #tpu.pipeline_mode<synchronous>, transform_indices = @transform_19, window_bounds = array<i64: 1, 32>}, {transform_indices = @transform_20, window_bounds = array<i64: 1, 8, 32>}, {transform_indices = @transform_21, window_bounds = array<i64: 1, 8, 32>}]} {
    %c0 = arith.constant 0 : index
    %c0_0 = arith.constant 0 : index
    %c0_1 = arith.constant 0 : index
    %0 = vector.load %arg2[%c0, %c0_0, %c0_1] : memref<1x8x32xbf16, #tpu.memory_space<vmem>>, vector<1x8x32xbf16>
    %1 = vector.shape_cast %0 : vector<1x8x32xbf16> to vector<8x32xbf16>
    %2 = arith.extf %1 : vector<8x32xbf16> to vector<8x32xf32>
    %c0_2 = arith.constant 0 : index
    %c0_3 = arith.constant 0 : index
    %3 = vector.load %arg4[%c0_2, %c0_3] : memref<32x32xbf16, #tpu.memory_space<vmem>>, vector<32x32xbf16>
    %cst = arith.constant dense<0.000000e+00> : vector<8x32xf32>
    %4 = tpu.matmul %1, %3, %cst {dimension_numbers = #tpu.dot_dimension_numbers<[1], [0], [0], [1], [0, 0, 1, 1], [], []>} : vector<8x32xbf16>, vector<32x32xbf16>, vector<8x32xf32> -> vector<8x32xf32>
    %c0_4 = arith.constant 0 : index
    %c0_5 = arith.constant 0 : index
    %5 = vector.load %arg5[%c0_4, %c0_5] : memref<1x32xf32, #tpu.memory_space<vmem>>, vector<1x32xf32>
    %6 = vector.broadcast %5 : vector<1x32xf32> to vector<8x32xf32>
    %7 = arith.addf %4, %6 : vector<8x32xf32>
    %c0_6 = arith.constant 0 : index
    %c0_7 = arith.constant 0 : index
    %8 = vector.load %arg6[%c0_6, %c0_7] : memref<32x32xbf16, #tpu.memory_space<vmem>>, vector<32x32xbf16>
    %cst_8 = arith.constant dense<0.000000e+00> : vector<8x32xf32>
    %9 = tpu.matmul %1, %8, %cst_8 {dimension_numbers = #tpu.dot_dimension_numbers<[1], [0], [0], [1], [0, 0, 1, 1], [], []>} : vector<8x32xbf16>, vector<32x32xbf16>, vector<8x32xf32> -> vector<8x32xf32>
    %c0_9 = arith.constant 0 : index
    %c0_10 = arith.constant 0 : index
    %10 = vector.load %arg7[%c0_9, %c0_10] : memref<1x32xf32, #tpu.memory_space<vmem>>, vector<1x32xf32>
    %11 = vector.broadcast %10 : vector<1x32xf32> to vector<8x32xf32>
    %12 = arith.addf %9, %11 : vector<8x32xf32>
    %c0_11 = arith.constant 0 : index
    %c0_12 = arith.constant 0 : index
    %13 = vector.load %arg8[%c0_11, %c0_12] : memref<32x32xbf16, #tpu.memory_space<vmem>>, vector<32x32xbf16>
    %cst_13 = arith.constant dense<0.000000e+00> : vector<8x32xf32>
    %14 = tpu.matmul %1, %13, %cst_13 {dimension_numbers = #tpu.dot_dimension_numbers<[1], [0], [0], [1], [0, 0, 1, 1], [], []>} : vector<8x32xbf16>, vector<32x32xbf16>, vector<8x32xf32> -> vector<8x32xf32>
    %c0_14 = arith.constant 0 : index
    %c0_15 = arith.constant 0 : index
    %15 = vector.load %arg9[%c0_14, %c0_15] : memref<1x32xf32, #tpu.memory_space<vmem>>, vector<1x32xf32>
    %16 = vector.broadcast %15 : vector<1x32xf32> to vector<8x32xf32>
    %17 = arith.addf %14, %16 : vector<8x32xf32>
    %18 = arith.truncf %7 : vector<8x32xf32> to vector<8x32xbf16>
    %19 = arith.truncf %12 : vector<8x32xf32> to vector<8x32xbf16>
    %20 = arith.truncf %17 : vector<8x32xf32> to vector<8x32xbf16>
    %21 = vector.extract_strided_slice %18 {offsets = [0, 0], sizes = [8, 8], strides = [1, 1]} : vector<8x32xbf16> to vector<8x8xbf16>
    %22 = vector.extract_strided_slice %19 {offsets = [0, 0], sizes = [8, 8], strides = [1, 1]} : vector<8x32xbf16> to vector<8x8xbf16>
    "tpu.trace_start"() <{level = 10 : i32, message = "qd,kd->qk"}> : () -> ()
    %cst_16 = arith.constant dense<0.000000e+00> : vector<8x8xf32>
    %23 = tpu.matmul %21, %22, %cst_16 {dimension_numbers = #tpu.dot_dimension_numbers<[1], [1], [0], [0], [0, 0, 1, 0], [], []>} : vector<8x8xbf16>, vector<8x8xbf16>, vector<8x8xf32> -> vector<8x8xf32>
    "tpu.trace_stop"() : () -> ()
    %cst_17 = arith.constant dense<0xFF800000> : vector<8xf32>
    %24 = vector.multi_reduction <maximumf>, %23, %cst_17 [1] : vector<8x8xf32> to vector<8xf32>
    %25 = vector.shape_cast %24 : vector<8xf32> to vector<8x1xf32>
    %26 = vector.broadcast %25 : vector<8x1xf32> to vector<8x8xf32>
    %27 = arith.subf %23, %26 : vector<8x8xf32>
    %28 = math.exp %27 : vector<8x8xf32>
    %cst_18 = arith.constant dense<0.000000e+00> : vector<8xf32>
    %29 = vector.multi_reduction <add>, %28, %cst_18 [1] : vector<8x8xf32> to vector<8xf32>
    %30 = vector.shape_cast %29 : vector<8xf32> to vector<8x1xf32>
    %31 = tpu.reciprocal %30 {approx = true} : vector<8x1xf32> -> vector<8x1xf32>
    %32 = vector.broadcast %31 : vector<8x1xf32> to vector<8x8xf32>
    %33 = arith.mulf %28, %32 : vector<8x8xf32>
    %34 = arith.truncf %33 : vector<8x8xf32> to vector<8x8xbf16>
    %35 = vector.extract_strided_slice %20 {offsets = [0, 0], sizes = [8, 8], strides = [1, 1]} : vector<8x32xbf16> to vector<8x8xbf16>
    %cst_19 = arith.constant dense<0.000000e+00> : vector<8x8xf32>
    %36 = tpu.matmul %34, %35, %cst_19 {dimension_numbers = #tpu.dot_dimension_numbers<[1], [0], [0], [1], [0, 0, 1, 1], [], []>} : vector<8x8xbf16>, vector<8x8xbf16>, vector<8x8xf32> -> vector<8x8xf32>
    %37 = arith.truncf %36 : vector<8x8xf32> to vector<8x8xbf16>
    %c0_20 = arith.constant 0 : index
    %c0_21 = arith.constant 0 : index
    %38 = vector.load %arg24[%c0_20, %c0_21] : memref<8x32xbf16, #tpu.memory_space<vmem>>, vector<8x8xbf16>
    tpu.vector_store %arg24[%c0_20, %c0_21], %37 {strides = array<i32>} : memref<8x32xbf16, #tpu.memory_space<vmem>>, vector<8x8xbf16>,
    %39 = vector.extract_strided_slice %18 {offsets = [0, 8], sizes = [8, 8], strides = [1, 1]} : vector<8x32xbf16> to vector<8x8xbf16>
    %40 = vector.extract_strided_slice %19 {offsets = [0, 8], sizes = [8, 8], strides = [1, 1]} : vector<8x32xbf16> to vector<8x8xbf16>
    "tpu.trace_start"() <{level = 10 : i32, message = "qd,kd->qk"}> : () -> ()
    %cst_22 = arith.constant dense<0.000000e+00> : vector<8x8xf32>
    %41 = tpu.matmul %39, %40, %cst_22 {dimension_numbers = #tpu.dot_dimension_numbers<[1], [1], [0], [0], [0, 0, 1, 0], [], []>} : vector<8x8xbf16>, vector<8x8xbf16>, vector<8x8xf32> -> vector<8x8xf32>
    "tpu.trace_stop"() : () -> ()
    %cst_23 = arith.constant dense<0xFF800000> : vector<8xf32>
    %42 = vector.multi_reduction <maximumf>, %41, %cst_23 [1] : vector<8x8xf32> to vector<8xf32>
    %43 = vector.shape_cast %42 : vector<8xf32> to vector<8x1xf32>
    %44 = vector.broadcast %43 : vector<8x1xf32> to vector<8x8xf32>
    %45 = arith.subf %41, %44 : vector<8x8xf32>
    %46 = math.exp %45 : vector<8x8xf32>
    %cst_24 = arith.constant dense<0.000000e+00> : vector<8xf32>
    %47 = vector.multi_reduction <add>, %46, %cst_24 [1] : vector<8x8xf32> to vector<8xf32>
    %48 = vector.shape_cast %47 : vector<8xf32> to vector<8x1xf32>
    %49 = tpu.reciprocal %48 {approx = true} : vector<8x1xf32> -> vector<8x1xf32>
    %50 = vector.broadcast %49 : vector<8x1xf32> to vector<8x8xf32>
    %51 = arith.mulf %46, %50 : vector<8x8xf32>
    %52 = arith.truncf %51 : vector<8x8xf32> to vector<8x8xbf16>
    %53 = vector.extract_strided_slice %20 {offsets = [0, 8], sizes = [8, 8], strides = [1, 1]} : vector<8x32xbf16> to vector<8x8xbf16>
    %cst_25 = arith.constant dense<0.000000e+00> : vector<8x8xf32>
    %54 = tpu.matmul %52, %53, %cst_25 {dimension_numbers = #tpu.dot_dimension_numbers<[1], [0], [0], [1], [0, 0, 1, 1], [], []>} : vector<8x8xbf16>, vector<8x8xbf16>, vector<8x8xf32> -> vector<8x8xf32>
    %55 = arith.truncf %54 : vector<8x8xf32> to vector<8x8xbf16>
    %c0_26 = arith.constant 0 : index
    %c8 = arith.constant 8 : index
    %56 = vector.load %arg24[%c0_26, %c8] : memref<8x32xbf16, #tpu.memory_space<vmem>>, vector<8x8xbf16>
    tpu.vector_store %arg24[%c0_26, %c8], %55 {strides = array<i32>} : memref<8x32xbf16, #tpu.memory_space<vmem>>, vector<8x8xbf16>,
    %57 = vector.extract_strided_slice %18 {offsets = [0, 16], sizes = [8, 8], strides = [1, 1]} : vector<8x32xbf16> to vector<8x8xbf16>
    %58 = vector.extract_strided_slice %19 {offsets = [0, 16], sizes = [8, 8], strides = [1, 1]} : vector<8x32xbf16> to vector<8x8xbf16>
    "tpu.trace_start"() <{level = 10 : i32, message = "qd,kd->qk"}> : () -> ()
    %cst_27 = arith.constant dense<0.000000e+00> : vector<8x8xf32>
    %59 = tpu.matmul %57, %58, %cst_27 {dimension_numbers = #tpu.dot_dimension_numbers<[1], [1], [0], [0], [0, 0, 1, 0], [], []>} : vector<8x8xbf16>, vector<8x8xbf16>, vector<8x8xf32> -> vector<8x8xf32>
    "tpu.trace_stop"() : () -> ()
    %cst_28 = arith.constant dense<0xFF800000> : vector<8xf32>
    %60 = vector.multi_reduction <maximumf>, %59, %cst_28 [1] : vector<8x8xf32> to vector<8xf32>
    %61 = vector.shape_cast %60 : vector<8xf32> to vector<8x1xf32>
    %62 = vector.broadcast %61 : vector<8x1xf32> to vector<8x8xf32>
    %63 = arith.subf %59, %62 : vector<8x8xf32>
    %64 = math.exp %63 : vector<8x8xf32>
    %cst_29 = arith.constant dense<0.000000e+00> : vector<8xf32>
    %65 = vector.multi_reduction <add>, %64, %cst_29 [1] : vector<8x8xf32> to vector<8xf32>
    %66 = vector.shape_cast %65 : vector<8xf32> to vector<8x1xf32>
    %67 = tpu.reciprocal %66 {approx = true} : vector<8x1xf32> -> vector<8x1xf32>
    %68 = vector.broadcast %67 : vector<8x1xf32> to vector<8x8xf32>
    %69 = arith.mulf %64, %68 : vector<8x8xf32>
    %70 = arith.truncf %69 : vector<8x8xf32> to vector<8x8xbf16>
    %71 = vector.extract_strided_slice %20 {offsets = [0, 16], sizes = [8, 8], strides = [1, 1]} : vector<8x32xbf16> to vector<8x8xbf16>
    %cst_30 = arith.constant dense<0.000000e+00> : vector<8x8xf32>
    %72 = tpu.matmul %70, %71, %cst_30 {dimension_numbers = #tpu.dot_dimension_numbers<[1], [0], [0], [1], [0, 0, 1, 1], [], []>} : vector<8x8xbf16>, vector<8x8xbf16>, vector<8x8xf32> -> vector<8x8xf32>
    %73 = arith.truncf %72 : vector<8x8xf32> to vector<8x8xbf16>
    %c0_31 = arith.constant 0 : index
    %c16 = arith.constant 16 : index
    %74 = vector.load %arg24[%c0_31, %c16] : memref<8x32xbf16, #tpu.memory_space<vmem>>, vector<8x8xbf16>
    tpu.vector_store %arg24[%c0_31, %c16], %73 {strides = array<i32>} : memref<8x32xbf16, #tpu.memory_space<vmem>>, vector<8x8xbf16>,
    %75 = vector.extract_strided_slice %18 {offsets = [0, 24], sizes = [8, 8], strides = [1, 1]} : vector<8x32xbf16> to vector<8x8xbf16>
    %76 = vector.extract_strided_slice %19 {offsets = [0, 24], sizes = [8, 8], strides = [1, 1]} : vector<8x32xbf16> to vector<8x8xbf16>
    "tpu.trace_start"() <{level = 10 : i32, message = "qd,kd->qk"}> : () -> ()
    %cst_32 = arith.constant dense<0.000000e+00> : vector<8x8xf32>
    %77 = tpu.matmul %75, %76, %cst_32 {dimension_numbers = #tpu.dot_dimension_numbers<[1], [1], [0], [0], [0, 0, 1, 0], [], []>} : vector<8x8xbf16>, vector<8x8xbf16>, vector<8x8xf32> -> vector<8x8xf32>
    "tpu.trace_stop"() : () -> ()
    %cst_33 = arith.constant dense<0xFF800000> : vector<8xf32>
    %78 = vector.multi_reduction <maximumf>, %77, %cst_33 [1] : vector<8x8xf32> to vector<8xf32>
    %79 = vector.shape_cast %78 : vector<8xf32> to vector<8x1xf32>
    %80 = vector.broadcast %79 : vector<8x1xf32> to vector<8x8xf32>
    %81 = arith.subf %77, %80 : vector<8x8xf32>
    %82 = math.exp %81 : vector<8x8xf32>
    %cst_34 = arith.constant dense<0.000000e+00> : vector<8xf32>
    %83 = vector.multi_reduction <add>, %82, %cst_34 [1] : vector<8x8xf32> to vector<8xf32>
    %84 = vector.shape_cast %83 : vector<8xf32> to vector<8x1xf32>
    %85 = tpu.reciprocal %84 {approx = true} : vector<8x1xf32> -> vector<8x1xf32>
    %86 = vector.broadcast %85 : vector<8x1xf32> to vector<8x8xf32>
    %87 = arith.mulf %82, %86 : vector<8x8xf32>
    %88 = arith.truncf %87 : vector<8x8xf32> to vector<8x8xbf16>
    %89 = vector.extract_strided_slice %20 {offsets = [0, 24], sizes = [8, 8], strides = [1, 1]} : vector<8x32xbf16> to vector<8x8xbf16>
    %cst_35 = arith.constant dense<0.000000e+00> : vector<8x8xf32>
    %90 = tpu.matmul %88, %89, %cst_35 {dimension_numbers = #tpu.dot_dimension_numbers<[1], [0], [0], [1], [0, 0, 1, 1], [], []>} : vector<8x8xbf16>, vector<8x8xbf16>, vector<8x8xf32> -> vector<8x8xf32>
    %91 = arith.truncf %90 : vector<8x8xf32> to vector<8x8xbf16>
    %c0_36 = arith.constant 0 : index
    %c24 = arith.constant 24 : index
    %92 = vector.load %arg24[%c0_36, %c24] : memref<8x32xbf16, #tpu.memory_space<vmem>>, vector<8x8xbf16>
    tpu.vector_store %arg24[%c0_36, %c24], %91 {strides = array<i32>} : memref<8x32xbf16, #tpu.memory_space<vmem>>, vector<8x8xbf16>,
    %c0_37 = arith.constant 0 : index
    %c0_38 = arith.constant 0 : index
    %93 = vector.load %arg24[%c0_37, %c0_38] : memref<8x32xbf16, #tpu.memory_space<vmem>>, vector<8x32xbf16>
    %c0_39 = arith.constant 0 : index
    %c0_40 = arith.constant 0 : index
    %94 = vector.load %arg10[%c0_39, %c0_40] : memref<32x32xbf16, #tpu.memory_space<vmem>>, vector<32x32xbf16>
    %cst_41 = arith.constant dense<0.000000e+00> : vector<8x32xf32>
    %95 = tpu.matmul %93, %94, %cst_41 {dimension_numbers = #tpu.dot_dimension_numbers<[1], [0], [0], [1], [0, 0, 1, 1], [], []>} : vector<8x32xbf16>, vector<32x32xbf16>, vector<8x32xf32> -> vector<8x32xf32>
    %c0_42 = arith.constant 0 : index
    %c0_43 = arith.constant 0 : index
    %96 = vector.load %arg11[%c0_42, %c0_43] : memref<1x32xf32, #tpu.memory_space<vmem>>, vector<1x32xf32>
    %97 = vector.broadcast %96 : vector<1x32xf32> to vector<8x32xf32>
    %98 = arith.addf %95, %97 : vector<8x32xf32>
    %99 = arith.addf %2, %98 : vector<8x32xf32>
    %c0_44 = arith.constant 0 : index
    %c0_45 = arith.constant 0 : index
    %100 = vector.load %arg12[%c0_44, %c0_45] : memref<1x32xf32, #tpu.memory_space<vmem>>, vector<1x32xf32>
    %c0_46 = arith.constant 0 : index
    %c0_47 = arith.constant 0 : index
    %101 = vector.load %arg13[%c0_46, %c0_47] : memref<1x32xf32, #tpu.memory_space<vmem>>, vector<1x32xf32>
    %cst_48 = arith.constant dense<0.000000e+00> : vector<8xf32>
    %102 = vector.multi_reduction <add>, %99, %cst_48 [1] : vector<8x32xf32> to vector<8xf32>
    %103 = vector.shape_cast %102 : vector<8xf32> to vector<8x1xf32>
    %cst_49 = arith.constant 3.200000e+01 : f32
    %104 = vector.broadcast %cst_49 : f32 to vector<8x1xf32>
    %105 = arith.divf %103, %104 : vector<8x1xf32>
    %106 = vector.broadcast %105 : vector<8x1xf32> to vector<8x32xf32>
    %107 = arith.subf %99, %106 : vector<8x32xf32>
    %108 = arith.mulf %107, %107 : vector<8x32xf32>
    %cst_50 = arith.constant dense<0.000000e+00> : vector<8xf32>
    %109 = vector.multi_reduction <add>, %108, %cst_50 [1] : vector<8x32xf32> to vector<8xf32>
    %110 = vector.shape_cast %109 : vector<8xf32> to vector<8x1xf32>
    %cst_51 = arith.constant 3.200000e+01 : f32
    %111 = vector.broadcast %cst_51 : f32 to vector<8x1xf32>
    %112 = arith.divf %110, %111 : vector<8x1xf32>
    %113 = vector.broadcast %105 : vector<8x1xf32> to vector<8x32xf32>
    %114 = arith.subf %99, %113 : vector<8x32xf32>
    %cst_52 = arith.constant 9.99999996E-13 : f32
    %115 = vector.broadcast %cst_52 : f32 to vector<8x1xf32>
    %116 = arith.addf %112, %115 : vector<8x1xf32>
    %117 = math.rsqrt %116 : vector<8x1xf32>
    %118 = vector.broadcast %117 : vector<8x1xf32> to vector<8x32xf32>
    %119 = arith.mulf %114, %118 : vector<8x32xf32>
    %120 = vector.broadcast %100 : vector<1x32xf32> to vector<8x32xf32>
    %121 = arith.mulf %119, %120 : vector<8x32xf32>
    %122 = vector.broadcast %101 : vector<1x32xf32> to vector<8x32xf32>
    %123 = arith.addf %121, %122 : vector<8x32xf32>
    %124 = arith.truncf %123 : vector<8x32xf32> to vector<8x32xbf16>
    %c0_53 = arith.constant 0 : index
    %c0_54 = arith.constant 0 : index
    %125 = vector.load %arg14[%c0_53, %c0_54] : memref<32x64xbf16, #tpu.memory_space<vmem>>, vector<32x64xbf16>
    %cst_55 = arith.constant dense<0.000000e+00> : vector<8x64xf32>
    %126 = tpu.matmul %124, %125, %cst_55 {dimension_numbers = #tpu.dot_dimension_numbers<[1], [0], [0], [1], [0, 0, 1, 1], [], []>} : vector<8x32xbf16>, vector<32x64xbf16>, vector<8x64xf32> -> vector<8x64xf32>
    %c0_56 = arith.constant 0 : index
    %c0_57 = arith.constant 0 : index
    %127 = vector.load %arg15[%c0_56, %c0_57] : memref<1x64xf32, #tpu.memory_space<vmem>>, vector<1x64xf32>
    %128 = vector.broadcast %127 : vector<1x64xf32> to vector<8x64xf32>
    %129 = arith.addf %126, %128 : vector<8x64xf32>
    %cst_58 = arith.constant 5.000000e-01 : f32
    %130 = vector.broadcast %cst_58 : f32 to vector<8x64xf32>
    %131 = arith.mulf %130, %129 : vector<8x64xf32>
    %cst_59 = arith.constant 4.471500e-02 : f32
    %132 = vector.broadcast %cst_59 : f32 to vector<8x64xf32>
    %133 = arith.mulf %132, %129 : vector<8x64xf32>
    %134 = arith.mulf %133, %129 : vector<8x64xf32>
    %135 = arith.mulf %134, %129 : vector<8x64xf32>
    %136 = arith.addf %129, %135 : vector<8x64xf32>
    %cst_60 = arith.constant 0.797884583 : f32
    %137 = vector.broadcast %cst_60 : f32 to vector<8x64xf32>
    %138 = arith.mulf %137, %136 : vector<8x64xf32>
    %139 = math.tanh %138 : vector<8x64xf32>
    %cst_61 = arith.constant 1.000000e+00 : f32
    %140 = vector.broadcast %cst_61 : f32 to vector<8x64xf32>
    %141 = arith.addf %140, %139 : vector<8x64xf32>
    %142 = arith.mulf %131, %141 : vector<8x64xf32>
    %143 = arith.truncf %142 : vector<8x64xf32> to vector<8x64xbf16>
    %c0_62 = arith.constant 0 : index
    %c0_63 = arith.constant 0 : index
    %144 = vector.load %arg16[%c0_62, %c0_63] : memref<64x32xbf16, #tpu.memory_space<vmem>>, vector<64x32xbf16>
    %cst_64 = arith.constant dense<0.000000e+00> : vector<8x32xf32>
    %145 = tpu.matmul %143, %144, %cst_64 {dimension_numbers = #tpu.dot_dimension_numbers<[1], [0], [0], [1], [0, 0, 1, 1], [], []>} : vector<8x64xbf16>, vector<64x32xbf16>, vector<8x32xf32> -> vector<8x32xf32>
    %c0_65 = arith.constant 0 : index
    %c0_66 = arith.constant 0 : index
    %146 = vector.load %arg17[%c0_65, %c0_66] : memref<1x32xf32, #tpu.memory_space<vmem>>, vector<1x32xf32>
    %147 = vector.broadcast %146 : vector<1x32xf32> to vector<8x32xf32>
    %148 = arith.addf %145, %147 : vector<8x32xf32>
    %149 = arith.addf %123, %148 : vector<8x32xf32>
    %c0_67 = arith.constant 0 : index
    %c0_68 = arith.constant 0 : index
    %150 = vector.load %arg18[%c0_67, %c0_68] : memref<1x32xf32, #tpu.memory_space<vmem>>, vector<1x32xf32>
    %c0_69 = arith.constant 0 : index
    %c0_70 = arith.constant 0 : index
    %151 = vector.load %arg19[%c0_69, %c0_70] : memref<1x32xf32, #tpu.memory_space<vmem>>, vector<1x32xf32>
    %cst_71 = arith.constant dense<0.000000e+00> : vector<8xf32>
    %152 = vector.multi_reduction <add>, %149, %cst_71 [1] : vector<8x32xf32> to vector<8xf32>
    %153 = vector.shape_cast %152 : vector<8xf32> to vector<8x1xf32>
    %cst_72 = arith.constant 3.200000e+01 : f32
    %154 = vector.broadcast %cst_72 : f32 to vector<8x1xf32>
    %155 = arith.divf %153, %154 : vector<8x1xf32>
    %156 = vector.broadcast %155 : vector<8x1xf32> to vector<8x32xf32>
    %157 = arith.subf %149, %156 : vector<8x32xf32>
    %158 = arith.mulf %157, %157 : vector<8x32xf32>
    %cst_73 = arith.constant dense<0.000000e+00> : vector<8xf32>
    %159 = vector.multi_reduction <add>, %158, %cst_73 [1] : vector<8x32xf32> to vector<8xf32>
    %160 = vector.shape_cast %159 : vector<8xf32> to vector<8x1xf32>
    %cst_74 = arith.constant 3.200000e+01 : f32
    %161 = vector.broadcast %cst_74 : f32 to vector<8x1xf32>
    %162 = arith.divf %160, %161 : vector<8x1xf32>
    %163 = vector.broadcast %155 : vector<8x1xf32> to vector<8x32xf32>
    %164 = arith.subf %149, %163 : vector<8x32xf32>
    %cst_75 = arith.constant 9.99999996E-13 : f32
    %165 = vector.broadcast %cst_75 : f32 to vector<8x1xf32>
    %166 = arith.addf %162, %165 : vector<8x1xf32>
    %167 = math.rsqrt %166 : vector<8x1xf32>
    %168 = vector.broadcast %167 : vector<8x1xf32> to vector<8x32xf32>
    %169 = arith.mulf %164, %168 : vector<8x32xf32>
    %170 = vector.broadcast %150 : vector<1x32xf32> to vector<8x32xf32>
    %171 = arith.mulf %169, %170 : vector<8x32xf32>
    %172 = vector.broadcast %151 : vector<1x32xf32> to vector<8x32xf32>
    %173 = arith.addf %171, %172 : vector<8x32xf32>
    %174 = arith.truncf %173 : vector<8x32xf32> to vector<8x32xbf16>
    %c0_76 = arith.constant 0 : index
    %c0_77 = arith.constant 0 : index
    %c0_78 = arith.constant 0 : index
    %175 = vector.load %arg22[%c0_76, %c0_77, %c0_78] : memref<1x8x32xbf16, #tpu.memory_space<vmem>>, vector<1x8x32xbf16>
    %176 = vector.shape_cast %175 : vector<1x8x32xbf16> to vector<8x32xbf16>
    %177 = vector.shape_cast %174 : vector<8x32xbf16> to vector<1x8x32xbf16>
    tpu.vector_store %arg22[%c0_76, %c0_77, %c0_78], %177 {strides = array<i32>} : memref<1x8x32xbf16, #tpu.memory_space<vmem>>, vector<1x8x32xbf16>,
    %c0_79 = arith.constant 0 : index
    %c0_80 = arith.constant 0 : index
    %c0_81 = arith.constant 0 : index
    %178 = vector.load %arg3[%c0_79, %c0_80, %c0_81] : memref<1x8x32xf32, #tpu.memory_space<vmem>>, vector<1x8x32xf32>
    %179 = vector.shape_cast %178 : vector<1x8x32xf32> to vector<8x32xf32>
    %180 = arith.addf %179, %173 : vector<8x32xf32>
    %c0_82 = arith.constant 0 : index
    %c0_83 = arith.constant 0 : index
    %c0_84 = arith.constant 0 : index
    %181 = vector.load %arg23[%c0_82, %c0_83, %c0_84] : memref<1x8x32xf32, #tpu.memory_space<vmem>>, vector<1x8x32xf32>
    %182 = vector.shape_cast %181 : vector<1x8x32xf32> to vector<8x32xf32>
    %183 = vector.shape_cast %180 : vector<8x32xf32> to vector<1x8x32xf32>
    tpu.vector_store %arg23[%c0_82, %c0_83, %c0_84], %183 {strides = array<i32>} : memref<1x8x32xf32, #tpu.memory_space<vmem>>, vector<1x8x32xf32>,
    return
  }
  func.func @transform_0(%arg0: i32, %arg1: i32) -> (i32, i32, i32) {
    %c0_i32 = arith.constant 0 : i32
    %c0_i32_0 = arith.constant 0 : i32
    %c0_i32_1 = arith.constant 0 : i32
    return %arg0, %c0_i32, %c0_i32_0 : i32, i32, i32
  }
  func.func @transform_1(%arg0: i32, %arg1: i32) -> (i32, i32, i32) {
    %c0_i32 = arith.constant 0 : i32
    %c0_i32_0 = arith.constant 0 : i32
    return %arg0, %arg1, %c0_i32 : i32, i32, i32
  }
  func.func @transform_2(%arg0: i32, %arg1: i32) -> (i32, i32) {
    %c0_i32 = arith.constant 0 : i32
    %c0_i32_0 = arith.constant 0 : i32
    %c0_i32_1 = arith.constant 0 : i32
    return %c0_i32, %c0_i32_0 : i32, i32
  }
  func.func @transform_3(%arg0: i32, %arg1: i32) -> (i32, i32) {
    %c0_i32 = arith.constant 0 : i32
    %c0_i32_0 = arith.constant 0 : i32
    %c0_i32_1 = arith.constant 0 : i32
    return %c0_i32, %c0_i32_0 : i32, i32
  }
  func.func @transform_4(%arg0: i32, %arg1: i32) -> (i32, i32) {
    %c0_i32 = arith.constant 0 : i32
    %c0_i32_0 = arith.constant 0 : i32
    %c0_i32_1 = arith.constant 0 : i32
    return %c0_i32, %c0_i32_0 : i32, i32
  }
  func.func @transform_5(%arg0: i32, %arg1: i32) -> (i32, i32) {
    %c0_i32 = arith.constant 0 : i32
    %c0_i32_0 = arith.constant 0 : i32
    %c0_i32_1 = arith.constant 0 : i32
    return %c0_i32, %c0_i32_0 : i32, i32
  }
  func.func @transform_6(%arg0: i32, %arg1: i32) -> (i32, i32) {
    %c0_i32 = arith.constant 0 : i32
    %c0_i32_0 = arith.constant 0 : i32
    %c0_i32_1 = arith.constant 0 : i32
    return %c0_i32, %c0_i32_0 : i32, i32
  }
  func.func @transform_7(%arg0: i32, %arg1: i32) -> (i32, i32) {
    %c0_i32 = arith.constant 0 : i32
    %c0_i32_0 = arith.constant 0 : i32
    %c0_i32_1 = arith.constant 0 : i32
    return %c0_i32, %c0_i32_0 : i32, i32
  }
  func.func @transform_8(%arg0: i32, %arg1: i32) -> (i32, i32) {
    %c0_i32 = arith.constant 0 : i32
    %c0_i32_0 = arith.constant 0 : i32
    %c0_i32_1 = arith.constant 0 : i32
    return %c0_i32, %c0_i32_0 : i32, i32
  }
  func.func @transform_9(%arg0: i32, %arg1: i32) -> (i32, i32) {
    %c0_i32 = arith.constant 0 : i32
    %c0_i32_0 = arith.constant 0 : i32
    %c0_i32_1 = arith.constant 0 : i32
    return %c0_i32, %c0_i32_0 : i32, i32
  }
  func.func @transform_10(%arg0: i32, %arg1: i32) -> (i32, i32) {
    %c0_i32 = arith.constant 0 : i32
    %c0_i32_0 = arith.constant 0 : i32
    %c0_i32_1 = arith.constant 0 : i32
    return %c0_i32, %c0_i32_0 : i32, i32
  }
  func.func @transform_11(%arg0: i32, %arg1: i32) -> (i32, i32) {
    %c0_i32 = arith.constant 0 : i32
    %c0_i32_0 = arith.constant 0 : i32
    %c0_i32_1 = arith.constant 0 : i32
    return %c0_i32, %c0_i32_0 : i32, i32
  }
  func.func @transform_12(%arg0: i32, %arg1: i32) -> (i32, i32) {
    %c0_i32 = arith.constant 0 : i32
    %c0_i32_0 = arith.constant 0 : i32
    %c0_i32_1 = arith.constant 0 : i32
    return %c0_i32, %c0_i32_0 : i32, i32
  }
  func.func @transform_13(%arg0: i32, %arg1: i32) -> (i32, i32) {
    %c0_i32 = arith.constant 0 : i32
    %c0_i32_0 = arith.constant 0 : i32
    %c0_i32_1 = arith.constant 0 : i32
    return %c0_i32, %c0_i32_0 : i32, i32
  }
  func.func @transform_14(%arg0: i32, %arg1: i32) -> (i32, i32) {
    %c0_i32 = arith.constant 0 : i32
    %c0_i32_0 = arith.constant 0 : i32
    %c0_i32_1 = arith.constant 0 : i32
    return %c0_i32, %c0_i32_0 : i32, i32
  }
  func.func @transform_15(%arg0: i32, %arg1: i32) -> (i32, i32) {
    %c0_i32 = arith.constant 0 : i32
    %c0_i32_0 = arith.constant 0 : i32
    %c0_i32_1 = arith.constant 0 : i32
    return %c0_i32, %c0_i32_0 : i32, i32
  }
  func.func @transform_16(%arg0: i32, %arg1: i32) -> (i32, i32) {
    %c0_i32 = arith.constant 0 : i32
    %c0_i32_0 = arith.constant 0 : i32
    %c0_i32_1 = arith.constant 0 : i32
    return %c0_i32, %c0_i32_0 : i32, i32
  }
  func.func @transform_17(%arg0: i32, %arg1: i32) -> (i32, i32) {
    %c0_i32 = arith.constant 0 : i32
    %c0_i32_0 = arith.constant 0 : i32
    %c0_i32_1 = arith.constant 0 : i32
    return %c0_i32, %c0_i32_0 : i32, i32
  }
  func.func @transform_18(%arg0: i32, %arg1: i32) -> (i32, i32) {
    %c0_i32 = arith.constant 0 : i32
    %c0_i32_0 = arith.constant 0 : i32
    %c0_i32_1 = arith.constant 0 : i32
    return %c0_i32, %c0_i32_0 : i32, i32
  }
  func.func @transform_19(%arg0: i32, %arg1: i32) -> (i32, i32) {
    %c0_i32 = arith.constant 0 : i32
    %c0_i32_0 = arith.constant 0 : i32
    %c0_i32_1 = arith.constant 0 : i32
    return %c0_i32, %c0_i32_0 : i32, i32
  }
  func.func @transform_20(%arg0: i32, %arg1: i32) -> (i32, i32, i32) {
    %c0_i32 = arith.constant 0 : i32
    %c0_i32_0 = arith.constant 0 : i32
    return %arg0, %arg1, %c0_i32 : i32, i32, i32
  }
  func.func @transform_21(%arg0: i32, %arg1: i32) -> (i32, i32, i32) {
    %c0_i32 = arith.constant 0 : i32
    %c0_i32_0 = arith.constant 0 : i32
    return %arg0, %arg1, %c0_i32 : i32, i32, i32
  }
}

module attributes {stable_mosaic.version = 11 : i64} {
  func.func @bert_layer_kernel(%arg0: i32, %arg1: i32, %arg2: memref<1x8x32xf32, #tpu.memory_space<vmem>>, %arg3: memref<32x32xbf16, #tpu.memory_space<vmem>>, %arg4: memref<1x32xf32, #tpu.memory_space<vmem>>, %arg5: memref<32x32xbf16, #tpu.memory_space<vmem>>, %arg6: memref<1x32xf32, #tpu.memory_space<vmem>>, %arg7: memref<32x32xbf16, #tpu.memory_space<vmem>>, %arg8: memref<1x32xf32, #tpu.memory_space<vmem>>, %arg9: memref<32x32xbf16, #tpu.memory_space<vmem>>, %arg10: memref<1x32xf32, #tpu.memory_space<vmem>>, %arg11: memref<1x32xf32, #tpu.memory_space<vmem>>, %arg12: memref<1x32xf32, #tpu.memory_space<vmem>>, %arg13: memref<32x64xbf16, #tpu.memory_space<vmem>>, %arg14: memref<1x64xf32, #tpu.memory_space<vmem>>, %arg15: memref<64x32xbf16, #tpu.memory_space<vmem>>, %arg16: memref<1x32xf32, #tpu.memory_space<vmem>>, %arg17: memref<1x32xf32, #tpu.memory_space<vmem>>, %arg18: memref<1x32xf32, #tpu.memory_space<vmem>>, %arg19: memref<1x32xf32, #tpu.memory_space<vmem>>, %arg20: memref<1x32xf32, #tpu.memory_space<vmem>>, %arg21: memref<1x8x32xbf16, #tpu.memory_space<vmem>>, %arg22: memref<1x8x32xf32, #tpu.memory_space<vmem>>, %arg23: memref<8x32xbf16, #tpu.memory_space<vmem>>) attributes {dimension_semantics = [#tpu.dimension_semantics<parallel>, #tpu.dimension_semantics<parallel>], iteration_bounds = array<i64: 2, 1>, scalar_prefetch = 0 : i64, scratch_operands = 1 : i64, tpu.core_type = #tpu.core_type<tc>, window_params = [{transform_indices = @transform_0, window_bounds = array<i64: 1, 8, 32>}, {pipeline_mode = #tpu.pipeline_mode<synchronous>, transform_indices = @transform_1, window_bounds = array<i64: 32, 32>}, {pipeline_mode = #tpu.pipeline_mode<synchronous>, transform_indices = @transform_2, window_bounds = array<i64: 1, 32>}, {pipeline_mode = #tpu.pipeline_mode<synchronous>, transform_indices = @transform_3, window_bounds = array<i64: 32, 32>}, {pipeline_mode = #tpu.pipeline_mode<synchronous>, transform_indices = @transform_4, window_bounds = array<i64: 1, 32>}, {pipeline_mode = #tpu.pipeline_mode<synchronous>, transform_indices = @transform_5, window_bounds = array<i64: 32, 32>}, {pipeline_mode = #tpu.pipeline_mode<synchronous>, transform_indices = @transform_6, window_bounds = array<i64: 1, 32>}, {pipeline_mode = #tpu.pipeline_mode<synchronous>, transform_indices = @transform_7, window_bounds = array<i64: 32, 32>}, {pipeline_mode = #tpu.pipeline_mode<synchronous>, transform_indices = @transform_8, window_bounds = array<i64: 1, 32>}, {pipeline_mode = #tpu.pipeline_mode<synchronous>, transform_indices = @transform_9, window_bounds = array<i64: 1, 32>}, {pipeline_mode = #tpu.pipeline_mode<synchronous>, transform_indices = @transform_10, window_bounds = array<i64: 1, 32>}, {pipeline_mode = #tpu.pipeline_mode<synchronous>, transform_indices = @transform_11, window_bounds = array<i64: 32, 64>}, {pipeline_mode = #tpu.pipeline_mode<synchronous>, transform_indices = @transform_12, window_bounds = array<i64: 1, 64>}, {pipeline_mode = #tpu.pipeline_mode<synchronous>, transform_indices = @transform_13, window_bounds = array<i64: 64, 32>}, {pipeline_mode = #tpu.pipeline_mode<synchronous>, transform_indices = @transform_14, window_bounds = array<i64: 1, 32>}, {pipeline_mode = #tpu.pipeline_mode<synchronous>, transform_indices = @transform_15, window_bounds = array<i64: 1, 32>}, {pipeline_mode = #tpu.pipeline_mode<synchronous>, transform_indices = @transform_16, window_bounds = array<i64: 1, 32>}, {pipeline_mode = #tpu.pipeline_mode<synchronous>, transform_indices = @transform_17, window_bounds = array<i64: 1, 32>}, {pipeline_mode = #tpu.pipeline_mode<synchronous>, transform_indices = @transform_18, window_bounds = array<i64: 1, 32>}, {transform_indices = @transform_19, window_bounds = array<i64: 1, 8, 32>}, {transform_indices = @transform_20, window_bounds = array<i64: 1, 8, 32>}]} {
    %c0 = arith.constant 0 : index
    %c0_0 = arith.constant 0 : index
    %c0_1 = arith.constant 0 : index
    %0 = vector.load %arg2[%c0, %c0_0, %c0_1] : memref<1x8x32xf32, #tpu.memory_space<vmem>>, vector<1x8x32xf32>
    %1 = vector.shape_cast %0 : vector<1x8x32xf32> to vector<8x32xf32>
    %c0_2 = arith.constant 0 : index
    %c0_3 = arith.constant 0 : index
    %2 = vector.load %arg19[%c0_2, %c0_3] : memref<1x32xf32, #tpu.memory_space<vmem>>, vector<1x32xf32>
    %c0_4 = arith.constant 0 : index
    %c0_5 = arith.constant 0 : index
    %3 = vector.load %arg20[%c0_4, %c0_5] : memref<1x32xf32, #tpu.memory_space<vmem>>, vector<1x32xf32>
    %cst = arith.constant dense<0.000000e+00> : vector<8xf32>
    %4 = vector.multi_reduction <add>, %1, %cst [1] : vector<8x32xf32> to vector<8xf32>
    %5 = vector.shape_cast %4 : vector<8xf32> to vector<8x1xf32>
    %cst_6 = arith.constant 3.200000e+01 : f32
    %6 = vector.broadcast %cst_6 : f32 to vector<8x1xf32>
    %7 = arith.divf %5, %6 : vector<8x1xf32>
    %8 = vector.broadcast %7 : vector<8x1xf32> to vector<8x32xf32>
    %9 = arith.subf %1, %8 : vector<8x32xf32>
    %10 = arith.mulf %9, %9 : vector<8x32xf32>
    %cst_7 = arith.constant dense<0.000000e+00> : vector<8xf32>
    %11 = vector.multi_reduction <add>, %10, %cst_7 [1] : vector<8x32xf32> to vector<8xf32>
    %12 = vector.shape_cast %11 : vector<8xf32> to vector<8x1xf32>
    %cst_8 = arith.constant 3.200000e+01 : f32
    %13 = vector.broadcast %cst_8 : f32 to vector<8x1xf32>
    %14 = arith.divf %12, %13 : vector<8x1xf32>
    %15 = vector.broadcast %7 : vector<8x1xf32> to vector<8x32xf32>
    %16 = arith.subf %1, %15 : vector<8x32xf32>
    %cst_9 = arith.constant 9.99999996E-13 : f32
    %17 = vector.broadcast %cst_9 : f32 to vector<8x1xf32>
    %18 = arith.addf %14, %17 : vector<8x1xf32>
    %19 = math.rsqrt %18 : vector<8x1xf32>
    %20 = vector.broadcast %19 : vector<8x1xf32> to vector<8x32xf32>
    %21 = arith.mulf %16, %20 : vector<8x32xf32>
    %22 = vector.broadcast %2 : vector<1x32xf32> to vector<8x32xf32>
    %23 = arith.mulf %21, %22 : vector<8x32xf32>
    %24 = vector.broadcast %3 : vector<1x32xf32> to vector<8x32xf32>
    %25 = arith.addf %23, %24 : vector<8x32xf32>
    %cst_10 = arith.constant dense<0.000000e+00> : vector<8xf32>
    %26 = vector.multi_reduction <add>, %1, %cst_10 [1] : vector<8x32xf32> to vector<8xf32>
    %27 = vector.shape_cast %26 : vector<8xf32> to vector<8x1xf32>
    %cst_11 = arith.constant 3.200000e+01 : f32
    %28 = vector.broadcast %cst_11 : f32 to vector<8x1xf32>
    %29 = arith.divf %27, %28 : vector<8x1xf32>
    %30 = vector.broadcast %29 : vector<8x1xf32> to vector<8x32xf32>
    %31 = arith.subf %1, %30 : vector<8x32xf32>
    %32 = arith.mulf %31, %31 : vector<8x32xf32>
    %cst_12 = arith.constant dense<0.000000e+00> : vector<8xf32>
    %33 = vector.multi_reduction <add>, %32, %cst_12 [1] : vector<8x32xf32> to vector<8xf32>
    %34 = vector.shape_cast %33 : vector<8xf32> to vector<8x1xf32>
    %cst_13 = arith.constant 3.200000e+01 : f32
    %35 = vector.broadcast %cst_13 : f32 to vector<8x1xf32>
    %36 = arith.divf %34, %35 : vector<8x1xf32>
    %37 = vector.broadcast %29 : vector<8x1xf32> to vector<8x32xf32>
    %38 = arith.subf %1, %37 : vector<8x32xf32>
    %cst_14 = arith.constant 9.99999996E-13 : f32
    %39 = vector.broadcast %cst_14 : f32 to vector<8x1xf32>
    %40 = arith.addf %36, %39 : vector<8x1xf32>
    %41 = math.rsqrt %40 : vector<8x1xf32>
    %42 = vector.broadcast %41 : vector<8x1xf32> to vector<8x32xf32>
    %43 = arith.mulf %38, %42 : vector<8x32xf32>
    %44 = vector.broadcast %2 : vector<1x32xf32> to vector<8x32xf32>
    %45 = arith.mulf %43, %44 : vector<8x32xf32>
    %46 = vector.broadcast %3 : vector<1x32xf32> to vector<8x32xf32>
    %47 = arith.addf %45, %46 : vector<8x32xf32>
    %48 = arith.truncf %47 : vector<8x32xf32> to vector<8x32xbf16>
    %49 = arith.truncf %25 : vector<8x32xf32> to vector<8x32xbf16>
    %c0_15 = arith.constant 0 : index
    %c0_16 = arith.constant 0 : index
    %50 = vector.load %arg3[%c0_15, %c0_16] : memref<32x32xbf16, #tpu.memory_space<vmem>>, vector<32x32xbf16>
    %cst_17 = arith.constant dense<0.000000e+00> : vector<8x32xf32>
    %51 = tpu.matmul %49, %50, %cst_17 {dimension_numbers = #tpu.dot_dimension_numbers<[1], [0], [0], [1], [0, 0, 1, 1], [], []>} : vector<8x32xbf16>, vector<32x32xbf16>, vector<8x32xf32> -> vector<8x32xf32>
    %c0_18 = arith.constant 0 : index
    %c0_19 = arith.constant 0 : index
    %52 = vector.load %arg4[%c0_18, %c0_19] : memref<1x32xf32, #tpu.memory_space<vmem>>, vector<1x32xf32>
    %53 = vector.broadcast %52 : vector<1x32xf32> to vector<8x32xf32>
    %54 = arith.addf %51, %53 : vector<8x32xf32>
    %c0_20 = arith.constant 0 : index
    %c0_21 = arith.constant 0 : index
    %55 = vector.load %arg5[%c0_20, %c0_21] : memref<32x32xbf16, #tpu.memory_space<vmem>>, vector<32x32xbf16>
    %cst_22 = arith.constant dense<0.000000e+00> : vector<8x32xf32>
    %56 = tpu.matmul %48, %55, %cst_22 {dimension_numbers = #tpu.dot_dimension_numbers<[1], [0], [0], [1], [0, 0, 1, 1], [], []>} : vector<8x32xbf16>, vector<32x32xbf16>, vector<8x32xf32> -> vector<8x32xf32>
    %c0_23 = arith.constant 0 : index
    %c0_24 = arith.constant 0 : index
    %57 = vector.load %arg6[%c0_23, %c0_24] : memref<1x32xf32, #tpu.memory_space<vmem>>, vector<1x32xf32>
    %58 = vector.broadcast %57 : vector<1x32xf32> to vector<8x32xf32>
    %59 = arith.addf %56, %58 : vector<8x32xf32>
    %c0_25 = arith.constant 0 : index
    %c0_26 = arith.constant 0 : index
    %60 = vector.load %arg7[%c0_25, %c0_26] : memref<32x32xbf16, #tpu.memory_space<vmem>>, vector<32x32xbf16>
    %cst_27 = arith.constant dense<0.000000e+00> : vector<8x32xf32>
    %61 = tpu.matmul %48, %60, %cst_27 {dimension_numbers = #tpu.dot_dimension_numbers<[1], [0], [0], [1], [0, 0, 1, 1], [], []>} : vector<8x32xbf16>, vector<32x32xbf16>, vector<8x32xf32> -> vector<8x32xf32>
    %c0_28 = arith.constant 0 : index
    %c0_29 = arith.constant 0 : index
    %62 = vector.load %arg8[%c0_28, %c0_29] : memref<1x32xf32, #tpu.memory_space<vmem>>, vector<1x32xf32>
    %63 = vector.broadcast %62 : vector<1x32xf32> to vector<8x32xf32>
    %64 = arith.addf %61, %63 : vector<8x32xf32>
    %65 = arith.truncf %54 : vector<8x32xf32> to vector<8x32xbf16>
    %66 = arith.truncf %59 : vector<8x32xf32> to vector<8x32xbf16>
    %67 = arith.truncf %64 : vector<8x32xf32> to vector<8x32xbf16>
    %68 = vector.extract_strided_slice %65 {offsets = [0, 0], sizes = [8, 8], strides = [1, 1]} : vector<8x32xbf16> to vector<8x8xbf16>
    %69 = vector.extract_strided_slice %66 {offsets = [0, 0], sizes = [8, 8], strides = [1, 1]} : vector<8x32xbf16> to vector<8x8xbf16>
    "tpu.trace_start"() <{level = 10 : i32, message = "qd,kd->qk"}> : () -> ()
    %cst_30 = arith.constant dense<0.000000e+00> : vector<8x8xf32>
    %70 = tpu.matmul %68, %69, %cst_30 {dimension_numbers = #tpu.dot_dimension_numbers<[1], [1], [0], [0], [0, 0, 1, 0], [], []>} : vector<8x8xbf16>, vector<8x8xbf16>, vector<8x8xf32> -> vector<8x8xf32>
    "tpu.trace_stop"() : () -> ()
    %cst_31 = arith.constant dense<0xFF800000> : vector<8xf32>
    %71 = vector.multi_reduction <maximumf>, %70, %cst_31 [1] : vector<8x8xf32> to vector<8xf32>
    %72 = vector.shape_cast %71 : vector<8xf32> to vector<8x1xf32>
    %73 = vector.broadcast %72 : vector<8x1xf32> to vector<8x8xf32>
    %74 = arith.subf %70, %73 : vector<8x8xf32>
    %75 = math.exp %74 : vector<8x8xf32>
    %cst_32 = arith.constant dense<0.000000e+00> : vector<8xf32>
    %76 = vector.multi_reduction <add>, %75, %cst_32 [1] : vector<8x8xf32> to vector<8xf32>
    %77 = vector.shape_cast %76 : vector<8xf32> to vector<8x1xf32>
    %78 = tpu.reciprocal %77 {approx = true} : vector<8x1xf32> -> vector<8x1xf32>
    %79 = vector.broadcast %78 : vector<8x1xf32> to vector<8x8xf32>
    %80 = arith.mulf %75, %79 : vector<8x8xf32>
    %81 = arith.truncf %80 : vector<8x8xf32> to vector<8x8xbf16>
    %82 = vector.extract_strided_slice %67 {offsets = [0, 0], sizes = [8, 8], strides = [1, 1]} : vector<8x32xbf16> to vector<8x8xbf16>
    %cst_33 = arith.constant dense<0.000000e+00> : vector<8x8xf32>
    %83 = tpu.matmul %81, %82, %cst_33 {dimension_numbers = #tpu.dot_dimension_numbers<[1], [0], [0], [1], [0, 0, 1, 1], [], []>} : vector<8x8xbf16>, vector<8x8xbf16>, vector<8x8xf32> -> vector<8x8xf32>
    %84 = arith.truncf %83 : vector<8x8xf32> to vector<8x8xbf16>
    %c0_34 = arith.constant 0 : index
    %c0_35 = arith.constant 0 : index
    %85 = vector.load %arg23[%c0_34, %c0_35] : memref<8x32xbf16, #tpu.memory_space<vmem>>, vector<8x8xbf16>
    tpu.vector_store %arg23[%c0_34, %c0_35], %84 {strides = array<i32>} : memref<8x32xbf16, #tpu.memory_space<vmem>>, vector<8x8xbf16>,
    %86 = vector.extract_strided_slice %65 {offsets = [0, 8], sizes = [8, 8], strides = [1, 1]} : vector<8x32xbf16> to vector<8x8xbf16>
    %87 = vector.extract_strided_slice %66 {offsets = [0, 8], sizes = [8, 8], strides = [1, 1]} : vector<8x32xbf16> to vector<8x8xbf16>
    "tpu.trace_start"() <{level = 10 : i32, message = "qd,kd->qk"}> : () -> ()
    %cst_36 = arith.constant dense<0.000000e+00> : vector<8x8xf32>
    %88 = tpu.matmul %86, %87, %cst_36 {dimension_numbers = #tpu.dot_dimension_numbers<[1], [1], [0], [0], [0, 0, 1, 0], [], []>} : vector<8x8xbf16>, vector<8x8xbf16>, vector<8x8xf32> -> vector<8x8xf32>
    "tpu.trace_stop"() : () -> ()
    %cst_37 = arith.constant dense<0xFF800000> : vector<8xf32>
    %89 = vector.multi_reduction <maximumf>, %88, %cst_37 [1] : vector<8x8xf32> to vector<8xf32>
    %90 = vector.shape_cast %89 : vector<8xf32> to vector<8x1xf32>
    %91 = vector.broadcast %90 : vector<8x1xf32> to vector<8x8xf32>
    %92 = arith.subf %88, %91 : vector<8x8xf32>
    %93 = math.exp %92 : vector<8x8xf32>
    %cst_38 = arith.constant dense<0.000000e+00> : vector<8xf32>
    %94 = vector.multi_reduction <add>, %93, %cst_38 [1] : vector<8x8xf32> to vector<8xf32>
    %95 = vector.shape_cast %94 : vector<8xf32> to vector<8x1xf32>
    %96 = tpu.reciprocal %95 {approx = true} : vector<8x1xf32> -> vector<8x1xf32>
    %97 = vector.broadcast %96 : vector<8x1xf32> to vector<8x8xf32>
    %98 = arith.mulf %93, %97 : vector<8x8xf32>
    %99 = arith.truncf %98 : vector<8x8xf32> to vector<8x8xbf16>
    %100 = vector.extract_strided_slice %67 {offsets = [0, 8], sizes = [8, 8], strides = [1, 1]} : vector<8x32xbf16> to vector<8x8xbf16>
    %cst_39 = arith.constant dense<0.000000e+00> : vector<8x8xf32>
    %101 = tpu.matmul %99, %100, %cst_39 {dimension_numbers = #tpu.dot_dimension_numbers<[1], [0], [0], [1], [0, 0, 1, 1], [], []>} : vector<8x8xbf16>, vector<8x8xbf16>, vector<8x8xf32> -> vector<8x8xf32>
    %102 = arith.truncf %101 : vector<8x8xf32> to vector<8x8xbf16>
    %c0_40 = arith.constant 0 : index
    %c8 = arith.constant 8 : index
    %103 = vector.load %arg23[%c0_40, %c8] : memref<8x32xbf16, #tpu.memory_space<vmem>>, vector<8x8xbf16>
    tpu.vector_store %arg23[%c0_40, %c8], %102 {strides = array<i32>} : memref<8x32xbf16, #tpu.memory_space<vmem>>, vector<8x8xbf16>,
    %104 = vector.extract_strided_slice %65 {offsets = [0, 16], sizes = [8, 8], strides = [1, 1]} : vector<8x32xbf16> to vector<8x8xbf16>
    %105 = vector.extract_strided_slice %66 {offsets = [0, 16], sizes = [8, 8], strides = [1, 1]} : vector<8x32xbf16> to vector<8x8xbf16>
    "tpu.trace_start"() <{level = 10 : i32, message = "qd,kd->qk"}> : () -> ()
    %cst_41 = arith.constant dense<0.000000e+00> : vector<8x8xf32>
    %106 = tpu.matmul %104, %105, %cst_41 {dimension_numbers = #tpu.dot_dimension_numbers<[1], [1], [0], [0], [0, 0, 1, 0], [], []>} : vector<8x8xbf16>, vector<8x8xbf16>, vector<8x8xf32> -> vector<8x8xf32>
    "tpu.trace_stop"() : () -> ()
    %cst_42 = arith.constant dense<0xFF800000> : vector<8xf32>
    %107 = vector.multi_reduction <maximumf>, %106, %cst_42 [1] : vector<8x8xf32> to vector<8xf32>
    %108 = vector.shape_cast %107 : vector<8xf32> to vector<8x1xf32>
    %109 = vector.broadcast %108 : vector<8x1xf32> to vector<8x8xf32>
    %110 = arith.subf %106, %109 : vector<8x8xf32>
    %111 = math.exp %110 : vector<8x8xf32>
    %cst_43 = arith.constant dense<0.000000e+00> : vector<8xf32>
    %112 = vector.multi_reduction <add>, %111, %cst_43 [1] : vector<8x8xf32> to vector<8xf32>
    %113 = vector.shape_cast %112 : vector<8xf32> to vector<8x1xf32>
    %114 = tpu.reciprocal %113 {approx = true} : vector<8x1xf32> -> vector<8x1xf32>
    %115 = vector.broadcast %114 : vector<8x1xf32> to vector<8x8xf32>
    %116 = arith.mulf %111, %115 : vector<8x8xf32>
    %117 = arith.truncf %116 : vector<8x8xf32> to vector<8x8xbf16>
    %118 = vector.extract_strided_slice %67 {offsets = [0, 16], sizes = [8, 8], strides = [1, 1]} : vector<8x32xbf16> to vector<8x8xbf16>
    %cst_44 = arith.constant dense<0.000000e+00> : vector<8x8xf32>
    %119 = tpu.matmul %117, %118, %cst_44 {dimension_numbers = #tpu.dot_dimension_numbers<[1], [0], [0], [1], [0, 0, 1, 1], [], []>} : vector<8x8xbf16>, vector<8x8xbf16>, vector<8x8xf32> -> vector<8x8xf32>
    %120 = arith.truncf %119 : vector<8x8xf32> to vector<8x8xbf16>
    %c0_45 = arith.constant 0 : index
    %c16 = arith.constant 16 : index
    %121 = vector.load %arg23[%c0_45, %c16] : memref<8x32xbf16, #tpu.memory_space<vmem>>, vector<8x8xbf16>
    tpu.vector_store %arg23[%c0_45, %c16], %120 {strides = array<i32>} : memref<8x32xbf16, #tpu.memory_space<vmem>>, vector<8x8xbf16>,
    %122 = vector.extract_strided_slice %65 {offsets = [0, 24], sizes = [8, 8], strides = [1, 1]} : vector<8x32xbf16> to vector<8x8xbf16>
    %123 = vector.extract_strided_slice %66 {offsets = [0, 24], sizes = [8, 8], strides = [1, 1]} : vector<8x32xbf16> to vector<8x8xbf16>
    "tpu.trace_start"() <{level = 10 : i32, message = "qd,kd->qk"}> : () -> ()
    %cst_46 = arith.constant dense<0.000000e+00> : vector<8x8xf32>
    %124 = tpu.matmul %122, %123, %cst_46 {dimension_numbers = #tpu.dot_dimension_numbers<[1], [1], [0], [0], [0, 0, 1, 0], [], []>} : vector<8x8xbf16>, vector<8x8xbf16>, vector<8x8xf32> -> vector<8x8xf32>
    "tpu.trace_stop"() : () -> ()
    %cst_47 = arith.constant dense<0xFF800000> : vector<8xf32>
    %125 = vector.multi_reduction <maximumf>, %124, %cst_47 [1] : vector<8x8xf32> to vector<8xf32>
    %126 = vector.shape_cast %125 : vector<8xf32> to vector<8x1xf32>
    %127 = vector.broadcast %126 : vector<8x1xf32> to vector<8x8xf32>
    %128 = arith.subf %124, %127 : vector<8x8xf32>
    %129 = math.exp %128 : vector<8x8xf32>
    %cst_48 = arith.constant dense<0.000000e+00> : vector<8xf32>
    %130 = vector.multi_reduction <add>, %129, %cst_48 [1] : vector<8x8xf32> to vector<8xf32>
    %131 = vector.shape_cast %130 : vector<8xf32> to vector<8x1xf32>
    %132 = tpu.reciprocal %131 {approx = true} : vector<8x1xf32> -> vector<8x1xf32>
    %133 = vector.broadcast %132 : vector<8x1xf32> to vector<8x8xf32>
    %134 = arith.mulf %129, %133 : vector<8x8xf32>
    %135 = arith.truncf %134 : vector<8x8xf32> to vector<8x8xbf16>
    %136 = vector.extract_strided_slice %67 {offsets = [0, 24], sizes = [8, 8], strides = [1, 1]} : vector<8x32xbf16> to vector<8x8xbf16>
    %cst_49 = arith.constant dense<0.000000e+00> : vector<8x8xf32>
    %137 = tpu.matmul %135, %136, %cst_49 {dimension_numbers = #tpu.dot_dimension_numbers<[1], [0], [0], [1], [0, 0, 1, 1], [], []>} : vector<8x8xbf16>, vector<8x8xbf16>, vector<8x8xf32> -> vector<8x8xf32>
    %138 = arith.truncf %137 : vector<8x8xf32> to vector<8x8xbf16>
    %c0_50 = arith.constant 0 : index
    %c24 = arith.constant 24 : index
    %139 = vector.load %arg23[%c0_50, %c24] : memref<8x32xbf16, #tpu.memory_space<vmem>>, vector<8x8xbf16>
    tpu.vector_store %arg23[%c0_50, %c24], %138 {strides = array<i32>} : memref<8x32xbf16, #tpu.memory_space<vmem>>, vector<8x8xbf16>,
    %c0_51 = arith.constant 0 : index
    %c0_52 = arith.constant 0 : index
    %140 = vector.load %arg23[%c0_51, %c0_52] : memref<8x32xbf16, #tpu.memory_space<vmem>>, vector<8x32xbf16>
    %c0_53 = arith.constant 0 : index
    %c0_54 = arith.constant 0 : index
    %141 = vector.load %arg9[%c0_53, %c0_54] : memref<32x32xbf16, #tpu.memory_space<vmem>>, vector<32x32xbf16>
    %cst_55 = arith.constant dense<0.000000e+00> : vector<8x32xf32>
    %142 = tpu.matmul %140, %141, %cst_55 {dimension_numbers = #tpu.dot_dimension_numbers<[1], [0], [0], [1], [0, 0, 1, 1], [], []>} : vector<8x32xbf16>, vector<32x32xbf16>, vector<8x32xf32> -> vector<8x32xf32>
    %c0_56 = arith.constant 0 : index
    %c0_57 = arith.constant 0 : index
    %143 = vector.load %arg10[%c0_56, %c0_57] : memref<1x32xf32, #tpu.memory_space<vmem>>, vector<1x32xf32>
    %144 = vector.broadcast %143 : vector<1x32xf32> to vector<8x32xf32>
    %145 = arith.addf %142, %144 : vector<8x32xf32>
    %146 = arith.addf %25, %145 : vector<8x32xf32>
    %c0_58 = arith.constant 0 : index
    %c0_59 = arith.constant 0 : index
    %147 = vector.load %arg11[%c0_58, %c0_59] : memref<1x32xf32, #tpu.memory_space<vmem>>, vector<1x32xf32>
    %c0_60 = arith.constant 0 : index
    %c0_61 = arith.constant 0 : index
    %148 = vector.load %arg12[%c0_60, %c0_61] : memref<1x32xf32, #tpu.memory_space<vmem>>, vector<1x32xf32>
    %cst_62 = arith.constant dense<0.000000e+00> : vector<8xf32>
    %149 = vector.multi_reduction <add>, %146, %cst_62 [1] : vector<8x32xf32> to vector<8xf32>
    %150 = vector.shape_cast %149 : vector<8xf32> to vector<8x1xf32>
    %cst_63 = arith.constant 3.200000e+01 : f32
    %151 = vector.broadcast %cst_63 : f32 to vector<8x1xf32>
    %152 = arith.divf %150, %151 : vector<8x1xf32>
    %153 = vector.broadcast %152 : vector<8x1xf32> to vector<8x32xf32>
    %154 = arith.subf %146, %153 : vector<8x32xf32>
    %155 = arith.mulf %154, %154 : vector<8x32xf32>
    %cst_64 = arith.constant dense<0.000000e+00> : vector<8xf32>
    %156 = vector.multi_reduction <add>, %155, %cst_64 [1] : vector<8x32xf32> to vector<8xf32>
    %157 = vector.shape_cast %156 : vector<8xf32> to vector<8x1xf32>
    %cst_65 = arith.constant 3.200000e+01 : f32
    %158 = vector.broadcast %cst_65 : f32 to vector<8x1xf32>
    %159 = arith.divf %157, %158 : vector<8x1xf32>
    %160 = vector.broadcast %152 : vector<8x1xf32> to vector<8x32xf32>
    %161 = arith.subf %146, %160 : vector<8x32xf32>
    %cst_66 = arith.constant 9.99999996E-13 : f32
    %162 = vector.broadcast %cst_66 : f32 to vector<8x1xf32>
    %163 = arith.addf %159, %162 : vector<8x1xf32>
    %164 = math.rsqrt %163 : vector<8x1xf32>
    %165 = vector.broadcast %164 : vector<8x1xf32> to vector<8x32xf32>
    %166 = arith.mulf %161, %165 : vector<8x32xf32>
    %167 = vector.broadcast %147 : vector<1x32xf32> to vector<8x32xf32>
    %168 = arith.mulf %166, %167 : vector<8x32xf32>
    %169 = vector.broadcast %148 : vector<1x32xf32> to vector<8x32xf32>
    %170 = arith.addf %168, %169 : vector<8x32xf32>
    %171 = arith.truncf %170 : vector<8x32xf32> to vector<8x32xbf16>
    %c0_67 = arith.constant 0 : index
    %c0_68 = arith.constant 0 : index
    %172 = vector.load %arg13[%c0_67, %c0_68] : memref<32x64xbf16, #tpu.memory_space<vmem>>, vector<32x64xbf16>
    %cst_69 = arith.constant dense<0.000000e+00> : vector<8x64xf32>
    %173 = tpu.matmul %171, %172, %cst_69 {dimension_numbers = #tpu.dot_dimension_numbers<[1], [0], [0], [1], [0, 0, 1, 1], [], []>} : vector<8x32xbf16>, vector<32x64xbf16>, vector<8x64xf32> -> vector<8x64xf32>
    %c0_70 = arith.constant 0 : index
    %c0_71 = arith.constant 0 : index
    %174 = vector.load %arg14[%c0_70, %c0_71] : memref<1x64xf32, #tpu.memory_space<vmem>>, vector<1x64xf32>
    %175 = vector.broadcast %174 : vector<1x64xf32> to vector<8x64xf32>
    %176 = arith.addf %173, %175 : vector<8x64xf32>
    %cst_72 = arith.constant 5.000000e-01 : f32
    %177 = vector.broadcast %cst_72 : f32 to vector<8x64xf32>
    %178 = arith.mulf %177, %176 : vector<8x64xf32>
    %cst_73 = arith.constant 4.471500e-02 : f32
    %179 = vector.broadcast %cst_73 : f32 to vector<8x64xf32>
    %180 = arith.mulf %179, %176 : vector<8x64xf32>
    %181 = arith.mulf %180, %176 : vector<8x64xf32>
    %182 = arith.mulf %181, %176 : vector<8x64xf32>
    %183 = arith.addf %176, %182 : vector<8x64xf32>
    %cst_74 = arith.constant 0.797884583 : f32
    %184 = vector.broadcast %cst_74 : f32 to vector<8x64xf32>
    %185 = arith.mulf %184, %183 : vector<8x64xf32>
    %186 = math.tanh %185 : vector<8x64xf32>
    %cst_75 = arith.constant 1.000000e+00 : f32
    %187 = vector.broadcast %cst_75 : f32 to vector<8x64xf32>
    %188 = arith.addf %187, %186 : vector<8x64xf32>
    %189 = arith.mulf %178, %188 : vector<8x64xf32>
    %190 = arith.truncf %189 : vector<8x64xf32> to vector<8x64xbf16>
    %c0_76 = arith.constant 0 : index
    %c0_77 = arith.constant 0 : index
    %191 = vector.load %arg15[%c0_76, %c0_77] : memref<64x32xbf16, #tpu.memory_space<vmem>>, vector<64x32xbf16>
    %cst_78 = arith.constant dense<0.000000e+00> : vector<8x32xf32>
    %192 = tpu.matmul %190, %191, %cst_78 {dimension_numbers = #tpu.dot_dimension_numbers<[1], [0], [0], [1], [0, 0, 1, 1], [], []>} : vector<8x64xbf16>, vector<64x32xbf16>, vector<8x32xf32> -> vector<8x32xf32>
    %c0_79 = arith.constant 0 : index
    %c0_80 = arith.constant 0 : index
    %193 = vector.load %arg16[%c0_79, %c0_80] : memref<1x32xf32, #tpu.memory_space<vmem>>, vector<1x32xf32>
    %194 = vector.broadcast %193 : vector<1x32xf32> to vector<8x32xf32>
    %195 = arith.addf %192, %194 : vector<8x32xf32>
    %196 = arith.addf %170, %195 : vector<8x32xf32>
    %c0_81 = arith.constant 0 : index
    %c0_82 = arith.constant 0 : index
    %197 = vector.load %arg17[%c0_81, %c0_82] : memref<1x32xf32, #tpu.memory_space<vmem>>, vector<1x32xf32>
    %c0_83 = arith.constant 0 : index
    %c0_84 = arith.constant 0 : index
    %198 = vector.load %arg18[%c0_83, %c0_84] : memref<1x32xf32, #tpu.memory_space<vmem>>, vector<1x32xf32>
    %cst_85 = arith.constant dense<0.000000e+00> : vector<8xf32>
    %199 = vector.multi_reduction <add>, %196, %cst_85 [1] : vector<8x32xf32> to vector<8xf32>
    %200 = vector.shape_cast %199 : vector<8xf32> to vector<8x1xf32>
    %cst_86 = arith.constant 3.200000e+01 : f32
    %201 = vector.broadcast %cst_86 : f32 to vector<8x1xf32>
    %202 = arith.divf %200, %201 : vector<8x1xf32>
    %203 = vector.broadcast %202 : vector<8x1xf32> to vector<8x32xf32>
    %204 = arith.subf %196, %203 : vector<8x32xf32>
    %205 = arith.mulf %204, %204 : vector<8x32xf32>
    %cst_87 = arith.constant dense<0.000000e+00> : vector<8xf32>
    %206 = vector.multi_reduction <add>, %205, %cst_87 [1] : vector<8x32xf32> to vector<8xf32>
    %207 = vector.shape_cast %206 : vector<8xf32> to vector<8x1xf32>
    %cst_88 = arith.constant 3.200000e+01 : f32
    %208 = vector.broadcast %cst_88 : f32 to vector<8x1xf32>
    %209 = arith.divf %207, %208 : vector<8x1xf32>
    %210 = vector.broadcast %202 : vector<8x1xf32> to vector<8x32xf32>
    %211 = arith.subf %196, %210 : vector<8x32xf32>
    %cst_89 = arith.constant 9.99999996E-13 : f32
    %212 = vector.broadcast %cst_89 : f32 to vector<8x1xf32>
    %213 = arith.addf %209, %212 : vector<8x1xf32>
    %214 = math.rsqrt %213 : vector<8x1xf32>
    %215 = vector.broadcast %214 : vector<8x1xf32> to vector<8x32xf32>
    %216 = arith.mulf %211, %215 : vector<8x32xf32>
    %217 = vector.broadcast %197 : vector<1x32xf32> to vector<8x32xf32>
    %218 = arith.mulf %216, %217 : vector<8x32xf32>
    %219 = vector.broadcast %198 : vector<1x32xf32> to vector<8x32xf32>
    %220 = arith.addf %218, %219 : vector<8x32xf32>
    %221 = arith.truncf %220 : vector<8x32xf32> to vector<8x32xbf16>
    %c0_90 = arith.constant 0 : index
    %c0_91 = arith.constant 0 : index
    %c0_92 = arith.constant 0 : index
    %222 = vector.load %arg21[%c0_90, %c0_91, %c0_92] : memref<1x8x32xbf16, #tpu.memory_space<vmem>>, vector<1x8x32xbf16>
    %223 = vector.shape_cast %222 : vector<1x8x32xbf16> to vector<8x32xbf16>
    %224 = vector.shape_cast %221 : vector<8x32xbf16> to vector<1x8x32xbf16>
    tpu.vector_store %arg21[%c0_90, %c0_91, %c0_92], %224 {strides = array<i32>} : memref<1x8x32xbf16, #tpu.memory_space<vmem>>, vector<1x8x32xbf16>,
    %c0_93 = arith.constant 0 : index
    %c0_94 = arith.constant 0 : index
    %c0_95 = arith.constant 0 : index
    %225 = vector.load %arg22[%c0_93, %c0_94, %c0_95] : memref<1x8x32xf32, #tpu.memory_space<vmem>>, vector<1x8x32xf32>
    %226 = vector.shape_cast %225 : vector<1x8x32xf32> to vector<8x32xf32>
    %227 = vector.shape_cast %220 : vector<8x32xf32> to vector<1x8x32xf32>
    tpu.vector_store %arg22[%c0_93, %c0_94, %c0_95], %227 {strides = array<i32>} : memref<1x8x32xf32, #tpu.memory_space<vmem>>, vector<1x8x32xf32>,
    return
  }
  func.func @transform_0(%arg0: i32, %arg1: i32) -> (i32, i32, i32) {
    %c0_i32 = arith.constant 0 : i32
    %c0_i32_0 = arith.constant 0 : i32
    %c0_i32_1 = arith.constant 0 : i32
    return %arg0, %c0_i32, %c0_i32_0 : i32, i32, i32
  }
  func.func @transform_1(%arg0: i32, %arg1: i32) -> (i32, i32) {
    %c0_i32 = arith.constant 0 : i32
    %c0_i32_0 = arith.constant 0 : i32
    %c0_i32_1 = arith.constant 0 : i32
    return %c0_i32, %c0_i32_0 : i32, i32
  }
  func.func @transform_2(%arg0: i32, %arg1: i32) -> (i32, i32) {
    %c0_i32 = arith.constant 0 : i32
    %c0_i32_0 = arith.constant 0 : i32
    %c0_i32_1 = arith.constant 0 : i32
    return %c0_i32, %c0_i32_0 : i32, i32
  }
  func.func @transform_3(%arg0: i32, %arg1: i32) -> (i32, i32) {
    %c0_i32 = arith.constant 0 : i32
    %c0_i32_0 = arith.constant 0 : i32
    %c0_i32_1 = arith.constant 0 : i32
    return %c0_i32, %c0_i32_0 : i32, i32
  }
  func.func @transform_4(%arg0: i32, %arg1: i32) -> (i32, i32) {
    %c0_i32 = arith.constant 0 : i32
    %c0_i32_0 = arith.constant 0 : i32
    %c0_i32_1 = arith.constant 0 : i32
    return %c0_i32, %c0_i32_0 : i32, i32
  }
  func.func @transform_5(%arg0: i32, %arg1: i32) -> (i32, i32) {
    %c0_i32 = arith.constant 0 : i32
    %c0_i32_0 = arith.constant 0 : i32
    %c0_i32_1 = arith.constant 0 : i32
    return %c0_i32, %c0_i32_0 : i32, i32
  }
  func.func @transform_6(%arg0: i32, %arg1: i32) -> (i32, i32) {
    %c0_i32 = arith.constant 0 : i32
    %c0_i32_0 = arith.constant 0 : i32
    %c0_i32_1 = arith.constant 0 : i32
    return %c0_i32, %c0_i32_0 : i32, i32
  }
  func.func @transform_7(%arg0: i32, %arg1: i32) -> (i32, i32) {
    %c0_i32 = arith.constant 0 : i32
    %c0_i32_0 = arith.constant 0 : i32
    %c0_i32_1 = arith.constant 0 : i32
    return %c0_i32, %c0_i32_0 : i32, i32
  }
  func.func @transform_8(%arg0: i32, %arg1: i32) -> (i32, i32) {
    %c0_i32 = arith.constant 0 : i32
    %c0_i32_0 = arith.constant 0 : i32
    %c0_i32_1 = arith.constant 0 : i32
    return %c0_i32, %c0_i32_0 : i32, i32
  }
  func.func @transform_9(%arg0: i32, %arg1: i32) -> (i32, i32) {
    %c0_i32 = arith.constant 0 : i32
    %c0_i32_0 = arith.constant 0 : i32
    %c0_i32_1 = arith.constant 0 : i32
    return %c0_i32, %c0_i32_0 : i32, i32
  }
  func.func @transform_10(%arg0: i32, %arg1: i32) -> (i32, i32) {
    %c0_i32 = arith.constant 0 : i32
    %c0_i32_0 = arith.constant 0 : i32
    %c0_i32_1 = arith.constant 0 : i32
    return %c0_i32, %c0_i32_0 : i32, i32
  }
  func.func @transform_11(%arg0: i32, %arg1: i32) -> (i32, i32) {
    %c0_i32 = arith.constant 0 : i32
    %c0_i32_0 = arith.constant 0 : i32
    %c0_i32_1 = arith.constant 0 : i32
    return %c0_i32, %c0_i32_0 : i32, i32
  }
  func.func @transform_12(%arg0: i32, %arg1: i32) -> (i32, i32) {
    %c0_i32 = arith.constant 0 : i32
    %c0_i32_0 = arith.constant 0 : i32
    %c0_i32_1 = arith.constant 0 : i32
    return %c0_i32, %c0_i32_0 : i32, i32
  }
  func.func @transform_13(%arg0: i32, %arg1: i32) -> (i32, i32) {
    %c0_i32 = arith.constant 0 : i32
    %c0_i32_0 = arith.constant 0 : i32
    %c0_i32_1 = arith.constant 0 : i32
    return %c0_i32, %c0_i32_0 : i32, i32
  }
  func.func @transform_14(%arg0: i32, %arg1: i32) -> (i32, i32) {
    %c0_i32 = arith.constant 0 : i32
    %c0_i32_0 = arith.constant 0 : i32
    %c0_i32_1 = arith.constant 0 : i32
    return %c0_i32, %c0_i32_0 : i32, i32
  }
  func.func @transform_15(%arg0: i32, %arg1: i32) -> (i32, i32) {
    %c0_i32 = arith.constant 0 : i32
    %c0_i32_0 = arith.constant 0 : i32
    %c0_i32_1 = arith.constant 0 : i32
    return %c0_i32, %c0_i32_0 : i32, i32
  }
  func.func @transform_16(%arg0: i32, %arg1: i32) -> (i32, i32) {
    %c0_i32 = arith.constant 0 : i32
    %c0_i32_0 = arith.constant 0 : i32
    %c0_i32_1 = arith.constant 0 : i32
    return %c0_i32, %c0_i32_0 : i32, i32
  }
  func.func @transform_17(%arg0: i32, %arg1: i32) -> (i32, i32) {
    %c0_i32 = arith.constant 0 : i32
    %c0_i32_0 = arith.constant 0 : i32
    %c0_i32_1 = arith.constant 0 : i32
    return %c0_i32, %c0_i32_0 : i32, i32
  }
  func.func @transform_18(%arg0: i32, %arg1: i32) -> (i32, i32) {
    %c0_i32 = arith.constant 0 : i32
    %c0_i32_0 = arith.constant 0 : i32
    %c0_i32_1 = arith.constant 0 : i32
    return %c0_i32, %c0_i32_0 : i32, i32
  }
  func.func @transform_19(%arg0: i32, %arg1: i32) -> (i32, i32, i32) {
    %c0_i32 = arith.constant 0 : i32
    %c0_i32_0 = arith.constant 0 : i32
    return %arg0, %arg1, %c0_i32 : i32, i32, i32
  }
  func.func @transform_20(%arg0: i32, %arg1: i32) -> (i32, i32, i32) {
    %c0_i32 = arith.constant 0 : i32
    %c0_i32_0 = arith.constant 0 : i32
    return %arg0, %arg1, %c0_i32 : i32, i32, i32
  }
}

module attributes {stable_mosaic.version = 11 : i64} {
  func.func @bert_layer_kernel(%arg0: i32, %arg1: i32, %arg2: memref<1x8x32xbf16, #tpu.memory_space<vmem>>, %arg3: memref<1x8x32xf32, #tpu.memory_space<vmem>>, %arg4: memref<32x32xbf16, #tpu.memory_space<vmem>>, %arg5: memref<1x32xf32, #tpu.memory_space<vmem>>, %arg6: memref<32x32xbf16, #tpu.memory_space<vmem>>, %arg7: memref<1x32xf32, #tpu.memory_space<vmem>>, %arg8: memref<32x32xbf16, #tpu.memory_space<vmem>>, %arg9: memref<1x32xf32, #tpu.memory_space<vmem>>, %arg10: memref<32x32xbf16, #tpu.memory_space<vmem>>, %arg11: memref<1x32xf32, #tpu.memory_space<vmem>>, %arg12: memref<1x32xf32, #tpu.memory_space<vmem>>, %arg13: memref<1x32xf32, #tpu.memory_space<vmem>>, %arg14: memref<32x64xbf16, #tpu.memory_space<vmem>>, %arg15: memref<1x64xf32, #tpu.memory_space<vmem>>, %arg16: memref<64x32xbf16, #tpu.memory_space<vmem>>, %arg17: memref<1x32xf32, #tpu.memory_space<vmem>>, %arg18: memref<1x32xf32, #tpu.memory_space<vmem>>, %arg19: memref<1x32xf32, #tpu.memory_space<vmem>>, %arg20: memref<1x32xf32, #tpu.memory_space<vmem>>, %arg21: memref<1x32xf32, #tpu.memory_space<vmem>>, %arg22: memref<1x8x32xbf16, #tpu.memory_space<vmem>>, %arg23: memref<1x8x32xf32, #tpu.memory_space<vmem>>, %arg24: memref<8x32xbf16, #tpu.memory_space<vmem>>) attributes {dimension_semantics = [#tpu.dimension_semantics<parallel>, #tpu.dimension_semantics<parallel>], iteration_bounds = array<i64: 2, 1>, scalar_prefetch = 0 : i64, scratch_operands = 1 : i64, tpu.core_type = #tpu.core_type<tc>, window_params = [{transform_indices = @transform_0, window_bounds = array<i64: 1, 8, 32>}, {transform_indices = @transform_1, window_bounds = array<i64: 1, 8, 32>}, {pipeline_mode = #tpu.pipeline_mode<synchronous>, transform_indices = @transform_2, window_bounds = array<i64: 32, 32>}, {pipeline_mode = #tpu.pipeline_mode<synchronous>, transform_indices = @transform_3, window_bounds = array<i64: 1, 32>}, {pipeline_mode = #tpu.pipeline_mode<synchronous>, transform_indices = @transform_4, window_bounds = array<i64: 32, 32>}, {pipeline_mode = #tpu.pipeline_mode<synchronous>, transform_indices = @transform_5, window_bounds = array<i64: 1, 32>}, {pipeline_mode = #tpu.pipeline_mode<synchronous>, transform_indices = @transform_6, window_bounds = array<i64: 32, 32>}, {pipeline_mode = #tpu.pipeline_mode<synchronous>, transform_indices = @transform_7, window_bounds = array<i64: 1, 32>}, {pipeline_mode = #tpu.pipeline_mode<synchronous>, transform_indices = @transform_8, window_bounds = array<i64: 32, 32>}, {pipeline_mode = #tpu.pipeline_mode<synchronous>, transform_indices = @transform_9, window_bounds = array<i64: 1, 32>}, {pipeline_mode = #tpu.pipeline_mode<synchronous>, transform_indices = @transform_10, window_bounds = array<i64: 1, 32>}, {pipeline_mode = #tpu.pipeline_mode<synchronous>, transform_indices = @transform_11, window_bounds = array<i64: 1, 32>}, {pipeline_mode = #tpu.pipeline_mode<synchronous>, transform_indices = @transform_12, window_bounds = array<i64: 32, 64>}, {pipeline_mode = #tpu.pipeline_mode<synchronous>, transform_indices = @transform_13, window_bounds = array<i64: 1, 64>}, {pipeline_mode = #tpu.pipeline_mode<synchronous>, transform_indices = @transform_14, window_bounds = array<i64: 64, 32>}, {pipeline_mode = #tpu.pipeline_mode<synchronous>, transform_indices = @transform_15, window_bounds = array<i64: 1, 32>}, {pipeline_mode = #tpu.pipeline_mode<synchronous>, transform_indices = @transform_16, window_bounds = array<i64: 1, 32>}, {pipeline_mode = #tpu.pipeline_mode<synchronous>, transform_indices = @transform_17, window_bounds = array<i64: 1, 32>}, {pipeline_mode = #tpu.pipeline_mode<synchronous>, transform_indices = @transform_18, window_bounds = array<i64: 1, 32>}, {pipeline_mode = #tpu.pipeline_mode<synchronous>, transform_indices = @transform_19, window_bounds = array<i64: 1, 32>}, {transform_indices = @transform_20, window_bounds = array<i64: 1, 8, 32>}, {transform_indices = @transform_21, window_bounds = array<i64: 1, 8, 32>}]} {
    %c0 = arith.constant 0 : index
    %c0_0 = arith.constant 0 : index
    %c0_1 = arith.constant 0 : index
    %0 = vector.load %arg2[%c0, %c0_0, %c0_1] : memref<1x8x32xbf16, #tpu.memory_space<vmem>>, vector<1x8x32xbf16>
    %1 = vector.shape_cast %0 : vector<1x8x32xbf16> to vector<8x32xbf16>
    %2 = arith.extf %1 : vector<8x32xbf16> to vector<8x32xf32>
    %c0_2 = arith.constant 0 : index
    %c0_3 = arith.constant 0 : index
    %3 = vector.load %arg4[%c0_2, %c0_3] : memref<32x32xbf16, #tpu.memory_space<vmem>>, vector<32x32xbf16>
    %cst = arith.constant dense<0.000000e+00> : vector<8x32xf32>
    %4 = tpu.matmul %1, %3, %cst {dimension_numbers = #tpu.dot_dimension_numbers<[1], [0], [0], [1], [0, 0, 1, 1], [], []>} : vector<8x32xbf16>, vector<32x32xbf16>, vector<8x32xf32> -> vector<8x32xf32>
    %c0_4 = arith.constant 0 : index
    %c0_5 = arith.constant 0 : index
    %5 = vector.load %arg5[%c0_4, %c0_5] : memref<1x32xf32, #tpu.memory_space<vmem>>, vector<1x32xf32>
    %6 = vector.broadcast %5 : vector<1x32xf32> to vector<8x32xf32>
    %7 = arith.addf %4, %6 : vector<8x32xf32>
    %c0_6 = arith.constant 0 : index
    %c0_7 = arith.constant 0 : index
    %8 = vector.load %arg6[%c0_6, %c0_7] : memref<32x32xbf16, #tpu.memory_space<vmem>>, vector<32x32xbf16>
    %cst_8 = arith.constant dense<0.000000e+00> : vector<8x32xf32>
    %9 = tpu.matmul %1, %8, %cst_8 {dimension_numbers = #tpu.dot_dimension_numbers<[1], [0], [0], [1], [0, 0, 1, 1], [], []>} : vector<8x32xbf16>, vector<32x32xbf16>, vector<8x32xf32> -> vector<8x32xf32>
    %c0_9 = arith.constant 0 : index
    %c0_10 = arith.constant 0 : index
    %10 = vector.load %arg7[%c0_9, %c0_10] : memref<1x32xf32, #tpu.memory_space<vmem>>, vector<1x32xf32>
    %11 = vector.broadcast %10 : vector<1x32xf32> to vector<8x32xf32>
    %12 = arith.addf %9, %11 : vector<8x32xf32>
    %c0_11 = arith.constant 0 : index
    %c0_12 = arith.constant 0 : index
    %13 = vector.load %arg8[%c0_11, %c0_12] : memref<32x32xbf16, #tpu.memory_space<vmem>>, vector<32x32xbf16>
    %cst_13 = arith.constant dense<0.000000e+00> : vector<8x32xf32>
    %14 = tpu.matmul %1, %13, %cst_13 {dimension_numbers = #tpu.dot_dimension_numbers<[1], [0], [0], [1], [0, 0, 1, 1], [], []>} : vector<8x32xbf16>, vector<32x32xbf16>, vector<8x32xf32> -> vector<8x32xf32>
    %c0_14 = arith.constant 0 : index
    %c0_15 = arith.constant 0 : index
    %15 = vector.load %arg9[%c0_14, %c0_15] : memref<1x32xf32, #tpu.memory_space<vmem>>, vector<1x32xf32>
    %16 = vector.broadcast %15 : vector<1x32xf32> to vector<8x32xf32>
    %17 = arith.addf %14, %16 : vector<8x32xf32>
    %18 = arith.truncf %7 : vector<8x32xf32> to vector<8x32xbf16>
    %19 = arith.truncf %12 : vector<8x32xf32> to vector<8x32xbf16>
    %20 = arith.truncf %17 : vector<8x32xf32> to vector<8x32xbf16>
    %21 = vector.extract_strided_slice %18 {offsets = [0, 0], sizes = [8, 8], strides = [1, 1]} : vector<8x32xbf16> to vector<8x8xbf16>
    %22 = vector.extract_strided_slice %19 {offsets = [0, 0], sizes = [8, 8], strides = [1, 1]} : vector<8x32xbf16> to vector<8x8xbf16>
    "tpu.trace_start"() <{level = 10 : i32, message = "qd,kd->qk"}> : () -> ()
    %cst_16 = arith.constant dense<0.000000e+00> : vector<8x8xf32>
    %23 = tpu.matmul %21, %22, %cst_16 {dimension_numbers = #tpu.dot_dimension_numbers<[1], [1], [0], [0], [0, 0, 1, 0], [], []>} : vector<8x8xbf16>, vector<8x8xbf16>, vector<8x8xf32> -> vector<8x8xf32>
    "tpu.trace_stop"() : () -> ()
    %cst_17 = arith.constant dense<0xFF800000> : vector<8xf32>
    %24 = vector.multi_reduction <maximumf>, %23, %cst_17 [1] : vector<8x8xf32> to vector<8xf32>
    %25 = vector.shape_cast %24 : vector<8xf32> to vector<8x1xf32>
    %26 = vector.broadcast %25 : vector<8x1xf32> to vector<8x8xf32>
    %27 = arith.subf %23, %26 : vector<8x8xf32>
    %28 = math.exp %27 : vector<8x8xf32>
    %cst_18 = arith.constant dense<0.000000e+00> : vector<8xf32>
    %29 = vector.multi_reduction <add>, %28, %cst_18 [1] : vector<8x8xf32> to vector<8xf32>
    %30 = vector.shape_cast %29 : vector<8xf32> to vector<8x1xf32>
    %31 = tpu.reciprocal %30 {approx = true} : vector<8x1xf32> -> vector<8x1xf32>
    %32 = vector.broadcast %31 : vector<8x1xf32> to vector<8x8xf32>
    %33 = arith.mulf %28, %32 : vector<8x8xf32>
    %34 = arith.truncf %33 : vector<8x8xf32> to vector<8x8xbf16>
    %35 = vector.extract_strided_slice %20 {offsets = [0, 0], sizes = [8, 8], strides = [1, 1]} : vector<8x32xbf16> to vector<8x8xbf16>
    %cst_19 = arith.constant dense<0.000000e+00> : vector<8x8xf32>
    %36 = tpu.matmul %34, %35, %cst_19 {dimension_numbers = #tpu.dot_dimension_numbers<[1], [0], [0], [1], [0, 0, 1, 1], [], []>} : vector<8x8xbf16>, vector<8x8xbf16>, vector<8x8xf32> -> vector<8x8xf32>
    %37 = arith.truncf %36 : vector<8x8xf32> to vector<8x8xbf16>
    %c0_20 = arith.constant 0 : index
    %c0_21 = arith.constant 0 : index
    %38 = vector.load %arg24[%c0_20, %c0_21] : memref<8x32xbf16, #tpu.memory_space<vmem>>, vector<8x8xbf16>
    tpu.vector_store %arg24[%c0_20, %c0_21], %37 {strides = array<i32>} : memref<8x32xbf16, #tpu.memory_space<vmem>>, vector<8x8xbf16>,
    %39 = vector.extract_strided_slice %18 {offsets = [0, 8], sizes = [8, 8], strides = [1, 1]} : vector<8x32xbf16> to vector<8x8xbf16>
    %40 = vector.extract_strided_slice %19 {offsets = [0, 8], sizes = [8, 8], strides = [1, 1]} : vector<8x32xbf16> to vector<8x8xbf16>
    "tpu.trace_start"() <{level = 10 : i32, message = "qd,kd->qk"}> : () -> ()
    %cst_22 = arith.constant dense<0.000000e+00> : vector<8x8xf32>
    %41 = tpu.matmul %39, %40, %cst_22 {dimension_numbers = #tpu.dot_dimension_numbers<[1], [1], [0], [0], [0, 0, 1, 0], [], []>} : vector<8x8xbf16>, vector<8x8xbf16>, vector<8x8xf32> -> vector<8x8xf32>
    "tpu.trace_stop"() : () -> ()
    %cst_23 = arith.constant dense<0xFF800000> : vector<8xf32>
    %42 = vector.multi_reduction <maximumf>, %41, %cst_23 [1] : vector<8x8xf32> to vector<8xf32>
    %43 = vector.shape_cast %42 : vector<8xf32> to vector<8x1xf32>
    %44 = vector.broadcast %43 : vector<8x1xf32> to vector<8x8xf32>
    %45 = arith.subf %41, %44 : vector<8x8xf32>
    %46 = math.exp %45 : vector<8x8xf32>
    %cst_24 = arith.constant dense<0.000000e+00> : vector<8xf32>
    %47 = vector.multi_reduction <add>, %46, %cst_24 [1] : vector<8x8xf32> to vector<8xf32>
    %48 = vector.shape_cast %47 : vector<8xf32> to vector<8x1xf32>
    %49 = tpu.reciprocal %48 {approx = true} : vector<8x1xf32> -> vector<8x1xf32>
    %50 = vector.broadcast %49 : vector<8x1xf32> to vector<8x8xf32>
    %51 = arith.mulf %46, %50 : vector<8x8xf32>
    %52 = arith.truncf %51 : vector<8x8xf32> to vector<8x8xbf16>
    %53 = vector.extract_strided_slice %20 {offsets = [0, 8], sizes = [8, 8], strides = [1, 1]} : vector<8x32xbf16> to vector<8x8xbf16>
    %cst_25 = arith.constant dense<0.000000e+00> : vector<8x8xf32>
    %54 = tpu.matmul %52, %53, %cst_25 {dimension_numbers = #tpu.dot_dimension_numbers<[1], [0], [0], [1], [0, 0, 1, 1], [], []>} : vector<8x8xbf16>, vector<8x8xbf16>, vector<8x8xf32> -> vector<8x8xf32>
    %55 = arith.truncf %54 : vector<8x8xf32> to vector<8x8xbf16>
    %c0_26 = arith.constant 0 : index
    %c8 = arith.constant 8 : index
    %56 = vector.load %arg24[%c0_26, %c8] : memref<8x32xbf16, #tpu.memory_space<vmem>>, vector<8x8xbf16>
    tpu.vector_store %arg24[%c0_26, %c8], %55 {strides = array<i32>} : memref<8x32xbf16, #tpu.memory_space<vmem>>, vector<8x8xbf16>,
    %57 = vector.extract_strided_slice %18 {offsets = [0, 16], sizes = [8, 8], strides = [1, 1]} : vector<8x32xbf16> to vector<8x8xbf16>
    %58 = vector.extract_strided_slice %19 {offsets = [0, 16], sizes = [8, 8], strides = [1, 1]} : vector<8x32xbf16> to vector<8x8xbf16>
    "tpu.trace_start"() <{level = 10 : i32, message = "qd,kd->qk"}> : () -> ()
    %cst_27 = arith.constant dense<0.000000e+00> : vector<8x8xf32>
    %59 = tpu.matmul %57, %58, %cst_27 {dimension_numbers = #tpu.dot_dimension_numbers<[1], [1], [0], [0], [0, 0, 1, 0], [], []>} : vector<8x8xbf16>, vector<8x8xbf16>, vector<8x8xf32> -> vector<8x8xf32>
    "tpu.trace_stop"() : () -> ()
    %cst_28 = arith.constant dense<0xFF800000> : vector<8xf32>
    %60 = vector.multi_reduction <maximumf>, %59, %cst_28 [1] : vector<8x8xf32> to vector<8xf32>
    %61 = vector.shape_cast %60 : vector<8xf32> to vector<8x1xf32>
    %62 = vector.broadcast %61 : vector<8x1xf32> to vector<8x8xf32>
    %63 = arith.subf %59, %62 : vector<8x8xf32>
    %64 = math.exp %63 : vector<8x8xf32>
    %cst_29 = arith.constant dense<0.000000e+00> : vector<8xf32>
    %65 = vector.multi_reduction <add>, %64, %cst_29 [1] : vector<8x8xf32> to vector<8xf32>
    %66 = vector.shape_cast %65 : vector<8xf32> to vector<8x1xf32>
    %67 = tpu.reciprocal %66 {approx = true} : vector<8x1xf32> -> vector<8x1xf32>
    %68 = vector.broadcast %67 : vector<8x1xf32> to vector<8x8xf32>
    %69 = arith.mulf %64, %68 : vector<8x8xf32>
    %70 = arith.truncf %69 : vector<8x8xf32> to vector<8x8xbf16>
    %71 = vector.extract_strided_slice %20 {offsets = [0, 16], sizes = [8, 8], strides = [1, 1]} : vector<8x32xbf16> to vector<8x8xbf16>
    %cst_30 = arith.constant dense<0.000000e+00> : vector<8x8xf32>
    %72 = tpu.matmul %70, %71, %cst_30 {dimension_numbers = #tpu.dot_dimension_numbers<[1], [0], [0], [1], [0, 0, 1, 1], [], []>} : vector<8x8xbf16>, vector<8x8xbf16>, vector<8x8xf32> -> vector<8x8xf32>
    %73 = arith.truncf %72 : vector<8x8xf32> to vector<8x8xbf16>
    %c0_31 = arith.constant 0 : index
    %c16 = arith.constant 16 : index
    %74 = vector.load %arg24[%c0_31, %c16] : memref<8x32xbf16, #tpu.memory_space<vmem>>, vector<8x8xbf16>
    tpu.vector_store %arg24[%c0_31, %c16], %73 {strides = array<i32>} : memref<8x32xbf16, #tpu.memory_space<vmem>>, vector<8x8xbf16>,
    %75 = vector.extract_strided_slice %18 {offsets = [0, 24], sizes = [8, 8], strides = [1, 1]} : vector<8x32xbf16> to vector<8x8xbf16>
    %76 = vector.extract_strided_slice %19 {offsets = [0, 24], sizes = [8, 8], strides = [1, 1]} : vector<8x32xbf16> to vector<8x8xbf16>
    "tpu.trace_start"() <{level = 10 : i32, message = "qd,kd->qk"}> : () -> ()
    %cst_32 = arith.constant dense<0.000000e+00> : vector<8x8xf32>
    %77 = tpu.matmul %75, %76, %cst_32 {dimension_numbers = #tpu.dot_dimension_numbers<[1], [1], [0], [0], [0, 0, 1, 0], [], []>} : vector<8x8xbf16>, vector<8x8xbf16>, vector<8x8xf32> -> vector<8x8xf32>
    "tpu.trace_stop"() : () -> ()
    %cst_33 = arith.constant dense<0xFF800000> : vector<8xf32>
    %78 = vector.multi_reduction <maximumf>, %77, %cst_33 [1] : vector<8x8xf32> to vector<8xf32>
    %79 = vector.shape_cast %78 : vector<8xf32> to vector<8x1xf32>
    %80 = vector.broadcast %79 : vector<8x1xf32> to vector<8x8xf32>
    %81 = arith.subf %77, %80 : vector<8x8xf32>
    %82 = math.exp %81 : vector<8x8xf32>
    %cst_34 = arith.constant dense<0.000000e+00> : vector<8xf32>
    %83 = vector.multi_reduction <add>, %82, %cst_34 [1] : vector<8x8xf32> to vector<8xf32>
    %84 = vector.shape_cast %83 : vector<8xf32> to vector<8x1xf32>
    %85 = tpu.reciprocal %84 {approx = true} : vector<8x1xf32> -> vector<8x1xf32>
    %86 = vector.broadcast %85 : vector<8x1xf32> to vector<8x8xf32>
    %87 = arith.mulf %82, %86 : vector<8x8xf32>
    %88 = arith.truncf %87 : vector<8x8xf32> to vector<8x8xbf16>
    %89 = vector.extract_strided_slice %20 {offsets = [0, 24], sizes = [8, 8], strides = [1, 1]} : vector<8x32xbf16> to vector<8x8xbf16>
    %cst_35 = arith.constant dense<0.000000e+00> : vector<8x8xf32>
    %90 = tpu.matmul %88, %89, %cst_35 {dimension_numbers = #tpu.dot_dimension_numbers<[1], [0], [0], [1], [0, 0, 1, 1], [], []>} : vector<8x8xbf16>, vector<8x8xbf16>, vector<8x8xf32> -> vector<8x8xf32>
    %91 = arith.truncf %90 : vector<8x8xf32> to vector<8x8xbf16>
    %c0_36 = arith.constant 0 : index
    %c24 = arith.constant 24 : index
    %92 = vector.load %arg24[%c0_36, %c24] : memref<8x32xbf16, #tpu.memory_space<vmem>>, vector<8x8xbf16>
    tpu.vector_store %arg24[%c0_36, %c24], %91 {strides = array<i32>} : memref<8x32xbf16, #tpu.memory_space<vmem>>, vector<8x8xbf16>,
    %c0_37 = arith.constant 0 : index
    %c0_38 = arith.constant 0 : index
    %93 = vector.load %arg24[%c0_37, %c0_38] : memref<8x32xbf16, #tpu.memory_space<vmem>>, vector<8x32xbf16>
    %c0_39 = arith.constant 0 : index
    %c0_40 = arith.constant 0 : index
    %94 = vector.load %arg10[%c0_39, %c0_40] : memref<32x32xbf16, #tpu.memory_space<vmem>>, vector<32x32xbf16>
    %cst_41 = arith.constant dense<0.000000e+00> : vector<8x32xf32>
    %95 = tpu.matmul %93, %94, %cst_41 {dimension_numbers = #tpu.dot_dimension_numbers<[1], [0], [0], [1], [0, 0, 1, 1], [], []>} : vector<8x32xbf16>, vector<32x32xbf16>, vector<8x32xf32> -> vector<8x32xf32>
    %c0_42 = arith.constant 0 : index
    %c0_43 = arith.constant 0 : index
    %96 = vector.load %arg11[%c0_42, %c0_43] : memref<1x32xf32, #tpu.memory_space<vmem>>, vector<1x32xf32>
    %97 = vector.broadcast %96 : vector<1x32xf32> to vector<8x32xf32>
    %98 = arith.addf %95, %97 : vector<8x32xf32>
    %99 = arith.addf %2, %98 : vector<8x32xf32>
    %c0_44 = arith.constant 0 : index
    %c0_45 = arith.constant 0 : index
    %100 = vector.load %arg12[%c0_44, %c0_45] : memref<1x32xf32, #tpu.memory_space<vmem>>, vector<1x32xf32>
    %c0_46 = arith.constant 0 : index
    %c0_47 = arith.constant 0 : index
    %101 = vector.load %arg13[%c0_46, %c0_47] : memref<1x32xf32, #tpu.memory_space<vmem>>, vector<1x32xf32>
    %cst_48 = arith.constant dense<0.000000e+00> : vector<8xf32>
    %102 = vector.multi_reduction <add>, %99, %cst_48 [1] : vector<8x32xf32> to vector<8xf32>
    %103 = vector.shape_cast %102 : vector<8xf32> to vector<8x1xf32>
    %cst_49 = arith.constant 3.200000e+01 : f32
    %104 = vector.broadcast %cst_49 : f32 to vector<8x1xf32>
    %105 = arith.divf %103, %104 : vector<8x1xf32>
    %106 = vector.broadcast %105 : vector<8x1xf32> to vector<8x32xf32>
    %107 = arith.subf %99, %106 : vector<8x32xf32>
    %108 = arith.mulf %107, %107 : vector<8x32xf32>
    %cst_50 = arith.constant dense<0.000000e+00> : vector<8xf32>
    %109 = vector.multi_reduction <add>, %108, %cst_50 [1] : vector<8x32xf32> to vector<8xf32>
    %110 = vector.shape_cast %109 : vector<8xf32> to vector<8x1xf32>
    %cst_51 = arith.constant 3.200000e+01 : f32
    %111 = vector.broadcast %cst_51 : f32 to vector<8x1xf32>
    %112 = arith.divf %110, %111 : vector<8x1xf32>
    %113 = vector.broadcast %105 : vector<8x1xf32> to vector<8x32xf32>
    %114 = arith.subf %99, %113 : vector<8x32xf32>
    %cst_52 = arith.constant 9.99999996E-13 : f32
    %115 = vector.broadcast %cst_52 : f32 to vector<8x1xf32>
    %116 = arith.addf %112, %115 : vector<8x1xf32>
    %117 = math.rsqrt %116 : vector<8x1xf32>
    %118 = vector.broadcast %117 : vector<8x1xf32> to vector<8x32xf32>
    %119 = arith.mulf %114, %118 : vector<8x32xf32>
    %120 = vector.broadcast %100 : vector<1x32xf32> to vector<8x32xf32>
    %121 = arith.mulf %119, %120 : vector<8x32xf32>
    %122 = vector.broadcast %101 : vector<1x32xf32> to vector<8x32xf32>
    %123 = arith.addf %121, %122 : vector<8x32xf32>
    %124 = arith.truncf %123 : vector<8x32xf32> to vector<8x32xbf16>
    %c0_53 = arith.constant 0 : index
    %c0_54 = arith.constant 0 : index
    %125 = vector.load %arg14[%c0_53, %c0_54] : memref<32x64xbf16, #tpu.memory_space<vmem>>, vector<32x64xbf16>
    %cst_55 = arith.constant dense<0.000000e+00> : vector<8x64xf32>
    %126 = tpu.matmul %124, %125, %cst_55 {dimension_numbers = #tpu.dot_dimension_numbers<[1], [0], [0], [1], [0, 0, 1, 1], [], []>} : vector<8x32xbf16>, vector<32x64xbf16>, vector<8x64xf32> -> vector<8x64xf32>
    %c0_56 = arith.constant 0 : index
    %c0_57 = arith.constant 0 : index
    %127 = vector.load %arg15[%c0_56, %c0_57] : memref<1x64xf32, #tpu.memory_space<vmem>>, vector<1x64xf32>
    %128 = vector.broadcast %127 : vector<1x64xf32> to vector<8x64xf32>
    %129 = arith.addf %126, %128 : vector<8x64xf32>
    %cst_58 = arith.constant 5.000000e-01 : f32
    %130 = vector.broadcast %cst_58 : f32 to vector<8x64xf32>
    %131 = arith.mulf %130, %129 : vector<8x64xf32>
    %cst_59 = arith.constant 4.471500e-02 : f32
    %132 = vector.broadcast %cst_59 : f32 to vector<8x64xf32>
    %133 = arith.mulf %132, %129 : vector<8x64xf32>
    %134 = arith.mulf %133, %129 : vector<8x64xf32>
    %135 = arith.mulf %134, %129 : vector<8x64xf32>
    %136 = arith.addf %129, %135 : vector<8x64xf32>
    %cst_60 = arith.constant 0.797884583 : f32
    %137 = vector.broadcast %cst_60 : f32 to vector<8x64xf32>
    %138 = arith.mulf %137, %136 : vector<8x64xf32>
    %139 = math.tanh %138 : vector<8x64xf32>
    %cst_61 = arith.constant 1.000000e+00 : f32
    %140 = vector.broadcast %cst_61 : f32 to vector<8x64xf32>
    %141 = arith.addf %140, %139 : vector<8x64xf32>
    %142 = arith.mulf %131, %141 : vector<8x64xf32>
    %143 = arith.truncf %142 : vector<8x64xf32> to vector<8x64xbf16>
    %c0_62 = arith.constant 0 : index
    %c0_63 = arith.constant 0 : index
    %144 = vector.load %arg16[%c0_62, %c0_63] : memref<64x32xbf16, #tpu.memory_space<vmem>>, vector<64x32xbf16>
    %cst_64 = arith.constant dense<0.000000e+00> : vector<8x32xf32>
    %145 = tpu.matmul %143, %144, %cst_64 {dimension_numbers = #tpu.dot_dimension_numbers<[1], [0], [0], [1], [0, 0, 1, 1], [], []>} : vector<8x64xbf16>, vector<64x32xbf16>, vector<8x32xf32> -> vector<8x32xf32>
    %c0_65 = arith.constant 0 : index
    %c0_66 = arith.constant 0 : index
    %146 = vector.load %arg17[%c0_65, %c0_66] : memref<1x32xf32, #tpu.memory_space<vmem>>, vector<1x32xf32>
    %147 = vector.broadcast %146 : vector<1x32xf32> to vector<8x32xf32>
    %148 = arith.addf %145, %147 : vector<8x32xf32>
    %149 = arith.addf %123, %148 : vector<8x32xf32>
    %c0_67 = arith.constant 0 : index
    %c0_68 = arith.constant 0 : index
    %150 = vector.load %arg18[%c0_67, %c0_68] : memref<1x32xf32, #tpu.memory_space<vmem>>, vector<1x32xf32>
    %c0_69 = arith.constant 0 : index
    %c0_70 = arith.constant 0 : index
    %151 = vector.load %arg19[%c0_69, %c0_70] : memref<1x32xf32, #tpu.memory_space<vmem>>, vector<1x32xf32>
    %cst_71 = arith.constant dense<0.000000e+00> : vector<8xf32>
    %152 = vector.multi_reduction <add>, %149, %cst_71 [1] : vector<8x32xf32> to vector<8xf32>
    %153 = vector.shape_cast %152 : vector<8xf32> to vector<8x1xf32>
    %cst_72 = arith.constant 3.200000e+01 : f32
    %154 = vector.broadcast %cst_72 : f32 to vector<8x1xf32>
    %155 = arith.divf %153, %154 : vector<8x1xf32>
    %156 = vector.broadcast %155 : vector<8x1xf32> to vector<8x32xf32>
    %157 = arith.subf %149, %156 : vector<8x32xf32>
    %158 = arith.mulf %157, %157 : vector<8x32xf32>
    %cst_73 = arith.constant dense<0.000000e+00> : vector<8xf32>
    %159 = vector.multi_reduction <add>, %158, %cst_73 [1] : vector<8x32xf32> to vector<8xf32>
    %160 = vector.shape_cast %159 : vector<8xf32> to vector<8x1xf32>
    %cst_74 = arith.constant 3.200000e+01 : f32
    %161 = vector.broadcast %cst_74 : f32 to vector<8x1xf32>
    %162 = arith.divf %160, %161 : vector<8x1xf32>
    %163 = vector.broadcast %155 : vector<8x1xf32> to vector<8x32xf32>
    %164 = arith.subf %149, %163 : vector<8x32xf32>
    %cst_75 = arith.constant 9.99999996E-13 : f32
    %165 = vector.broadcast %cst_75 : f32 to vector<8x1xf32>
    %166 = arith.addf %162, %165 : vector<8x1xf32>
    %167 = math.rsqrt %166 : vector<8x1xf32>
    %168 = vector.broadcast %167 : vector<8x1xf32> to vector<8x32xf32>
    %169 = arith.mulf %164, %168 : vector<8x32xf32>
    %170 = vector.broadcast %150 : vector<1x32xf32> to vector<8x32xf32>
    %171 = arith.mulf %169, %170 : vector<8x32xf32>
    %172 = vector.broadcast %151 : vector<1x32xf32> to vector<8x32xf32>
    %173 = arith.addf %171, %172 : vector<8x32xf32>
    %174 = arith.truncf %173 : vector<8x32xf32> to vector<8x32xbf16>
    %c0_76 = arith.constant 0 : index
    %c0_77 = arith.constant 0 : index
    %c0_78 = arith.constant 0 : index
    %175 = vector.load %arg22[%c0_76, %c0_77, %c0_78] : memref<1x8x32xbf16, #tpu.memory_space<vmem>>, vector<1x8x32xbf16>
    %176 = vector.shape_cast %175 : vector<1x8x32xbf16> to vector<8x32xbf16>
    %177 = vector.shape_cast %174 : vector<8x32xbf16> to vector<1x8x32xbf16>
    tpu.vector_store %arg22[%c0_76, %c0_77, %c0_78], %177 {strides = array<i32>} : memref<1x8x32xbf16, #tpu.memory_space<vmem>>, vector<1x8x32xbf16>,
    %c0_79 = arith.constant 0 : index
    %c0_80 = arith.constant 0 : index
    %c0_81 = arith.constant 0 : index
    %178 = vector.load %arg3[%c0_79, %c0_80, %c0_81] : memref<1x8x32xf32, #tpu.memory_space<vmem>>, vector<1x8x32xf32>
    %179 = vector.shape_cast %178 : vector<1x8x32xf32> to vector<8x32xf32>
    %180 = arith.addf %179, %173 : vector<8x32xf32>
    %c0_82 = arith.constant 0 : index
    %c0_83 = arith.constant 0 : index
    %c0_84 = arith.constant 0 : index
    %181 = vector.load %arg23[%c0_82, %c0_83, %c0_84] : memref<1x8x32xf32, #tpu.memory_space<vmem>>, vector<1x8x32xf32>
    %182 = vector.shape_cast %181 : vector<1x8x32xf32> to vector<8x32xf32>
    %183 = vector.shape_cast %180 : vector<8x32xf32> to vector<1x8x32xf32>
    tpu.vector_store %arg23[%c0_82, %c0_83, %c0_84], %183 {strides = array<i32>} : memref<1x8x32xf32, #tpu.memory_space<vmem>>, vector<1x8x32xf32>,
    return
  }
  func.func @transform_0(%arg0: i32, %arg1: i32) -> (i32, i32, i32) {
    %c0_i32 = arith.constant 0 : i32
    %c0_i32_0 = arith.constant 0 : i32
    %c0_i32_1 = arith.constant 0 : i32
    return %arg0, %c0_i32, %c0_i32_0 : i32, i32, i32
  }
  func.func @transform_1(%arg0: i32, %arg1: i32) -> (i32, i32, i32) {
    %c0_i32 = arith.constant 0 : i32
    %c0_i32_0 = arith.constant 0 : i32
    return %arg0, %arg1, %c0_i32 : i32, i32, i32
  }
  func.func @transform_2(%arg0: i32, %arg1: i32) -> (i32, i32) {
    %c0_i32 = arith.constant 0 : i32
    %c0_i32_0 = arith.constant 0 : i32
    %c0_i32_1 = arith.constant 0 : i32
    return %c0_i32, %c0_i32_0 : i32, i32
  }
  func.func @transform_3(%arg0: i32, %arg1: i32) -> (i32, i32) {
    %c0_i32 = arith.constant 0 : i32
    %c0_i32_0 = arith.constant 0 : i32
    %c0_i32_1 = arith.constant 0 : i32
    return %c0_i32, %c0_i32_0 : i32, i32
  }
  func.func @transform_4(%arg0: i32, %arg1: i32) -> (i32, i32) {
    %c0_i32 = arith.constant 0 : i32
    %c0_i32_0 = arith.constant 0 : i32
    %c0_i32_1 = arith.constant 0 : i32
    return %c0_i32, %c0_i32_0 : i32, i32
  }
  func.func @transform_5(%arg0: i32, %arg1: i32) -> (i32, i32) {
    %c0_i32 = arith.constant 0 : i32
    %c0_i32_0 = arith.constant 0 : i32
    %c0_i32_1 = arith.constant 0 : i32
    return %c0_i32, %c0_i32_0 : i32, i32
  }
  func.func @transform_6(%arg0: i32, %arg1: i32) -> (i32, i32) {
    %c0_i32 = arith.constant 0 : i32
    %c0_i32_0 = arith.constant 0 : i32
    %c0_i32_1 = arith.constant 0 : i32
    return %c0_i32, %c0_i32_0 : i32, i32
  }
  func.func @transform_7(%arg0: i32, %arg1: i32) -> (i32, i32) {
    %c0_i32 = arith.constant 0 : i32
    %c0_i32_0 = arith.constant 0 : i32
    %c0_i32_1 = arith.constant 0 : i32
    return %c0_i32, %c0_i32_0 : i32, i32
  }
  func.func @transform_8(%arg0: i32, %arg1: i32) -> (i32, i32) {
    %c0_i32 = arith.constant 0 : i32
    %c0_i32_0 = arith.constant 0 : i32
    %c0_i32_1 = arith.constant 0 : i32
    return %c0_i32, %c0_i32_0 : i32, i32
  }
  func.func @transform_9(%arg0: i32, %arg1: i32) -> (i32, i32) {
    %c0_i32 = arith.constant 0 : i32
    %c0_i32_0 = arith.constant 0 : i32
    %c0_i32_1 = arith.constant 0 : i32
    return %c0_i32, %c0_i32_0 : i32, i32
  }
  func.func @transform_10(%arg0: i32, %arg1: i32) -> (i32, i32) {
    %c0_i32 = arith.constant 0 : i32
    %c0_i32_0 = arith.constant 0 : i32
    %c0_i32_1 = arith.constant 0 : i32
    return %c0_i32, %c0_i32_0 : i32, i32
  }
  func.func @transform_11(%arg0: i32, %arg1: i32) -> (i32, i32) {
    %c0_i32 = arith.constant 0 : i32
    %c0_i32_0 = arith.constant 0 : i32
    %c0_i32_1 = arith.constant 0 : i32
    return %c0_i32, %c0_i32_0 : i32, i32
  }
  func.func @transform_12(%arg0: i32, %arg1: i32) -> (i32, i32) {
    %c0_i32 = arith.constant 0 : i32
    %c0_i32_0 = arith.constant 0 : i32
    %c0_i32_1 = arith.constant 0 : i32
    return %c0_i32, %c0_i32_0 : i32, i32
  }
  func.func @transform_13(%arg0: i32, %arg1: i32) -> (i32, i32) {
    %c0_i32 = arith.constant 0 : i32
    %c0_i32_0 = arith.constant 0 : i32
    %c0_i32_1 = arith.constant 0 : i32
    return %c0_i32, %c0_i32_0 : i32, i32
  }
  func.func @transform_14(%arg0: i32, %arg1: i32) -> (i32, i32) {
    %c0_i32 = arith.constant 0 : i32
    %c0_i32_0 = arith.constant 0 : i32
    %c0_i32_1 = arith.constant 0 : i32
    return %c0_i32, %c0_i32_0 : i32, i32
  }
  func.func @transform_15(%arg0: i32, %arg1: i32) -> (i32, i32) {
    %c0_i32 = arith.constant 0 : i32
    %c0_i32_0 = arith.constant 0 : i32
    %c0_i32_1 = arith.constant 0 : i32
    return %c0_i32, %c0_i32_0 : i32, i32
  }
  func.func @transform_16(%arg0: i32, %arg1: i32) -> (i32, i32) {
    %c0_i32 = arith.constant 0 : i32
    %c0_i32_0 = arith.constant 0 : i32
    %c0_i32_1 = arith.constant 0 : i32
    return %c0_i32, %c0_i32_0 : i32, i32
  }
  func.func @transform_17(%arg0: i32, %arg1: i32) -> (i32, i32) {
    %c0_i32 = arith.constant 0 : i32
    %c0_i32_0 = arith.constant 0 : i32
    %c0_i32_1 = arith.constant 0 : i32
    return %c0_i32, %c0_i32_0 : i32, i32
  }
  func.func @transform_18(%arg0: i32, %arg1: i32) -> (i32, i32) {
    %c0_i32 = arith.constant 0 : i32
    %c0_i32_0 = arith.constant 0 : i32
    %c0_i32_1 = arith.constant 0 : i32
    return %c0_i32, %c0_i32_0 : i32, i32
  }
  func.func @transform_19(%arg0: i32, %arg1: i32) -> (i32, i32) {
    %c0_i32 = arith.constant 0 : i32
    %c0_i32_0 = arith.constant 0 : i32
    %c0_i32_1 = arith.constant 0 : i32
    return %c0_i32, %c0_i32_0 : i32, i32
  }
  func.func @transform_20(%arg0: i32, %arg1: i32) -> (i32, i32, i32) {
    %c0_i32 = arith.constant 0 : i32
    %c0_i32_0 = arith.constant 0 : i32
    return %arg0, %arg1, %c0_i32 : i32, i32, i32
  }
  func.func @transform_21(%arg0: i32, %arg1: i32) -> (i32, i32, i32) {
    %c0_i32 = arith.constant 0 : i32
    %c0_i32_0 = arith.constant 0 : i32
    return %arg0, %arg1, %c0_i32 : i32, i32, i32
  }
}

</mosaic_0001>

<llo_original>
// kernel: bert_embeddings_forward.4
$region0: #{bert_embeddings_forward.4}
  #allocation0 [shape = 'u32[]', space=smem, size = 0x4, offset = 0x4, fixed_abs, tag = 'smem constant byte address 0x4 - core index']
  #allocation1 [shape = 'u32[144,128]{1,0:T(1,128)}', space=vmem, size = 0x12000, scoped, tag = 'internal scratch']
  #allocation2 [shape = 'bf16[8,32]{1,0:T(8,128)(2,1)}', space=vmem, size = 0x800, scoped, tag = 'scratch operand']
  %s0 = inlined_call_operand.vmem [shape: f32[2,8,32], index: 0, kind: input, shape index: {}]
  %s1 = inlined_call_operand.vmem [shape: bf16[32,32], index: 1, kind: input, shape index: {}]
  %s2 = inlined_call_operand.vmem [shape: f32[1,32], index: 2, kind: input, shape index: {}]
  %s3 = inlined_call_operand.vmem [shape: bf16[32,32], index: 3, kind: input, shape index: {}]
  %s4 = inlined_call_operand.vmem [shape: f32[1,32], index: 4, kind: input, shape index: {}]
  %s5 = inlined_call_operand.vmem [shape: bf16[32,32], index: 5, kind: input, shape index: {}]
  %s6 = inlined_call_operand.vmem [shape: f32[1,32], index: 6, kind: input, shape index: {}]
  %s7 = inlined_call_operand.vmem [shape: bf16[32,32], index: 7, kind: input, shape index: {}]
  %s8 = inlined_call_operand.vmem [shape: f32[1,32], index: 8, kind: input, shape index: {}]
  %s9 = inlined_call_operand.vmem [shape: f32[1,32], index: 9, kind: input, shape index: {}]
  %s10 = inlined_call_operand.vmem [shape: f32[1,32], index: 10, kind: input, shape index: {}]
  %s11 = inlined_call_operand.vmem [shape: bf16[32,64], index: 11, kind: input, shape index: {}]
  %s12 = inlined_call_operand.vmem [shape: f32[1,64], index: 12, kind: input, shape index: {}]
  %s13 = inlined_call_operand.vmem [shape: bf16[64,32], index: 13, kind: input, shape index: {}]
  %s14 = inlined_call_operand.vmem [shape: f32[1,32], index: 14, kind: input, shape index: {}]
  %s15 = inlined_call_operand.vmem [shape: f32[1,32], index: 15, kind: input, shape index: {}]
  %s16 = inlined_call_operand.vmem [shape: f32[1,32], index: 16, kind: input, shape index: {}]
  %s17 = inlined_call_operand.vmem [shape: f32[1,32], index: 17, kind: input, shape index: {}]
  %s18 = inlined_call_operand.vmem [shape: f32[1,32], index: 18, kind: input, shape index: {}]
  %s19 = inlined_call_operand.vmem [shape: bf16[2,8,32], index: 19, kind: output, shape index: {0}]
  %s20 = inlined_call_operand.vmem [shape: f32[2,8,32], index: 20, kind: output, shape index: {1}]
  %21 = xla_tuple %s19, %s20
  %s22 = sld [smem:[#allocation0]]
  $region117: #{bert_embeddings_forward.4} parent=0
    _
  %s24 = ssub.s32 1, %s22
  %s25 = scalar_select 0, %s24, %s22
  loop: start=0, step=1, limit=4
  $region2: #{bert_embeddings_forward.4} parent=0 // loop_pre_header
    _
  $region3: #{bert_embeddings_forward.4} parent=0 // loop_header
    %s27 = sphi 0, %s31
    %p28 = scmp.ge.s32.totalorder %s27, 4
    %s34 = sphi 0, %s46
    %s35 = sphi 0, %s42
    %s36 = sphi 0, %s34
    %s37 = sphi 0, %s35
    %s38 = sphi 0, %s36
    %s39 = sphi 0, %s37
    %s49 = sphi 0, %s51
    %s52 = sphi 0, %s49
    %s53 = sphi 0, %s52
    %s69 = sphi 0, %s53
    %s73 = sphi 0, %s73
    %s75 = sphi 0, %s73
    %s76 = sphi 0, %s75
    %s90 = sphi 0, %s76
    %s94 = sphi 0, %s94
    %s96 = sphi 0, %s94
    %s97 = sphi 0, %s96
    %s111 = sphi 0, %s97
    %s115 = sphi 0, %s115
    %s117 = sphi 0, %s115
    %s118 = sphi 0, %s117
    %s132 = sphi 0, %s118
    %s136 = sphi 0, %s136
    %s138 = sphi 0, %s136
    %s139 = sphi 0, %s138
    %s153 = sphi 0, %s139
    %s157 = sphi 0, %s157
    %s159 = sphi 0, %s157
    %s160 = sphi 0, %s159
    %s174 = sphi 0, %s160
    %s178 = sphi 0, %s178
    %s180 = sphi 0, %s178
    %s181 = sphi 0, %s180
    %s195 = sphi 0, %s181
    %s199 = sphi 0, %s199
    %s201 = sphi 0, %s199
    %s202 = sphi 0, %s201
    %s216 = sphi 0, %s202
    %s220 = sphi 0, %s220
    %s222 = sphi 0, %s220
    %s223 = sphi 0, %s222
    %s237 = sphi 0, %s223
    %s241 = sphi 0, %s241
    %s243 = sphi 0, %s241
    %s244 = sphi 0, %s243
    %s258 = sphi 0, %s244
    %s262 = sphi 0, %s262
    %s264 = sphi 0, %s262
    %s265 = sphi 0, %s264
    %s279 = sphi 0, %s265
    %s283 = sphi 0, %s283
    %s285 = sphi 0, %s283
    %s286 = sphi 0, %s285
    %s300 = sphi 0, %s286
    %s304 = sphi 0, %s304
    %s306 = sphi 0, %s304
    %s307 = sphi 0, %s306
    %s321 = sphi 0, %s307
    %s325 = sphi 0, %s325
    %s327 = sphi 0, %s325
    %s328 = sphi 0, %s327
    %s342 = sphi 0, %s328
    %s346 = sphi 0, %s346
    %s348 = sphi 0, %s346
    %s349 = sphi 0, %s348
    %s363 = sphi 0, %s349
    %s367 = sphi 0, %s367
    %s369 = sphi 0, %s367
    %s370 = sphi 0, %s369
    %s384 = sphi 0, %s370
    %s388 = sphi 0, %s388
    %s390 = sphi 0, %s388
    %s391 = sphi 0, %s390
    %s405 = sphi 0, %s391
    %s409 = sphi 0, %s409
    %s411 = sphi 0, %s409
    %s412 = sphi 0, %s411
    %s426 = sphi 0, %s412
    %s430 = sphi 0, %s430
    %s432 = sphi 0, %s430
    %s433 = sphi 0, %s432
    %s447 = sphi 0, %s433
    %s455 = sphi 0, %s457
    %s458 = sphi 0, %s455
    %s459 = sphi 0, %s458
    %s475 = sphi 0, %s459
    %s483 = sphi 0, %s485
    %s486 = sphi 0, %s483
    %s487 = sphi 0, %s486
    %s503 = sphi 0, %s487
  $region4: #{bert_embeddings_forward.4} parent=0 // loop_header_branch
    %30 = sbr.rel (%p28) target = $region8
  $region5: #{bert_embeddings_forward.4} parent=0 // loop_body
    %s32 = ssub.s32 %s27, 1
    %s33 = ssub.s32 %s27, 2
    %s40 = sadd.s32 1, %s35
    %p41 = scmp.ge.s32.totalorder %s40, 1
    %s42 = scalar_select %p41, 0, %s40
    %s43 = sadd.s32 1, %s34
    %s44 = scalar_select %p41, %s43, %s34
    %p45 = scmp.ge.s32.totalorder %s44, 2
    %s46 = scalar_select %p45, 0, %s44
    %s47 = ssub.s32 %s34, %s46
    %p48 = scmp.eq.s32.totalorder %s47, 0
    %s50 = sadd.s32 %s49, 1
    %s51 = scalar_select %p48, %s49, %s50
    %p54 = pneg %p48
    %p55 = scmp.eq.s32.totalorder %s27, 1
    %p56 = por %p54, %p55
    %p57 = scmp.ne.s32.totalorder %s49, %s52
    %p58 = scmp.eq.s32.totalorder %s27, 0
    %p59 = por %p57, %p58
    %p60 = scmp.ne.s32.totalorder %s49, %s52
    %p61 = scmp.eq.s32.totalorder %s32, 1
    %p62 = por %p60, %p61
    %p63 = scmp.ne.s32.totalorder %s52, %s53
    %p64 = scmp.eq.s32.totalorder %s32, 0
    %p65 = por %p63, %p64
    %p66 = scmp.ne.s32.totalorder %s52, %s53
    %p67 = scmp.eq.s32.totalorder %s33, 1
    %p68 = por %p66, %p67
    %p70 = scmp.ne.s32.totalorder %s53, %s69
    %p71 = scmp.eq.s32.totalorder %s33, 0
    %p72 = por %p70, %p71
    %s74 = sadd.s32 %s73, 1
    %p77 = scmp.eq.s32.totalorder %s27, 1
    %p78 = scmp.ne.s32.totalorder %s73, %s75
    %p79 = scmp.eq.s32.totalorder %s27, 0
    %p80 = por %p78, %p79
    %p81 = scmp.ne.s32.totalorder %s73, %s75
    %p82 = scmp.eq.s32.totalorder %s32, 1
    %p83 = por %p81, %p82
    %p84 = scmp.ne.s32.totalorder %s75, %s76
    %p85 = scmp.eq.s32.totalorder %s32, 0
    %p86 = por %p84, %p85
    %p87 = scmp.ne.s32.totalorder %s75, %s76
    %p88 = scmp.eq.s32.totalorder %s33, 1
    %p89 = por %p87, %p88
    %p91 = scmp.ne.s32.totalorder %s76, %s90
    %p92 = scmp.eq.s32.totalorder %s33, 0
    %p93 = por %p91, %p92
    %s95 = sadd.s32 %s94, 1
    %p98 = scmp.eq.s32.totalorder %s27, 1
    %p99 = scmp.ne.s32.totalorder %s94, %s96
    %p100 = scmp.eq.s32.totalorder %s27, 0
    %p101 = por %p99, %p100
    %p102 = scmp.ne.s32.totalorder %s94, %s96
    %p103 = scmp.eq.s32.totalorder %s32, 1
    %p104 = por %p102, %p103
    %p105 = scmp.ne.s32.totalorder %s96, %s97
    %p106 = scmp.eq.s32.totalorder %s32, 0
    %p107 = por %p105, %p106
    %p108 = scmp.ne.s32.totalorder %s96, %s97
    %p109 = scmp.eq.s32.totalorder %s33, 1
    %p110 = por %p108, %p109
    %p112 = scmp.ne.s32.totalorder %s97, %s111
    %p113 = scmp.eq.s32.totalorder %s33, 0
    %p114 = por %p112, %p113
    %s116 = sadd.s32 %s115, 1
    %p119 = scmp.eq.s32.totalorder %s27, 1
    %p120 = scmp.ne.s32.totalorder %s115, %s117
    %p121 = scmp.eq.s32.totalorder %s27, 0
    %p122 = por %p120, %p121
    %p123 = scmp.ne.s32.totalorder %s115, %s117
    %p124 = scmp.eq.s32.totalorder %s32, 1
    %p125 = por %p123, %p124
    %p126 = scmp.ne.s32.totalorder %s117, %s118
    %p127 = scmp.eq.s32.totalorder %s32, 0
    %p128 = por %p126, %p127
    %p129 = scmp.ne.s32.totalorder %s117, %s118
    %p130 = scmp.eq.s32.totalorder %s33, 1
    %p131 = por %p129, %p130
    %p133 = scmp.ne.s32.totalorder %s118, %s132
    %p134 = scmp.eq.s32.totalorder %s33, 0
    %p135 = por %p133, %p134
    %s137 = sadd.s32 %s136, 1
    %p140 = scmp.eq.s32.totalorder %s27, 1
    %p141 = scmp.ne.s32.totalorder %s136, %s138
    %p142 = scmp.eq.s32.totalorder %s27, 0
    %p143 = por %p141, %p142
    %p144 = scmp.ne.s32.totalorder %s136, %s138
    %p145 = scmp.eq.s32.totalorder %s32, 1
    %p146 = por %p144, %p145
    %p147 = scmp.ne.s32.totalorder %s138, %s139
    %p148 = scmp.eq.s32.totalorder %s32, 0
    %p149 = por %p147, %p148
    %p150 = scmp.ne.s32.totalorder %s138, %s139
    %p151 = scmp.eq.s32.totalorder %s33, 1
    %p152 = por %p150, %p151
    %p154 = scmp.ne.s32.totalorder %s139, %s153
    %p155 = scmp.eq.s32.totalorder %s33, 0
    %p156 = por %p154, %p155
    %s158 = sadd.s32 %s157, 1
    %p161 = scmp.eq.s32.totalorder %s27, 1
    %p162 = scmp.ne.s32.totalorder %s157, %s159
    %p163 = scmp.eq.s32.totalorder %s27, 0
    %p164 = por %p162, %p163
    %p165 = scmp.ne.s32.totalorder %s157, %s159
    %p166 = scmp.eq.s32.totalorder %s32, 1
    %p167 = por %p165, %p166
    %p168 = scmp.ne.s32.totalorder %s159, %s160
    %p169 = scmp.eq.s32.totalorder %s32, 0
    %p170 = por %p168, %p169
    %p171 = scmp.ne.s32.totalorder %s159, %s160
    %p172 = scmp.eq.s32.totalorder %s33, 1
    %p173 = por %p171, %p172
    %p175 = scmp.ne.s32.totalorder %s160, %s174
    %p176 = scmp.eq.s32.totalorder %s33, 0
    %p177 = por %p175, %p176
    %s179 = sadd.s32 %s178, 1
    %p182 = scmp.eq.s32.totalorder %s27, 1
    %p183 = scmp.ne.s32.totalorder %s178, %s180
    %p184 = scmp.eq.s32.totalorder %s27, 0
    %p185 = por %p183, %p184
    %p186 = scmp.ne.s32.totalorder %s178, %s180
    %p187 = scmp.eq.s32.totalorder %s32, 1
    %p188 = por %p186, %p187
    %p189 = scmp.ne.s32.totalorder %s180, %s181
    %p190 = scmp.eq.s32.totalorder %s32, 0
    %p191 = por %p189, %p190
    %p192 = scmp.ne.s32.totalorder %s180, %s181
    %p193 = scmp.eq.s32.totalorder %s33, 1
    %p194 = por %p192, %p193
    %p196 = scmp.ne.s32.totalorder %s181, %s195
    %p197 = scmp.eq.s32.totalorder %s33, 0
    %p198 = por %p196, %p197
    %s200 = sadd.s32 %s199, 1
    %p203 = scmp.eq.s32.totalorder %s27, 1
    %p204 = scmp.ne.s32.totalorder %s199, %s201
    %p205 = scmp.eq.s32.totalorder %s27, 0
    %p206 = por %p204, %p205
    %p207 = scmp.ne.s32.totalorder %s199, %s201
    %p208 = scmp.eq.s32.totalorder %s32, 1
    %p209 = por %p207, %p208
    %p210 = scmp.ne.s32.totalorder %s201, %s202
    %p211 = scmp.eq.s32.totalorder %s32, 0
    %p212 = por %p210, %p211
    %p213 = scmp.ne.s32.totalorder %s201, %s202
    %p214 = scmp.eq.s32.totalorder %s33, 1
    %p215 = por %p213, %p214
    %p217 = scmp.ne.s32.totalorder %s202, %s216
    %p218 = scmp.eq.s32.totalorder %s33, 0
    %p219 = por %p217, %p218
    %s221 = sadd.s32 %s220, 1
    %p224 = scmp.eq.s32.totalorder %s27, 1
    %p225 = scmp.ne.s32.totalorder %s220, %s222
    %p226 = scmp.eq.s32.totalorder %s27, 0
    %p227 = por %p225, %p226
    %p228 = scmp.ne.s32.totalorder %s220, %s222
    %p229 = scmp.eq.s32.totalorder %s32, 1
    %p230 = por %p228, %p229
    %p231 = scmp.ne.s32.totalorder %s222, %s223
    %p232 = scmp.eq.s32.totalorder %s32, 0
    %p233 = por %p231, %p232
    %p234 = scmp.ne.s32.totalorder %s222, %s223
    %p235 = scmp.eq.s32.totalorder %s33, 1
    %p236 = por %p234, %p235
    %p238 = scmp.ne.s32.totalorder %s223, %s237
    %p239 = scmp.eq.s32.totalorder %s33, 0
    %p240 = por %p238, %p239
    %s242 = sadd.s32 %s241, 1
    %p245 = scmp.eq.s32.totalorder %s27, 1
    %p246 = scmp.ne.s32.totalorder %s241, %s243
    %p247 = scmp.eq.s32.totalorder %s27, 0
    %p248 = por %p246, %p247
    %p249 = scmp.ne.s32.totalorder %s241, %s243
    %p250 = scmp.eq.s32.totalorder %s32, 1
    %p251 = por %p249, %p250
    %p252 = scmp.ne.s32.totalorder %s243, %s244
    %p253 = scmp.eq.s32.totalorder %s32, 0
    %p254 = por %p252, %p253
    %p255 = scmp.ne.s32.totalorder %s243, %s244
    %p256 = scmp.eq.s32.totalorder %s33, 1
    %p257 = por %p255, %p256
    %p259 = scmp.ne.s32.totalorder %s244, %s258
    %p260 = scmp.eq.s32.totalorder %s33, 0
    %p261 = por %p259, %p260
    %s263 = sadd.s32 %s262, 1
    %p266 = scmp.eq.s32.totalorder %s27, 1
    %p267 = scmp.ne.s32.totalorder %s262, %s264
    %p268 = scmp.eq.s32.totalorder %s27, 0
    %p269 = por %p267, %p268
    %p270 = scmp.ne.s32.totalorder %s262, %s264
    %p271 = scmp.eq.s32.totalorder %s32, 1
    %p272 = por %p270, %p271
    %p273 = scmp.ne.s32.totalorder %s264, %s265
    %p274 = scmp.eq.s32.totalorder %s32, 0
    %p275 = por %p273, %p274
    %p276 = scmp.ne.s32.totalorder %s264, %s265
    %p277 = scmp.eq.s32.totalorder %s33, 1
    %p278 = por %p276, %p277
    %p280 = scmp.ne.s32.totalorder %s265, %s279
    %p281 = scmp.eq.s32.totalorder %s33, 0
    %p282 = por %p280, %p281
    %s284 = sadd.s32 %s283, 1
    %p287 = scmp.eq.s32.totalorder %s27, 1
    %p288 = scmp.ne.s32.totalorder %s283, %s285
    %p289 = scmp.eq.s32.totalorder %s27, 0
    %p290 = por %p288, %p289
    %p291 = scmp.ne.s32.totalorder %s283, %s285
    %p292 = scmp.eq.s32.totalorder %s32, 1
    %p293 = por %p291, %p292
    %p294 = scmp.ne.s32.totalorder %s285, %s286
    %p295 = scmp.eq.s32.totalorder %s32, 0
    %p296 = por %p294, %p295
    %p297 = scmp.ne.s32.totalorder %s285, %s286
    %p298 = scmp.eq.s32.totalorder %s33, 1
    %p299 = por %p297, %p298
    %p301 = scmp.ne.s32.totalorder %s286, %s300
    %p302 = scmp.eq.s32.totalorder %s33, 0
    %p303 = por %p301, %p302
    %s305 = sadd.s32 %s304, 1
    %p308 = scmp.eq.s32.totalorder %s27, 1
    %p309 = scmp.ne.s32.totalorder %s304, %s306
    %p310 = scmp.eq.s32.totalorder %s27, 0
    %p311 = por %p309, %p310
    %p312 = scmp.ne.s32.totalorder %s304, %s306
    %p313 = scmp.eq.s32.totalorder %s32, 1
    %p314 = por %p312, %p313
    %p315 = scmp.ne.s32.totalorder %s306, %s307
    %p316 = scmp.eq.s32.totalorder %s32, 0
    %p317 = por %p315, %p316
    %p318 = scmp.ne.s32.totalorder %s306, %s307
    %p319 = scmp.eq.s32.totalorder %s33, 1
    %p320 = por %p318, %p319
    %p322 = scmp.ne.s32.totalorder %s307, %s321
    %p323 = scmp.eq.s32.totalorder %s33, 0
    %p324 = por %p322, %p323
    %s326 = sadd.s32 %s325, 1
    %p329 = scmp.eq.s32.totalorder %s27, 1
    %p330 = scmp.ne.s32.totalorder %s325, %s327
    %p331 = scmp.eq.s32.totalorder %s27, 0
    %p332 = por %p330, %p331
    %p333 = scmp.ne.s32.totalorder %s325, %s327
    %p334 = scmp.eq.s32.totalorder %s32, 1
    %p335 = por %p333, %p334
    %p336 = scmp.ne.s32.totalorder %s327, %s328
    %p337 = scmp.eq.s32.totalorder %s32, 0
    %p338 = por %p336, %p337
    %p339 = scmp.ne.s32.totalorder %s327, %s328
    %p340 = scmp.eq.s32.totalorder %s33, 1
    %p341 = por %p339, %p340
    %p343 = scmp.ne.s32.totalorder %s328, %s342
    %p344 = scmp.eq.s32.totalorder %s33, 0
    %p345 = por %p343, %p344
    %s347 = sadd.s32 %s346, 1
    %p350 = scmp.eq.s32.totalorder %s27, 1
    %p351 = scmp.ne.s32.totalorder %s346, %s348
    %p352 = scmp.eq.s32.totalorder %s27, 0
    %p353 = por %p351, %p352
    %p354 = scmp.ne.s32.totalorder %s346, %s348
    %p355 = scmp.eq.s32.totalorder %s32, 1
    %p356 = por %p354, %p355
    %p357 = scmp.ne.s32.totalorder %s348, %s349
    %p358 = scmp.eq.s32.totalorder %s32, 0
    %p359 = por %p357, %p358
    %p360 = scmp.ne.s32.totalorder %s348, %s349
    %p361 = scmp.eq.s32.totalorder %s33, 1
    %p362 = por %p360, %p361
    %p364 = scmp.ne.s32.totalorder %s349, %s363
    %p365 = scmp.eq.s32.totalorder %s33, 0
    %p366 = por %p364, %p365
    %s368 = sadd.s32 %s367, 1
    %p371 = scmp.eq.s32.totalorder %s27, 1
    %p372 = scmp.ne.s32.totalorder %s367, %s369
    %p373 = scmp.eq.s32.totalorder %s27, 0
    %p374 = por %p372, %p373
    %p375 = scmp.ne.s32.totalorder %s367, %s369
    %p376 = scmp.eq.s32.totalorder %s32, 1
    %p377 = por %p375, %p376
    %p378 = scmp.ne.s32.totalorder %s369, %s370
    %p379 = scmp.eq.s32.totalorder %s32, 0
    %p380 = por %p378, %p379
    %p381 = scmp.ne.s32.totalorder %s369, %s370
    %p382 = scmp.eq.s32.totalorder %s33, 1
    %p383 = por %p381, %p382
    %p385 = scmp.ne.s32.totalorder %s370, %s384
    %p386 = scmp.eq.s32.totalorder %s33, 0
    %p387 = por %p385, %p386
    %s389 = sadd.s32 %s388, 1
    %p392 = scmp.eq.s32.totalorder %s27, 1
    %p393 = scmp.ne.s32.totalorder %s388, %s390
    %p394 = scmp.eq.s32.totalorder %s27, 0
    %p395 = por %p393, %p394
    %p396 = scmp.ne.s32.totalorder %s388, %s390
    %p397 = scmp.eq.s32.totalorder %s32, 1
    %p398 = por %p396, %p397
    %p399 = scmp.ne.s32.totalorder %s390, %s391
    %p400 = scmp.eq.s32.totalorder %s32, 0
    %p401 = por %p399, %p400
    %p402 = scmp.ne.s32.totalorder %s390, %s391
    %p403 = scmp.eq.s32.totalorder %s33, 1
    %p404 = por %p402, %p403
    %p406 = scmp.ne.s32.totalorder %s391, %s405
    %p407 = scmp.eq.s32.totalorder %s33, 0
    %p408 = por %p406, %p407
    %s410 = sadd.s32 %s409, 1
    %p413 = scmp.eq.s32.totalorder %s27, 1
    %p414 = scmp.ne.s32.totalorder %s409, %s411
    %p415 = scmp.eq.s32.totalorder %s27, 0
    %p416 = por %p414, %p415
    %p417 = scmp.ne.s32.totalorder %s409, %s411
    %p418 = scmp.eq.s32.totalorder %s32, 1
    %p419 = por %p417, %p418
    %p420 = scmp.ne.s32.totalorder %s411, %s412
    %p421 = scmp.eq.s32.totalorder %s32, 0
    %p422 = por %p420, %p421
    %p423 = scmp.ne.s32.totalorder %s411, %s412
    %p424 = scmp.eq.s32.totalorder %s33, 1
    %p425 = por %p423, %p424
    %p427 = scmp.ne.s32.totalorder %s412, %s426
    %p428 = scmp.eq.s32.totalorder %s33, 0
    %p429 = por %p427, %p428
    %s431 = sadd.s32 %s430, 1
    %p434 = scmp.eq.s32.totalorder %s27, 1
    %p435 = scmp.ne.s32.totalorder %s430, %s432
    %p436 = scmp.eq.s32.totalorder %s27, 0
    %p437 = por %p435, %p436
    %p438 = scmp.ne.s32.totalorder %s430, %s432
    %p439 = scmp.eq.s32.totalorder %s32, 1
    %p440 = por %p438, %p439
    %p441 = scmp.ne.s32.totalorder %s432, %s433
    %p442 = scmp.eq.s32.totalorder %s32, 0
    %p443 = por %p441, %p442
    %p444 = scmp.ne.s32.totalorder %s432, %s433
    %p445 = scmp.eq.s32.totalorder %s33, 1
    %p446 = por %p444, %p445
    %p448 = scmp.ne.s32.totalorder %s433, %s447
    %p449 = scmp.eq.s32.totalorder %s33, 0
    %p450 = por %p448, %p449
    %s451 = ssub.s32 %s34, %s46
    %s452 = ssub.s32 %s35, %s42
    %s453 = sor.u32 %s451, %s452
    %p454 = scmp.eq.s32.totalorder %s453, 0
    %s456 = sadd.s32 %s455, 1
    %s457 = scalar_select %p454, %s455, %s456
    %p460 = pneg %p454
    %p461 = scmp.eq.s32.totalorder %s27, 1
    %p462 = por %p460, %p461
    %p463 = scmp.ne.s32.totalorder %s455, %s458
    %p464 = scmp.eq.s32.totalorder %s27, 0
    %p465 = por %p463, %p464
    %p466 = scmp.ne.s32.totalorder %s455, %s458
    %p467 = scmp.eq.s32.totalorder %s32, 1
    %p468 = por %p466, %p467
    %p469 = scmp.ne.s32.totalorder %s458, %s459
    %p470 = scmp.eq.s32.totalorder %s32, 0
    %p471 = por %p469, %p470
    %p472 = scmp.ne.s32.totalorder %s458, %s459
    %p473 = scmp.eq.s32.totalorder %s33, 1
    %p474 = por %p472, %p473
    %p476 = scmp.ne.s32.totalorder %s459, %s475
    %p477 = scmp.eq.s32.totalorder %s33, 0
    %p478 = por %p476, %p477
    %s479 = ssub.s32 %s34, %s46
    %s480 = ssub.s32 %s35, %s42
    %s481 = sor.u32 %s479, %s480
    %p482 = scmp.eq.s32.totalorder %s481, 0
    %s484 = sadd.s32 %s483, 1
    %s485 = scalar_select %p482, %s483, %s484
    %p488 = pneg %p482
    %p489 = scmp.eq.s32.totalorder %s27, 1
    %p490 = por %p488, %p489
    %p491 = scmp.ne.s32.totalorder %s483, %s486
    %p492 = scmp.eq.s32.totalorder %s27, 0
    %p493 = por %p491, %p492
    %p494 = scmp.ne.s32.totalorder %s483, %s486
    %p495 = scmp.eq.s32.totalorder %s32, 1
    %p496 = por %p494, %p495
    %p497 = scmp.ne.s32.totalorder %s486, %s487
    %p498 = scmp.eq.s32.totalorder %s32, 0
    %p499 = por %p497, %p498
    %p500 = scmp.ne.s32.totalorder %s486, %s487
    %p501 = scmp.eq.s32.totalorder %s33, 1
    %p502 = por %p500, %p501
    %p504 = scmp.ne.s32.totalorder %s487, %s503
    %p505 = scmp.eq.s32.totalorder %s33, 0
    %p506 = por %p504, %p505
    %p507 = scmp.le.s32.totalorder 1, %s27
    %p508 = scmp.lt.s32.totalorder %s27, 3
    %p509 = pnand %p507, %p508
    %p510 = pneg %p509
    // Predicated region
    $region9: #{bert_embeddings_forward.4} parent=5 // pred_check
      _
    $region10: #{bert_embeddings_forward.4} parent=5 // pred_check_branch
      %512 = sbr.rel (%p509) target = $region12
    $region11: #{bert_embeddings_forward.4} parent=5 // pred_region
      %s513 = ssub.s32 %s27, 1
      // Predicated region
      $region13: #{bert_embeddings_forward.4} parent=11 // pred_check
        %p514 = pneg %p86
      $region14: #{bert_embeddings_forward.4} parent=11 // pred_check_branch
        %516 = sbr.rel (%p514) target = $region16
      $region15: #{bert_embeddings_forward.4} parent=11 // pred_region
        _
      $region16: #{bert_embeddings_forward.4} parent=11 // pred_fallthru
        _
      // Predicated region
      $region17: #{bert_embeddings_forward.4} parent=11 // pred_check
        %p517 = pneg %p107
      $region18: #{bert_embeddings_forward.4} parent=11 // pred_check_branch
        %519 = sbr.rel (%p517) target = $region20
      $region19: #{bert_embeddings_forward.4} parent=11 // pred_region
        _
      $region20: #{bert_embeddings_forward.4} parent=11 // pred_fallthru
        _
      // Predicated region
      $region21: #{bert_embeddings_forward.4} parent=11 // pred_check
        %p520 = pneg %p128
      $region22: #{bert_embeddings_forward.4} parent=11 // pred_check_branch
        %522 = sbr.rel (%p520) target = $region24
      $region23: #{bert_embeddings_forward.4} parent=11 // pred_region
        _
      $region24: #{bert_embeddings_forward.4} parent=11 // pred_fallthru
        _
      // Predicated region
      $region25: #{bert_embeddings_forward.4} parent=11 // pred_check
        %p523 = pneg %p149
      $region26: #{bert_embeddings_forward.4} parent=11 // pred_check_branch
        %525 = sbr.rel (%p523) target = $region28
      $region27: #{bert_embeddings_forward.4} parent=11 // pred_region
        _
      $region28: #{bert_embeddings_forward.4} parent=11 // pred_fallthru
        _
      // Predicated region
      $region29: #{bert_embeddings_forward.4} parent=11 // pred_check
        %p526 = pneg %p170
      $region30: #{bert_embeddings_forward.4} parent=11 // pred_check_branch
        %528 = sbr.rel (%p526) target = $region32
      $region31: #{bert_embeddings_forward.4} parent=11 // pred_region
        _
      $region32: #{bert_embeddings_forward.4} parent=11 // pred_fallthru
        _
      // Predicated region
      $region33: #{bert_embeddings_forward.4} parent=11 // pred_check
        %p529 = pneg %p191
      $region34: #{bert_embeddings_forward.4} parent=11 // pred_check_branch
        %531 = sbr.rel (%p529) target = $region36
      $region35: #{bert_embeddings_forward.4} parent=11 // pred_region
        _
      $region36: #{bert_embeddings_forward.4} parent=11 // pred_fallthru
        _
      // Predicated region
      $region37: #{bert_embeddings_forward.4} parent=11 // pred_check
        %p532 = pneg %p212
      $region38: #{bert_embeddings_forward.4} parent=11 // pred_check_branch
        %534 = sbr.rel (%p532) target = $region40
      $region39: #{bert_embeddings_forward.4} parent=11 // pred_region
        _
      $region40: #{bert_embeddings_forward.4} parent=11 // pred_fallthru
        _
      // Predicated region
      $region41: #{bert_embeddings_forward.4} parent=11 // pred_check
        %p535 = pneg %p233
      $region42: #{bert_embeddings_forward.4} parent=11 // pred_check_branch
        %537 = sbr.rel (%p535) target = $region44
      $region43: #{bert_embeddings_forward.4} parent=11 // pred_region
        _
      $region44: #{bert_embeddings_forward.4} parent=11 // pred_fallthru
        _
      // Predicated region
      $region45: #{bert_embeddings_forward.4} parent=11 // pred_check
        %p538 = pneg %p254
      $region46: #{bert_embeddings_forward.4} parent=11 // pred_check_branch
        %540 = sbr.rel (%p538) target = $region48
      $region47: #{bert_embeddings_forward.4} parent=11 // pred_region
        _
      $region48: #{bert_embeddings_forward.4} parent=11 // pred_fallthru
        _
      // Predicated region
      $region49: #{bert_embeddings_forward.4} parent=11 // pred_check
        %p541 = pneg %p275
      $region50: #{bert_embeddings_forward.4} parent=11 // pred_check_branch
        %543 = sbr.rel (%p541) target = $region52
      $region51: #{bert_embeddings_forward.4} parent=11 // pred_region
        _
      $region52: #{bert_embeddings_forward.4} parent=11 // pred_fallthru
        _
      // Predicated region
      $region53: #{bert_embeddings_forward.4} parent=11 // pred_check
        %p544 = pneg %p296
      $region54: #{bert_embeddings_forward.4} parent=11 // pred_check_branch
        %546 = sbr.rel (%p544) target = $region56
      $region55: #{bert_embeddings_forward.4} parent=11 // pred_region
        _
      $region56: #{bert_embeddings_forward.4} parent=11 // pred_fallthru
        _
      // Predicated region
      $region57: #{bert_embeddings_forward.4} parent=11 // pred_check
        %p547 = pneg %p317
      $region58: #{bert_embeddings_forward.4} parent=11 // pred_check_branch
        %549 = sbr.rel (%p547) target = $region60
      $region59: #{bert_embeddings_forward.4} parent=11 // pred_region
        _
      $region60: #{bert_embeddings_forward.4} parent=11 // pred_fallthru
        _
      // Predicated region
      $region61: #{bert_embeddings_forward.4} parent=11 // pred_check
        %p550 = pneg %p338
      $region62: #{bert_embeddings_forward.4} parent=11 // pred_check_branch
        %552 = sbr.rel (%p550) target = $region64
      $region63: #{bert_embeddings_forward.4} parent=11 // pred_region
        _
      $region64: #{bert_embeddings_forward.4} parent=11 // pred_fallthru
        _
      // Predicated region
      $region65: #{bert_embeddings_forward.4} parent=11 // pred_check
        %p553 = pneg %p359
      $region66: #{bert_embeddings_forward.4} parent=11 // pred_check_branch
        %555 = sbr.rel (%p553) target = $region68
      $region67: #{bert_embeddings_forward.4} parent=11 // pred_region
        _
      $region68: #{bert_embeddings_forward.4} parent=11 // pred_fallthru
        _
      // Predicated region
      $region69: #{bert_embeddings_forward.4} parent=11 // pred_check
        %p556 = pneg %p380
      $region70: #{bert_embeddings_forward.4} parent=11 // pred_check_branch
        %558 = sbr.rel (%p556) target = $region72
      $region71: #{bert_embeddings_forward.4} parent=11 // pred_region
        _
      $region72: #{bert_embeddings_forward.4} parent=11 // pred_fallthru
        _
      // Predicated region
      $region73: #{bert_embeddings_forward.4} parent=11 // pred_check
        %p559 = pneg %p401
      $region74: #{bert_embeddings_forward.4} parent=11 // pred_check_branch
        %561 = sbr.rel (%p559) target = $region76
      $region75: #{bert_embeddings_forward.4} parent=11 // pred_region
        _
      $region76: #{bert_embeddings_forward.4} parent=11 // pred_fallthru
        _
      // Predicated region
      $region77: #{bert_embeddings_forward.4} parent=11 // pred_check
        %p562 = pneg %p422
      $region78: #{bert_embeddings_forward.4} parent=11 // pred_check_branch
        %564 = sbr.rel (%p562) target = $region80
      $region79: #{bert_embeddings_forward.4} parent=11 // pred_region
        _
      $region80: #{bert_embeddings_forward.4} parent=11 // pred_fallthru
        _
      // Predicated region
      $region81: #{bert_embeddings_forward.4} parent=11 // pred_check
        %p565 = pneg %p443
      $region82: #{bert_embeddings_forward.4} parent=11 // pred_check_branch
        %567 = sbr.rel (%p565) target = $region84
      $region83: #{bert_embeddings_forward.4} parent=11 // pred_region
        _
      $region84: #{bert_embeddings_forward.4} parent=11 // pred_fallthru
        _
    $region12: #{bert_embeddings_forward.4} parent=5 // pred_fallthru
      _
    %p568 = scmp.lt.s32.totalorder %s27, 2
    // Predicated region
    $region85: #{bert_embeddings_forward.4} parent=5 // pred_check
      %p569 = pneg %p568
    $region86: #{bert_embeddings_forward.4} parent=5 // pred_check_branch
      %571 = sbr.rel (%p569) target = $region88
    $region87: #{bert_embeddings_forward.4} parent=5 // pred_region
      // Predicated region
      $region89: #{bert_embeddings_forward.4} parent=87 // pred_check
        %p572 = pneg %p59
      $region90: #{bert_embeddings_forward.4} parent=87 // pred_check_branch
        %574 = sbr.rel (%p572) target = $region92
      $region91: #{bert_embeddings_forward.4} parent=87 // pred_region
        %p575 = scmp.lt.s32.totalorder %s34, 1
        %s576 = scalar_select %p575, %s34, 1
        %s577 = smul.addr %s576, 8
        %s578 = scalar_lea.vmem %s0, %s577
      $region92: #{bert_embeddings_forward.4} parent=87 // pred_fallthru
        _
    $region88: #{bert_embeddings_forward.4} parent=5 // pred_fallthru
      _
    %p579 = scmp.le.s32.totalorder 1, %s27
    %p580 = scmp.lt.s32.totalorder %s27, 3
    %p581 = pnand %p579, %p580
    %p582 = pneg %p581
    // Predicated region
    $region93: #{bert_embeddings_forward.4} parent=5 // pred_check
      _
    $region94: #{bert_embeddings_forward.4} parent=5 // pred_check_branch
      %584 = sbr.rel (%p581) target = $region96
    $region95: #{bert_embeddings_forward.4} parent=5 // pred_region
      %s585 = ssub.s32 %s27, 1
      %p586 = scmp.lt.s32.totalorder %s36, 1
      %s587 = scalar_select %p586, %s36, 1
      %s588 = smul.addr %s587, 8
      %s589 = scalar_lea.vmem %s0, %s588
      %p590 = pneg %p65
      %p591 = pneg %p62
      %p592 = pneg %p86
      %p593 = pneg %p83
      %p594 = pneg %p107
      %p595 = pneg %p104
      %p596 = pneg %p128
      %p597 = pneg %p125
      %p598 = pneg %p149
      %p599 = pneg %p146
      %p600 = pneg %p170
      %p601 = pneg %p167
      %p602 = pneg %p191
      %p603 = pneg %p188
      %p604 = pneg %p212
      %p605 = pneg %p209
      %p606 = pneg %p233
      %p607 = pneg %p230
      %p608 = pneg %p254
      %p609 = pneg %p251
      %p610 = pneg %p275
      %p611 = pneg %p272
      %p612 = pneg %p296
      %p613 = pneg %p293
      %p614 = pneg %p317
      %p615 = pneg %p314
      %p616 = pneg %p338
      %p617 = pneg %p335
      %p618 = pneg %p359
      %p619 = pneg %p356
      %p620 = pneg %p380
      %p621 = pneg %p377
      %p622 = pneg %p401
      %p623 = pneg %p398
      %p624 = pneg %p422
      %p625 = pneg %p419
      %p626 = pneg %p443
      %p627 = pneg %p440
      %p628 = pneg %p471
      %p629 = pneg %p468
      %p630 = scmp.lt.s32.totalorder %s36, 1
      %s631 = scalar_select %p630, %s36, 1
      %p632 = scmp.lt.s32.totalorder %s37, 0
      %s633 = scalar_select %p632, %s37, 0
      %s634 = sadd.s32 %s633, %s631
      %s635 = smul.addr %s634, 4
      %s636 = scalar_lea.vmem %s19, %s635
      %p637 = pneg %p499
      %p638 = pneg %p496
      %p639 = scmp.lt.s32.totalorder %s36, 1
      %s640 = scalar_select %p639, %s36, 1
      %p641 = scmp.lt.s32.totalorder %s37, 0
      %s642 = scalar_select %p641, %s37, 0
      %s643 = sadd.s32 %s642, %s640
      %s644 = smul.addr %s643, 8
      %s645 = scalar_lea.vmem %s20, %s644
      %p646 = scmp.lt.s32.totalorder %s36, 1
      %s647 = scalar_select %p646, %s36, 1
      %s648 = smul.addr %s647, 8
      %s649 = scalar_lea.vmem %s0, %s648
      %p650 = scmp.lt.s32.totalorder %s36, 1
      %s651 = scalar_select %p650, %s36, 1
      %p652 = scmp.lt.s32.totalorder %s37, 0
      %s653 = scalar_select %p652, %s37, 0
      %s654 = sadd.s32 %s653, %s651
      %s655 = smul.addr %s654, 4
      %s656 = scalar_lea.vmem %s19, %s655
      %p657 = scmp.lt.s32.totalorder %s36, 1
      %s658 = scalar_select %p657, %s36, 1
      %p659 = scmp.lt.s32.totalorder %s37, 0
      %s660 = scalar_select %p659, %s37, 0
      %s661 = sadd.s32 %s660, %s658
      %s662 = smul.addr %s661, 8
      %s663 = scalar_lea.vmem %s20, %s662
      %v665 = vld [vmem:[%s649] sm:$0xff]
      %v666 = vld [vmem:[%s17] sm:$0x1]
      %v667 = vld [vmem:[%s18] sm:$0x1]
      %vm668 = vcmask 261120
      %v669 = vsel %vm668, %v665, 0.0
      %670 = vadd.xlane.f32.xlu0 %v669
      %v671 = vpop.xlane.xlu0 %670
      %v672 = vrcp.pop 32.0
      %v673 = vmul.f32 %v671, %v672
      %v674 = vsub.f32 %v665, %v673
      %v675 = vmul.f32 %v674, %v674
      %v676 = vsel %vm668, %v675, 0.0
      %677 = vadd.xlane.f32.xlu0 %v676
      %v678 = vpop.xlane.xlu0 %677
      %v679 = vmul.f32 %v678, %v672
      %v680 = vadd.f32 %v679, 1e-12
      %v681 = vrsqrt.pop %v680
      %v682 = vmul.f32 %v674, %v681
      %v684 = vlaneseq
      %v685 = vshrl.u32 %v684, 7
      %v686 = vsub.s32 0, %v685
      %v687 = vrot.slane %v666, %v686
      %v689 = vmul.f32 %v682, %v687
      %v691 = vlaneseq
      %v692 = vshrl.u32 %v691, 7
      %v693 = vsub.s32 0, %v692
      %v694 = vrot.slane %v667, %v693
      %v696 = vadd.f32 %v689, %v694
      %v697 = vpack.c.bf16 %v696, %v696
      %v698 = vld [vmem:[%s1] sm:$0xf]
      %v699 = vld [vmem:[%s1 + $0x4] sm:$0xf]
      %v700 = vld [vmem:[%s1 + $0x8] sm:$0xf]
      %v701 = vld [vmem:[%s1 + $0xc] sm:$0xf]
      %v702 = vld [vmem:[%s2] sm:$0x1]
      %v704 = vlaneseq
      %v705 = vshrl.u32 %v704, 7
      %v706 = vsub.s32 0, %v705
      %v707 = vrot.slane %v702, %v706
      %v713 = vunpack.c.l.b16 %v698
      %v714 = vunpack.c.l.b16 %v699
      %v715 = vunpack.c.l.b16 %v700
      %v716 = vunpack.c.l.b16 %v701
      %v717 = vpack.c.b16 %v714, %v713
      %v718 = vpack.c.b16 %v716, %v715
      %v722 = vsel %vm668, %v697, 0
      %724 = vmatprep.subr.bf16.mxu0 0
      %725 = vmatpush1.bf16.msra.mxu0 0
      %726 = vmatprep.subr.bf16.mxu0 0
      %727 = vmatpush1.bf16.msra.mxu0 0
      %728 = vmatprep.subr.bf16.mxu0 0
      %729 = vmatpush1.bf16.msra.mxu0 0
      %730 = vmatprep.subr.bf16.mxu0 0
      %731 = vmatpush1.bf16.msra.mxu0 0
      %732 = vmatprep.subr.bf16.mxu0 0
      %733 = vmatpush1.bf16.msra.mxu0 0
      %734 = vmatprep.subr.bf16.mxu0 0
      %735 = vmatpush1.bf16.msra.mxu0 0
      %736 = vmatprep.subr.bf16.mxu0 0
      %737 = vmatpush1.bf16.msra.mxu0 %v718
      %738 = vmatprep.subr.bf16.mxu0 0
      %739 = vmatpush1.bf16.msra.mxu0 %v717
      %740 = vmatprep.subr.bf16.mxu0 0
      %741 = vmatpush2.bf16.msra.mxu0 0
      %742 = vmatprep.subr.bf16.mxu0 0
      %743 = vmatpush2.bf16.msra.mxu0 0
      %744 = vmatprep.subr.bf16.mxu0 0
      %745 = vmatpush2.bf16.msra.mxu0 0
      %746 = vmatprep.subr.bf16.mxu0 0
      %747 = vmatpush2.bf16.msra.mxu0 0
      %748 = vmatprep.subr.bf16.mxu0 0
      %749 = vmatpush2.bf16.msra.mxu0 0
      %750 = vmatprep.subr.bf16.mxu0 0
      %751 = vmatpush2.bf16.msra.mxu0 0
      %752 = vmatprep.subr.bf16.mxu0 0
      %753 = vmatpush2.bf16.msra.mxu0 0
      %754 = vmatprep.subr.bf16.mxu0 0
      %755 = vmatpush2.bf16.msra.mxu0 0
      %756 = vmatprep.mubr.bf16.mxu0 0
      %757 = vmatmul.mubr.bf16.gmra.mxu0 %v722
      %v758 = vpop.f32.mrf.mxu0
      %v759 = vadd.f32 %v707, %v758
      %v760 = vpop.f32.mrf.mxu0
      %v761 = vpop.f32.mrf.mxu0
      %v762 = vpop.f32.mrf.mxu0
      %763 = vdwg.mxu0
      %v764 = vld [vmem:[%s3] sm:$0xf]
      %v765 = vld [vmem:[%s3 + $0x4] sm:$0xf]
      %v766 = vld [vmem:[%s3 + $0x8] sm:$0xf]
      %v767 = vld [vmem:[%s3 + $0xc] sm:$0xf]
      %v768 = vld [vmem:[%s4] sm:$0x1]
      %v770 = vlaneseq
      %v771 = vshrl.u32 %v770, 7
      %v772 = vsub.s32 0, %v771
      %v773 = vrot.slane %v768, %v772
      %v779 = vunpack.c.l.b16 %v764
      %v780 = vunpack.c.l.b16 %v765
      %v781 = vunpack.c.l.b16 %v766
      %v782 = vunpack.c.l.b16 %v767
      %v783 = vpack.c.b16 %v780, %v779
      %v784 = vpack.c.b16 %v782, %v781
      %787 = vmatprep.subr.bf16.mxu0 0
      %788 = vmatpush1.bf16.msra.mxu0 0
      %789 = vmatprep.subr.bf16.mxu0 0
      %790 = vmatpush1.bf16.msra.mxu0 0
      %791 = vmatprep.subr.bf16.mxu0 0
      %792 = vmatpush1.bf16.msra.mxu0 0
      %793 = vmatprep.subr.bf16.mxu0 0
      %794 = vmatpush1.bf16.msra.mxu0 0
      %795 = vmatprep.subr.bf16.mxu0 0
      %796 = vmatpush1.bf16.msra.mxu0 0
      %797 = vmatprep.subr.bf16.mxu0 0
      %798 = vmatpush1.bf16.msra.mxu0 0
      %799 = vmatprep.subr.bf16.mxu0 0
      %800 = vmatpush1.bf16.msra.mxu0 %v784
      %801 = vmatprep.subr.bf16.mxu0 0
      %802 = vmatpush1.bf16.msra.mxu0 %v783
      %803 = vmatprep.subr.bf16.mxu0 0
      %804 = vmatpush2.bf16.msra.mxu0 0
      %805 = vmatprep.subr.bf16.mxu0 0
      %806 = vmatpush2.bf16.msra.mxu0 0
      %807 = vmatprep.subr.bf16.mxu0 0
      %808 = vmatpush2.bf16.msra.mxu0 0
      %809 = vmatprep.subr.bf16.mxu0 0
      %810 = vmatpush2.bf16.msra.mxu0 0
      %811 = vmatprep.subr.bf16.mxu0 0
      %812 = vmatpush2.bf16.msra.mxu0 0
      %813 = vmatprep.subr.bf16.mxu0 0
      %814 = vmatpush2.bf16.msra.mxu0 0
      %815 = vmatprep.subr.bf16.mxu0 0
      %816 = vmatpush2.bf16.msra.mxu0 0
      %817 = vmatprep.subr.bf16.mxu0 0
      %818 = vmatpush2.bf16.msra.mxu0 0
      %819 = vmatprep.mubr.bf16.mxu0 0
      %820 = vmatmul.mubr.bf16.gmra.mxu0 %v722
      %v821 = vpop.f32.mrf.mxu0
      %v822 = vadd.f32 %v773, %v821
      %v823 = vpop.f32.mrf.mxu0
      %v824 = vpop.f32.mrf.mxu0
      %v825 = vpop.f32.mrf.mxu0
      %826 = vdwg.mxu0
      %v827 = vld [vmem:[%s5] sm:$0xf]
      %v828 = vld [vmem:[%s5 + $0x4] sm:$0xf]
      %v829 = vld [vmem:[%s5 + $0x8] sm:$0xf]
      %v830 = vld [vmem:[%s5 + $0xc] sm:$0xf]
      %v831 = vld [vmem:[%s6] sm:$0x1]
      %v833 = vlaneseq
      %v834 = vshrl.u32 %v833, 7
      %v835 = vsub.s32 0, %v834
      %v836 = vrot.slane %v831, %v835
      %v842 = vunpack.c.l.b16 %v827
      %v843 = vunpack.c.l.b16 %v828
      %v844 = vunpack.c.l.b16 %v829
      %v845 = vunpack.c.l.b16 %v830
      %v846 = vpack.c.b16 %v843, %v842
      %v847 = vpack.c.b16 %v845, %v844
      %850 = vmatprep.subr.bf16.mxu0 0
      %851 = vmatpush1.bf16.msra.mxu0 0
      %852 = vmatprep.subr.bf16.mxu0 0
      %853 = vmatpush1.bf16.msra.mxu0 0
      %854 = vmatprep.subr.bf16.mxu0 0
      %855 = vmatpush1.bf16.msra.mxu0 0
      %856 = vmatprep.subr.bf16.mxu0 0
      %857 = vmatpush1.bf16.msra.mxu0 0
      %858 = vmatprep.subr.bf16.mxu0 0
      %859 = vmatpush1.bf16.msra.mxu0 0
      %860 = vmatprep.subr.bf16.mxu0 0
      %861 = vmatpush1.bf16.msra.mxu0 0
      %862 = vmatprep.subr.bf16.mxu0 0
      %863 = vmatpush1.bf16.msra.mxu0 %v847
      %864 = vmatprep.subr.bf16.mxu0 0
      %865 = vmatpush1.bf16.msra.mxu0 %v846
      %866 = vmatprep.subr.bf16.mxu0 0
      %867 = vmatpush2.bf16.msra.mxu0 0
      %868 = vmatprep.subr.bf16.mxu0 0
      %869 = vmatpush2.bf16.msra.mxu0 0
      %870 = vmatprep.subr.bf16.mxu0 0
      %871 = vmatpush2.bf16.msra.mxu0 0
      %872 = vmatprep.subr.bf16.mxu0 0
      %873 = vmatpush2.bf16.msra.mxu0 0
      %874 = vmatprep.subr.bf16.mxu0 0
      %875 = vmatpush2.bf16.msra.mxu0 0
      %876 = vmatprep.subr.bf16.mxu0 0
      %877 = vmatpush2.bf16.msra.mxu0 0
      %878 = vmatprep.subr.bf16.mxu0 0
      %879 = vmatpush2.bf16.msra.mxu0 0
      %880 = vmatprep.subr.bf16.mxu0 0
      %881 = vmatpush2.bf16.msra.mxu0 0
      %882 = vmatprep.mubr.bf16.mxu0 0
      %883 = vmatmul.mubr.bf16.gmra.mxu0 %v722
      %v884 = vpop.f32.mrf.mxu0
      %v885 = vadd.f32 %v836, %v884
      %v886 = vpop.f32.mrf.mxu0
      %v887 = vpop.f32.mrf.mxu0
      %v888 = vpop.f32.mrf.mxu0
      %889 = vdwg.mxu0
      %v890 = vpack.c.bf16 %v759, %v759
      %v891 = vpack.c.bf16 %v822, %v822
      %v892 = vpack.c.bf16 %v885, %v885
      %vm893 = vcmask 64512
      %v895 = vsel %vm893, %v890, 0
      %v898 = vsel %vm893, %v891, 0
      %900 = vmatprep.subr.bf16.mxu0 0
      %901 = vmatpush1.bf16.xpose.msra.mxu0 0
      %902 = vmatprep.subr.bf16.mxu0 0
      %903 = vmatpush1.bf16.xpose.msra.mxu0 0
      %904 = vmatprep.subr.bf16.mxu0 0
      %905 = vmatpush1.bf16.xpose.msra.mxu0 0
      %906 = vmatprep.subr.bf16.mxu0 0
      %907 = vmatpush1.bf16.xpose.msra.mxu0 0
      %908 = vmatprep.subr.bf16.mxu0 0
      %909 = vmatpush1.bf16.xpose.msra.mxu0 0
      %910 = vmatprep.subr.bf16.mxu0 0
      %911 = vmatpush1.bf16.xpose.msra.mxu0 0
      %912 = vmatprep.subr.bf16.mxu0 0
      %913 = vmatpush1.bf16.xpose.msra.mxu0 0
      %914 = vmatprep.subr.bf16.mxu0 0
      %915 = vmatpush1.bf16.xpose.msra.mxu0 %v898
      %916 = vmatprep.subr.bf16.mxu0 0
      %917 = vmatpush2.bf16.xpose.msra.mxu0 0
      %918 = vmatprep.subr.bf16.mxu0 0
      %919 = vmatpush2.bf16.xpose.msra.mxu0 0
      %920 = vmatprep.subr.bf16.mxu0 0
      %921 = vmatpush2.bf16.xpose.msra.mxu0 0
      %922 = vmatprep.subr.bf16.mxu0 0
      %923 = vmatpush2.bf16.xpose.msra.mxu0 0
      %924 = vmatprep.subr.bf16.mxu0 0
      %925 = vmatpush2.bf16.xpose.msra.mxu0 0
      %926 = vmatprep.subr.bf16.mxu0 0
      %927 = vmatpush2.bf16.xpose.msra.mxu0 0
      %928 = vmatprep.subr.bf16.mxu0 0
      %929 = vmatpush2.bf16.xpose.msra.mxu0 0
      %930 = vmatprep.subr.bf16.mxu0 0
      %931 = vmatpush2.bf16.xpose.msra.mxu0 0
      %932 = vmatprep.mubr.bf16.mxu0 0
      %933 = vmatmul.mubr.bf16.gmra.mxu0 %v895
      %v934 = vpop.f32.mrf.mxu0
      %v935 = vadd.f32 0.0, %v934
      %v936 = vpop.f32.mrf.mxu0
      %v937 = vpop.f32.mrf.mxu0
      %v938 = vpop.f32.mrf.mxu0
      %939 = vdwg.mxu0
      %v940 = vsel %vm893, %v935, -inf
      %941 = vmax.xlane.f32.xlu0 %v940
      %v942 = vpop.xlane.xlu0 %941
      %v943 = vsub.f32 %v935, %v942
      %v944 = vmul.f32 %v943, 1.442695
      %v945 = vpow.pop %v944
      %v946 = vsel %vm893, %v945, 0.0
      %947 = vadd.xlane.f32.xlu0 %v946
      %v948 = vpop.xlane.xlu0 %947
      %v949 = vrcp.pop %v948
      %v950 = vmul.f32 %v945, %v949
      %v951 = vpack.c.bf16 %v950, %v950
      %v953 = vsel %vm893, %v951, 0
      %vm955 = vcmask 1043456
      %v957 = vsel %vm955, %v892, 0
      %959 = vmatprep.subr.bf16.mxu0 0
      %960 = vmatpush1.bf16.msra.mxu0 0
      %961 = vmatprep.subr.bf16.mxu0 0
      %962 = vmatpush1.bf16.msra.mxu0 0
      %963 = vmatprep.subr.bf16.mxu0 0
      %964 = vmatpush1.bf16.msra.mxu0 0
      %965 = vmatprep.subr.bf16.mxu0 0
      %966 = vmatpush1.bf16.msra.mxu0 0
      %967 = vmatprep.subr.bf16.mxu0 0
      %968 = vmatpush1.bf16.msra.mxu0 0
      %969 = vmatprep.subr.bf16.mxu0 0
      %970 = vmatpush1.bf16.msra.mxu0 0
      %971 = vmatprep.subr.bf16.mxu0 0
      %972 = vmatpush1.bf16.msra.mxu0 0
      %973 = vmatprep.subr.bf16.mxu0 0
      %974 = vmatpush1.bf16.msra.mxu0 %v957
      %975 = vmatprep.subr.bf16.mxu0 0
      %976 = vmatpush2.bf16.msra.mxu0 0
      %977 = vmatprep.subr.bf16.mxu0 0
      %978 = vmatpush2.bf16.msra.mxu0 0
      %979 = vmatprep.subr.bf16.mxu0 0
      %980 = vmatpush2.bf16.msra.mxu0 0
      %981 = vmatprep.subr.bf16.mxu0 0
      %982 = vmatpush2.bf16.msra.mxu0 0
      %983 = vmatprep.subr.bf16.mxu0 0
      %984 = vmatpush2.bf16.msra.mxu0 0
      %985 = vmatprep.subr.bf16.mxu0 0
      %986 = vmatpush2.bf16.msra.mxu0 0
      %987 = vmatprep.subr.bf16.mxu0 0
      %988 = vmatpush2.bf16.msra.mxu0 0
      %989 = vmatprep.subr.bf16.mxu0 0
      %990 = vmatpush2.bf16.msra.mxu0 0
      %991 = vmatprep.mubr.bf16.mxu0 0
      %992 = vmatmul.mubr.bf16.gmra.mxu0 %v953
      %v993 = vpop.f32.mrf.mxu0
      %v994 = vadd.f32 0.0, %v993
      %v995 = vpop.f32.mrf.mxu0
      %v996 = vpop.f32.mrf.mxu0
      %v997 = vpop.f32.mrf.mxu0
      %998 = vdwg.mxu0
      %v999 = vpack.c.bf16 %v994, %v994
      %vm1000 = vcmask 60416
      %1001 = vst.msk [vmem:[#allocation2] sm:$0xf] %vm1000, %v999
      %1003 = vrot.lane.b32.xlu0 %v890, 120
      %v1004 = vpop.permute.xlu0 %1003
      %1006 = vrot.lane.b32.xlu0 %v891, 120
      %v1007 = vpop.permute.xlu0 %1006
      %v1009 = vsel %vm893, %v1004, 0
      %v1012 = vsel %vm893, %v1007, 0
      %1014 = vmatprep.subr.bf16.mxu0 0
      %1015 = vmatpush1.bf16.xpose.msra.mxu0 0
      %1016 = vmatprep.subr.bf16.mxu0 0
      %1017 = vmatpush1.bf16.xpose.msra.mxu0 0
      %1018 = vmatprep.subr.bf16.mxu0 0
      %1019 = vmatpush1.bf16.xpose.msra.mxu0 0
      %1020 = vmatprep.subr.bf16.mxu0 0
      %1021 = vmatpush1.bf16.xpose.msra.mxu0 0
      %1022 = vmatprep.subr.bf16.mxu0 0
      %1023 = vmatpush1.bf16.xpose.msra.mxu0 0
      %1024 = vmatprep.subr.bf16.mxu0 0
      %1025 = vmatpush1.bf16.xpose.msra.mxu0 0
      %1026 = vmatprep.subr.bf16.mxu0 0
      %1027 = vmatpush1.bf16.xpose.msra.mxu0 0
      %1028 = vmatprep.subr.bf16.mxu0 0
      %1029 = vmatpush1.bf16.xpose.msra.mxu0 %v1012
      %1030 = vmatprep.subr.bf16.mxu0 0
      %1031 = vmatpush2.bf16.xpose.msra.mxu0 0
      %1032 = vmatprep.subr.bf16.mxu0 0
      %1033 = vmatpush2.bf16.xpose.msra.mxu0 0
      %1034 = vmatprep.subr.bf16.mxu0 0
      %1035 = vmatpush2.bf16.xpose.msra.mxu0 0
      %1036 = vmatprep.subr.bf16.mxu0 0
      %1037 = vmatpush2.bf16.xpose.msra.mxu0 0
      %1038 = vmatprep.subr.bf16.mxu0 0
      %1039 = vmatpush2.bf16.xpose.msra.mxu0 0
      %1040 = vmatprep.subr.bf16.mxu0 0
      %1041 = vmatpush2.bf16.xpose.msra.mxu0 0
      %1042 = vmatprep.subr.bf16.mxu0 0
      %1043 = vmatpush2.bf16.xpose.msra.mxu0 0
      %1044 = vmatprep.subr.bf16.mxu0 0
      %1045 = vmatpush2.bf16.xpose.msra.mxu0 0
      %1046 = vmatprep.mubr.bf16.mxu0 0
      %1047 = vmatmul.mubr.bf16.gmra.mxu0 %v1009
      %v1048 = vpop.f32.mrf.mxu0
      %v1049 = vadd.f32 0.0, %v1048
      %v1050 = vpop.f32.mrf.mxu0
      %v1051 = vpop.f32.mrf.mxu0
      %v1052 = vpop.f32.mrf.mxu0
      %1053 = vdwg.mxu0
      %v1054 = vsel %vm893, %v1049, -inf
      %1055 = vmax.xlane.f32.xlu0 %v1054
      %v1056 = vpop.xlane.xlu0 %1055
      %v1057 = vsub.f32 %v1049, %v1056
      %v1058 = vmul.f32 %v1057, 1.442695
      %v1059 = vpow.pop %v1058
      %v1060 = vsel %vm893, %v1059, 0.0
      %1061 = vadd.xlane.f32.xlu0 %v1060
      %v1062 = vpop.xlane.xlu0 %1061
      %v1063 = vrcp.pop %v1062
      %v1064 = vmul.f32 %v1059, %v1063
      %v1065 = vpack.c.bf16 %v1064, %v1064
      %1067 = vrot.lane.b32.xlu0 %v892, 120
      %v1068 = vpop.permute.xlu0 %1067
      %v1070 = vsel %vm893, %v1065, 0
      %v1073 = vsel %vm955, %v1068, 0
      %1075 = vmatprep.subr.bf16.mxu0 0
      %1076 = vmatpush1.bf16.msra.mxu0 0
      %1077 = vmatprep.subr.bf16.mxu0 0
      %1078 = vmatpush1.bf16.msra.mxu0 0
      %1079 = vmatprep.subr.bf16.mxu0 0
      %1080 = vmatpush1.bf16.msra.mxu0 0
      %1081 = vmatprep.subr.bf16.mxu0 0
      %1082 = vmatpush1.bf16.msra.mxu0 0
      %1083 = vmatprep.subr.bf16.mxu0 0
      %1084 = vmatpush1.bf16.msra.mxu0 0
      %1085 = vmatprep.subr.bf16.mxu0 0
      %1086 = vmatpush1.bf16.msra.mxu0 0
      %1087 = vmatprep.subr.bf16.mxu0 0
      %1088 = vmatpush1.bf16.msra.mxu0 0
      %1089 = vmatprep.subr.bf16.mxu0 0
      %1090 = vmatpush1.bf16.msra.mxu0 %v1073
      %1091 = vmatprep.subr.bf16.mxu0 0
      %1092 = vmatpush2.bf16.msra.mxu0 0
      %1093 = vmatprep.subr.bf16.mxu0 0
      %1094 = vmatpush2.bf16.msra.mxu0 0
      %1095 = vmatprep.subr.bf16.mxu0 0
      %1096 = vmatpush2.bf16.msra.mxu0 0
      %1097 = vmatprep.subr.bf16.mxu0 0
      %1098 = vmatpush2.bf16.msra.mxu0 0
      %1099 = vmatprep.subr.bf16.mxu0 0
      %1100 = vmatpush2.bf16.msra.mxu0 0
      %1101 = vmatprep.subr.bf16.mxu0 0
      %1102 = vmatpush2.bf16.msra.mxu0 0
      %1103 = vmatprep.subr.bf16.mxu0 0
      %1104 = vmatpush2.bf16.msra.mxu0 0
      %1105 = vmatprep.subr.bf16.mxu0 0
      %1106 = vmatpush2.bf16.msra.mxu0 0
      %1107 = vmatprep.mubr.bf16.mxu0 0
      %1108 = vmatmul.mubr.bf16.gmra.mxu0 %v1070
      %v1109 = vpop.f32.mrf.mxu0
      %v1110 = vadd.f32 0.0, %v1109
      %v1111 = vpop.f32.mrf.mxu0
      %v1112 = vpop.f32.mrf.mxu0
      %v1113 = vpop.f32.mrf.mxu0
      %1114 = vdwg.mxu0
      %v1115 = vpack.c.bf16 %v1110, %v1110
      %v1117 = vunpack.c.l.b16 %v1115
      %v1118 = vpack.c.b16 %v1117, %v1117
      %1119 = vrot.lane.b32.xlu0 %v1118, 8
      %v1120 = vpop.permute.xlu0 %1119
      %vm1122 = vcmask 126016
      %1123 = vst.msk [vmem:[#allocation2] sm:$0xf] %vm1122, %v1120
      %1124 = vrot.lane.b32.xlu0 %v890, 112
      %v1125 = vpop.permute.xlu0 %1124
      %1126 = vrot.lane.b32.xlu0 %v891, 112
      %v1127 = vpop.permute.xlu0 %1126
      %v1129 = vsel %vm893, %v1125, 0
      %v1132 = vsel %vm893, %v1127, 0
      %1134 = vmatprep.subr.bf16.mxu0 0
      %1135 = vmatpush1.bf16.xpose.msra.mxu0 0
      %1136 = vmatprep.subr.bf16.mxu0 0
      %1137 = vmatpush1.bf16.xpose.msra.mxu0 0
      %1138 = vmatprep.subr.bf16.mxu0 0
      %1139 = vmatpush1.bf16.xpose.msra.mxu0 0
      %1140 = vmatprep.subr.bf16.mxu0 0
      %1141 = vmatpush1.bf16.xpose.msra.mxu0 0
      %1142 = vmatprep.subr.bf16.mxu0 0
      %1143 = vmatpush1.bf16.xpose.msra.mxu0 0
      %1144 = vmatprep.subr.bf16.mxu0 0
      %1145 = vmatpush1.bf16.xpose.msra.mxu0 0
      %1146 = vmatprep.subr.bf16.mxu0 0
      %1147 = vmatpush1.bf16.xpose.msra.mxu0 0
      %1148 = vmatprep.subr.bf16.mxu0 0
      %1149 = vmatpush1.bf16.xpose.msra.mxu0 %v1132
      %1150 = vmatprep.subr.bf16.mxu0 0
      %1151 = vmatpush2.bf16.xpose.msra.mxu0 0
      %1152 = vmatprep.subr.bf16.mxu0 0
      %1153 = vmatpush2.bf16.xpose.msra.mxu0 0
      %1154 = vmatprep.subr.bf16.mxu0 0
      %1155 = vmatpush2.bf16.xpose.msra.mxu0 0
      %1156 = vmatprep.subr.bf16.mxu0 0
      %1157 = vmatpush2.bf16.xpose.msra.mxu0 0
      %1158 = vmatprep.subr.bf16.mxu0 0
      %1159 = vmatpush2.bf16.xpose.msra.mxu0 0
      %1160 = vmatprep.subr.bf16.mxu0 0
      %1161 = vmatpush2.bf16.xpose.msra.mxu0 0
      %1162 = vmatprep.subr.bf16.mxu0 0
      %1163 = vmatpush2.bf16.xpose.msra.mxu0 0
      %1164 = vmatprep.subr.bf16.mxu0 0
      %1165 = vmatpush2.bf16.xpose.msra.mxu0 0
      %1166 = vmatprep.mubr.bf16.mxu0 0
      %1167 = vmatmul.mubr.bf16.gmra.mxu0 %v1129
      %v1168 = vpop.f32.mrf.mxu0
      %v1169 = vadd.f32 0.0, %v1168
      %v1170 = vpop.f32.mrf.mxu0
      %v1171 = vpop.f32.mrf.mxu0
      %v1172 = vpop.f32.mrf.mxu0
      %1173 = vdwg.mxu0
      %v1174 = vsel %vm893, %v1169, -inf
      %1175 = vmax.xlane.f32.xlu0 %v1174
      %v1176 = vpop.xlane.xlu0 %1175
      %v1177 = vsub.f32 %v1169, %v1176
      %v1178 = vmul.f32 %v1177, 1.442695
      %v1179 = vpow.pop %v1178
      %v1180 = vsel %vm893, %v1179, 0.0
      %1181 = vadd.xlane.f32.xlu0 %v1180
      %v1182 = vpop.xlane.xlu0 %1181
      %v1183 = vrcp.pop %v1182
      %v1184 = vmul.f32 %v1179, %v1183
      %v1185 = vpack.c.bf16 %v1184, %v1184
      %1186 = vrot.lane.b32.xlu0 %v892, 112
      %v1187 = vpop.permute.xlu0 %1186
      %v1189 = vsel %vm893, %v1185, 0
      %v1192 = vsel %vm955, %v1187, 0
      %1194 = vmatprep.subr.bf16.mxu0 0
      %1195 = vmatpush1.bf16.msra.mxu0 0
      %1196 = vmatprep.subr.bf16.mxu0 0
      %1197 = vmatpush1.bf16.msra.mxu0 0
      %1198 = vmatprep.subr.bf16.mxu0 0
      %1199 = vmatpush1.bf16.msra.mxu0 0
      %1200 = vmatprep.subr.bf16.mxu0 0
      %1201 = vmatpush1.bf16.msra.mxu0 0
      %1202 = vmatprep.subr.bf16.mxu0 0
      %1203 = vmatpush1.bf16.msra.mxu0 0
      %1204 = vmatprep.subr.bf16.mxu0 0
      %1205 = vmatpush1.bf16.msra.mxu0 0
      %1206 = vmatprep.subr.bf16.mxu0 0
      %1207 = vmatpush1.bf16.msra.mxu0 0
      %1208 = vmatprep.subr.bf16.mxu0 0
      %1209 = vmatpush1.bf16.msra.mxu0 %v1192
      %1210 = vmatprep.subr.bf16.mxu0 0
      %1211 = vmatpush2.bf16.msra.mxu0 0
      %1212 = vmatprep.subr.bf16.mxu0 0
      %1213 = vmatpush2.bf16.msra.mxu0 0
      %1214 = vmatprep.subr.bf16.mxu0 0
      %1215 = vmatpush2.bf16.msra.mxu0 0
      %1216 = vmatprep.subr.bf16.mxu0 0
      %1217 = vmatpush2.bf16.msra.mxu0 0
      %1218 = vmatprep.subr.bf16.mxu0 0
      %1219 = vmatpush2.bf16.msra.mxu0 0
      %1220 = vmatprep.subr.bf16.mxu0 0
      %1221 = vmatpush2.bf16.msra.mxu0 0
      %1222 = vmatprep.subr.bf16.mxu0 0
      %1223 = vmatpush2.bf16.msra.mxu0 0
      %1224 = vmatprep.subr.bf16.mxu0 0
      %1225 = vmatpush2.bf16.msra.mxu0 0
      %1226 = vmatprep.mubr.bf16.mxu0 0
      %1227 = vmatmul.mubr.bf16.gmra.mxu0 %v1189
      %v1228 = vpop.f32.mrf.mxu0
      %v1229 = vadd.f32 0.0, %v1228
      %v1230 = vpop.f32.mrf.mxu0
      %v1231 = vpop.f32.mrf.mxu0
      %v1232 = vpop.f32.mrf.mxu0
      %1233 = vdwg.mxu0
      %v1234 = vpack.c.bf16 %v1229, %v1229
      %v1236 = vunpack.c.l.b16 %v1234
      %v1237 = vpack.c.b16 %v1236, %v1236
      %1238 = vrot.lane.b32.xlu0 %v1237, 16
      %v1239 = vpop.permute.xlu0 %1238
      %vm1241 = vcmask 191616
      %1242 = vst.msk [vmem:[#allocation2] sm:$0xf] %vm1241, %v1239
      %1243 = vrot.lane.b32.xlu0 %v890, 104
      %v1244 = vpop.permute.xlu0 %1243
      %1245 = vrot.lane.b32.xlu0 %v891, 104
      %v1246 = vpop.permute.xlu0 %1245
      %v1248 = vsel %vm893, %v1244, 0
      %v1251 = vsel %vm893, %v1246, 0
      %1253 = vmatprep.subr.bf16.mxu0 0
      %1254 = vmatpush1.bf16.xpose.msra.mxu0 0
      %1255 = vmatprep.subr.bf16.mxu0 0
      %1256 = vmatpush1.bf16.xpose.msra.mxu0 0
      %1257 = vmatprep.subr.bf16.mxu0 0
      %1258 = vmatpush1.bf16.xpose.msra.mxu0 0
      %1259 = vmatprep.subr.bf16.mxu0 0
      %1260 = vmatpush1.bf16.xpose.msra.mxu0 0
      %1261 = vmatprep.subr.bf16.mxu0 0
      %1262 = vmatpush1.bf16.xpose.msra.mxu0 0
      %1263 = vmatprep.subr.bf16.mxu0 0
      %1264 = vmatpush1.bf16.xpose.msra.mxu0 0
      %1265 = vmatprep.subr.bf16.mxu0 0
      %1266 = vmatpush1.bf16.xpose.msra.mxu0 0
      %1267 = vmatprep.subr.bf16.mxu0 0
      %1268 = vmatpush1.bf16.xpose.msra.mxu0 %v1251
      %1269 = vmatprep.subr.bf16.mxu0 0
      %1270 = vmatpush2.bf16.xpose.msra.mxu0 0
      %1271 = vmatprep.subr.bf16.mxu0 0
      %1272 = vmatpush2.bf16.xpose.msra.mxu0 0
      %1273 = vmatprep.subr.bf16.mxu0 0
      %1274 = vmatpush2.bf16.xpose.msra.mxu0 0
      %1275 = vmatprep.subr.bf16.mxu0 0
      %1276 = vmatpush2.bf16.xpose.msra.mxu0 0
      %1277 = vmatprep.subr.bf16.mxu0 0
      %1278 = vmatpush2.bf16.xpose.msra.mxu0 0
      %1279 = vmatprep.subr.bf16.mxu0 0
      %1280 = vmatpush2.bf16.xpose.msra.mxu0 0
      %1281 = vmatprep.subr.bf16.mxu0 0
      %1282 = vmatpush2.bf16.xpose.msra.mxu0 0
      %1283 = vmatprep.subr.bf16.mxu0 0
      %1284 = vmatpush2.bf16.xpose.msra.mxu0 0
      %1285 = vmatprep.mubr.bf16.mxu0 0
      %1286 = vmatmul.mubr.bf16.gmra.mxu0 %v1248
      %v1287 = vpop.f32.mrf.mxu0
      %v1288 = vadd.f32 0.0, %v1287
      %v1289 = vpop.f32.mrf.mxu0
      %v1290 = vpop.f32.mrf.mxu0
      %v1291 = vpop.f32.mrf.mxu0
      %1292 = vdwg.mxu0
      %v1293 = vsel %vm893, %v1288, -inf
      %1294 = vmax.xlane.f32.xlu0 %v1293
      %v1295 = vpop.xlane.xlu0 %1294
      %v1296 = vsub.f32 %v1288, %v1295
      %v1297 = vmul.f32 %v1296, 1.442695
      %v1298 = vpow.pop %v1297
      %v1299 = vsel %vm893, %v1298, 0.0
      %1300 = vadd.xlane.f32.xlu0 %v1299
      %v1301 = vpop.xlane.xlu0 %1300
      %v1302 = vrcp.pop %v1301
      %v1303 = vmul.f32 %v1298, %v1302
      %v1304 = vpack.c.bf16 %v1303, %v1303
      %1305 = vrot.lane.b32.xlu0 %v892, 104
      %v1306 = vpop.permute.xlu0 %1305
      %v1308 = vsel %vm893, %v1304, 0
      %v1311 = vsel %vm955, %v1306, 0
      %1313 = vmatprep.subr.bf16.mxu0 0
      %1314 = vmatpush1.bf16.msra.mxu0 0
      %1315 = vmatprep.subr.bf16.mxu0 0
      %1316 = vmatpush1.bf16.msra.mxu0 0
      %1317 = vmatprep.subr.bf16.mxu0 0
      %1318 = vmatpush1.bf16.msra.mxu0 0
      %1319 = vmatprep.subr.bf16.mxu0 0
      %1320 = vmatpush1.bf16.msra.mxu0 0
      %1321 = vmatprep.subr.bf16.mxu0 0
      %1322 = vmatpush1.bf16.msra.mxu0 0
      %1323 = vmatprep.subr.bf16.mxu0 0
      %1324 = vmatpush1.bf16.msra.mxu0 0
      %1325 = vmatprep.subr.bf16.mxu0 0
      %1326 = vmatpush1.bf16.msra.mxu0 0
      %1327 = vmatprep.subr.bf16.mxu0 0
      %1328 = vmatpush1.bf16.msra.mxu0 %v1311
      %1329 = vmatprep.subr.bf16.mxu0 0
      %1330 = vmatpush2.bf16.msra.mxu0 0
      %1331 = vmatprep.subr.bf16.mxu0 0
      %1332 = vmatpush2.bf16.msra.mxu0 0
      %1333 = vmatprep.subr.bf16.mxu0 0
      %1334 = vmatpush2.bf16.msra.mxu0 0
      %1335 = vmatprep.subr.bf16.mxu0 0
      %1336 = vmatpush2.bf16.msra.mxu0 0
      %1337 = vmatprep.subr.bf16.mxu0 0
      %1338 = vmatpush2.bf16.msra.mxu0 0
      %1339 = vmatprep.subr.bf16.mxu0 0
      %1340 = vmatpush2.bf16.msra.mxu0 0
      %1341 = vmatprep.subr.bf16.mxu0 0
      %1342 = vmatpush2.bf16.msra.mxu0 0
      %1343 = vmatprep.subr.bf16.mxu0 0
      %1344 = vmatpush2.bf16.msra.mxu0 0
      %1345 = vmatprep.mubr.bf16.mxu0 0
      %1346 = vmatmul.mubr.bf16.gmra.mxu0 %v1308
      %v1347 = vpop.f32.mrf.mxu0
      %v1348 = vadd.f32 0.0, %v1347
      %v1349 = vpop.f32.mrf.mxu0
      %v1350 = vpop.f32.mrf.mxu0
      %v1351 = vpop.f32.mrf.mxu0
      %1352 = vdwg.mxu0
      %v1353 = vpack.c.bf16 %v1348, %v1348
      %v1355 = vunpack.c.l.b16 %v1353
      %v1356 = vpack.c.b16 %v1355, %v1355
      %1357 = vrot.lane.b32.xlu0 %v1356, 24
      %v1358 = vpop.permute.xlu0 %1357
      %vm1360 = vcmask 257216
      %1361 = vst.msk [vmem:[#allocation2] sm:$0xf] %vm1360, %v1358
      %v1362 = vld [vmem:[#allocation2] sm:$0xf]
      %v1363 = vld [vmem:[%s7] sm:$0xf]
      %v1364 = vld [vmem:[%s7 + $0x4] sm:$0xf]
      %v1365 = vld [vmem:[%s7 + $0x8] sm:$0xf]
      %v1366 = vld [vmem:[%s7 + $0xc] sm:$0xf]
      %v1367 = vld [vmem:[%s8] sm:$0x1]
      %v1369 = vlaneseq
      %v1370 = vshrl.u32 %v1369, 7
      %v1371 = vsub.s32 0, %v1370
      %v1372 = vrot.slane %v1367, %v1371
      %v1378 = vunpack.c.l.b16 %v1363
      %v1379 = vunpack.c.l.b16 %v1364
      %v1380 = vunpack.c.l.b16 %v1365
      %v1381 = vunpack.c.l.b16 %v1366
      %v1382 = vpack.c.b16 %v1379, %v1378
      %v1383 = vpack.c.b16 %v1381, %v1380
      %v1387 = vsel %vm668, %v1362, 0
      %1389 = vmatprep.subr.bf16.mxu0 0
      %1390 = vmatpush1.bf16.msra.mxu0 0
      %1391 = vmatprep.subr.bf16.mxu0 0
      %1392 = vmatpush1.bf16.msra.mxu0 0
      %1393 = vmatprep.subr.bf16.mxu0 0
      %1394 = vmatpush1.bf16.msra.mxu0 0
      %1395 = vmatprep.subr.bf16.mxu0 0
      %1396 = vmatpush1.bf16.msra.mxu0 0
      %1397 = vmatprep.subr.bf16.mxu0 0
      %1398 = vmatpush1.bf16.msra.mxu0 0
      %1399 = vmatprep.subr.bf16.mxu0 0
      %1400 = vmatpush1.bf16.msra.mxu0 0
      %1401 = vmatprep.subr.bf16.mxu0 0
      %1402 = vmatpush1.bf16.msra.mxu0 %v1383
      %1403 = vmatprep.subr.bf16.mxu0 0
      %1404 = vmatpush1.bf16.msra.mxu0 %v1382
      %1405 = vmatprep.subr.bf16.mxu0 0
      %1406 = vmatpush2.bf16.msra.mxu0 0
      %1407 = vmatprep.subr.bf16.mxu0 0
      %1408 = vmatpush2.bf16.msra.mxu0 0
      %1409 = vmatprep.subr.bf16.mxu0 0
      %1410 = vmatpush2.bf16.msra.mxu0 0
      %1411 = vmatprep.subr.bf16.mxu0 0
      %1412 = vmatpush2.bf16.msra.mxu0 0
      %1413 = vmatprep.subr.bf16.mxu0 0
      %1414 = vmatpush2.bf16.msra.mxu0 0
      %1415 = vmatprep.subr.bf16.mxu0 0
      %1416 = vmatpush2.bf16.msra.mxu0 0
      %1417 = vmatprep.subr.bf16.mxu0 0
      %1418 = vmatpush2.bf16.msra.mxu0 0
      %1419 = vmatprep.subr.bf16.mxu0 0
      %1420 = vmatpush2.bf16.msra.mxu0 0
      %1421 = vmatprep.mubr.bf16.mxu0 0
      %1422 = vmatmul.mubr.bf16.gmra.mxu0 %v1387
      %v1423 = vpop.f32.mrf.mxu0
      %v1424 = vadd.f32 %v1372, %v1423
      %v1425 = vpop.f32.mrf.mxu0
      %v1426 = vpop.f32.mrf.mxu0
      %v1427 = vpop.f32.mrf.mxu0
      %1428 = vdwg.mxu0
      %v1429 = vadd.f32 %v696, %v1424
      %v1430 = vld [vmem:[%s9] sm:$0x1]
      %v1431 = vld [vmem:[%s10] sm:$0x1]
      %v1432 = vsel %vm668, %v1429, 0.0
      %1433 = vadd.xlane.f32.xlu0 %v1432
      %v1434 = vpop.xlane.xlu0 %1433
      %v1435 = vmul.f32 %v1434, %v672
      %v1436 = vsub.f32 %v1429, %v1435
      %v1437 = vmul.f32 %v1436, %v1436
      %v1438 = vsel %vm668, %v1437, 0.0
      %1439 = vadd.xlane.f32.xlu0 %v1438
      %v1440 = vpop.xlane.xlu0 %1439
      %v1441 = vmul.f32 %v1440, %v672
      %v1442 = vadd.f32 %v1441, 1e-12
      %v1443 = vrsqrt.pop %v1442
      %v1444 = vmul.f32 %v1436, %v1443
      %v1446 = vlaneseq
      %v1447 = vshrl.u32 %v1446, 7
      %v1448 = vsub.s32 0, %v1447
      %v1449 = vrot.slane %v1430, %v1448
      %v1451 = vmul.f32 %v1444, %v1449
      %v1453 = vlaneseq
      %v1454 = vshrl.u32 %v1453, 7
      %v1455 = vsub.s32 0, %v1454
      %v1456 = vrot.slane %v1431, %v1455
      %v1458 = vadd.f32 %v1451, %v1456
      %v1459 = vpack.c.bf16 %v1458, %v1458
      %v1460 = vld [vmem:[%s11] sm:$0xf]
      %v1461 = vld [vmem:[%s11 + $0x4] sm:$0xf]
      %v1462 = vld [vmem:[%s11 + $0x8] sm:$0xf]
      %v1463 = vld [vmem:[%s11 + $0xc] sm:$0xf]
      %v1464 = vld [vmem:[%s12] sm:$0x1]
      %v1466 = vlaneseq
      %v1467 = vshrl.u32 %v1466, 7
      %v1468 = vsub.s32 0, %v1467
      %v1469 = vrot.slane %v1464, %v1468
      %v1475 = vunpack.c.l.b16 %v1460
      %v1476 = vunpack.c.l.b16 %v1461
      %v1477 = vunpack.c.l.b16 %v1462
      %v1478 = vunpack.c.l.b16 %v1463
      %v1479 = vpack.c.b16 %v1476, %v1475
      %v1480 = vpack.c.b16 %v1478, %v1477
      %v1484 = vsel %vm668, %v1459, 0
      %1486 = vmatprep.subr.bf16.mxu0 0
      %1487 = vmatpush1.bf16.msra.mxu0 0
      %1488 = vmatprep.subr.bf16.mxu0 0
      %1489 = vmatpush1.bf16.msra.mxu0 0
      %1490 = vmatprep.subr.bf16.mxu0 0
      %1491 = vmatpush1.bf16.msra.mxu0 0
      %1492 = vmatprep.subr.bf16.mxu0 0
      %1493 = vmatpush1.bf16.msra.mxu0 0
      %1494 = vmatprep.subr.bf16.mxu0 0
      %1495 = vmatpush1.bf16.msra.mxu0 0
      %1496 = vmatprep.subr.bf16.mxu0 0
      %1497 = vmatpush1.bf16.msra.mxu0 0
      %1498 = vmatprep.subr.bf16.mxu0 0
      %1499 = vmatpush1.bf16.msra.mxu0 %v1480
      %1500 = vmatprep.subr.bf16.mxu0 0
      %1501 = vmatpush1.bf16.msra.mxu0 %v1479
      %1502 = vmatprep.subr.bf16.mxu0 0
      %1503 = vmatpush2.bf16.msra.mxu0 0
      %1504 = vmatprep.subr.bf16.mxu0 0
      %1505 = vmatpush2.bf16.msra.mxu0 0
      %1506 = vmatprep.subr.bf16.mxu0 0
      %1507 = vmatpush2.bf16.msra.mxu0 0
      %1508 = vmatprep.subr.bf16.mxu0 0
      %1509 = vmatpush2.bf16.msra.mxu0 0
      %1510 = vmatprep.subr.bf16.mxu0 0
      %1511 = vmatpush2.bf16.msra.mxu0 0
      %1512 = vmatprep.subr.bf16.mxu0 0
      %1513 = vmatpush2.bf16.msra.mxu0 0
      %1514 = vmatprep.subr.bf16.mxu0 0
      %1515 = vmatpush2.bf16.msra.mxu0 0
      %1516 = vmatprep.subr.bf16.mxu0 0
      %1517 = vmatpush2.bf16.msra.mxu0 0
      %1518 = vmatprep.mubr.bf16.mxu0 0
      %1519 = vmatmul.mubr.bf16.gmra.mxu0 %v1484
      %v1520 = vpop.f32.mrf.mxu0
      %v1521 = vadd.f32 %v1469, %v1520
      %v1522 = vpop.f32.mrf.mxu0
      %v1523 = vpop.f32.mrf.mxu0
      %v1524 = vpop.f32.mrf.mxu0
      %1525 = vdwg.mxu0
      %v1526 = vmul.f32 %v1521, 0.5
      %v1527 = vmul.f32 %v1521, 0.044715
      %v1528 = vmul.f32 %v1527, %v1521
      %v1529 = vmul.f32 %v1528, %v1521
      %v1530 = vadd.f32 %v1521, %v1529
      %v1531 = vmul.f32 %v1530, 0.7978846
      %v1532 = vtanh.pop %v1531
      %v1533 = vadd.f32 %v1532, 1.0
      %v1534 = vmul.f32 %v1526, %v1533
      %v1535 = vpack.c.bf16 %v1534, %v1534
      %v1536 = vld [vmem:[%s13] sm:$0xf]
      %v1537 = vld [vmem:[%s13 + $0x4] sm:$0xf]
      %v1538 = vld [vmem:[%s13 + $0x8] sm:$0xf]
      %v1539 = vld [vmem:[%s13 + $0xc] sm:$0xf]
      %v1540 = vld [vmem:[%s13 + $0x10] sm:$0xf]
      %v1541 = vld [vmem:[%s13 + $0x14] sm:$0xf]
      %v1542 = vld [vmem:[%s13 + $0x18] sm:$0xf]
      %v1543 = vld [vmem:[%s13 + $0x1c] sm:$0xf]
      %v1544 = vld [vmem:[%s14] sm:$0x1]
      %v1546 = vlaneseq
      %v1547 = vshrl.u32 %v1546, 7
      %v1548 = vsub.s32 0, %v1547
      %v1549 = vrot.slane %v1544, %v1548
      %v1559 = vunpack.c.l.b16 %v1536
      %v1560 = vunpack.c.l.b16 %v1537
      %v1561 = vunpack.c.l.b16 %v1538
      %v1562 = vunpack.c.l.b16 %v1539
      %v1563 = vunpack.c.l.b16 %v1540
      %v1564 = vunpack.c.l.b16 %v1541
      %v1565 = vunpack.c.l.b16 %v1542
      %v1566 = vunpack.c.l.b16 %v1543
      %v1567 = vpack.c.b16 %v1560, %v1559
      %v1568 = vpack.c.b16 %v1562, %v1561
      %v1569 = vpack.c.b16 %v1564, %v1563
      %v1570 = vpack.c.b16 %v1566, %v1565
      %vm1575 = vcmask 523264
      %v1577 = vsel %vm1575, %v1535, 0
      %1579 = vmatprep.subr.bf16.mxu0 0
      %1580 = vmatpush1.bf16.msra.mxu0 0
      %1581 = vmatprep.subr.bf16.mxu0 0
      %1582 = vmatpush1.bf16.msra.mxu0 0
      %1583 = vmatprep.subr.bf16.mxu0 0
      %1584 = vmatpush1.bf16.msra.mxu0 0
      %1585 = vmatprep.subr.bf16.mxu0 0
      %1586 = vmatpush1.bf16.msra.mxu0 0
      %1587 = vmatprep.subr.bf16.mxu0 0
      %1588 = vmatpush1.bf16.msra.mxu0 %v1570
      %1589 = vmatprep.subr.bf16.mxu0 0
      %1590 = vmatpush1.bf16.msra.mxu0 %v1569
      %1591 = vmatprep.subr.bf16.mxu0 0
      %1592 = vmatpush1.bf16.msra.mxu0 %v1568
      %1593 = vmatprep.subr.bf16.mxu0 0
      %1594 = vmatpush1.bf16.msra.mxu0 %v1567
      %1595 = vmatprep.subr.bf16.mxu0 0
      %1596 = vmatpush2.bf16.msra.mxu0 0
      %1597 = vmatprep.subr.bf16.mxu0 0
      %1598 = vmatpush2.bf16.msra.mxu0 0
      %1599 = vmatprep.subr.bf16.mxu0 0
      %1600 = vmatpush2.bf16.msra.mxu0 0
      %1601 = vmatprep.subr.bf16.mxu0 0
      %1602 = vmatpush2.bf16.msra.mxu0 0
      %1603 = vmatprep.subr.bf16.mxu0 0
      %1604 = vmatpush2.bf16.msra.mxu0 0
      %1605 = vmatprep.subr.bf16.mxu0 0
      %1606 = vmatpush2.bf16.msra.mxu0 0
      %1607 = vmatprep.subr.bf16.mxu0 0
      %1608 = vmatpush2.bf16.msra.mxu0 0
      %1609 = vmatprep.subr.bf16.mxu0 0
      %1610 = vmatpush2.bf16.msra.mxu0 0
      %1611 = vmatprep.mubr.bf16.mxu0 0
      %1612 = vmatmul.mubr.bf16.gmra.mxu0 %v1577
      %v1613 = vpop.f32.mrf.mxu0
      %v1614 = vadd.f32 %v1549, %v1613
      %v1615 = vpop.f32.mrf.mxu0
      %v1616 = vpop.f32.mrf.mxu0
      %v1617 = vpop.f32.mrf.mxu0
      %1618 = vdwg.mxu0
      %v1619 = vadd.f32 %v1458, %v1614
      %v1620 = vld [vmem:[%s15] sm:$0x1]
      %v1621 = vld [vmem:[%s16] sm:$0x1]
      %v1622 = vsel %vm668, %v1619, 0.0
      %1623 = vadd.xlane.f32.xlu0 %v1622
      %v1624 = vpop.xlane.xlu0 %1623
      %v1625 = vmul.f32 %v1624, %v672
      %v1626 = vsub.f32 %v1619, %v1625
      %v1627 = vmul.f32 %v1626, %v1626
      %v1628 = vsel %vm668, %v1627, 0.0
      %1629 = vadd.xlane.f32.xlu0 %v1628
      %v1630 = vpop.xlane.xlu0 %1629
      %v1631 = vmul.f32 %v1630, %v672
      %v1632 = vadd.f32 %v1631, 1e-12
      %v1633 = vrsqrt.pop %v1632
      %v1634 = vmul.f32 %v1626, %v1633
      %v1636 = vlaneseq
      %v1637 = vshrl.u32 %v1636, 7
      %v1638 = vsub.s32 0, %v1637
      %v1639 = vrot.slane %v1620, %v1638
      %v1641 = vmul.f32 %v1634, %v1639
      %v1643 = vlaneseq
      %v1644 = vshrl.u32 %v1643, 7
      %v1645 = vsub.s32 0, %v1644
      %v1646 = vrot.slane %v1621, %v1645
      %v1648 = vadd.f32 %v1641, %v1646
      %v1649 = vpack.c.bf16 %v1648, %v1648
      %vm1650 = vcmask 257024
      %1651 = vst.msk [vmem:[%s656] sm:$0xf] %vm1650, %v1649
      %1652 = vst.msk [vmem:[%s663] sm:$0xff] %vm668, %v1648
      %p1653 = scmp.lt.s32.totalorder %s36, 1
      %s1654 = scalar_select %p1653, %s36, 1
      %p1655 = scmp.lt.s32.totalorder %s37, 0
      %s1656 = scalar_select %p1655, %s37, 0
      %s1657 = sadd.s32 %s1656, %s1654
      %s1658 = smul.addr %s1657, 4
      %s1659 = scalar_lea.vmem %s19, %s1658
      %p1660 = scmp.lt.s32.totalorder %s36, 1
      %s1661 = scalar_select %p1660, %s36, 1
      %p1662 = scmp.lt.s32.totalorder %s37, 0
      %s1663 = scalar_select %p1662, %s37, 0
      %s1664 = sadd.s32 %s1663, %s1661
      %s1665 = smul.addr %s1664, 8
      %s1666 = scalar_lea.vmem %s20, %s1665
      // Predicated region
      $region97: #{bert_embeddings_forward.4} parent=95 // pred_check
        %p1667 = pneg %p468
      $region98: #{bert_embeddings_forward.4} parent=95 // pred_check_branch
        %1669 = sbr.rel (%p1667) target = $region100
      $region99: #{bert_embeddings_forward.4} parent=95 // pred_region
        _
      $region100: #{bert_embeddings_forward.4} parent=95 // pred_fallthru
        _
      // Predicated region
      $region101: #{bert_embeddings_forward.4} parent=95 // pred_check
        %p1670 = pneg %p496
      $region102: #{bert_embeddings_forward.4} parent=95 // pred_check_branch
        %1672 = sbr.rel (%p1670) target = $region104
      $region103: #{bert_embeddings_forward.4} parent=95 // pred_region
        _
      $region104: #{bert_embeddings_forward.4} parent=95 // pred_fallthru
        _
    $region96: #{bert_embeddings_forward.4} parent=5 // pred_fallthru
      _
    %p1673 = scmp.le.s32.totalorder 2, %s27
    // Predicated region
    $region105: #{bert_embeddings_forward.4} parent=5 // pred_check
      %p1674 = pneg %p1673
    $region106: #{bert_embeddings_forward.4} parent=5 // pred_check_branch
      %1676 = sbr.rel (%p1674) target = $region108
    $region107: #{bert_embeddings_forward.4} parent=5 // pred_region
      %s1677 = ssub.s32 %s27, 2
      // Predicated region
      $region109: #{bert_embeddings_forward.4} parent=107 // pred_check
        %p1678 = pneg %p474
      $region110: #{bert_embeddings_forward.4} parent=107 // pred_check_branch
        %1680 = sbr.rel (%p1678) target = $region112
      $region111: #{bert_embeddings_forward.4} parent=107 // pred_region
        %p1681 = scmp.lt.s32.totalorder %s38, 1
        %s1682 = scalar_select %p1681, %s38, 1
        %p1683 = scmp.lt.s32.totalorder %s39, 0
        %s1684 = scalar_select %p1683, %s39, 0
        %s1685 = sadd.s32 %s1684, %s1682
        %s1686 = smul.addr %s1685, 4
        %s1687 = scalar_lea.vmem %s19, %s1686
      $region112: #{bert_embeddings_forward.4} parent=107 // pred_fallthru
        _
      // Predicated region
      $region113: #{bert_embeddings_forward.4} parent=107 // pred_check
        %p1688 = pneg %p502
      $region114: #{bert_embeddings_forward.4} parent=107 // pred_check_branch
        %1690 = sbr.rel (%p1688) target = $region116
      $region115: #{bert_embeddings_forward.4} parent=107 // pred_region
        %p1691 = scmp.lt.s32.totalorder %s38, 1
        %s1692 = scalar_select %p1691, %s38, 1
        %p1693 = scmp.lt.s32.totalorder %s39, 0
        %s1694 = scalar_select %p1693, %s39, 0
        %s1695 = sadd.s32 %s1694, %s1692
        %s1696 = smul.addr %s1695, 8
        %s1697 = scalar_lea.vmem %s20, %s1696
      $region116: #{bert_embeddings_forward.4} parent=107 // pred_fallthru
        _
    $region108: #{bert_embeddings_forward.4} parent=5 // pred_fallthru
      _
  $region6: #{bert_embeddings_forward.4} parent=0 // loop_footer
    %s31 = sadd.s32 1, %s27
  $region7: #{bert_embeddings_forward.4} parent=0 // loop_footer_branch
    %26 = sbr.rel target = $region3
  $region8: #{bert_embeddings_forward.4} parent=0 // loop_exit
    _

// kernel: bert_embeddings_forward.7
$region0: #{bert_embeddings_forward.7}
  #allocation0 [shape = 'u32[]', space=smem, size = 0x4, offset = 0x4, fixed_abs, tag = 'smem constant byte address 0x4 - core index']
  #allocation1 [shape = 'u32[144,128]{1,0:T(1,128)}', space=vmem, size = 0x12000, scoped, tag = 'internal scratch']
  #allocation2 [shape = 'bf16[8,32]{1,0:T(8,128)(2,1)}', space=vmem, size = 0x800, scoped, tag = 'scratch operand']
  %s0 = inlined_call_operand.vmem [shape: bf16[2,8,32], index: 0, kind: input, shape index: {}]
  %s1 = inlined_call_operand.vmem [shape: f32[2,8,32], index: 1, kind: input, shape index: {}, may-alias: {1,21}]
  %s2 = inlined_call_operand.vmem [shape: bf16[32,32], index: 2, kind: input, shape index: {}]
  %s3 = inlined_call_operand.vmem [shape: f32[1,32], index: 3, kind: input, shape index: {}]
  %s4 = inlined_call_operand.vmem [shape: bf16[32,32], index: 4, kind: input, shape index: {}]
  %s5 = inlined_call_operand.vmem [shape: f32[1,32], index: 5, kind: input, shape index: {}]
  %s6 = inlined_call_operand.vmem [shape: bf16[32,32], index: 6, kind: input, shape index: {}]
  %s7 = inlined_call_operand.vmem [shape: f32[1,32], index: 7, kind: input, shape index: {}]
  %s8 = inlined_call_operand.vmem [shape: bf16[32,32], index: 8, kind: input, shape index: {}]
  %s9 = inlined_call_operand.vmem [shape: f32[1,32], index: 9, kind: input, shape index: {}]
  %s10 = inlined_call_operand.vmem [shape: f32[1,32], index: 10, kind: input, shape index: {}]
  %s11 = inlined_call_operand.vmem [shape: f32[1,32], index: 11, kind: input, shape index: {}]
  %s12 = inlined_call_operand.vmem [shape: bf16[32,64], index: 12, kind: input, shape index: {}]
  %s13 = inlined_call_operand.vmem [shape: f32[1,64], index: 13, kind: input, shape index: {}]
  %s14 = inlined_call_operand.vmem [shape: bf16[64,32], index: 14, kind: input, shape index: {}]
  %s15 = inlined_call_operand.vmem [shape: f32[1,32], index: 15, kind: input, shape index: {}]
  %s16 = inlined_call_operand.vmem [shape: f32[1,32], index: 16, kind: input, shape index: {}]
  %s17 = inlined_call_operand.vmem [shape: f32[1,32], index: 17, kind: input, shape index: {}]
  %s18 = inlined_call_operand.vmem [shape: f32[1,32], index: 18, kind: input, shape index: {}]
  %s19 = inlined_call_operand.vmem [shape: f32[1,32], index: 19, kind: input, shape index: {}]
  %s20 = inlined_call_operand.hbm [shape: bf16[2,8,32], index: 20, kind: output, shape index: {0}]
  %s21 = inlined_call_operand.vmem [shape: f32[2,8,32], index: 21, kind: output, shape index: {1}, may-alias: {1,21}]
  %22 = xla_tuple %s20, %s21
  %s23 = sld [smem:[#allocation0]]
  $region121: #{bert_embeddings_forward.7} parent=0
    _
  %s25 = ssub.s32 1, %s23
  %s26 = scalar_select 0, %s25, %s23
  $region1: #{bert_embeddings_forward.7} parent=0
    #allocation3 [shape = 'u8[4096]{0}', space=vmem, size = 0x1000, scoped, tag = 'output window, operand 0']
    #allocation4 [shape = 's32[2]{0}', space=sflag, size = 0x8, scoped, tag = 'scoped memory for bert_embeddings_forward.7']
    %27 = vsyncpa [#allocation4], 0
    %s28 = scalar_lea.sflag [#allocation4], 1
    %29 = vsyncpa %s28, 0
    loop: start=0, step=1, limit=4
    $region2: #{bert_embeddings_forward.7} parent=1 // loop_pre_header
      _
    $region3: #{bert_embeddings_forward.7} parent=1 // loop_header
      %s31 = sphi 0, %s35
      %p32 = scmp.ge.s32.totalorder %s31, 4
      %s38 = sphi 0, %s50
      %s39 = sphi 0, %s46
      %s40 = sphi 0, %s38
      %s41 = sphi 0, %s39
      %s42 = sphi 0, %s40
      %s43 = sphi 0, %s41
      %s53 = sphi 0, %s55
      %s56 = sphi 0, %s53
      %s57 = sphi 0, %s56
      %s73 = sphi 0, %s57
      %s81 = sphi 0, %s83
      %s84 = sphi 0, %s81
      %s85 = sphi 0, %s84
      %s101 = sphi 0, %s85
      %s105 = sphi 0, %s105
      %s107 = sphi 0, %s105
      %s108 = sphi 0, %s107
      %s122 = sphi 0, %s108
      %s126 = sphi 0, %s126
      %s128 = sphi 0, %s126
      %s129 = sphi 0, %s128
      %s143 = sphi 0, %s129
      %s147 = sphi 0, %s147
      %s149 = sphi 0, %s147
      %s150 = sphi 0, %s149
      %s164 = sphi 0, %s150
      %s168 = sphi 0, %s168
      %s170 = sphi 0, %s168
      %s171 = sphi 0, %s170
      %s185 = sphi 0, %s171
      %s189 = sphi 0, %s189
      %s191 = sphi 0, %s189
      %s192 = sphi 0, %s191
      %s206 = sphi 0, %s192
      %s210 = sphi 0, %s210
      %s212 = sphi 0, %s210
      %s213 = sphi 0, %s212
      %s227 = sphi 0, %s213
      %s231 = sphi 0, %s231
      %s233 = sphi 0, %s231
      %s234 = sphi 0, %s233
      %s248 = sphi 0, %s234
      %s252 = sphi 0, %s252
      %s254 = sphi 0, %s252
      %s255 = sphi 0, %s254
      %s269 = sphi 0, %s255
      %s273 = sphi 0, %s273
      %s275 = sphi 0, %s273
      %s276 = sphi 0, %s275
      %s290 = sphi 0, %s276
      %s294 = sphi 0, %s294
      %s296 = sphi 0, %s294
      %s297 = sphi 0, %s296
      %s311 = sphi 0, %s297
      %s315 = sphi 0, %s315
      %s317 = sphi 0, %s315
      %s318 = sphi 0, %s317
      %s332 = sphi 0, %s318
      %s336 = sphi 0, %s336
      %s338 = sphi 0, %s336
      %s339 = sphi 0, %s338
      %s353 = sphi 0, %s339
      %s357 = sphi 0, %s357
      %s359 = sphi 0, %s357
      %s360 = sphi 0, %s359
      %s374 = sphi 0, %s360
      %s378 = sphi 0, %s378
      %s380 = sphi 0, %s378
      %s381 = sphi 0, %s380
      %s395 = sphi 0, %s381
      %s399 = sphi 0, %s399
      %s401 = sphi 0, %s399
      %s402 = sphi 0, %s401
      %s416 = sphi 0, %s402
      %s420 = sphi 0, %s420
      %s422 = sphi 0, %s420
      %s423 = sphi 0, %s422
      %s437 = sphi 0, %s423
      %s441 = sphi 0, %s441
      %s443 = sphi 0, %s441
      %s444 = sphi 0, %s443
      %s458 = sphi 0, %s444
      %s462 = sphi 0, %s462
      %s464 = sphi 0, %s462
      %s465 = sphi 0, %s464
      %s479 = sphi 0, %s465
      %s487 = sphi 0, %s489
      %s490 = sphi 0, %s487
      %s491 = sphi 0, %s490
      %s507 = sphi 0, %s491
      %s515 = sphi 0, %s517
      %s518 = sphi 0, %s515
      %s519 = sphi 0, %s518
      %s535 = sphi 0, %s519
    $region4: #{bert_embeddings_forward.7} parent=1 // loop_header_branch
      %34 = sbr.rel (%p32) target = $region8
    $region5: #{bert_embeddings_forward.7} parent=1 // loop_body
      %s36 = ssub.s32 %s31, 1
      %s37 = ssub.s32 %s31, 2
      %s44 = sadd.s32 1, %s39
      %p45 = scmp.ge.s32.totalorder %s44, 1
      %s46 = scalar_select %p45, 0, %s44
      %s47 = sadd.s32 1, %s38
      %s48 = scalar_select %p45, %s47, %s38
      %p49 = scmp.ge.s32.totalorder %s48, 2
      %s50 = scalar_select %p49, 0, %s48
      %s51 = ssub.s32 %s38, %s50
      %p52 = scmp.eq.s32.totalorder %s51, 0
      %s54 = sadd.s32 %s53, 1
      %s55 = scalar_select %p52, %s53, %s54
      %p58 = pneg %p52
      %p59 = scmp.eq.s32.totalorder %s31, 1
      %p60 = por %p58, %p59
      %p61 = scmp.ne.s32.totalorder %s53, %s56
      %p62 = scmp.eq.s32.totalorder %s31, 0
      %p63 = por %p61, %p62
      %p64 = scmp.ne.s32.totalorder %s53, %s56
      %p65 = scmp.eq.s32.totalorder %s36, 1
      %p66 = por %p64, %p65
      %p67 = scmp.ne.s32.totalorder %s56, %s57
      %p68 = scmp.eq.s32.totalorder %s36, 0
      %p69 = por %p67, %p68
      %p70 = scmp.ne.s32.totalorder %s56, %s57
      %p71 = scmp.eq.s32.totalorder %s37, 1
      %p72 = por %p70, %p71
      %p74 = scmp.ne.s32.totalorder %s57, %s73
      %p75 = scmp.eq.s32.totalorder %s37, 0
      %p76 = por %p74, %p75
      %s77 = ssub.s32 %s38, %s50
      %s78 = ssub.s32 %s39, %s46
      %s79 = sor.u32 %s77, %s78
      %p80 = scmp.eq.s32.totalorder %s79, 0
      %s82 = sadd.s32 %s81, 1
      %s83 = scalar_select %p80, %s81, %s82
      %p86 = pneg %p80
      %p87 = scmp.eq.s32.totalorder %s31, 1
      %p88 = por %p86, %p87
      %p89 = scmp.ne.s32.totalorder %s81, %s84
      %p90 = scmp.eq.s32.totalorder %s31, 0
      %p91 = por %p89, %p90
      %p92 = scmp.ne.s32.totalorder %s81, %s84
      %p93 = scmp.eq.s32.totalorder %s36, 1
      %p94 = por %p92, %p93
      %p95 = scmp.ne.s32.totalorder %s84, %s85
      %p96 = scmp.eq.s32.totalorder %s36, 0
      %p97 = por %p95, %p96
      %p98 = scmp.ne.s32.totalorder %s84, %s85
      %p99 = scmp.eq.s32.totalorder %s37, 1
      %p100 = por %p98, %p99
      %p102 = scmp.ne.s32.totalorder %s85, %s101
      %p103 = scmp.eq.s32.totalorder %s37, 0
      %p104 = por %p102, %p103
      %s106 = sadd.s32 %s105, 1
      %p109 = scmp.eq.s32.totalorder %s31, 1
      %p110 = scmp.ne.s32.totalorder %s105, %s107
      %p111 = scmp.eq.s32.totalorder %s31, 0
      %p112 = por %p110, %p111
      %p113 = scmp.ne.s32.totalorder %s105, %s107
      %p114 = scmp.eq.s32.totalorder %s36, 1
      %p115 = por %p113, %p114
      %p116 = scmp.ne.s32.totalorder %s107, %s108
      %p117 = scmp.eq.s32.totalorder %s36, 0
      %p118 = por %p116, %p117
      %p119 = scmp.ne.s32.totalorder %s107, %s108
      %p120 = scmp.eq.s32.totalorder %s37, 1
      %p121 = por %p119, %p120
      %p123 = scmp.ne.s32.totalorder %s108, %s122
      %p124 = scmp.eq.s32.totalorder %s37, 0
      %p125 = por %p123, %p124
      %s127 = sadd.s32 %s126, 1
      %p130 = scmp.eq.s32.totalorder %s31, 1
      %p131 = scmp.ne.s32.totalorder %s126, %s128
      %p132 = scmp.eq.s32.totalorder %s31, 0
      %p133 = por %p131, %p132
      %p134 = scmp.ne.s32.totalorder %s126, %s128
      %p135 = scmp.eq.s32.totalorder %s36, 1
      %p136 = por %p134, %p135
      %p137 = scmp.ne.s32.totalorder %s128, %s129
      %p138 = scmp.eq.s32.totalorder %s36, 0
      %p139 = por %p137, %p138
      %p140 = scmp.ne.s32.totalorder %s128, %s129
      %p141 = scmp.eq.s32.totalorder %s37, 1
      %p142 = por %p140, %p141
      %p144 = scmp.ne.s32.totalorder %s129, %s143
      %p145 = scmp.eq.s32.totalorder %s37, 0
      %p146 = por %p144, %p145
      %s148 = sadd.s32 %s147, 1
      %p151 = scmp.eq.s32.totalorder %s31, 1
      %p152 = scmp.ne.s32.totalorder %s147, %s149
      %p153 = scmp.eq.s32.totalorder %s31, 0
      %p154 = por %p152, %p153
      %p155 = scmp.ne.s32.totalorder %s147, %s149
      %p156 = scmp.eq.s32.totalorder %s36, 1
      %p157 = por %p155, %p156
      %p158 = scmp.ne.s32.totalorder %s149, %s150
      %p159 = scmp.eq.s32.totalorder %s36, 0
      %p160 = por %p158, %p159
      %p161 = scmp.ne.s32.totalorder %s149, %s150
      %p162 = scmp.eq.s32.totalorder %s37, 1
      %p163 = por %p161, %p162
      %p165 = scmp.ne.s32.totalorder %s150, %s164
      %p166 = scmp.eq.s32.totalorder %s37, 0
      %p167 = por %p165, %p166
      %s169 = sadd.s32 %s168, 1
      %p172 = scmp.eq.s32.totalorder %s31, 1
      %p173 = scmp.ne.s32.totalorder %s168, %s170
      %p174 = scmp.eq.s32.totalorder %s31, 0
      %p175 = por %p173, %p174
      %p176 = scmp.ne.s32.totalorder %s168, %s170
      %p177 = scmp.eq.s32.totalorder %s36, 1
      %p178 = por %p176, %p177
      %p179 = scmp.ne.s32.totalorder %s170, %s171
      %p180 = scmp.eq.s32.totalorder %s36, 0
      %p181 = por %p179, %p180
      %p182 = scmp.ne.s32.totalorder %s170, %s171
      %p183 = scmp.eq.s32.totalorder %s37, 1
      %p184 = por %p182, %p183
      %p186 = scmp.ne.s32.totalorder %s171, %s185
      %p187 = scmp.eq.s32.totalorder %s37, 0
      %p188 = por %p186, %p187
      %s190 = sadd.s32 %s189, 1
      %p193 = scmp.eq.s32.totalorder %s31, 1
      %p194 = scmp.ne.s32.totalorder %s189, %s191
      %p195 = scmp.eq.s32.totalorder %s31, 0
      %p196 = por %p194, %p195
      %p197 = scmp.ne.s32.totalorder %s189, %s191
      %p198 = scmp.eq.s32.totalorder %s36, 1
      %p199 = por %p197, %p198
      %p200 = scmp.ne.s32.totalorder %s191, %s192
      %p201 = scmp.eq.s32.totalorder %s36, 0
      %p202 = por %p200, %p201
      %p203 = scmp.ne.s32.totalorder %s191, %s192
      %p204 = scmp.eq.s32.totalorder %s37, 1
      %p205 = por %p203, %p204
      %p207 = scmp.ne.s32.totalorder %s192, %s206
      %p208 = scmp.eq.s32.totalorder %s37, 0
      %p209 = por %p207, %p208
      %s211 = sadd.s32 %s210, 1
      %p214 = scmp.eq.s32.totalorder %s31, 1
      %p215 = scmp.ne.s32.totalorder %s210, %s212
      %p216 = scmp.eq.s32.totalorder %s31, 0
      %p217 = por %p215, %p216
      %p218 = scmp.ne.s32.totalorder %s210, %s212
      %p219 = scmp.eq.s32.totalorder %s36, 1
      %p220 = por %p218, %p219
      %p221 = scmp.ne.s32.totalorder %s212, %s213
      %p222 = scmp.eq.s32.totalorder %s36, 0
      %p223 = por %p221, %p222
      %p224 = scmp.ne.s32.totalorder %s212, %s213
      %p225 = scmp.eq.s32.totalorder %s37, 1
      %p226 = por %p224, %p225
      %p228 = scmp.ne.s32.totalorder %s213, %s227
      %p229 = scmp.eq.s32.totalorder %s37, 0
      %p230 = por %p228, %p229
      %s232 = sadd.s32 %s231, 1
      %p235 = scmp.eq.s32.totalorder %s31, 1
      %p236 = scmp.ne.s32.totalorder %s231, %s233
      %p237 = scmp.eq.s32.totalorder %s31, 0
      %p238 = por %p236, %p237
      %p239 = scmp.ne.s32.totalorder %s231, %s233
      %p240 = scmp.eq.s32.totalorder %s36, 1
      %p241 = por %p239, %p240
      %p242 = scmp.ne.s32.totalorder %s233, %s234
      %p243 = scmp.eq.s32.totalorder %s36, 0
      %p244 = por %p242, %p243
      %p245 = scmp.ne.s32.totalorder %s233, %s234
      %p246 = scmp.eq.s32.totalorder %s37, 1
      %p247 = por %p245, %p246
      %p249 = scmp.ne.s32.totalorder %s234, %s248
      %p250 = scmp.eq.s32.totalorder %s37, 0
      %p251 = por %p249, %p250
      %s253 = sadd.s32 %s252, 1
      %p256 = scmp.eq.s32.totalorder %s31, 1
      %p257 = scmp.ne.s32.totalorder %s252, %s254
      %p258 = scmp.eq.s32.totalorder %s31, 0
      %p259 = por %p257, %p258
      %p260 = scmp.ne.s32.totalorder %s252, %s254
      %p261 = scmp.eq.s32.totalorder %s36, 1
      %p262 = por %p260, %p261
      %p263 = scmp.ne.s32.totalorder %s254, %s255
      %p264 = scmp.eq.s32.totalorder %s36, 0
      %p265 = por %p263, %p264
      %p266 = scmp.ne.s32.totalorder %s254, %s255
      %p267 = scmp.eq.s32.totalorder %s37, 1
      %p268 = por %p266, %p267
      %p270 = scmp.ne.s32.totalorder %s255, %s269
      %p271 = scmp.eq.s32.totalorder %s37, 0
      %p272 = por %p270, %p271
      %s274 = sadd.s32 %s273, 1
      %p277 = scmp.eq.s32.totalorder %s31, 1
      %p278 = scmp.ne.s32.totalorder %s273, %s275
      %p279 = scmp.eq.s32.totalorder %s31, 0
      %p280 = por %p278, %p279
      %p281 = scmp.ne.s32.totalorder %s273, %s275
      %p282 = scmp.eq.s32.totalorder %s36, 1
      %p283 = por %p281, %p282
      %p284 = scmp.ne.s32.totalorder %s275, %s276
      %p285 = scmp.eq.s32.totalorder %s36, 0
      %p286 = por %p284, %p285
      %p287 = scmp.ne.s32.totalorder %s275, %s276
      %p288 = scmp.eq.s32.totalorder %s37, 1
      %p289 = por %p287, %p288
      %p291 = scmp.ne.s32.totalorder %s276, %s290
      %p292 = scmp.eq.s32.totalorder %s37, 0
      %p293 = por %p291, %p292
      %s295 = sadd.s32 %s294, 1
      %p298 = scmp.eq.s32.totalorder %s31, 1
      %p299 = scmp.ne.s32.totalorder %s294, %s296
      %p300 = scmp.eq.s32.totalorder %s31, 0
      %p301 = por %p299, %p300
      %p302 = scmp.ne.s32.totalorder %s294, %s296
      %p303 = scmp.eq.s32.totalorder %s36, 1
      %p304 = por %p302, %p303
      %p305 = scmp.ne.s32.totalorder %s296, %s297
      %p306 = scmp.eq.s32.totalorder %s36, 0
      %p307 = por %p305, %p306
      %p308 = scmp.ne.s32.totalorder %s296, %s297
      %p309 = scmp.eq.s32.totalorder %s37, 1
      %p310 = por %p308, %p309
      %p312 = scmp.ne.s32.totalorder %s297, %s311
      %p313 = scmp.eq.s32.totalorder %s37, 0
      %p314 = por %p312, %p313
      %s316 = sadd.s32 %s315, 1
      %p319 = scmp.eq.s32.totalorder %s31, 1
      %p320 = scmp.ne.s32.totalorder %s315, %s317
      %p321 = scmp.eq.s32.totalorder %s31, 0
      %p322 = por %p320, %p321
      %p323 = scmp.ne.s32.totalorder %s315, %s317
      %p324 = scmp.eq.s32.totalorder %s36, 1
      %p325 = por %p323, %p324
      %p326 = scmp.ne.s32.totalorder %s317, %s318
      %p327 = scmp.eq.s32.totalorder %s36, 0
      %p328 = por %p326, %p327
      %p329 = scmp.ne.s32.totalorder %s317, %s318
      %p330 = scmp.eq.s32.totalorder %s37, 1
      %p331 = por %p329, %p330
      %p333 = scmp.ne.s32.totalorder %s318, %s332
      %p334 = scmp.eq.s32.totalorder %s37, 0
      %p335 = por %p333, %p334
      %s337 = sadd.s32 %s336, 1
      %p340 = scmp.eq.s32.totalorder %s31, 1
      %p341 = scmp.ne.s32.totalorder %s336, %s338
      %p342 = scmp.eq.s32.totalorder %s31, 0
      %p343 = por %p341, %p342
      %p344 = scmp.ne.s32.totalorder %s336, %s338
      %p345 = scmp.eq.s32.totalorder %s36, 1
      %p346 = por %p344, %p345
      %p347 = scmp.ne.s32.totalorder %s338, %s339
      %p348 = scmp.eq.s32.totalorder %s36, 0
      %p349 = por %p347, %p348
      %p350 = scmp.ne.s32.totalorder %s338, %s339
      %p351 = scmp.eq.s32.totalorder %s37, 1
      %p352 = por %p350, %p351
      %p354 = scmp.ne.s32.totalorder %s339, %s353
      %p355 = scmp.eq.s32.totalorder %s37, 0
      %p356 = por %p354, %p355
      %s358 = sadd.s32 %s357, 1
      %p361 = scmp.eq.s32.totalorder %s31, 1
      %p362 = scmp.ne.s32.totalorder %s357, %s359
      %p363 = scmp.eq.s32.totalorder %s31, 0
      %p364 = por %p362, %p363
      %p365 = scmp.ne.s32.totalorder %s357, %s359
      %p366 = scmp.eq.s32.totalorder %s36, 1
      %p367 = por %p365, %p366
      %p368 = scmp.ne.s32.totalorder %s359, %s360
      %p369 = scmp.eq.s32.totalorder %s36, 0
      %p370 = por %p368, %p369
      %p371 = scmp.ne.s32.totalorder %s359, %s360
      %p372 = scmp.eq.s32.totalorder %s37, 1
      %p373 = por %p371, %p372
      %p375 = scmp.ne.s32.totalorder %s360, %s374
      %p376 = scmp.eq.s32.totalorder %s37, 0
      %p377 = por %p375, %p376
      %s379 = sadd.s32 %s378, 1
      %p382 = scmp.eq.s32.totalorder %s31, 1
      %p383 = scmp.ne.s32.totalorder %s378, %s380
      %p384 = scmp.eq.s32.totalorder %s31, 0
      %p385 = por %p383, %p384
      %p386 = scmp.ne.s32.totalorder %s378, %s380
      %p387 = scmp.eq.s32.totalorder %s36, 1
      %p388 = por %p386, %p387
      %p389 = scmp.ne.s32.totalorder %s380, %s381
      %p390 = scmp.eq.s32.totalorder %s36, 0
      %p391 = por %p389, %p390
      %p392 = scmp.ne.s32.totalorder %s380, %s381
      %p393 = scmp.eq.s32.totalorder %s37, 1
      %p394 = por %p392, %p393
      %p396 = scmp.ne.s32.totalorder %s381, %s395
      %p397 = scmp.eq.s32.totalorder %s37, 0
      %p398 = por %p396, %p397
      %s400 = sadd.s32 %s399, 1
      %p403 = scmp.eq.s32.totalorder %s31, 1
      %p404 = scmp.ne.s32.totalorder %s399, %s401
      %p405 = scmp.eq.s32.totalorder %s31, 0
      %p406 = por %p404, %p405
      %p407 = scmp.ne.s32.totalorder %s399, %s401
      %p408 = scmp.eq.s32.totalorder %s36, 1
      %p409 = por %p407, %p408
      %p410 = scmp.ne.s32.totalorder %s401, %s402
      %p411 = scmp.eq.s32.totalorder %s36, 0
      %p412 = por %p410, %p411
      %p413 = scmp.ne.s32.totalorder %s401, %s402
      %p414 = scmp.eq.s32.totalorder %s37, 1
      %p415 = por %p413, %p414
      %p417 = scmp.ne.s32.totalorder %s402, %s416
      %p418 = scmp.eq.s32.totalorder %s37, 0
      %p419 = por %p417, %p418
      %s421 = sadd.s32 %s420, 1
      %p424 = scmp.eq.s32.totalorder %s31, 1
      %p425 = scmp.ne.s32.totalorder %s420, %s422
      %p426 = scmp.eq.s32.totalorder %s31, 0
      %p427 = por %p425, %p426
      %p428 = scmp.ne.s32.totalorder %s420, %s422
      %p429 = scmp.eq.s32.totalorder %s36, 1
      %p430 = por %p428, %p429
      %p431 = scmp.ne.s32.totalorder %s422, %s423
      %p432 = scmp.eq.s32.totalorder %s36, 0
      %p433 = por %p431, %p432
      %p434 = scmp.ne.s32.totalorder %s422, %s423
      %p435 = scmp.eq.s32.totalorder %s37, 1
      %p436 = por %p434, %p435
      %p438 = scmp.ne.s32.totalorder %s423, %s437
      %p439 = scmp.eq.s32.totalorder %s37, 0
      %p440 = por %p438, %p439
      %s442 = sadd.s32 %s441, 1
      %p445 = scmp.eq.s32.totalorder %s31, 1
      %p446 = scmp.ne.s32.totalorder %s441, %s443
      %p447 = scmp.eq.s32.totalorder %s31, 0
      %p448 = por %p446, %p447
      %p449 = scmp.ne.s32.totalorder %s441, %s443
      %p450 = scmp.eq.s32.totalorder %s36, 1
      %p451 = por %p449, %p450
      %p452 = scmp.ne.s32.totalorder %s443, %s444
      %p453 = scmp.eq.s32.totalorder %s36, 0
      %p454 = por %p452, %p453
      %p455 = scmp.ne.s32.totalorder %s443, %s444
      %p456 = scmp.eq.s32.totalorder %s37, 1
      %p457 = por %p455, %p456
      %p459 = scmp.ne.s32.totalorder %s444, %s458
      %p460 = scmp.eq.s32.totalorder %s37, 0
      %p461 = por %p459, %p460
      %s463 = sadd.s32 %s462, 1
      %p466 = scmp.eq.s32.totalorder %s31, 1
      %p467 = scmp.ne.s32.totalorder %s462, %s464
      %p468 = scmp.eq.s32.totalorder %s31, 0
      %p469 = por %p467, %p468
      %p470 = scmp.ne.s32.totalorder %s462, %s464
      %p471 = scmp.eq.s32.totalorder %s36, 1
      %p472 = por %p470, %p471
      %p473 = scmp.ne.s32.totalorder %s464, %s465
      %p474 = scmp.eq.s32.totalorder %s36, 0
      %p475 = por %p473, %p474
      %p476 = scmp.ne.s32.totalorder %s464, %s465
      %p477 = scmp.eq.s32.totalorder %s37, 1
      %p478 = por %p476, %p477
      %p480 = scmp.ne.s32.totalorder %s465, %s479
      %p481 = scmp.eq.s32.totalorder %s37, 0
      %p482 = por %p480, %p481
      %s483 = ssub.s32 %s38, %s50
      %s484 = ssub.s32 %s39, %s46
      %s485 = sor.u32 %s483, %s484
      %p486 = scmp.eq.s32.totalorder %s485, 0
      %s488 = sadd.s32 %s487, 1
      %s489 = scalar_select %p486, %s487, %s488
      %p492 = pneg %p486
      %p493 = scmp.eq.s32.totalorder %s31, 1
      %p494 = por %p492, %p493
      %p495 = scmp.ne.s32.totalorder %s487, %s490
      %p496 = scmp.eq.s32.totalorder %s31, 0
      %p497 = por %p495, %p496
      %p498 = scmp.ne.s32.totalorder %s487, %s490
      %p499 = scmp.eq.s32.totalorder %s36, 1
      %p500 = por %p498, %p499
      %p501 = scmp.ne.s32.totalorder %s490, %s491
      %p502 = scmp.eq.s32.totalorder %s36, 0
      %p503 = por %p501, %p502
      %p504 = scmp.ne.s32.totalorder %s490, %s491
      %p505 = scmp.eq.s32.totalorder %s37, 1
      %p506 = por %p504, %p505
      %p508 = scmp.ne.s32.totalorder %s491, %s507
      %p509 = scmp.eq.s32.totalorder %s37, 0
      %p510 = por %p508, %p509
      %s511 = ssub.s32 %s38, %s50
      %s512 = ssub.s32 %s39, %s46
      %s513 = sor.u32 %s511, %s512
      %p514 = scmp.eq.s32.totalorder %s513, 0
      %s516 = sadd.s32 %s515, 1
      %s517 = scalar_select %p514, %s515, %s516
      %p520 = pneg %p514
      %p521 = scmp.eq.s32.totalorder %s31, 1
      %p522 = por %p520, %p521
      %p523 = scmp.ne.s32.totalorder %s515, %s518
      %p524 = scmp.eq.s32.totalorder %s31, 0
      %p525 = por %p523, %p524
      %p526 = scmp.ne.s32.totalorder %s515, %s518
      %p527 = scmp.eq.s32.totalorder %s36, 1
      %p528 = por %p526, %p527
      %p529 = scmp.ne.s32.totalorder %s518, %s519
      %p530 = scmp.eq.s32.totalorder %s36, 0
      %p531 = por %p529, %p530
      %p532 = scmp.ne.s32.totalorder %s518, %s519
      %p533 = scmp.eq.s32.totalorder %s37, 1
      %p534 = por %p532, %p533
      %p536 = scmp.ne.s32.totalorder %s519, %s535
      %p537 = scmp.eq.s32.totalorder %s37, 0
      %p538 = por %p536, %p537
      %p539 = scmp.le.s32.totalorder 1, %s31
      %p540 = scmp.lt.s32.totalorder %s31, 3
      %p541 = pnand %p539, %p540
      %p542 = pneg %p541
      // Predicated region
      $region9: #{bert_embeddings_forward.7} parent=5 // pred_check
        _
      $region10: #{bert_embeddings_forward.7} parent=5 // pred_check_branch
        %544 = sbr.rel (%p541) target = $region12
      $region11: #{bert_embeddings_forward.7} parent=5 // pred_region
        %s545 = ssub.s32 %s31, 1
        // Predicated region
        $region13: #{bert_embeddings_forward.7} parent=11 // pred_check
          %p546 = pneg %p118
        $region14: #{bert_embeddings_forward.7} parent=11 // pred_check_branch
          %548 = sbr.rel (%p546) target = $region16
        $region15: #{bert_embeddings_forward.7} parent=11 // pred_region
          _
        $region16: #{bert_embeddings_forward.7} parent=11 // pred_fallthru
          _
        // Predicated region
        $region17: #{bert_embeddings_forward.7} parent=11 // pred_check
          %p549 = pneg %p139
        $region18: #{bert_embeddings_forward.7} parent=11 // pred_check_branch
          %551 = sbr.rel (%p549) target = $region20
        $region19: #{bert_embeddings_forward.7} parent=11 // pred_region
          _
        $region20: #{bert_embeddings_forward.7} parent=11 // pred_fallthru
          _
        // Predicated region
        $region21: #{bert_embeddings_forward.7} parent=11 // pred_check
          %p552 = pneg %p160
        $region22: #{bert_embeddings_forward.7} parent=11 // pred_check_branch
          %554 = sbr.rel (%p552) target = $region24
        $region23: #{bert_embeddings_forward.7} parent=11 // pred_region
          _
        $region24: #{bert_embeddings_forward.7} parent=11 // pred_fallthru
          _
        // Predicated region
        $region25: #{bert_embeddings_forward.7} parent=11 // pred_check
          %p555 = pneg %p181
        $region26: #{bert_embeddings_forward.7} parent=11 // pred_check_branch
          %557 = sbr.rel (%p555) target = $region28
        $region27: #{bert_embeddings_forward.7} parent=11 // pred_region
          _
        $region28: #{bert_embeddings_forward.7} parent=11 // pred_fallthru
          _
        // Predicated region
        $region29: #{bert_embeddings_forward.7} parent=11 // pred_check
          %p558 = pneg %p202
        $region30: #{bert_embeddings_forward.7} parent=11 // pred_check_branch
          %560 = sbr.rel (%p558) target = $region32
        $region31: #{bert_embeddings_forward.7} parent=11 // pred_region
          _
        $region32: #{bert_embeddings_forward.7} parent=11 // pred_fallthru
          _
        // Predicated region
        $region33: #{bert_embeddings_forward.7} parent=11 // pred_check
          %p561 = pneg %p223
        $region34: #{bert_embeddings_forward.7} parent=11 // pred_check_branch
          %563 = sbr.rel (%p561) target = $region36
        $region35: #{bert_embeddings_forward.7} parent=11 // pred_region
          _
        $region36: #{bert_embeddings_forward.7} parent=11 // pred_fallthru
          _
        // Predicated region
        $region37: #{bert_embeddings_forward.7} parent=11 // pred_check
          %p564 = pneg %p244
        $region38: #{bert_embeddings_forward.7} parent=11 // pred_check_branch
          %566 = sbr.rel (%p564) target = $region40
        $region39: #{bert_embeddings_forward.7} parent=11 // pred_region
          _
        $region40: #{bert_embeddings_forward.7} parent=11 // pred_fallthru
          _
        // Predicated region
        $region41: #{bert_embeddings_forward.7} parent=11 // pred_check
          %p567 = pneg %p265
        $region42: #{bert_embeddings_forward.7} parent=11 // pred_check_branch
          %569 = sbr.rel (%p567) target = $region44
        $region43: #{bert_embeddings_forward.7} parent=11 // pred_region
          _
        $region44: #{bert_embeddings_forward.7} parent=11 // pred_fallthru
          _
        // Predicated region
        $region45: #{bert_embeddings_forward.7} parent=11 // pred_check
          %p570 = pneg %p286
        $region46: #{bert_embeddings_forward.7} parent=11 // pred_check_branch
          %572 = sbr.rel (%p570) target = $region48
        $region47: #{bert_embeddings_forward.7} parent=11 // pred_region
          _
        $region48: #{bert_embeddings_forward.7} parent=11 // pred_fallthru
          _
        // Predicated region
        $region49: #{bert_embeddings_forward.7} parent=11 // pred_check
          %p573 = pneg %p307
        $region50: #{bert_embeddings_forward.7} parent=11 // pred_check_branch
          %575 = sbr.rel (%p573) target = $region52
        $region51: #{bert_embeddings_forward.7} parent=11 // pred_region
          _
        $region52: #{bert_embeddings_forward.7} parent=11 // pred_fallthru
          _
        // Predicated region
        $region53: #{bert_embeddings_forward.7} parent=11 // pred_check
          %p576 = pneg %p328
        $region54: #{bert_embeddings_forward.7} parent=11 // pred_check_branch
          %578 = sbr.rel (%p576) target = $region56
        $region55: #{bert_embeddings_forward.7} parent=11 // pred_region
          _
        $region56: #{bert_embeddings_forward.7} parent=11 // pred_fallthru
          _
        // Predicated region
        $region57: #{bert_embeddings_forward.7} parent=11 // pred_check
          %p579 = pneg %p349
        $region58: #{bert_embeddings_forward.7} parent=11 // pred_check_branch
          %581 = sbr.rel (%p579) target = $region60
        $region59: #{bert_embeddings_forward.7} parent=11 // pred_region
          _
        $region60: #{bert_embeddings_forward.7} parent=11 // pred_fallthru
          _
        // Predicated region
        $region61: #{bert_embeddings_forward.7} parent=11 // pred_check
          %p582 = pneg %p370
        $region62: #{bert_embeddings_forward.7} parent=11 // pred_check_branch
          %584 = sbr.rel (%p582) target = $region64
        $region63: #{bert_embeddings_forward.7} parent=11 // pred_region
          _
        $region64: #{bert_embeddings_forward.7} parent=11 // pred_fallthru
          _
        // Predicated region
        $region65: #{bert_embeddings_forward.7} parent=11 // pred_check
          %p585 = pneg %p391
        $region66: #{bert_embeddings_forward.7} parent=11 // pred_check_branch
          %587 = sbr.rel (%p585) target = $region68
        $region67: #{bert_embeddings_forward.7} parent=11 // pred_region
          _
        $region68: #{bert_embeddings_forward.7} parent=11 // pred_fallthru
          _
        // Predicated region
        $region69: #{bert_embeddings_forward.7} parent=11 // pred_check
          %p588 = pneg %p412
        $region70: #{bert_embeddings_forward.7} parent=11 // pred_check_branch
          %590 = sbr.rel (%p588) target = $region72
        $region71: #{bert_embeddings_forward.7} parent=11 // pred_region
          _
        $region72: #{bert_embeddings_forward.7} parent=11 // pred_fallthru
          _
        // Predicated region
        $region73: #{bert_embeddings_forward.7} parent=11 // pred_check
          %p591 = pneg %p433
        $region74: #{bert_embeddings_forward.7} parent=11 // pred_check_branch
          %593 = sbr.rel (%p591) target = $region76
        $region75: #{bert_embeddings_forward.7} parent=11 // pred_region
          _
        $region76: #{bert_embeddings_forward.7} parent=11 // pred_fallthru
          _
        // Predicated region
        $region77: #{bert_embeddings_forward.7} parent=11 // pred_check
          %p594 = pneg %p454
        $region78: #{bert_embeddings_forward.7} parent=11 // pred_check_branch
          %596 = sbr.rel (%p594) target = $region80
        $region79: #{bert_embeddings_forward.7} parent=11 // pred_region
          _
        $region80: #{bert_embeddings_forward.7} parent=11 // pred_fallthru
          _
        // Predicated region
        $region81: #{bert_embeddings_forward.7} parent=11 // pred_check
          %p597 = pneg %p475
        $region82: #{bert_embeddings_forward.7} parent=11 // pred_check_branch
          %599 = sbr.rel (%p597) target = $region84
        $region83: #{bert_embeddings_forward.7} parent=11 // pred_region
          _
        $region84: #{bert_embeddings_forward.7} parent=11 // pred_fallthru
          _
      $region12: #{bert_embeddings_forward.7} parent=5 // pred_fallthru
        _
      %p600 = scmp.lt.s32.totalorder %s31, 2
      // Predicated region
      $region85: #{bert_embeddings_forward.7} parent=5 // pred_check
        %p601 = pneg %p600
      $region86: #{bert_embeddings_forward.7} parent=5 // pred_check_branch
        %603 = sbr.rel (%p601) target = $region88
      $region87: #{bert_embeddings_forward.7} parent=5 // pred_region
        // Predicated region
        $region89: #{bert_embeddings_forward.7} parent=87 // pred_check
          %p604 = pneg %p63
        $region90: #{bert_embeddings_forward.7} parent=87 // pred_check_branch
          %606 = sbr.rel (%p604) target = $region92
        $region91: #{bert_embeddings_forward.7} parent=87 // pred_region
          %p607 = scmp.lt.s32.totalorder %s38, 1
          %s608 = scalar_select %p607, %s38, 1
          %s609 = smul.addr %s608, 4
          %s610 = scalar_lea.vmem %s0, %s609
        $region92: #{bert_embeddings_forward.7} parent=87 // pred_fallthru
          _
        // Predicated region
        $region93: #{bert_embeddings_forward.7} parent=87 // pred_check
          %p611 = pneg %p91
        $region94: #{bert_embeddings_forward.7} parent=87 // pred_check_branch
          %613 = sbr.rel (%p611) target = $region96
        $region95: #{bert_embeddings_forward.7} parent=87 // pred_region
          %p614 = scmp.lt.s32.totalorder %s38, 1
          %s615 = scalar_select %p614, %s38, 1
          %p616 = scmp.lt.s32.totalorder %s39, 0
          %s617 = scalar_select %p616, %s39, 0
          %s618 = sadd.s32 %s617, %s615
          %s619 = smul.addr %s618, 8
          %s620 = scalar_lea.vmem %s1, %s619
        $region96: #{bert_embeddings_forward.7} parent=87 // pred_fallthru
          _
      $region88: #{bert_embeddings_forward.7} parent=5 // pred_fallthru
        _
      %p621 = scmp.le.s32.totalorder 1, %s31
      %p622 = scmp.lt.s32.totalorder %s31, 3
      %p623 = pnand %p621, %p622
      %p624 = pneg %p623
      // Predicated region
      $region97: #{bert_embeddings_forward.7} parent=5 // pred_check
        _
      $region98: #{bert_embeddings_forward.7} parent=5 // pred_check_branch
        %626 = sbr.rel (%p623) target = $region100
      $region99: #{bert_embeddings_forward.7} parent=5 // pred_region
        %s627 = ssub.s32 %s31, 1
        %p628 = scmp.lt.s32.totalorder %s40, 1
        %s629 = scalar_select %p628, %s40, 1
        %s630 = smul.addr %s629, 4
        %s631 = scalar_lea.vmem %s0, %s630
        %p632 = pneg %p69
        %p633 = pneg %p66
        %p634 = scmp.lt.s32.totalorder %s40, 1
        %s635 = scalar_select %p634, %s40, 1
        %p636 = scmp.lt.s32.totalorder %s41, 0
        %s637 = scalar_select %p636, %s41, 0
        %s638 = sadd.s32 %s637, %s635
        %s639 = smul.addr %s638, 8
        %s640 = scalar_lea.vmem %s1, %s639
        %p641 = pneg %p97
        %p642 = pneg %p94
        %p643 = pneg %p118
        %p644 = pneg %p115
        %p645 = pneg %p139
        %p646 = pneg %p136
        %p647 = pneg %p160
        %p648 = pneg %p157
        %p649 = pneg %p181
        %p650 = pneg %p178
        %p651 = pneg %p202
        %p652 = pneg %p199
        %p653 = pneg %p223
        %p654 = pneg %p220
        %p655 = pneg %p244
        %p656 = pneg %p241
        %p657 = pneg %p265
        %p658 = pneg %p262
        %p659 = pneg %p286
        %p660 = pneg %p283
        %p661 = pneg %p307
        %p662 = pneg %p304
        %p663 = pneg %p328
        %p664 = pneg %p325
        %p665 = pneg %p349
        %p666 = pneg %p346
        %p667 = pneg %p370
        %p668 = pneg %p367
        %p669 = pneg %p391
        %p670 = pneg %p388
        %p671 = pneg %p412
        %p672 = pneg %p409
        %p673 = pneg %p433
        %p674 = pneg %p430
        %p675 = pneg %p454
        %p676 = pneg %p451
        %p677 = pneg %p475
        %p678 = pneg %p472
        %p679 = pneg %p503
        %p680 = pneg %p500
        %s681 = sand.u32 %s490, 1
        %s682 = scalar_lea.sflag [#allocation4], %s681
        %s683 = sand.u32 %s490, 1
        %s684 = smul.addr %s683, 4
        %s685 = scalar_lea.vmem [#allocation3], %s684
        %p686 = pneg %p531
        %p687 = pneg %p528
        %p688 = scmp.lt.s32.totalorder %s40, 1
        %s689 = scalar_select %p688, %s40, 1
        %p690 = scmp.lt.s32.totalorder %s41, 0
        %s691 = scalar_select %p690, %s41, 0
        %s692 = sadd.s32 %s691, %s689
        %s693 = smul.addr %s692, 8
        %s694 = scalar_lea.vmem %s21, %s693
        %p695 = scmp.lt.s32.totalorder %s40, 1
        %s696 = scalar_select %p695, %s40, 1
        %s697 = smul.addr %s696, 4
        %s698 = scalar_lea.vmem %s0, %s697
        %p699 = scmp.lt.s32.totalorder %s40, 1
        %s700 = scalar_select %p699, %s40, 1
        %p701 = scmp.lt.s32.totalorder %s41, 0
        %s702 = scalar_select %p701, %s41, 0
        %s703 = sadd.s32 %s702, %s700
        %s704 = smul.addr %s703, 8
        %s705 = scalar_lea.vmem %s1, %s704
        %p706 = scmp.lt.s32.totalorder %s40, 1
        %s707 = scalar_select %p706, %s40, 1
        %p708 = scmp.lt.s32.totalorder %s41, 0
        %s709 = scalar_select %p708, %s41, 0
        %s710 = sadd.s32 %s709, %s707
        %s711 = smul.addr %s710, 8
        %s712 = scalar_lea.vmem %s21, %s711
        %v714 = vld [vmem:[%s698] sm:$0xf]
        %v715 = vunpack.c.l.bf16 %v714
        %v716 = vld [vmem:[%s2] sm:$0xf]
        %v717 = vld [vmem:[%s2 + $0x4] sm:$0xf]
        %v718 = vld [vmem:[%s2 + $0x8] sm:$0xf]
        %v719 = vld [vmem:[%s2 + $0xc] sm:$0xf]
        %v720 = vld [vmem:[%s3] sm:$0x1]
        %v722 = vlaneseq
        %v723 = vshrl.u32 %v722, 7
        %v724 = vsub.s32 0, %v723
        %v725 = vrot.slane %v720, %v724
        %v731 = vunpack.c.l.b16 %v716
        %v732 = vunpack.c.l.b16 %v717
        %v733 = vunpack.c.l.b16 %v718
        %v734 = vunpack.c.l.b16 %v719
        %v735 = vpack.c.b16 %v732, %v731
        %v736 = vpack.c.b16 %v734, %v733
        %vm739 = vcmask 261120
        %v741 = vsel %vm739, %v714, 0
        %743 = vmatprep.subr.bf16.mxu0 0
        %744 = vmatpush1.bf16.msra.mxu0 0
        %745 = vmatprep.subr.bf16.mxu0 0
        %746 = vmatpush1.bf16.msra.mxu0 0
        %747 = vmatprep.subr.bf16.mxu0 0
        %748 = vmatpush1.bf16.msra.mxu0 0
        %749 = vmatprep.subr.bf16.mxu0 0
        %750 = vmatpush1.bf16.msra.mxu0 0
        %751 = vmatprep.subr.bf16.mxu0 0
        %752 = vmatpush1.bf16.msra.mxu0 0
        %753 = vmatprep.subr.bf16.mxu0 0
        %754 = vmatpush1.bf16.msra.mxu0 0
        %755 = vmatprep.subr.bf16.mxu0 0
        %756 = vmatpush1.bf16.msra.mxu0 %v736
        %757 = vmatprep.subr.bf16.mxu0 0
        %758 = vmatpush1.bf16.msra.mxu0 %v735
        %759 = vmatprep.subr.bf16.mxu0 0
        %760 = vmatpush2.bf16.msra.mxu0 0
        %761 = vmatprep.subr.bf16.mxu0 0
        %762 = vmatpush2.bf16.msra.mxu0 0
        %763 = vmatprep.subr.bf16.mxu0 0
        %764 = vmatpush2.bf16.msra.mxu0 0
        %765 = vmatprep.subr.bf16.mxu0 0
        %766 = vmatpush2.bf16.msra.mxu0 0
        %767 = vmatprep.subr.bf16.mxu0 0
        %768 = vmatpush2.bf16.msra.mxu0 0
        %769 = vmatprep.subr.bf16.mxu0 0
        %770 = vmatpush2.bf16.msra.mxu0 0
        %771 = vmatprep.subr.bf16.mxu0 0
        %772 = vmatpush2.bf16.msra.mxu0 0
        %773 = vmatprep.subr.bf16.mxu0 0
        %774 = vmatpush2.bf16.msra.mxu0 0
        %775 = vmatprep.mubr.bf16.mxu0 0
        %776 = vmatmul.mubr.bf16.gmra.mxu0 %v741
        %v777 = vpop.f32.mrf.mxu0
        %v778 = vadd.f32 %v725, %v777
        %v779 = vpop.f32.mrf.mxu0
        %v780 = vpop.f32.mrf.mxu0
        %v781 = vpop.f32.mrf.mxu0
        %782 = vdwg.mxu0
        %v783 = vld [vmem:[%s4] sm:$0xf]
        %v784 = vld [vmem:[%s4 + $0x4] sm:$0xf]
        %v785 = vld [vmem:[%s4 + $0x8] sm:$0xf]
        %v786 = vld [vmem:[%s4 + $0xc] sm:$0xf]
        %v787 = vld [vmem:[%s5] sm:$0x1]
        %v789 = vlaneseq
        %v790 = vshrl.u32 %v789, 7
        %v791 = vsub.s32 0, %v790
        %v792 = vrot.slane %v787, %v791
        %v798 = vunpack.c.l.b16 %v783
        %v799 = vunpack.c.l.b16 %v784
        %v800 = vunpack.c.l.b16 %v785
        %v801 = vunpack.c.l.b16 %v786
        %v802 = vpack.c.b16 %v799, %v798
        %v803 = vpack.c.b16 %v801, %v800
        %806 = vmatprep.subr.bf16.mxu0 0
        %807 = vmatpush1.bf16.msra.mxu0 0
        %808 = vmatprep.subr.bf16.mxu0 0
        %809 = vmatpush1.bf16.msra.mxu0 0
        %810 = vmatprep.subr.bf16.mxu0 0
        %811 = vmatpush1.bf16.msra.mxu0 0
        %812 = vmatprep.subr.bf16.mxu0 0
        %813 = vmatpush1.bf16.msra.mxu0 0
        %814 = vmatprep.subr.bf16.mxu0 0
        %815 = vmatpush1.bf16.msra.mxu0 0
        %816 = vmatprep.subr.bf16.mxu0 0
        %817 = vmatpush1.bf16.msra.mxu0 0
        %818 = vmatprep.subr.bf16.mxu0 0
        %819 = vmatpush1.bf16.msra.mxu0 %v803
        %820 = vmatprep.subr.bf16.mxu0 0
        %821 = vmatpush1.bf16.msra.mxu0 %v802
        %822 = vmatprep.subr.bf16.mxu0 0
        %823 = vmatpush2.bf16.msra.mxu0 0
        %824 = vmatprep.subr.bf16.mxu0 0
        %825 = vmatpush2.bf16.msra.mxu0 0
        %826 = vmatprep.subr.bf16.mxu0 0
        %827 = vmatpush2.bf16.msra.mxu0 0
        %828 = vmatprep.subr.bf16.mxu0 0
        %829 = vmatpush2.bf16.msra.mxu0 0
        %830 = vmatprep.subr.bf16.mxu0 0
        %831 = vmatpush2.bf16.msra.mxu0 0
        %832 = vmatprep.subr.bf16.mxu0 0
        %833 = vmatpush2.bf16.msra.mxu0 0
        %834 = vmatprep.subr.bf16.mxu0 0
        %835 = vmatpush2.bf16.msra.mxu0 0
        %836 = vmatprep.subr.bf16.mxu0 0
        %837 = vmatpush2.bf16.msra.mxu0 0
        %838 = vmatprep.mubr.bf16.mxu0 0
        %839 = vmatmul.mubr.bf16.gmra.mxu0 %v741
        %v840 = vpop.f32.mrf.mxu0
        %v841 = vadd.f32 %v792, %v840
        %v842 = vpop.f32.mrf.mxu0
        %v843 = vpop.f32.mrf.mxu0
        %v844 = vpop.f32.mrf.mxu0
        %845 = vdwg.mxu0
        %v846 = vld [vmem:[%s6] sm:$0xf]
        %v847 = vld [vmem:[%s6 + $0x4] sm:$0xf]
        %v848 = vld [vmem:[%s6 + $0x8] sm:$0xf]
        %v849 = vld [vmem:[%s6 + $0xc] sm:$0xf]
        %v850 = vld [vmem:[%s7] sm:$0x1]
        %v852 = vlaneseq
        %v853 = vshrl.u32 %v852, 7
        %v854 = vsub.s32 0, %v853
        %v855 = vrot.slane %v850, %v854
        %v861 = vunpack.c.l.b16 %v846
        %v862 = vunpack.c.l.b16 %v847
        %v863 = vunpack.c.l.b16 %v848
        %v864 = vunpack.c.l.b16 %v849
        %v865 = vpack.c.b16 %v862, %v861
        %v866 = vpack.c.b16 %v864, %v863
        %869 = vmatprep.subr.bf16.mxu0 0
        %870 = vmatpush1.bf16.msra.mxu0 0
        %871 = vmatprep.subr.bf16.mxu0 0
        %872 = vmatpush1.bf16.msra.mxu0 0
        %873 = vmatprep.subr.bf16.mxu0 0
        %874 = vmatpush1.bf16.msra.mxu0 0
        %875 = vmatprep.subr.bf16.mxu0 0
        %876 = vmatpush1.bf16.msra.mxu0 0
        %877 = vmatprep.subr.bf16.mxu0 0
        %878 = vmatpush1.bf16.msra.mxu0 0
        %879 = vmatprep.subr.bf16.mxu0 0
        %880 = vmatpush1.bf16.msra.mxu0 0
        %881 = vmatprep.subr.bf16.mxu0 0
        %882 = vmatpush1.bf16.msra.mxu0 %v866
        %883 = vmatprep.subr.bf16.mxu0 0
        %884 = vmatpush1.bf16.msra.mxu0 %v865
        %885 = vmatprep.subr.bf16.mxu0 0
        %886 = vmatpush2.bf16.msra.mxu0 0
        %887 = vmatprep.subr.bf16.mxu0 0
        %888 = vmatpush2.bf16.msra.mxu0 0
        %889 = vmatprep.subr.bf16.mxu0 0
        %890 = vmatpush2.bf16.msra.mxu0 0
        %891 = vmatprep.subr.bf16.mxu0 0
        %892 = vmatpush2.bf16.msra.mxu0 0
        %893 = vmatprep.subr.bf16.mxu0 0
        %894 = vmatpush2.bf16.msra.mxu0 0
        %895 = vmatprep.subr.bf16.mxu0 0
        %896 = vmatpush2.bf16.msra.mxu0 0
        %897 = vmatprep.subr.bf16.mxu0 0
        %898 = vmatpush2.bf16.msra.mxu0 0
        %899 = vmatprep.subr.bf16.mxu0 0
        %900 = vmatpush2.bf16.msra.mxu0 0
        %901 = vmatprep.mubr.bf16.mxu0 0
        %902 = vmatmul.mubr.bf16.gmra.mxu0 %v741
        %v903 = vpop.f32.mrf.mxu0
        %v904 = vadd.f32 %v855, %v903
        %v905 = vpop.f32.mrf.mxu0
        %v906 = vpop.f32.mrf.mxu0
        %v907 = vpop.f32.mrf.mxu0
        %908 = vdwg.mxu0
        %v909 = vpack.c.bf16 %v778, %v778
        %v910 = vpack.c.bf16 %v841, %v841
        %v911 = vpack.c.bf16 %v904, %v904
        %vm912 = vcmask 64512
        %v914 = vsel %vm912, %v909, 0
        %v917 = vsel %vm912, %v910, 0
        %919 = vmatprep.subr.bf16.mxu0 0
        %920 = vmatpush1.bf16.xpose.msra.mxu0 0
        %921 = vmatprep.subr.bf16.mxu0 0
        %922 = vmatpush1.bf16.xpose.msra.mxu0 0
        %923 = vmatprep.subr.bf16.mxu0 0
        %924 = vmatpush1.bf16.xpose.msra.mxu0 0
        %925 = vmatprep.subr.bf16.mxu0 0
        %926 = vmatpush1.bf16.xpose.msra.mxu0 0
        %927 = vmatprep.subr.bf16.mxu0 0
        %928 = vmatpush1.bf16.xpose.msra.mxu0 0
        %929 = vmatprep.subr.bf16.mxu0 0
        %930 = vmatpush1.bf16.xpose.msra.mxu0 0
        %931 = vmatprep.subr.bf16.mxu0 0
        %932 = vmatpush1.bf16.xpose.msra.mxu0 0
        %933 = vmatprep.subr.bf16.mxu0 0
        %934 = vmatpush1.bf16.xpose.msra.mxu0 %v917
        %935 = vmatprep.subr.bf16.mxu0 0
        %936 = vmatpush2.bf16.xpose.msra.mxu0 0
        %937 = vmatprep.subr.bf16.mxu0 0
        %938 = vmatpush2.bf16.xpose.msra.mxu0 0
        %939 = vmatprep.subr.bf16.mxu0 0
        %940 = vmatpush2.bf16.xpose.msra.mxu0 0
        %941 = vmatprep.subr.bf16.mxu0 0
        %942 = vmatpush2.bf16.xpose.msra.mxu0 0
        %943 = vmatprep.subr.bf16.mxu0 0
        %944 = vmatpush2.bf16.xpose.msra.mxu0 0
        %945 = vmatprep.subr.bf16.mxu0 0
        %946 = vmatpush2.bf16.xpose.msra.mxu0 0
        %947 = vmatprep.subr.bf16.mxu0 0
        %948 = vmatpush2.bf16.xpose.msra.mxu0 0
        %949 = vmatprep.subr.bf16.mxu0 0
        %950 = vmatpush2.bf16.xpose.msra.mxu0 0
        %951 = vmatprep.mubr.bf16.mxu0 0
        %952 = vmatmul.mubr.bf16.gmra.mxu0 %v914
        %v953 = vpop.f32.mrf.mxu0
        %v954 = vadd.f32 0.0, %v953
        %v955 = vpop.f32.mrf.mxu0
        %v956 = vpop.f32.mrf.mxu0
        %v957 = vpop.f32.mrf.mxu0
        %958 = vdwg.mxu0
        %v959 = vsel %vm912, %v954, -inf
        %960 = vmax.xlane.f32.xlu0 %v959
        %v961 = vpop.xlane.xlu0 %960
        %v962 = vsub.f32 %v954, %v961
        %v963 = vmul.f32 %v962, 1.442695
        %v964 = vpow.pop %v963
        %v965 = vsel %vm912, %v964, 0.0
        %966 = vadd.xlane.f32.xlu0 %v965
        %v967 = vpop.xlane.xlu0 %966
        %v968 = vrcp.pop %v967
        %v969 = vmul.f32 %v964, %v968
        %v970 = vpack.c.bf16 %v969, %v969
        %v972 = vsel %vm912, %v970, 0
        %vm974 = vcmask 1043456
        %v976 = vsel %vm974, %v911, 0
        %978 = vmatprep.subr.bf16.mxu0 0
        %979 = vmatpush1.bf16.msra.mxu0 0
        %980 = vmatprep.subr.bf16.mxu0 0
        %981 = vmatpush1.bf16.msra.mxu0 0
        %982 = vmatprep.subr.bf16.mxu0 0
        %983 = vmatpush1.bf16.msra.mxu0 0
        %984 = vmatprep.subr.bf16.mxu0 0
        %985 = vmatpush1.bf16.msra.mxu0 0
        %986 = vmatprep.subr.bf16.mxu0 0
        %987 = vmatpush1.bf16.msra.mxu0 0
        %988 = vmatprep.subr.bf16.mxu0 0
        %989 = vmatpush1.bf16.msra.mxu0 0
        %990 = vmatprep.subr.bf16.mxu0 0
        %991 = vmatpush1.bf16.msra.mxu0 0
        %992 = vmatprep.subr.bf16.mxu0 0
        %993 = vmatpush1.bf16.msra.mxu0 %v976
        %994 = vmatprep.subr.bf16.mxu0 0
        %995 = vmatpush2.bf16.msra.mxu0 0
        %996 = vmatprep.subr.bf16.mxu0 0
        %997 = vmatpush2.bf16.msra.mxu0 0
        %998 = vmatprep.subr.bf16.mxu0 0
        %999 = vmatpush2.bf16.msra.mxu0 0
        %1000 = vmatprep.subr.bf16.mxu0 0
        %1001 = vmatpush2.bf16.msra.mxu0 0
        %1002 = vmatprep.subr.bf16.mxu0 0
        %1003 = vmatpush2.bf16.msra.mxu0 0
        %1004 = vmatprep.subr.bf16.mxu0 0
        %1005 = vmatpush2.bf16.msra.mxu0 0
        %1006 = vmatprep.subr.bf16.mxu0 0
        %1007 = vmatpush2.bf16.msra.mxu0 0
        %1008 = vmatprep.subr.bf16.mxu0 0
        %1009 = vmatpush2.bf16.msra.mxu0 0
        %1010 = vmatprep.mubr.bf16.mxu0 0
        %1011 = vmatmul.mubr.bf16.gmra.mxu0 %v972
        %v1012 = vpop.f32.mrf.mxu0
        %v1013 = vadd.f32 0.0, %v1012
        %v1014 = vpop.f32.mrf.mxu0
        %v1015 = vpop.f32.mrf.mxu0
        %v1016 = vpop.f32.mrf.mxu0
        %1017 = vdwg.mxu0
        %v1018 = vpack.c.bf16 %v1013, %v1013
        %vm1019 = vcmask 60416
        %1020 = vst.msk [vmem:[#allocation2] sm:$0xf] %vm1019, %v1018
        %1022 = vrot.lane.b32.xlu0 %v909, 120
        %v1023 = vpop.permute.xlu0 %1022
        %1025 = vrot.lane.b32.xlu0 %v910, 120
        %v1026 = vpop.permute.xlu0 %1025
        %v1028 = vsel %vm912, %v1023, 0
        %v1031 = vsel %vm912, %v1026, 0
        %1033 = vmatprep.subr.bf16.mxu0 0
        %1034 = vmatpush1.bf16.xpose.msra.mxu0 0
        %1035 = vmatprep.subr.bf16.mxu0 0
        %1036 = vmatpush1.bf16.xpose.msra.mxu0 0
        %1037 = vmatprep.subr.bf16.mxu0 0
        %1038 = vmatpush1.bf16.xpose.msra.mxu0 0
        %1039 = vmatprep.subr.bf16.mxu0 0
        %1040 = vmatpush1.bf16.xpose.msra.mxu0 0
        %1041 = vmatprep.subr.bf16.mxu0 0
        %1042 = vmatpush1.bf16.xpose.msra.mxu0 0
        %1043 = vmatprep.subr.bf16.mxu0 0
        %1044 = vmatpush1.bf16.xpose.msra.mxu0 0
        %1045 = vmatprep.subr.bf16.mxu0 0
        %1046 = vmatpush1.bf16.xpose.msra.mxu0 0
        %1047 = vmatprep.subr.bf16.mxu0 0
        %1048 = vmatpush1.bf16.xpose.msra.mxu0 %v1031
        %1049 = vmatprep.subr.bf16.mxu0 0
        %1050 = vmatpush2.bf16.xpose.msra.mxu0 0
        %1051 = vmatprep.subr.bf16.mxu0 0
        %1052 = vmatpush2.bf16.xpose.msra.mxu0 0
        %1053 = vmatprep.subr.bf16.mxu0 0
        %1054 = vmatpush2.bf16.xpose.msra.mxu0 0
        %1055 = vmatprep.subr.bf16.mxu0 0
        %1056 = vmatpush2.bf16.xpose.msra.mxu0 0
        %1057 = vmatprep.subr.bf16.mxu0 0
        %1058 = vmatpush2.bf16.xpose.msra.mxu0 0
        %1059 = vmatprep.subr.bf16.mxu0 0
        %1060 = vmatpush2.bf16.xpose.msra.mxu0 0
        %1061 = vmatprep.subr.bf16.mxu0 0
        %1062 = vmatpush2.bf16.xpose.msra.mxu0 0
        %1063 = vmatprep.subr.bf16.mxu0 0
        %1064 = vmatpush2.bf16.xpose.msra.mxu0 0
        %1065 = vmatprep.mubr.bf16.mxu0 0
        %1066 = vmatmul.mubr.bf16.gmra.mxu0 %v1028
        %v1067 = vpop.f32.mrf.mxu0
        %v1068 = vadd.f32 0.0, %v1067
        %v1069 = vpop.f32.mrf.mxu0
        %v1070 = vpop.f32.mrf.mxu0
        %v1071 = vpop.f32.mrf.mxu0
        %1072 = vdwg.mxu0
        %v1073 = vsel %vm912, %v1068, -inf
        %1074 = vmax.xlane.f32.xlu0 %v1073
        %v1075 = vpop.xlane.xlu0 %1074
        %v1076 = vsub.f32 %v1068, %v1075
        %v1077 = vmul.f32 %v1076, 1.442695
        %v1078 = vpow.pop %v1077
        %v1079 = vsel %vm912, %v1078, 0.0
        %1080 = vadd.xlane.f32.xlu0 %v1079
        %v1081 = vpop.xlane.xlu0 %1080
        %v1082 = vrcp.pop %v1081
        %v1083 = vmul.f32 %v1078, %v1082
        %v1084 = vpack.c.bf16 %v1083, %v1083
        %1086 = vrot.lane.b32.xlu0 %v911, 120
        %v1087 = vpop.permute.xlu0 %1086
        %v1089 = vsel %vm912, %v1084, 0
        %v1092 = vsel %vm974, %v1087, 0
        %1094 = vmatprep.subr.bf16.mxu0 0
        %1095 = vmatpush1.bf16.msra.mxu0 0
        %1096 = vmatprep.subr.bf16.mxu0 0
        %1097 = vmatpush1.bf16.msra.mxu0 0
        %1098 = vmatprep.subr.bf16.mxu0 0
        %1099 = vmatpush1.bf16.msra.mxu0 0
        %1100 = vmatprep.subr.bf16.mxu0 0
        %1101 = vmatpush1.bf16.msra.mxu0 0
        %1102 = vmatprep.subr.bf16.mxu0 0
        %1103 = vmatpush1.bf16.msra.mxu0 0
        %1104 = vmatprep.subr.bf16.mxu0 0
        %1105 = vmatpush1.bf16.msra.mxu0 0
        %1106 = vmatprep.subr.bf16.mxu0 0
        %1107 = vmatpush1.bf16.msra.mxu0 0
        %1108 = vmatprep.subr.bf16.mxu0 0
        %1109 = vmatpush1.bf16.msra.mxu0 %v1092
        %1110 = vmatprep.subr.bf16.mxu0 0
        %1111 = vmatpush2.bf16.msra.mxu0 0
        %1112 = vmatprep.subr.bf16.mxu0 0
        %1113 = vmatpush2.bf16.msra.mxu0 0
        %1114 = vmatprep.subr.bf16.mxu0 0
        %1115 = vmatpush2.bf16.msra.mxu0 0
        %1116 = vmatprep.subr.bf16.mxu0 0
        %1117 = vmatpush2.bf16.msra.mxu0 0
        %1118 = vmatprep.subr.bf16.mxu0 0
        %1119 = vmatpush2.bf16.msra.mxu0 0
        %1120 = vmatprep.subr.bf16.mxu0 0
        %1121 = vmatpush2.bf16.msra.mxu0 0
        %1122 = vmatprep.subr.bf16.mxu0 0
        %1123 = vmatpush2.bf16.msra.mxu0 0
        %1124 = vmatprep.subr.bf16.mxu0 0
        %1125 = vmatpush2.bf16.msra.mxu0 0
        %1126 = vmatprep.mubr.bf16.mxu0 0
        %1127 = vmatmul.mubr.bf16.gmra.mxu0 %v1089
        %v1128 = vpop.f32.mrf.mxu0
        %v1129 = vadd.f32 0.0, %v1128
        %v1130 = vpop.f32.mrf.mxu0
        %v1131 = vpop.f32.mrf.mxu0
        %v1132 = vpop.f32.mrf.mxu0
        %1133 = vdwg.mxu0
        %v1134 = vpack.c.bf16 %v1129, %v1129
        %v1136 = vunpack.c.l.b16 %v1134
        %v1137 = vpack.c.b16 %v1136, %v1136
        %1138 = vrot.lane.b32.xlu0 %v1137, 8
        %v1139 = vpop.permute.xlu0 %1138
        %vm1141 = vcmask 126016
        %1142 = vst.msk [vmem:[#allocation2] sm:$0xf] %vm1141, %v1139
        %1143 = vrot.lane.b32.xlu0 %v909, 112
        %v1144 = vpop.permute.xlu0 %1143
        %1145 = vrot.lane.b32.xlu0 %v910, 112
        %v1146 = vpop.permute.xlu0 %1145
        %v1148 = vsel %vm912, %v1144, 0
        %v1151 = vsel %vm912, %v1146, 0
        %1153 = vmatprep.subr.bf16.mxu0 0
        %1154 = vmatpush1.bf16.xpose.msra.mxu0 0
        %1155 = vmatprep.subr.bf16.mxu0 0
        %1156 = vmatpush1.bf16.xpose.msra.mxu0 0
        %1157 = vmatprep.subr.bf16.mxu0 0
        %1158 = vmatpush1.bf16.xpose.msra.mxu0 0
        %1159 = vmatprep.subr.bf16.mxu0 0
        %1160 = vmatpush1.bf16.xpose.msra.mxu0 0
        %1161 = vmatprep.subr.bf16.mxu0 0
        %1162 = vmatpush1.bf16.xpose.msra.mxu0 0
        %1163 = vmatprep.subr.bf16.mxu0 0
        %1164 = vmatpush1.bf16.xpose.msra.mxu0 0
        %1165 = vmatprep.subr.bf16.mxu0 0
        %1166 = vmatpush1.bf16.xpose.msra.mxu0 0
        %1167 = vmatprep.subr.bf16.mxu0 0
        %1168 = vmatpush1.bf16.xpose.msra.mxu0 %v1151
        %1169 = vmatprep.subr.bf16.mxu0 0
        %1170 = vmatpush2.bf16.xpose.msra.mxu0 0
        %1171 = vmatprep.subr.bf16.mxu0 0
        %1172 = vmatpush2.bf16.xpose.msra.mxu0 0
        %1173 = vmatprep.subr.bf16.mxu0 0
        %1174 = vmatpush2.bf16.xpose.msra.mxu0 0
        %1175 = vmatprep.subr.bf16.mxu0 0
        %1176 = vmatpush2.bf16.xpose.msra.mxu0 0
        %1177 = vmatprep.subr.bf16.mxu0 0
        %1178 = vmatpush2.bf16.xpose.msra.mxu0 0
        %1179 = vmatprep.subr.bf16.mxu0 0
        %1180 = vmatpush2.bf16.xpose.msra.mxu0 0
        %1181 = vmatprep.subr.bf16.mxu0 0
        %1182 = vmatpush2.bf16.xpose.msra.mxu0 0
        %1183 = vmatprep.subr.bf16.mxu0 0
        %1184 = vmatpush2.bf16.xpose.msra.mxu0 0
        %1185 = vmatprep.mubr.bf16.mxu0 0
        %1186 = vmatmul.mubr.bf16.gmra.mxu0 %v1148
        %v1187 = vpop.f32.mrf.mxu0
        %v1188 = vadd.f32 0.0, %v1187
        %v1189 = vpop.f32.mrf.mxu0
        %v1190 = vpop.f32.mrf.mxu0
        %v1191 = vpop.f32.mrf.mxu0
        %1192 = vdwg.mxu0
        %v1193 = vsel %vm912, %v1188, -inf
        %1194 = vmax.xlane.f32.xlu0 %v1193
        %v1195 = vpop.xlane.xlu0 %1194
        %v1196 = vsub.f32 %v1188, %v1195
        %v1197 = vmul.f32 %v1196, 1.442695
        %v1198 = vpow.pop %v1197
        %v1199 = vsel %vm912, %v1198, 0.0
        %1200 = vadd.xlane.f32.xlu0 %v1199
        %v1201 = vpop.xlane.xlu0 %1200
        %v1202 = vrcp.pop %v1201
        %v1203 = vmul.f32 %v1198, %v1202
        %v1204 = vpack.c.bf16 %v1203, %v1203
        %1205 = vrot.lane.b32.xlu0 %v911, 112
        %v1206 = vpop.permute.xlu0 %1205
        %v1208 = vsel %vm912, %v1204, 0
        %v1211 = vsel %vm974, %v1206, 0
        %1213 = vmatprep.subr.bf16.mxu0 0
        %1214 = vmatpush1.bf16.msra.mxu0 0
        %1215 = vmatprep.subr.bf16.mxu0 0
        %1216 = vmatpush1.bf16.msra.mxu0 0
        %1217 = vmatprep.subr.bf16.mxu0 0
        %1218 = vmatpush1.bf16.msra.mxu0 0
        %1219 = vmatprep.subr.bf16.mxu0 0
        %1220 = vmatpush1.bf16.msra.mxu0 0
        %1221 = vmatprep.subr.bf16.mxu0 0
        %1222 = vmatpush1.bf16.msra.mxu0 0
        %1223 = vmatprep.subr.bf16.mxu0 0
        %1224 = vmatpush1.bf16.msra.mxu0 0
        %1225 = vmatprep.subr.bf16.mxu0 0
        %1226 = vmatpush1.bf16.msra.mxu0 0
        %1227 = vmatprep.subr.bf16.mxu0 0
        %1228 = vmatpush1.bf16.msra.mxu0 %v1211
        %1229 = vmatprep.subr.bf16.mxu0 0
        %1230 = vmatpush2.bf16.msra.mxu0 0
        %1231 = vmatprep.subr.bf16.mxu0 0
        %1232 = vmatpush2.bf16.msra.mxu0 0
        %1233 = vmatprep.subr.bf16.mxu0 0
        %1234 = vmatpush2.bf16.msra.mxu0 0
        %1235 = vmatprep.subr.bf16.mxu0 0
        %1236 = vmatpush2.bf16.msra.mxu0 0
        %1237 = vmatprep.subr.bf16.mxu0 0
        %1238 = vmatpush2.bf16.msra.mxu0 0
        %1239 = vmatprep.subr.bf16.mxu0 0
        %1240 = vmatpush2.bf16.msra.mxu0 0
        %1241 = vmatprep.subr.bf16.mxu0 0
        %1242 = vmatpush2.bf16.msra.mxu0 0
        %1243 = vmatprep.subr.bf16.mxu0 0
        %1244 = vmatpush2.bf16.msra.mxu0 0
        %1245 = vmatprep.mubr.bf16.mxu0 0
        %1246 = vmatmul.mubr.bf16.gmra.mxu0 %v1208
        %v1247 = vpop.f32.mrf.mxu0
        %v1248 = vadd.f32 0.0, %v1247
        %v1249 = vpop.f32.mrf.mxu0
        %v1250 = vpop.f32.mrf.mxu0
        %v1251 = vpop.f32.mrf.mxu0
        %1252 = vdwg.mxu0
        %v1253 = vpack.c.bf16 %v1248, %v1248
        %v1255 = vunpack.c.l.b16 %v1253
        %v1256 = vpack.c.b16 %v1255, %v1255
        %1257 = vrot.lane.b32.xlu0 %v1256, 16
        %v1258 = vpop.permute.xlu0 %1257
        %vm1260 = vcmask 191616
        %1261 = vst.msk [vmem:[#allocation2] sm:$0xf] %vm1260, %v1258
        %1262 = vrot.lane.b32.xlu0 %v909, 104
        %v1263 = vpop.permute.xlu0 %1262
        %1264 = vrot.lane.b32.xlu0 %v910, 104
        %v1265 = vpop.permute.xlu0 %1264
        %v1267 = vsel %vm912, %v1263, 0
        %v1270 = vsel %vm912, %v1265, 0
        %1272 = vmatprep.subr.bf16.mxu0 0
        %1273 = vmatpush1.bf16.xpose.msra.mxu0 0
        %1274 = vmatprep.subr.bf16.mxu0 0
        %1275 = vmatpush1.bf16.xpose.msra.mxu0 0
        %1276 = vmatprep.subr.bf16.mxu0 0
        %1277 = vmatpush1.bf16.xpose.msra.mxu0 0
        %1278 = vmatprep.subr.bf16.mxu0 0
        %1279 = vmatpush1.bf16.xpose.msra.mxu0 0
        %1280 = vmatprep.subr.bf16.mxu0 0
        %1281 = vmatpush1.bf16.xpose.msra.mxu0 0
        %1282 = vmatprep.subr.bf16.mxu0 0
        %1283 = vmatpush1.bf16.xpose.msra.mxu0 0
        %1284 = vmatprep.subr.bf16.mxu0 0
        %1285 = vmatpush1.bf16.xpose.msra.mxu0 0
        %1286 = vmatprep.subr.bf16.mxu0 0
        %1287 = vmatpush1.bf16.xpose.msra.mxu0 %v1270
        %1288 = vmatprep.subr.bf16.mxu0 0
        %1289 = vmatpush2.bf16.xpose.msra.mxu0 0
        %1290 = vmatprep.subr.bf16.mxu0 0
        %1291 = vmatpush2.bf16.xpose.msra.mxu0 0
        %1292 = vmatprep.subr.bf16.mxu0 0
        %1293 = vmatpush2.bf16.xpose.msra.mxu0 0
        %1294 = vmatprep.subr.bf16.mxu0 0
        %1295 = vmatpush2.bf16.xpose.msra.mxu0 0
        %1296 = vmatprep.subr.bf16.mxu0 0
        %1297 = vmatpush2.bf16.xpose.msra.mxu0 0
        %1298 = vmatprep.subr.bf16.mxu0 0
        %1299 = vmatpush2.bf16.xpose.msra.mxu0 0
        %1300 = vmatprep.subr.bf16.mxu0 0
        %1301 = vmatpush2.bf16.xpose.msra.mxu0 0
        %1302 = vmatprep.subr.bf16.mxu0 0
        %1303 = vmatpush2.bf16.xpose.msra.mxu0 0
        %1304 = vmatprep.mubr.bf16.mxu0 0
        %1305 = vmatmul.mubr.bf16.gmra.mxu0 %v1267
        %v1306 = vpop.f32.mrf.mxu0
        %v1307 = vadd.f32 0.0, %v1306
        %v1308 = vpop.f32.mrf.mxu0
        %v1309 = vpop.f32.mrf.mxu0
        %v1310 = vpop.f32.mrf.mxu0
        %1311 = vdwg.mxu0
        %v1312 = vsel %vm912, %v1307, -inf
        %1313 = vmax.xlane.f32.xlu0 %v1312
        %v1314 = vpop.xlane.xlu0 %1313
        %v1315 = vsub.f32 %v1307, %v1314
        %v1316 = vmul.f32 %v1315, 1.442695
        %v1317 = vpow.pop %v1316
        %v1318 = vsel %vm912, %v1317, 0.0
        %1319 = vadd.xlane.f32.xlu0 %v1318
        %v1320 = vpop.xlane.xlu0 %1319
        %v1321 = vrcp.pop %v1320
        %v1322 = vmul.f32 %v1317, %v1321
        %v1323 = vpack.c.bf16 %v1322, %v1322
        %1324 = vrot.lane.b32.xlu0 %v911, 104
        %v1325 = vpop.permute.xlu0 %1324
        %v1327 = vsel %vm912, %v1323, 0
        %v1330 = vsel %vm974, %v1325, 0
        %1332 = vmatprep.subr.bf16.mxu0 0
        %1333 = vmatpush1.bf16.msra.mxu0 0
        %1334 = vmatprep.subr.bf16.mxu0 0
        %1335 = vmatpush1.bf16.msra.mxu0 0
        %1336 = vmatprep.subr.bf16.mxu0 0
        %1337 = vmatpush1.bf16.msra.mxu0 0
        %1338 = vmatprep.subr.bf16.mxu0 0
        %1339 = vmatpush1.bf16.msra.mxu0 0
        %1340 = vmatprep.subr.bf16.mxu0 0
        %1341 = vmatpush1.bf16.msra.mxu0 0
        %1342 = vmatprep.subr.bf16.mxu0 0
        %1343 = vmatpush1.bf16.msra.mxu0 0
        %1344 = vmatprep.subr.bf16.mxu0 0
        %1345 = vmatpush1.bf16.msra.mxu0 0
        %1346 = vmatprep.subr.bf16.mxu0 0
        %1347 = vmatpush1.bf16.msra.mxu0 %v1330
        %1348 = vmatprep.subr.bf16.mxu0 0
        %1349 = vmatpush2.bf16.msra.mxu0 0
        %1350 = vmatprep.subr.bf16.mxu0 0
        %1351 = vmatpush2.bf16.msra.mxu0 0
        %1352 = vmatprep.subr.bf16.mxu0 0
        %1353 = vmatpush2.bf16.msra.mxu0 0
        %1354 = vmatprep.subr.bf16.mxu0 0
        %1355 = vmatpush2.bf16.msra.mxu0 0
        %1356 = vmatprep.subr.bf16.mxu0 0
        %1357 = vmatpush2.bf16.msra.mxu0 0
        %1358 = vmatprep.subr.bf16.mxu0 0
        %1359 = vmatpush2.bf16.msra.mxu0 0
        %1360 = vmatprep.subr.bf16.mxu0 0
        %1361 = vmatpush2.bf16.msra.mxu0 0
        %1362 = vmatprep.subr.bf16.mxu0 0
        %1363 = vmatpush2.bf16.msra.mxu0 0
        %1364 = vmatprep.mubr.bf16.mxu0 0
        %1365 = vmatmul.mubr.bf16.gmra.mxu0 %v1327
        %v1366 = vpop.f32.mrf.mxu0
        %v1367 = vadd.f32 0.0, %v1366
        %v1368 = vpop.f32.mrf.mxu0
        %v1369 = vpop.f32.mrf.mxu0
        %v1370 = vpop.f32.mrf.mxu0
        %1371 = vdwg.mxu0
        %v1372 = vpack.c.bf16 %v1367, %v1367
        %v1374 = vunpack.c.l.b16 %v1372
        %v1375 = vpack.c.b16 %v1374, %v1374
        %1376 = vrot.lane.b32.xlu0 %v1375, 24
        %v1377 = vpop.permute.xlu0 %1376
        %vm1379 = vcmask 257216
        %1380 = vst.msk [vmem:[#allocation2] sm:$0xf] %vm1379, %v1377
        %v1381 = vld [vmem:[#allocation2] sm:$0xf]
        %v1382 = vld [vmem:[%s8] sm:$0xf]
        %v1383 = vld [vmem:[%s8 + $0x4] sm:$0xf]
        %v1384 = vld [vmem:[%s8 + $0x8] sm:$0xf]
        %v1385 = vld [vmem:[%s8 + $0xc] sm:$0xf]
        %v1386 = vld [vmem:[%s9] sm:$0x1]
        %v1388 = vlaneseq
        %v1389 = vshrl.u32 %v1388, 7
        %v1390 = vsub.s32 0, %v1389
        %v1391 = vrot.slane %v1386, %v1390
        %v1397 = vunpack.c.l.b16 %v1382
        %v1398 = vunpack.c.l.b16 %v1383
        %v1399 = vunpack.c.l.b16 %v1384
        %v1400 = vunpack.c.l.b16 %v1385
        %v1401 = vpack.c.b16 %v1398, %v1397
        %v1402 = vpack.c.b16 %v1400, %v1399
        %v1406 = vsel %vm739, %v1381, 0
        %1408 = vmatprep.subr.bf16.mxu0 0
        %1409 = vmatpush1.bf16.msra.mxu0 0
        %1410 = vmatprep.subr.bf16.mxu0 0
        %1411 = vmatpush1.bf16.msra.mxu0 0
        %1412 = vmatprep.subr.bf16.mxu0 0
        %1413 = vmatpush1.bf16.msra.mxu0 0
        %1414 = vmatprep.subr.bf16.mxu0 0
        %1415 = vmatpush1.bf16.msra.mxu0 0
        %1416 = vmatprep.subr.bf16.mxu0 0
        %1417 = vmatpush1.bf16.msra.mxu0 0
        %1418 = vmatprep.subr.bf16.mxu0 0
        %1419 = vmatpush1.bf16.msra.mxu0 0
        %1420 = vmatprep.subr.bf16.mxu0 0
        %1421 = vmatpush1.bf16.msra.mxu0 %v1402
        %1422 = vmatprep.subr.bf16.mxu0 0
        %1423 = vmatpush1.bf16.msra.mxu0 %v1401
        %1424 = vmatprep.subr.bf16.mxu0 0
        %1425 = vmatpush2.bf16.msra.mxu0 0
        %1426 = vmatprep.subr.bf16.mxu0 0
        %1427 = vmatpush2.bf16.msra.mxu0 0
        %1428 = vmatprep.subr.bf16.mxu0 0
        %1429 = vmatpush2.bf16.msra.mxu0 0
        %1430 = vmatprep.subr.bf16.mxu0 0
        %1431 = vmatpush2.bf16.msra.mxu0 0
        %1432 = vmatprep.subr.bf16.mxu0 0
        %1433 = vmatpush2.bf16.msra.mxu0 0
        %1434 = vmatprep.subr.bf16.mxu0 0
        %1435 = vmatpush2.bf16.msra.mxu0 0
        %1436 = vmatprep.subr.bf16.mxu0 0
        %1437 = vmatpush2.bf16.msra.mxu0 0
        %1438 = vmatprep.subr.bf16.mxu0 0
        %1439 = vmatpush2.bf16.msra.mxu0 0
        %1440 = vmatprep.mubr.bf16.mxu0 0
        %1441 = vmatmul.mubr.bf16.gmra.mxu0 %v1406
        %v1442 = vpop.f32.mrf.mxu0
        %v1443 = vadd.f32 %v1391, %v1442
        %v1444 = vpop.f32.mrf.mxu0
        %v1445 = vpop.f32.mrf.mxu0
        %v1446 = vpop.f32.mrf.mxu0
        %1447 = vdwg.mxu0
        %v1448 = vadd.f32 %v715, %v1443
        %v1449 = vld [vmem:[%s10] sm:$0x1]
        %v1450 = vld [vmem:[%s11] sm:$0x1]
        %v1451 = vsel %vm739, %v1448, 0.0
        %1452 = vadd.xlane.f32.xlu0 %v1451
        %v1453 = vpop.xlane.xlu0 %1452
        %v1454 = vrcp.pop 32.0
        %v1455 = vmul.f32 %v1453, %v1454
        %v1456 = vsub.f32 %v1448, %v1455
        %v1457 = vmul.f32 %v1456, %v1456
        %v1458 = vsel %vm739, %v1457, 0.0
        %1459 = vadd.xlane.f32.xlu0 %v1458
        %v1460 = vpop.xlane.xlu0 %1459
        %v1461 = vmul.f32 %v1460, %v1454
        %v1462 = vadd.f32 %v1461, 1e-12
        %v1463 = vrsqrt.pop %v1462
        %v1464 = vmul.f32 %v1456, %v1463
        %v1466 = vlaneseq
        %v1467 = vshrl.u32 %v1466, 7
        %v1468 = vsub.s32 0, %v1467
        %v1469 = vrot.slane %v1449, %v1468
        %v1471 = vmul.f32 %v1464, %v1469
        %v1473 = vlaneseq
        %v1474 = vshrl.u32 %v1473, 7
        %v1475 = vsub.s32 0, %v1474
        %v1476 = vrot.slane %v1450, %v1475
        %v1478 = vadd.f32 %v1471, %v1476
        %v1479 = vpack.c.bf16 %v1478, %v1478
        %v1480 = vld [vmem:[%s12] sm:$0xf]
        %v1481 = vld [vmem:[%s12 + $0x4] sm:$0xf]
        %v1482 = vld [vmem:[%s12 + $0x8] sm:$0xf]
        %v1483 = vld [vmem:[%s12 + $0xc] sm:$0xf]
        %v1484 = vld [vmem:[%s13] sm:$0x1]
        %v1486 = vlaneseq
        %v1487 = vshrl.u32 %v1486, 7
        %v1488 = vsub.s32 0, %v1487
        %v1489 = vrot.slane %v1484, %v1488
        %v1495 = vunpack.c.l.b16 %v1480
        %v1496 = vunpack.c.l.b16 %v1481
        %v1497 = vunpack.c.l.b16 %v1482
        %v1498 = vunpack.c.l.b16 %v1483
        %v1499 = vpack.c.b16 %v1496, %v1495
        %v1500 = vpack.c.b16 %v1498, %v1497
        %v1504 = vsel %vm739, %v1479, 0
        %1506 = vmatprep.subr.bf16.mxu0 0
        %1507 = vmatpush1.bf16.msra.mxu0 0
        %1508 = vmatprep.subr.bf16.mxu0 0
        %1509 = vmatpush1.bf16.msra.mxu0 0
        %1510 = vmatprep.subr.bf16.mxu0 0
        %1511 = vmatpush1.bf16.msra.mxu0 0
        %1512 = vmatprep.subr.bf16.mxu0 0
        %1513 = vmatpush1.bf16.msra.mxu0 0
        %1514 = vmatprep.subr.bf16.mxu0 0
        %1515 = vmatpush1.bf16.msra.mxu0 0
        %1516 = vmatprep.subr.bf16.mxu0 0
        %1517 = vmatpush1.bf16.msra.mxu0 0
        %1518 = vmatprep.subr.bf16.mxu0 0
        %1519 = vmatpush1.bf16.msra.mxu0 %v1500
        %1520 = vmatprep.subr.bf16.mxu0 0
        %1521 = vmatpush1.bf16.msra.mxu0 %v1499
        %1522 = vmatprep.subr.bf16.mxu0 0
        %1523 = vmatpush2.bf16.msra.mxu0 0
        %1524 = vmatprep.subr.bf16.mxu0 0
        %1525 = vmatpush2.bf16.msra.mxu0 0
        %1526 = vmatprep.subr.bf16.mxu0 0
        %1527 = vmatpush2.bf16.msra.mxu0 0
        %1528 = vmatprep.subr.bf16.mxu0 0
        %1529 = vmatpush2.bf16.msra.mxu0 0
        %1530 = vmatprep.subr.bf16.mxu0 0
        %1531 = vmatpush2.bf16.msra.mxu0 0
        %1532 = vmatprep.subr.bf16.mxu0 0
        %1533 = vmatpush2.bf16.msra.mxu0 0
        %1534 = vmatprep.subr.bf16.mxu0 0
        %1535 = vmatpush2.bf16.msra.mxu0 0
        %1536 = vmatprep.subr.bf16.mxu0 0
        %1537 = vmatpush2.bf16.msra.mxu0 0
        %1538 = vmatprep.mubr.bf16.mxu0 0
        %1539 = vmatmul.mubr.bf16.gmra.mxu0 %v1504
        %v1540 = vpop.f32.mrf.mxu0
        %v1541 = vadd.f32 %v1489, %v1540
        %v1542 = vpop.f32.mrf.mxu0
        %v1543 = vpop.f32.mrf.mxu0
        %v1544 = vpop.f32.mrf.mxu0
        %1545 = vdwg.mxu0
        %v1546 = vmul.f32 %v1541, 0.5
        %v1547 = vmul.f32 %v1541, 0.044715
        %v1548 = vmul.f32 %v1547, %v1541
        %v1549 = vmul.f32 %v1548, %v1541
        %v1550 = vadd.f32 %v1541, %v1549
        %v1551 = vmul.f32 %v1550, 0.7978846
        %v1552 = vtanh.pop %v1551
        %v1553 = vadd.f32 %v1552, 1.0
        %v1554 = vmul.f32 %v1546, %v1553
        %v1555 = vpack.c.bf16 %v1554, %v1554
        %v1556 = vld [vmem:[%s14] sm:$0xf]
        %v1557 = vld [vmem:[%s14 + $0x4] sm:$0xf]
        %v1558 = vld [vmem:[%s14 + $0x8] sm:$0xf]
        %v1559 = vld [vmem:[%s14 + $0xc] sm:$0xf]
        %v1560 = vld [vmem:[%s14 + $0x10] sm:$0xf]
        %v1561 = vld [vmem:[%s14 + $0x14] sm:$0xf]
        %v1562 = vld [vmem:[%s14 + $0x18] sm:$0xf]
        %v1563 = vld [vmem:[%s14 + $0x1c] sm:$0xf]
        %v1564 = vld [vmem:[%s15] sm:$0x1]
        %v1566 = vlaneseq
        %v1567 = vshrl.u32 %v1566, 7
        %v1568 = vsub.s32 0, %v1567
        %v1569 = vrot.slane %v1564, %v1568
        %v1579 = vunpack.c.l.b16 %v1556
        %v1580 = vunpack.c.l.b16 %v1557
        %v1581 = vunpack.c.l.b16 %v1558
        %v1582 = vunpack.c.l.b16 %v1559
        %v1583 = vunpack.c.l.b16 %v1560
        %v1584 = vunpack.c.l.b16 %v1561
        %v1585 = vunpack.c.l.b16 %v1562
        %v1586 = vunpack.c.l.b16 %v1563
        %v1587 = vpack.c.b16 %v1580, %v1579
        %v1588 = vpack.c.b16 %v1582, %v1581
        %v1589 = vpack.c.b16 %v1584, %v1583
        %v1590 = vpack.c.b16 %v1586, %v1585
        %vm1595 = vcmask 523264
        %v1597 = vsel %vm1595, %v1555, 0
        %1599 = vmatprep.subr.bf16.mxu0 0
        %1600 = vmatpush1.bf16.msra.mxu0 0
        %1601 = vmatprep.subr.bf16.mxu0 0
        %1602 = vmatpush1.bf16.msra.mxu0 0
        %1603 = vmatprep.subr.bf16.mxu0 0
        %1604 = vmatpush1.bf16.msra.mxu0 0
        %1605 = vmatprep.subr.bf16.mxu0 0
        %1606 = vmatpush1.bf16.msra.mxu0 0
        %1607 = vmatprep.subr.bf16.mxu0 0
        %1608 = vmatpush1.bf16.msra.mxu0 %v1590
        %1609 = vmatprep.subr.bf16.mxu0 0
        %1610 = vmatpush1.bf16.msra.mxu0 %v1589
        %1611 = vmatprep.subr.bf16.mxu0 0
        %1612 = vmatpush1.bf16.msra.mxu0 %v1588
        %1613 = vmatprep.subr.bf16.mxu0 0
        %1614 = vmatpush1.bf16.msra.mxu0 %v1587
        %1615 = vmatprep.subr.bf16.mxu0 0
        %1616 = vmatpush2.bf16.msra.mxu0 0
        %1617 = vmatprep.subr.bf16.mxu0 0
        %1618 = vmatpush2.bf16.msra.mxu0 0
        %1619 = vmatprep.subr.bf16.mxu0 0
        %1620 = vmatpush2.bf16.msra.mxu0 0
        %1621 = vmatprep.subr.bf16.mxu0 0
        %1622 = vmatpush2.bf16.msra.mxu0 0
        %1623 = vmatprep.subr.bf16.mxu0 0
        %1624 = vmatpush2.bf16.msra.mxu0 0
        %1625 = vmatprep.subr.bf16.mxu0 0
        %1626 = vmatpush2.bf16.msra.mxu0 0
        %1627 = vmatprep.subr.bf16.mxu0 0
        %1628 = vmatpush2.bf16.msra.mxu0 0
        %1629 = vmatprep.subr.bf16.mxu0 0
        %1630 = vmatpush2.bf16.msra.mxu0 0
        %1631 = vmatprep.mubr.bf16.mxu0 0
        %1632 = vmatmul.mubr.bf16.gmra.mxu0 %v1597
        %v1633 = vpop.f32.mrf.mxu0
        %v1634 = vadd.f32 %v1569, %v1633
        %v1635 = vpop.f32.mrf.mxu0
        %v1636 = vpop.f32.mrf.mxu0
        %v1637 = vpop.f32.mrf.mxu0
        %1638 = vdwg.mxu0
        %v1639 = vadd.f32 %v1478, %v1634
        %v1640 = vld [vmem:[%s16] sm:$0x1]
        %v1641 = vld [vmem:[%s17] sm:$0x1]
        %v1642 = vsel %vm739, %v1639, 0.0
        %1643 = vadd.xlane.f32.xlu0 %v1642
        %v1644 = vpop.xlane.xlu0 %1643
        %v1645 = vmul.f32 %v1644, %v1454
        %v1646 = vsub.f32 %v1639, %v1645
        %v1647 = vmul.f32 %v1646, %v1646
        %v1648 = vsel %vm739, %v1647, 0.0
        %1649 = vadd.xlane.f32.xlu0 %v1648
        %v1650 = vpop.xlane.xlu0 %1649
        %v1651 = vmul.f32 %v1650, %v1454
        %v1652 = vadd.f32 %v1651, 1e-12
        %v1653 = vrsqrt.pop %v1652
        %v1654 = vmul.f32 %v1646, %v1653
        %v1656 = vlaneseq
        %v1657 = vshrl.u32 %v1656, 7
        %v1658 = vsub.s32 0, %v1657
        %v1659 = vrot.slane %v1640, %v1658
        %v1661 = vmul.f32 %v1654, %v1659
        %v1663 = vlaneseq
        %v1664 = vshrl.u32 %v1663, 7
        %v1665 = vsub.s32 0, %v1664
        %v1666 = vrot.slane %v1641, %v1665
        %v1668 = vadd.f32 %v1661, %v1666
        %v1669 = vpack.c.bf16 %v1668, %v1668
        %vm1670 = vcmask 257024
        %1671 = vst.msk [vmem:[%s685] sm:$0xf] %vm1670, %v1669
        %v1672 = vld [vmem:[%s705] sm:$0xff]
        %v1673 = vadd.f32 %v1672, %v1668
        %1674 = vst.msk [vmem:[%s712] sm:$0xff] %vm739, %v1673
        %s1675 = sand.u32 %s490, 1
        %s1676 = scalar_lea.sflag [#allocation4], %s1675
        %s1677 = sand.u32 %s490, 1
        %s1678 = smul.addr %s1677, 4
        %s1679 = scalar_lea.vmem [#allocation3], %s1678
        %p1680 = scmp.lt.s32.totalorder %s40, 1
        %s1681 = scalar_select %p1680, %s40, 1
        %p1682 = scmp.lt.s32.totalorder %s41, 0
        %s1683 = scalar_select %p1682, %s41, 0
        %s1684 = sadd.s32 %s1683, %s1681
        %s1685 = smul.addr %s1684, 8
        %s1686 = scalar_lea.vmem %s21, %s1685
        // Predicated region
        $region101: #{bert_embeddings_forward.7} parent=99 // pred_check
          %p1687 = pneg %p500
        $region102: #{bert_embeddings_forward.7} parent=99 // pred_check_branch
          %1689 = sbr.rel (%p1687) target = $region104
        $region103: #{bert_embeddings_forward.7} parent=99 // pred_region
          %s1691 = ssub.s32 64, 64
          %1692 = vsyncadd %s1676, %s1691
          %s1693 = sadd.s32 %s41, %s40
          %s1694 = smul.addr %s1693, 64
          %s1695 = scalar_lea.hbm %s20, %s1694
          %s1697 = sshll.u32 %s1679, 4
          %s1698 = int_to_ptr.vmem [resolvable:$true] %s1697
          %1700 = dma.vmem_to_hbm [thread:$0]  %s1698, 64, %s1695, %s1676
        $region104: #{bert_embeddings_forward.7} parent=99 // pred_fallthru
          _
        // Predicated region
        $region105: #{bert_embeddings_forward.7} parent=99 // pred_check
          %p1701 = pneg %p528
        $region106: #{bert_embeddings_forward.7} parent=99 // pred_check_branch
          %1703 = sbr.rel (%p1701) target = $region108
        $region107: #{bert_embeddings_forward.7} parent=99 // pred_region
          _
        $region108: #{bert_embeddings_forward.7} parent=99 // pred_fallthru
          _
      $region100: #{bert_embeddings_forward.7} parent=5 // pred_fallthru
        _
      %p1704 = scmp.le.s32.totalorder 2, %s31
      // Predicated region
      $region109: #{bert_embeddings_forward.7} parent=5 // pred_check
        %p1705 = pneg %p1704
      $region110: #{bert_embeddings_forward.7} parent=5 // pred_check_branch
        %1707 = sbr.rel (%p1705) target = $region112
      $region111: #{bert_embeddings_forward.7} parent=5 // pred_region
        %s1708 = ssub.s32 %s31, 2
        // Predicated region
        $region113: #{bert_embeddings_forward.7} parent=111 // pred_check
          %p1709 = pneg %p506
        $region114: #{bert_embeddings_forward.7} parent=111 // pred_check_branch
          %1711 = sbr.rel (%p1709) target = $region116
        $region115: #{bert_embeddings_forward.7} parent=111 // pred_region
          %s1712 = sand.u32 %s491, 1
          %s1713 = scalar_lea.sflag [#allocation4], %s1712
          %s1714 = sand.u32 %s491, 1
          %s1715 = smul.addr %s1714, 4
          %s1716 = scalar_lea.vmem [#allocation3], %s1715
          %1717 = dma.done %s1713, 64
        $region116: #{bert_embeddings_forward.7} parent=111 // pred_fallthru
          _
        // Predicated region
        $region117: #{bert_embeddings_forward.7} parent=111 // pred_check
          %p1718 = pneg %p534
        $region118: #{bert_embeddings_forward.7} parent=111 // pred_check_branch
          %1720 = sbr.rel (%p1718) target = $region120
        $region119: #{bert_embeddings_forward.7} parent=111 // pred_region
          %p1721 = scmp.lt.s32.totalorder %s42, 1
          %s1722 = scalar_select %p1721, %s42, 1
          %p1723 = scmp.lt.s32.totalorder %s43, 0
          %s1724 = scalar_select %p1723, %s43, 0
          %s1725 = sadd.s32 %s1724, %s1722
          %s1726 = smul.addr %s1725, 8
          %s1727 = scalar_lea.vmem %s21, %s1726
        $region120: #{bert_embeddings_forward.7} parent=111 // pred_fallthru
          _
      $region112: #{bert_embeddings_forward.7} parent=5 // pred_fallthru
        _
    $region6: #{bert_embeddings_forward.7} parent=1 // loop_footer
      %s35 = sadd.s32 1, %s31
    $region7: #{bert_embeddings_forward.7} parent=1 // loop_footer_branch
      %30 = sbr.rel target = $region3
    $region8: #{bert_embeddings_forward.7} parent=1 // loop_exit
      _
    %1728 = vsyncpa [#allocation4], 1
    %s1729 = scalar_lea.sflag [#allocation4], 1
    %1730 = vsyncpa %s1729, 1

// kernel: bert_embeddings_forward.5
$region0: #{bert_embeddings_forward.5}
  #allocation0 [shape = 'u32[]', space=smem, size = 0x4, offset = 0x4, fixed_abs, tag = 'smem constant byte address 0x4 - core index']
  #allocation1 [shape = 'u32[144,128]{1,0:T(1,128)}', space=vmem, size = 0x12000, scoped, tag = 'internal scratch']
  #allocation2 [shape = 'bf16[8,32]{1,0:T(8,128)(2,1)}', space=vmem, size = 0x800, scoped, tag = 'scratch operand']
  %s0 = inlined_call_operand.vmem [shape: bf16[2,8,32], index: 0, kind: input, shape index: {}]
  %s1 = inlined_call_operand.vmem [shape: f32[2,8,32], index: 1, kind: input, shape index: {}, may-alias: {1,21}]
  %s2 = inlined_call_operand.vmem [shape: bf16[32,32], index: 2, kind: input, shape index: {}]
  %s3 = inlined_call_operand.vmem [shape: f32[1,32], index: 3, kind: input, shape index: {}]
  %s4 = inlined_call_operand.vmem [shape: bf16[32,32], index: 4, kind: input, shape index: {}]
  %s5 = inlined_call_operand.vmem [shape: f32[1,32], index: 5, kind: input, shape index: {}]
  %s6 = inlined_call_operand.vmem [shape: bf16[32,32], index: 6, kind: input, shape index: {}]
  %s7 = inlined_call_operand.vmem [shape: f32[1,32], index: 7, kind: input, shape index: {}]
  %s8 = inlined_call_operand.vmem [shape: bf16[32,32], index: 8, kind: input, shape index: {}]
  %s9 = inlined_call_operand.vmem [shape: f32[1,32], index: 9, kind: input, shape index: {}]
  %s10 = inlined_call_operand.vmem [shape: f32[1,32], index: 10, kind: input, shape index: {}]
  %s11 = inlined_call_operand.vmem [shape: f32[1,32], index: 11, kind: input, shape index: {}]
  %s12 = inlined_call_operand.vmem [shape: bf16[32,64], index: 12, kind: input, shape index: {}]
  %s13 = inlined_call_operand.vmem [shape: f32[1,64], index: 13, kind: input, shape index: {}]
  %s14 = inlined_call_operand.vmem [shape: bf16[64,32], index: 14, kind: input, shape index: {}]
  %s15 = inlined_call_operand.vmem [shape: f32[1,32], index: 15, kind: input, shape index: {}]
  %s16 = inlined_call_operand.vmem [shape: f32[1,32], index: 16, kind: input, shape index: {}]
  %s17 = inlined_call_operand.vmem [shape: f32[1,32], index: 17, kind: input, shape index: {}]
  %s18 = inlined_call_operand.vmem [shape: f32[1,32], index: 18, kind: input, shape index: {}]
  %s19 = inlined_call_operand.vmem [shape: f32[1,32], index: 19, kind: input, shape index: {}]
  %s20 = inlined_call_operand.vmem [shape: bf16[2,8,32], index: 20, kind: output, shape index: {0}]
  %s21 = inlined_call_operand.vmem [shape: f32[2,8,32], index: 21, kind: output, shape index: {1}, may-alias: {1,21}]
  %22 = xla_tuple %s20, %s21
  %s23 = sld [smem:[#allocation0]]
  $region121: #{bert_embeddings_forward.5} parent=0
    _
  %s25 = ssub.s32 1, %s23
  %s26 = scalar_select 0, %s25, %s23
  loop: start=0, step=1, limit=4
  $region2: #{bert_embeddings_forward.5} parent=0 // loop_pre_header
    _
  $region3: #{bert_embeddings_forward.5} parent=0 // loop_header
    %s28 = sphi 0, %s32
    %p29 = scmp.ge.s32.totalorder %s28, 4
    %s35 = sphi 0, %s47
    %s36 = sphi 0, %s43
    %s37 = sphi 0, %s35
    %s38 = sphi 0, %s36
    %s39 = sphi 0, %s37
    %s40 = sphi 0, %s38
    %s50 = sphi 0, %s52
    %s53 = sphi 0, %s50
    %s54 = sphi 0, %s53
    %s70 = sphi 0, %s54
    %s78 = sphi 0, %s80
    %s81 = sphi 0, %s78
    %s82 = sphi 0, %s81
    %s98 = sphi 0, %s82
    %s102 = sphi 0, %s102
    %s104 = sphi 0, %s102
    %s105 = sphi 0, %s104
    %s119 = sphi 0, %s105
    %s123 = sphi 0, %s123
    %s125 = sphi 0, %s123
    %s126 = sphi 0, %s125
    %s140 = sphi 0, %s126
    %s144 = sphi 0, %s144
    %s146 = sphi 0, %s144
    %s147 = sphi 0, %s146
    %s161 = sphi 0, %s147
    %s165 = sphi 0, %s165
    %s167 = sphi 0, %s165
    %s168 = sphi 0, %s167
    %s182 = sphi 0, %s168
    %s186 = sphi 0, %s186
    %s188 = sphi 0, %s186
    %s189 = sphi 0, %s188
    %s203 = sphi 0, %s189
    %s207 = sphi 0, %s207
    %s209 = sphi 0, %s207
    %s210 = sphi 0, %s209
    %s224 = sphi 0, %s210
    %s228 = sphi 0, %s228
    %s230 = sphi 0, %s228
    %s231 = sphi 0, %s230
    %s245 = sphi 0, %s231
    %s249 = sphi 0, %s249
    %s251 = sphi 0, %s249
    %s252 = sphi 0, %s251
    %s266 = sphi 0, %s252
    %s270 = sphi 0, %s270
    %s272 = sphi 0, %s270
    %s273 = sphi 0, %s272
    %s287 = sphi 0, %s273
    %s291 = sphi 0, %s291
    %s293 = sphi 0, %s291
    %s294 = sphi 0, %s293
    %s308 = sphi 0, %s294
    %s312 = sphi 0, %s312
    %s314 = sphi 0, %s312
    %s315 = sphi 0, %s314
    %s329 = sphi 0, %s315
    %s333 = sphi 0, %s333
    %s335 = sphi 0, %s333
    %s336 = sphi 0, %s335
    %s350 = sphi 0, %s336
    %s354 = sphi 0, %s354
    %s356 = sphi 0, %s354
    %s357 = sphi 0, %s356
    %s371 = sphi 0, %s357
    %s375 = sphi 0, %s375
    %s377 = sphi 0, %s375
    %s378 = sphi 0, %s377
    %s392 = sphi 0, %s378
    %s396 = sphi 0, %s396
    %s398 = sphi 0, %s396
    %s399 = sphi 0, %s398
    %s413 = sphi 0, %s399
    %s417 = sphi 0, %s417
    %s419 = sphi 0, %s417
    %s420 = sphi 0, %s419
    %s434 = sphi 0, %s420
    %s438 = sphi 0, %s438
    %s440 = sphi 0, %s438
    %s441 = sphi 0, %s440
    %s455 = sphi 0, %s441
    %s459 = sphi 0, %s459
    %s461 = sphi 0, %s459
    %s462 = sphi 0, %s461
    %s476 = sphi 0, %s462
    %s484 = sphi 0, %s486
    %s487 = sphi 0, %s484
    %s488 = sphi 0, %s487
    %s504 = sphi 0, %s488
    %s512 = sphi 0, %s514
    %s515 = sphi 0, %s512
    %s516 = sphi 0, %s515
    %s532 = sphi 0, %s516
  $region4: #{bert_embeddings_forward.5} parent=0 // loop_header_branch
    %31 = sbr.rel (%p29) target = $region8
  $region5: #{bert_embeddings_forward.5} parent=0 // loop_body
    %s33 = ssub.s32 %s28, 1
    %s34 = ssub.s32 %s28, 2
    %s41 = sadd.s32 1, %s36
    %p42 = scmp.ge.s32.totalorder %s41, 1
    %s43 = scalar_select %p42, 0, %s41
    %s44 = sadd.s32 1, %s35
    %s45 = scalar_select %p42, %s44, %s35
    %p46 = scmp.ge.s32.totalorder %s45, 2
    %s47 = scalar_select %p46, 0, %s45
    %s48 = ssub.s32 %s35, %s47
    %p49 = scmp.eq.s32.totalorder %s48, 0
    %s51 = sadd.s32 %s50, 1
    %s52 = scalar_select %p49, %s50, %s51
    %p55 = pneg %p49
    %p56 = scmp.eq.s32.totalorder %s28, 1
    %p57 = por %p55, %p56
    %p58 = scmp.ne.s32.totalorder %s50, %s53
    %p59 = scmp.eq.s32.totalorder %s28, 0
    %p60 = por %p58, %p59
    %p61 = scmp.ne.s32.totalorder %s50, %s53
    %p62 = scmp.eq.s32.totalorder %s33, 1
    %p63 = por %p61, %p62
    %p64 = scmp.ne.s32.totalorder %s53, %s54
    %p65 = scmp.eq.s32.totalorder %s33, 0
    %p66 = por %p64, %p65
    %p67 = scmp.ne.s32.totalorder %s53, %s54
    %p68 = scmp.eq.s32.totalorder %s34, 1
    %p69 = por %p67, %p68
    %p71 = scmp.ne.s32.totalorder %s54, %s70
    %p72 = scmp.eq.s32.totalorder %s34, 0
    %p73 = por %p71, %p72
    %s74 = ssub.s32 %s35, %s47
    %s75 = ssub.s32 %s36, %s43
    %s76 = sor.u32 %s74, %s75
    %p77 = scmp.eq.s32.totalorder %s76, 0
    %s79 = sadd.s32 %s78, 1
    %s80 = scalar_select %p77, %s78, %s79
    %p83 = pneg %p77
    %p84 = scmp.eq.s32.totalorder %s28, 1
    %p85 = por %p83, %p84
    %p86 = scmp.ne.s32.totalorder %s78, %s81
    %p87 = scmp.eq.s32.totalorder %s28, 0
    %p88 = por %p86, %p87
    %p89 = scmp.ne.s32.totalorder %s78, %s81
    %p90 = scmp.eq.s32.totalorder %s33, 1
    %p91 = por %p89, %p90
    %p92 = scmp.ne.s32.totalorder %s81, %s82
    %p93 = scmp.eq.s32.totalorder %s33, 0
    %p94 = por %p92, %p93
    %p95 = scmp.ne.s32.totalorder %s81, %s82
    %p96 = scmp.eq.s32.totalorder %s34, 1
    %p97 = por %p95, %p96
    %p99 = scmp.ne.s32.totalorder %s82, %s98
    %p100 = scmp.eq.s32.totalorder %s34, 0
    %p101 = por %p99, %p100
    %s103 = sadd.s32 %s102, 1
    %p106 = scmp.eq.s32.totalorder %s28, 1
    %p107 = scmp.ne.s32.totalorder %s102, %s104
    %p108 = scmp.eq.s32.totalorder %s28, 0
    %p109 = por %p107, %p108
    %p110 = scmp.ne.s32.totalorder %s102, %s104
    %p111 = scmp.eq.s32.totalorder %s33, 1
    %p112 = por %p110, %p111
    %p113 = scmp.ne.s32.totalorder %s104, %s105
    %p114 = scmp.eq.s32.totalorder %s33, 0
    %p115 = por %p113, %p114
    %p116 = scmp.ne.s32.totalorder %s104, %s105
    %p117 = scmp.eq.s32.totalorder %s34, 1
    %p118 = por %p116, %p117
    %p120 = scmp.ne.s32.totalorder %s105, %s119
    %p121 = scmp.eq.s32.totalorder %s34, 0
    %p122 = por %p120, %p121
    %s124 = sadd.s32 %s123, 1
    %p127 = scmp.eq.s32.totalorder %s28, 1
    %p128 = scmp.ne.s32.totalorder %s123, %s125
    %p129 = scmp.eq.s32.totalorder %s28, 0
    %p130 = por %p128, %p129
    %p131 = scmp.ne.s32.totalorder %s123, %s125
    %p132 = scmp.eq.s32.totalorder %s33, 1
    %p133 = por %p131, %p132
    %p134 = scmp.ne.s32.totalorder %s125, %s126
    %p135 = scmp.eq.s32.totalorder %s33, 0
    %p136 = por %p134, %p135
    %p137 = scmp.ne.s32.totalorder %s125, %s126
    %p138 = scmp.eq.s32.totalorder %s34, 1
    %p139 = por %p137, %p138
    %p141 = scmp.ne.s32.totalorder %s126, %s140
    %p142 = scmp.eq.s32.totalorder %s34, 0
    %p143 = por %p141, %p142
    %s145 = sadd.s32 %s144, 1
    %p148 = scmp.eq.s32.totalorder %s28, 1
    %p149 = scmp.ne.s32.totalorder %s144, %s146
    %p150 = scmp.eq.s32.totalorder %s28, 0
    %p151 = por %p149, %p150
    %p152 = scmp.ne.s32.totalorder %s144, %s146
    %p153 = scmp.eq.s32.totalorder %s33, 1
    %p154 = por %p152, %p153
    %p155 = scmp.ne.s32.totalorder %s146, %s147
    %p156 = scmp.eq.s32.totalorder %s33, 0
    %p157 = por %p155, %p156
    %p158 = scmp.ne.s32.totalorder %s146, %s147
    %p159 = scmp.eq.s32.totalorder %s34, 1
    %p160 = por %p158, %p159
    %p162 = scmp.ne.s32.totalorder %s147, %s161
    %p163 = scmp.eq.s32.totalorder %s34, 0
    %p164 = por %p162, %p163
    %s166 = sadd.s32 %s165, 1
    %p169 = scmp.eq.s32.totalorder %s28, 1
    %p170 = scmp.ne.s32.totalorder %s165, %s167
    %p171 = scmp.eq.s32.totalorder %s28, 0
    %p172 = por %p170, %p171
    %p173 = scmp.ne.s32.totalorder %s165, %s167
    %p174 = scmp.eq.s32.totalorder %s33, 1
    %p175 = por %p173, %p174
    %p176 = scmp.ne.s32.totalorder %s167, %s168
    %p177 = scmp.eq.s32.totalorder %s33, 0
    %p178 = por %p176, %p177
    %p179 = scmp.ne.s32.totalorder %s167, %s168
    %p180 = scmp.eq.s32.totalorder %s34, 1
    %p181 = por %p179, %p180
    %p183 = scmp.ne.s32.totalorder %s168, %s182
    %p184 = scmp.eq.s32.totalorder %s34, 0
    %p185 = por %p183, %p184
    %s187 = sadd.s32 %s186, 1
    %p190 = scmp.eq.s32.totalorder %s28, 1
    %p191 = scmp.ne.s32.totalorder %s186, %s188
    %p192 = scmp.eq.s32.totalorder %s28, 0
    %p193 = por %p191, %p192
    %p194 = scmp.ne.s32.totalorder %s186, %s188
    %p195 = scmp.eq.s32.totalorder %s33, 1
    %p196 = por %p194, %p195
    %p197 = scmp.ne.s32.totalorder %s188, %s189
    %p198 = scmp.eq.s32.totalorder %s33, 0
    %p199 = por %p197, %p198
    %p200 = scmp.ne.s32.totalorder %s188, %s189
    %p201 = scmp.eq.s32.totalorder %s34, 1
    %p202 = por %p200, %p201
    %p204 = scmp.ne.s32.totalorder %s189, %s203
    %p205 = scmp.eq.s32.totalorder %s34, 0
    %p206 = por %p204, %p205
    %s208 = sadd.s32 %s207, 1
    %p211 = scmp.eq.s32.totalorder %s28, 1
    %p212 = scmp.ne.s32.totalorder %s207, %s209
    %p213 = scmp.eq.s32.totalorder %s28, 0
    %p214 = por %p212, %p213
    %p215 = scmp.ne.s32.totalorder %s207, %s209
    %p216 = scmp.eq.s32.totalorder %s33, 1
    %p217 = por %p215, %p216
    %p218 = scmp.ne.s32.totalorder %s209, %s210
    %p219 = scmp.eq.s32.totalorder %s33, 0
    %p220 = por %p218, %p219
    %p221 = scmp.ne.s32.totalorder %s209, %s210
    %p222 = scmp.eq.s32.totalorder %s34, 1
    %p223 = por %p221, %p222
    %p225 = scmp.ne.s32.totalorder %s210, %s224
    %p226 = scmp.eq.s32.totalorder %s34, 0
    %p227 = por %p225, %p226
    %s229 = sadd.s32 %s228, 1
    %p232 = scmp.eq.s32.totalorder %s28, 1
    %p233 = scmp.ne.s32.totalorder %s228, %s230
    %p234 = scmp.eq.s32.totalorder %s28, 0
    %p235 = por %p233, %p234
    %p236 = scmp.ne.s32.totalorder %s228, %s230
    %p237 = scmp.eq.s32.totalorder %s33, 1
    %p238 = por %p236, %p237
    %p239 = scmp.ne.s32.totalorder %s230, %s231
    %p240 = scmp.eq.s32.totalorder %s33, 0
    %p241 = por %p239, %p240
    %p242 = scmp.ne.s32.totalorder %s230, %s231
    %p243 = scmp.eq.s32.totalorder %s34, 1
    %p244 = por %p242, %p243
    %p246 = scmp.ne.s32.totalorder %s231, %s245
    %p247 = scmp.eq.s32.totalorder %s34, 0
    %p248 = por %p246, %p247
    %s250 = sadd.s32 %s249, 1
    %p253 = scmp.eq.s32.totalorder %s28, 1
    %p254 = scmp.ne.s32.totalorder %s249, %s251
    %p255 = scmp.eq.s32.totalorder %s28, 0
    %p256 = por %p254, %p255
    %p257 = scmp.ne.s32.totalorder %s249, %s251
    %p258 = scmp.eq.s32.totalorder %s33, 1
    %p259 = por %p257, %p258
    %p260 = scmp.ne.s32.totalorder %s251, %s252
    %p261 = scmp.eq.s32.totalorder %s33, 0
    %p262 = por %p260, %p261
    %p263 = scmp.ne.s32.totalorder %s251, %s252
    %p264 = scmp.eq.s32.totalorder %s34, 1
    %p265 = por %p263, %p264
    %p267 = scmp.ne.s32.totalorder %s252, %s266
    %p268 = scmp.eq.s32.totalorder %s34, 0
    %p269 = por %p267, %p268
    %s271 = sadd.s32 %s270, 1
    %p274 = scmp.eq.s32.totalorder %s28, 1
    %p275 = scmp.ne.s32.totalorder %s270, %s272
    %p276 = scmp.eq.s32.totalorder %s28, 0
    %p277 = por %p275, %p276
    %p278 = scmp.ne.s32.totalorder %s270, %s272
    %p279 = scmp.eq.s32.totalorder %s33, 1
    %p280 = por %p278, %p279
    %p281 = scmp.ne.s32.totalorder %s272, %s273
    %p282 = scmp.eq.s32.totalorder %s33, 0
    %p283 = por %p281, %p282
    %p284 = scmp.ne.s32.totalorder %s272, %s273
    %p285 = scmp.eq.s32.totalorder %s34, 1
    %p286 = por %p284, %p285
    %p288 = scmp.ne.s32.totalorder %s273, %s287
    %p289 = scmp.eq.s32.totalorder %s34, 0
    %p290 = por %p288, %p289
    %s292 = sadd.s32 %s291, 1
    %p295 = scmp.eq.s32.totalorder %s28, 1
    %p296 = scmp.ne.s32.totalorder %s291, %s293
    %p297 = scmp.eq.s32.totalorder %s28, 0
    %p298 = por %p296, %p297
    %p299 = scmp.ne.s32.totalorder %s291, %s293
    %p300 = scmp.eq.s32.totalorder %s33, 1
    %p301 = por %p299, %p300
    %p302 = scmp.ne.s32.totalorder %s293, %s294
    %p303 = scmp.eq.s32.totalorder %s33, 0
    %p304 = por %p302, %p303
    %p305 = scmp.ne.s32.totalorder %s293, %s294
    %p306 = scmp.eq.s32.totalorder %s34, 1
    %p307 = por %p305, %p306
    %p309 = scmp.ne.s32.totalorder %s294, %s308
    %p310 = scmp.eq.s32.totalorder %s34, 0
    %p311 = por %p309, %p310
    %s313 = sadd.s32 %s312, 1
    %p316 = scmp.eq.s32.totalorder %s28, 1
    %p317 = scmp.ne.s32.totalorder %s312, %s314
    %p318 = scmp.eq.s32.totalorder %s28, 0
    %p319 = por %p317, %p318
    %p320 = scmp.ne.s32.totalorder %s312, %s314
    %p321 = scmp.eq.s32.totalorder %s33, 1
    %p322 = por %p320, %p321
    %p323 = scmp.ne.s32.totalorder %s314, %s315
    %p324 = scmp.eq.s32.totalorder %s33, 0
    %p325 = por %p323, %p324
    %p326 = scmp.ne.s32.totalorder %s314, %s315
    %p327 = scmp.eq.s32.totalorder %s34, 1
    %p328 = por %p326, %p327
    %p330 = scmp.ne.s32.totalorder %s315, %s329
    %p331 = scmp.eq.s32.totalorder %s34, 0
    %p332 = por %p330, %p331
    %s334 = sadd.s32 %s333, 1
    %p337 = scmp.eq.s32.totalorder %s28, 1
    %p338 = scmp.ne.s32.totalorder %s333, %s335
    %p339 = scmp.eq.s32.totalorder %s28, 0
    %p340 = por %p338, %p339
    %p341 = scmp.ne.s32.totalorder %s333, %s335
    %p342 = scmp.eq.s32.totalorder %s33, 1
    %p343 = por %p341, %p342
    %p344 = scmp.ne.s32.totalorder %s335, %s336
    %p345 = scmp.eq.s32.totalorder %s33, 0
    %p346 = por %p344, %p345
    %p347 = scmp.ne.s32.totalorder %s335, %s336
    %p348 = scmp.eq.s32.totalorder %s34, 1
    %p349 = por %p347, %p348
    %p351 = scmp.ne.s32.totalorder %s336, %s350
    %p352 = scmp.eq.s32.totalorder %s34, 0
    %p353 = por %p351, %p352
    %s355 = sadd.s32 %s354, 1
    %p358 = scmp.eq.s32.totalorder %s28, 1
    %p359 = scmp.ne.s32.totalorder %s354, %s356
    %p360 = scmp.eq.s32.totalorder %s28, 0
    %p361 = por %p359, %p360
    %p362 = scmp.ne.s32.totalorder %s354, %s356
    %p363 = scmp.eq.s32.totalorder %s33, 1
    %p364 = por %p362, %p363
    %p365 = scmp.ne.s32.totalorder %s356, %s357
    %p366 = scmp.eq.s32.totalorder %s33, 0
    %p367 = por %p365, %p366
    %p368 = scmp.ne.s32.totalorder %s356, %s357
    %p369 = scmp.eq.s32.totalorder %s34, 1
    %p370 = por %p368, %p369
    %p372 = scmp.ne.s32.totalorder %s357, %s371
    %p373 = scmp.eq.s32.totalorder %s34, 0
    %p374 = por %p372, %p373
    %s376 = sadd.s32 %s375, 1
    %p379 = scmp.eq.s32.totalorder %s28, 1
    %p380 = scmp.ne.s32.totalorder %s375, %s377
    %p381 = scmp.eq.s32.totalorder %s28, 0
    %p382 = por %p380, %p381
    %p383 = scmp.ne.s32.totalorder %s375, %s377
    %p384 = scmp.eq.s32.totalorder %s33, 1
    %p385 = por %p383, %p384
    %p386 = scmp.ne.s32.totalorder %s377, %s378
    %p387 = scmp.eq.s32.totalorder %s33, 0
    %p388 = por %p386, %p387
    %p389 = scmp.ne.s32.totalorder %s377, %s378
    %p390 = scmp.eq.s32.totalorder %s34, 1
    %p391 = por %p389, %p390
    %p393 = scmp.ne.s32.totalorder %s378, %s392
    %p394 = scmp.eq.s32.totalorder %s34, 0
    %p395 = por %p393, %p394
    %s397 = sadd.s32 %s396, 1
    %p400 = scmp.eq.s32.totalorder %s28, 1
    %p401 = scmp.ne.s32.totalorder %s396, %s398
    %p402 = scmp.eq.s32.totalorder %s28, 0
    %p403 = por %p401, %p402
    %p404 = scmp.ne.s32.totalorder %s396, %s398
    %p405 = scmp.eq.s32.totalorder %s33, 1
    %p406 = por %p404, %p405
    %p407 = scmp.ne.s32.totalorder %s398, %s399
    %p408 = scmp.eq.s32.totalorder %s33, 0
    %p409 = por %p407, %p408
    %p410 = scmp.ne.s32.totalorder %s398, %s399
    %p411 = scmp.eq.s32.totalorder %s34, 1
    %p412 = por %p410, %p411
    %p414 = scmp.ne.s32.totalorder %s399, %s413
    %p415 = scmp.eq.s32.totalorder %s34, 0
    %p416 = por %p414, %p415
    %s418 = sadd.s32 %s417, 1
    %p421 = scmp.eq.s32.totalorder %s28, 1
    %p422 = scmp.ne.s32.totalorder %s417, %s419
    %p423 = scmp.eq.s32.totalorder %s28, 0
    %p424 = por %p422, %p423
    %p425 = scmp.ne.s32.totalorder %s417, %s419
    %p426 = scmp.eq.s32.totalorder %s33, 1
    %p427 = por %p425, %p426
    %p428 = scmp.ne.s32.totalorder %s419, %s420
    %p429 = scmp.eq.s32.totalorder %s33, 0
    %p430 = por %p428, %p429
    %p431 = scmp.ne.s32.totalorder %s419, %s420
    %p432 = scmp.eq.s32.totalorder %s34, 1
    %p433 = por %p431, %p432
    %p435 = scmp.ne.s32.totalorder %s420, %s434
    %p436 = scmp.eq.s32.totalorder %s34, 0
    %p437 = por %p435, %p436
    %s439 = sadd.s32 %s438, 1
    %p442 = scmp.eq.s32.totalorder %s28, 1
    %p443 = scmp.ne.s32.totalorder %s438, %s440
    %p444 = scmp.eq.s32.totalorder %s28, 0
    %p445 = por %p443, %p444
    %p446 = scmp.ne.s32.totalorder %s438, %s440
    %p447 = scmp.eq.s32.totalorder %s33, 1
    %p448 = por %p446, %p447
    %p449 = scmp.ne.s32.totalorder %s440, %s441
    %p450 = scmp.eq.s32.totalorder %s33, 0
    %p451 = por %p449, %p450
    %p452 = scmp.ne.s32.totalorder %s440, %s441
    %p453 = scmp.eq.s32.totalorder %s34, 1
    %p454 = por %p452, %p453
    %p456 = scmp.ne.s32.totalorder %s441, %s455
    %p457 = scmp.eq.s32.totalorder %s34, 0
    %p458 = por %p456, %p457
    %s460 = sadd.s32 %s459, 1
    %p463 = scmp.eq.s32.totalorder %s28, 1
    %p464 = scmp.ne.s32.totalorder %s459, %s461
    %p465 = scmp.eq.s32.totalorder %s28, 0
    %p466 = por %p464, %p465
    %p467 = scmp.ne.s32.totalorder %s459, %s461
    %p468 = scmp.eq.s32.totalorder %s33, 1
    %p469 = por %p467, %p468
    %p470 = scmp.ne.s32.totalorder %s461, %s462
    %p471 = scmp.eq.s32.totalorder %s33, 0
    %p472 = por %p470, %p471
    %p473 = scmp.ne.s32.totalorder %s461, %s462
    %p474 = scmp.eq.s32.totalorder %s34, 1
    %p475 = por %p473, %p474
    %p477 = scmp.ne.s32.totalorder %s462, %s476
    %p478 = scmp.eq.s32.totalorder %s34, 0
    %p479 = por %p477, %p478
    %s480 = ssub.s32 %s35, %s47
    %s481 = ssub.s32 %s36, %s43
    %s482 = sor.u32 %s480, %s481
    %p483 = scmp.eq.s32.totalorder %s482, 0
    %s485 = sadd.s32 %s484, 1
    %s486 = scalar_select %p483, %s484, %s485
    %p489 = pneg %p483
    %p490 = scmp.eq.s32.totalorder %s28, 1
    %p491 = por %p489, %p490
    %p492 = scmp.ne.s32.totalorder %s484, %s487
    %p493 = scmp.eq.s32.totalorder %s28, 0
    %p494 = por %p492, %p493
    %p495 = scmp.ne.s32.totalorder %s484, %s487
    %p496 = scmp.eq.s32.totalorder %s33, 1
    %p497 = por %p495, %p496
    %p498 = scmp.ne.s32.totalorder %s487, %s488
    %p499 = scmp.eq.s32.totalorder %s33, 0
    %p500 = por %p498, %p499
    %p501 = scmp.ne.s32.totalorder %s487, %s488
    %p502 = scmp.eq.s32.totalorder %s34, 1
    %p503 = por %p501, %p502
    %p505 = scmp.ne.s32.totalorder %s488, %s504
    %p506 = scmp.eq.s32.totalorder %s34, 0
    %p507 = por %p505, %p506
    %s508 = ssub.s32 %s35, %s47
    %s509 = ssub.s32 %s36, %s43
    %s510 = sor.u32 %s508, %s509
    %p511 = scmp.eq.s32.totalorder %s510, 0
    %s513 = sadd.s32 %s512, 1
    %s514 = scalar_select %p511, %s512, %s513
    %p517 = pneg %p511
    %p518 = scmp.eq.s32.totalorder %s28, 1
    %p519 = por %p517, %p518
    %p520 = scmp.ne.s32.totalorder %s512, %s515
    %p521 = scmp.eq.s32.totalorder %s28, 0
    %p522 = por %p520, %p521
    %p523 = scmp.ne.s32.totalorder %s512, %s515
    %p524 = scmp.eq.s32.totalorder %s33, 1
    %p525 = por %p523, %p524
    %p526 = scmp.ne.s32.totalorder %s515, %s516
    %p527 = scmp.eq.s32.totalorder %s33, 0
    %p528 = por %p526, %p527
    %p529 = scmp.ne.s32.totalorder %s515, %s516
    %p530 = scmp.eq.s32.totalorder %s34, 1
    %p531 = por %p529, %p530
    %p533 = scmp.ne.s32.totalorder %s516, %s532
    %p534 = scmp.eq.s32.totalorder %s34, 0
    %p535 = por %p533, %p534
    %p536 = scmp.le.s32.totalorder 1, %s28
    %p537 = scmp.lt.s32.totalorder %s28, 3
    %p538 = pnand %p536, %p537
    %p539 = pneg %p538
    // Predicated region
    $region9: #{bert_embeddings_forward.5} parent=5 // pred_check
      _
    $region10: #{bert_embeddings_forward.5} parent=5 // pred_check_branch
      %541 = sbr.rel (%p538) target = $region12
    $region11: #{bert_embeddings_forward.5} parent=5 // pred_region
      %s542 = ssub.s32 %s28, 1
      // Predicated region
      $region13: #{bert_embeddings_forward.5} parent=11 // pred_check
        %p543 = pneg %p115
      $region14: #{bert_embeddings_forward.5} parent=11 // pred_check_branch
        %545 = sbr.rel (%p543) target = $region16
      $region15: #{bert_embeddings_forward.5} parent=11 // pred_region
        _
      $region16: #{bert_embeddings_forward.5} parent=11 // pred_fallthru
        _
      // Predicated region
      $region17: #{bert_embeddings_forward.5} parent=11 // pred_check
        %p546 = pneg %p136
      $region18: #{bert_embeddings_forward.5} parent=11 // pred_check_branch
        %548 = sbr.rel (%p546) target = $region20
      $region19: #{bert_embeddings_forward.5} parent=11 // pred_region
        _
      $region20: #{bert_embeddings_forward.5} parent=11 // pred_fallthru
        _
      // Predicated region
      $region21: #{bert_embeddings_forward.5} parent=11 // pred_check
        %p549 = pneg %p157
      $region22: #{bert_embeddings_forward.5} parent=11 // pred_check_branch
        %551 = sbr.rel (%p549) target = $region24
      $region23: #{bert_embeddings_forward.5} parent=11 // pred_region
        _
      $region24: #{bert_embeddings_forward.5} parent=11 // pred_fallthru
        _
      // Predicated region
      $region25: #{bert_embeddings_forward.5} parent=11 // pred_check
        %p552 = pneg %p178
      $region26: #{bert_embeddings_forward.5} parent=11 // pred_check_branch
        %554 = sbr.rel (%p552) target = $region28
      $region27: #{bert_embeddings_forward.5} parent=11 // pred_region
        _
      $region28: #{bert_embeddings_forward.5} parent=11 // pred_fallthru
        _
      // Predicated region
      $region29: #{bert_embeddings_forward.5} parent=11 // pred_check
        %p555 = pneg %p199
      $region30: #{bert_embeddings_forward.5} parent=11 // pred_check_branch
        %557 = sbr.rel (%p555) target = $region32
      $region31: #{bert_embeddings_forward.5} parent=11 // pred_region
        _
      $region32: #{bert_embeddings_forward.5} parent=11 // pred_fallthru
        _
      // Predicated region
      $region33: #{bert_embeddings_forward.5} parent=11 // pred_check
        %p558 = pneg %p220
      $region34: #{bert_embeddings_forward.5} parent=11 // pred_check_branch
        %560 = sbr.rel (%p558) target = $region36
      $region35: #{bert_embeddings_forward.5} parent=11 // pred_region
        _
      $region36: #{bert_embeddings_forward.5} parent=11 // pred_fallthru
        _
      // Predicated region
      $region37: #{bert_embeddings_forward.5} parent=11 // pred_check
        %p561 = pneg %p241
      $region38: #{bert_embeddings_forward.5} parent=11 // pred_check_branch
        %563 = sbr.rel (%p561) target = $region40
      $region39: #{bert_embeddings_forward.5} parent=11 // pred_region
        _
      $region40: #{bert_embeddings_forward.5} parent=11 // pred_fallthru
        _
      // Predicated region
      $region41: #{bert_embeddings_forward.5} parent=11 // pred_check
        %p564 = pneg %p262
      $region42: #{bert_embeddings_forward.5} parent=11 // pred_check_branch
        %566 = sbr.rel (%p564) target = $region44
      $region43: #{bert_embeddings_forward.5} parent=11 // pred_region
        _
      $region44: #{bert_embeddings_forward.5} parent=11 // pred_fallthru
        _
      // Predicated region
      $region45: #{bert_embeddings_forward.5} parent=11 // pred_check
        %p567 = pneg %p283
      $region46: #{bert_embeddings_forward.5} parent=11 // pred_check_branch
        %569 = sbr.rel (%p567) target = $region48
      $region47: #{bert_embeddings_forward.5} parent=11 // pred_region
        _
      $region48: #{bert_embeddings_forward.5} parent=11 // pred_fallthru
        _
      // Predicated region
      $region49: #{bert_embeddings_forward.5} parent=11 // pred_check
        %p570 = pneg %p304
      $region50: #{bert_embeddings_forward.5} parent=11 // pred_check_branch
        %572 = sbr.rel (%p570) target = $region52
      $region51: #{bert_embeddings_forward.5} parent=11 // pred_region
        _
      $region52: #{bert_embeddings_forward.5} parent=11 // pred_fallthru
        _
      // Predicated region
      $region53: #{bert_embeddings_forward.5} parent=11 // pred_check
        %p573 = pneg %p325
      $region54: #{bert_embeddings_forward.5} parent=11 // pred_check_branch
        %575 = sbr.rel (%p573) target = $region56
      $region55: #{bert_embeddings_forward.5} parent=11 // pred_region
        _
      $region56: #{bert_embeddings_forward.5} parent=11 // pred_fallthru
        _
      // Predicated region
      $region57: #{bert_embeddings_forward.5} parent=11 // pred_check
        %p576 = pneg %p346
      $region58: #{bert_embeddings_forward.5} parent=11 // pred_check_branch
        %578 = sbr.rel (%p576) target = $region60
      $region59: #{bert_embeddings_forward.5} parent=11 // pred_region
        _
      $region60: #{bert_embeddings_forward.5} parent=11 // pred_fallthru
        _
      // Predicated region
      $region61: #{bert_embeddings_forward.5} parent=11 // pred_check
        %p579 = pneg %p367
      $region62: #{bert_embeddings_forward.5} parent=11 // pred_check_branch
        %581 = sbr.rel (%p579) target = $region64
      $region63: #{bert_embeddings_forward.5} parent=11 // pred_region
        _
      $region64: #{bert_embeddings_forward.5} parent=11 // pred_fallthru
        _
      // Predicated region
      $region65: #{bert_embeddings_forward.5} parent=11 // pred_check
        %p582 = pneg %p388
      $region66: #{bert_embeddings_forward.5} parent=11 // pred_check_branch
        %584 = sbr.rel (%p582) target = $region68
      $region67: #{bert_embeddings_forward.5} parent=11 // pred_region
        _
      $region68: #{bert_embeddings_forward.5} parent=11 // pred_fallthru
        _
      // Predicated region
      $region69: #{bert_embeddings_forward.5} parent=11 // pred_check
        %p585 = pneg %p409
      $region70: #{bert_embeddings_forward.5} parent=11 // pred_check_branch
        %587 = sbr.rel (%p585) target = $region72
      $region71: #{bert_embeddings_forward.5} parent=11 // pred_region
        _
      $region72: #{bert_embeddings_forward.5} parent=11 // pred_fallthru
        _
      // Predicated region
      $region73: #{bert_embeddings_forward.5} parent=11 // pred_check
        %p588 = pneg %p430
      $region74: #{bert_embeddings_forward.5} parent=11 // pred_check_branch
        %590 = sbr.rel (%p588) target = $region76
      $region75: #{bert_embeddings_forward.5} parent=11 // pred_region
        _
      $region76: #{bert_embeddings_forward.5} parent=11 // pred_fallthru
        _
      // Predicated region
      $region77: #{bert_embeddings_forward.5} parent=11 // pred_check
        %p591 = pneg %p451
      $region78: #{bert_embeddings_forward.5} parent=11 // pred_check_branch
        %593 = sbr.rel (%p591) target = $region80
      $region79: #{bert_embeddings_forward.5} parent=11 // pred_region
        _
      $region80: #{bert_embeddings_forward.5} parent=11 // pred_fallthru
        _
      // Predicated region
      $region81: #{bert_embeddings_forward.5} parent=11 // pred_check
        %p594 = pneg %p472
      $region82: #{bert_embeddings_forward.5} parent=11 // pred_check_branch
        %596 = sbr.rel (%p594) target = $region84
      $region83: #{bert_embeddings_forward.5} parent=11 // pred_region
        _
      $region84: #{bert_embeddings_forward.5} parent=11 // pred_fallthru
        _
    $region12: #{bert_embeddings_forward.5} parent=5 // pred_fallthru
      _
    %p597 = scmp.lt.s32.totalorder %s28, 2
    // Predicated region
    $region85: #{bert_embeddings_forward.5} parent=5 // pred_check
      %p598 = pneg %p597
    $region86: #{bert_embeddings_forward.5} parent=5 // pred_check_branch
      %600 = sbr.rel (%p598) target = $region88
    $region87: #{bert_embeddings_forward.5} parent=5 // pred_region
      // Predicated region
      $region89: #{bert_embeddings_forward.5} parent=87 // pred_check
        %p601 = pneg %p60
      $region90: #{bert_embeddings_forward.5} parent=87 // pred_check_branch
        %603 = sbr.rel (%p601) target = $region92
      $region91: #{bert_embeddings_forward.5} parent=87 // pred_region
        %p604 = scmp.lt.s32.totalorder %s35, 1
        %s605 = scalar_select %p604, %s35, 1
        %s606 = smul.addr %s605, 4
        %s607 = scalar_lea.vmem %s0, %s606
      $region92: #{bert_embeddings_forward.5} parent=87 // pred_fallthru
        _
      // Predicated region
      $region93: #{bert_embeddings_forward.5} parent=87 // pred_check
        %p608 = pneg %p88
      $region94: #{bert_embeddings_forward.5} parent=87 // pred_check_branch
        %610 = sbr.rel (%p608) target = $region96
      $region95: #{bert_embeddings_forward.5} parent=87 // pred_region
        %p611 = scmp.lt.s32.totalorder %s35, 1
        %s612 = scalar_select %p611, %s35, 1
        %p613 = scmp.lt.s32.totalorder %s36, 0
        %s614 = scalar_select %p613, %s36, 0
        %s615 = sadd.s32 %s614, %s612
        %s616 = smul.addr %s615, 8
        %s617 = scalar_lea.vmem %s1, %s616
      $region96: #{bert_embeddings_forward.5} parent=87 // pred_fallthru
        _
    $region88: #{bert_embeddings_forward.5} parent=5 // pred_fallthru
      _
    %p618 = scmp.le.s32.totalorder 1, %s28
    %p619 = scmp.lt.s32.totalorder %s28, 3
    %p620 = pnand %p618, %p619
    %p621 = pneg %p620
    // Predicated region
    $region97: #{bert_embeddings_forward.5} parent=5 // pred_check
      _
    $region98: #{bert_embeddings_forward.5} parent=5 // pred_check_branch
      %623 = sbr.rel (%p620) target = $region100
    $region99: #{bert_embeddings_forward.5} parent=5 // pred_region
      %s624 = ssub.s32 %s28, 1
      %p625 = scmp.lt.s32.totalorder %s37, 1
      %s626 = scalar_select %p625, %s37, 1
      %s627 = smul.addr %s626, 4
      %s628 = scalar_lea.vmem %s0, %s627
      %p629 = pneg %p66
      %p630 = pneg %p63
      %p631 = scmp.lt.s32.totalorder %s37, 1
      %s632 = scalar_select %p631, %s37, 1
      %p633 = scmp.lt.s32.totalorder %s38, 0
      %s634 = scalar_select %p633, %s38, 0
      %s635 = sadd.s32 %s634, %s632
      %s636 = smul.addr %s635, 8
      %s637 = scalar_lea.vmem %s1, %s636
      %p638 = pneg %p94
      %p639 = pneg %p91
      %p640 = pneg %p115
      %p641 = pneg %p112
      %p642 = pneg %p136
      %p643 = pneg %p133
      %p644 = pneg %p157
      %p645 = pneg %p154
      %p646 = pneg %p178
      %p647 = pneg %p175
      %p648 = pneg %p199
      %p649 = pneg %p196
      %p650 = pneg %p220
      %p651 = pneg %p217
      %p652 = pneg %p241
      %p653 = pneg %p238
      %p654 = pneg %p262
      %p655 = pneg %p259
      %p656 = pneg %p283
      %p657 = pneg %p280
      %p658 = pneg %p304
      %p659 = pneg %p301
      %p660 = pneg %p325
      %p661 = pneg %p322
      %p662 = pneg %p346
      %p663 = pneg %p343
      %p664 = pneg %p367
      %p665 = pneg %p364
      %p666 = pneg %p388
      %p667 = pneg %p385
      %p668 = pneg %p409
      %p669 = pneg %p406
      %p670 = pneg %p430
      %p671 = pneg %p427
      %p672 = pneg %p451
      %p673 = pneg %p448
      %p674 = pneg %p472
      %p675 = pneg %p469
      %p676 = pneg %p500
      %p677 = pneg %p497
      %p678 = scmp.lt.s32.totalorder %s37, 1
      %s679 = scalar_select %p678, %s37, 1
      %p680 = scmp.lt.s32.totalorder %s38, 0
      %s681 = scalar_select %p680, %s38, 0
      %s682 = sadd.s32 %s681, %s679
      %s683 = smul.addr %s682, 4
      %s684 = scalar_lea.vmem %s20, %s683
      %p685 = pneg %p528
      %p686 = pneg %p525
      %p687 = scmp.lt.s32.totalorder %s37, 1
      %s688 = scalar_select %p687, %s37, 1
      %p689 = scmp.lt.s32.totalorder %s38, 0
      %s690 = scalar_select %p689, %s38, 0
      %s691 = sadd.s32 %s690, %s688
      %s692 = smul.addr %s691, 8
      %s693 = scalar_lea.vmem %s21, %s692
      %p694 = scmp.lt.s32.totalorder %s37, 1
      %s695 = scalar_select %p694, %s37, 1
      %s696 = smul.addr %s695, 4
      %s697 = scalar_lea.vmem %s0, %s696
      %p698 = scmp.lt.s32.totalorder %s37, 1
      %s699 = scalar_select %p698, %s37, 1
      %p700 = scmp.lt.s32.totalorder %s38, 0
      %s701 = scalar_select %p700, %s38, 0
      %s702 = sadd.s32 %s701, %s699
      %s703 = smul.addr %s702, 8
      %s704 = scalar_lea.vmem %s1, %s703
      %p705 = scmp.lt.s32.totalorder %s37, 1
      %s706 = scalar_select %p705, %s37, 1
      %p707 = scmp.lt.s32.totalorder %s38, 0
      %s708 = scalar_select %p707, %s38, 0
      %s709 = sadd.s32 %s708, %s706
      %s710 = smul.addr %s709, 4
      %s711 = scalar_lea.vmem %s20, %s710
      %p712 = scmp.lt.s32.totalorder %s37, 1
      %s713 = scalar_select %p712, %s37, 1
      %p714 = scmp.lt.s32.totalorder %s38, 0
      %s715 = scalar_select %p714, %s38, 0
      %s716 = sadd.s32 %s715, %s713
      %s717 = smul.addr %s716, 8
      %s718 = scalar_lea.vmem %s21, %s717
      %v720 = vld [vmem:[%s697] sm:$0xf]
      %v721 = vunpack.c.l.bf16 %v720
      %v722 = vld [vmem:[%s2] sm:$0xf]
      %v723 = vld [vmem:[%s2 + $0x4] sm:$0xf]
      %v724 = vld [vmem:[%s2 + $0x8] sm:$0xf]
      %v725 = vld [vmem:[%s2 + $0xc] sm:$0xf]
      %v726 = vld [vmem:[%s3] sm:$0x1]
      %v728 = vlaneseq
      %v729 = vshrl.u32 %v728, 7
      %v730 = vsub.s32 0, %v729
      %v731 = vrot.slane %v726, %v730
      %v737 = vunpack.c.l.b16 %v722
      %v738 = vunpack.c.l.b16 %v723
      %v739 = vunpack.c.l.b16 %v724
      %v740 = vunpack.c.l.b16 %v725
      %v741 = vpack.c.b16 %v738, %v737
      %v742 = vpack.c.b16 %v740, %v739
      %vm745 = vcmask 261120
      %v747 = vsel %vm745, %v720, 0
      %749 = vmatprep.subr.bf16.mxu0 0
      %750 = vmatpush1.bf16.msra.mxu0 0
      %751 = vmatprep.subr.bf16.mxu0 0
      %752 = vmatpush1.bf16.msra.mxu0 0
      %753 = vmatprep.subr.bf16.mxu0 0
      %754 = vmatpush1.bf16.msra.mxu0 0
      %755 = vmatprep.subr.bf16.mxu0 0
      %756 = vmatpush1.bf16.msra.mxu0 0
      %757 = vmatprep.subr.bf16.mxu0 0
      %758 = vmatpush1.bf16.msra.mxu0 0
      %759 = vmatprep.subr.bf16.mxu0 0
      %760 = vmatpush1.bf16.msra.mxu0 0
      %761 = vmatprep.subr.bf16.mxu0 0
      %762 = vmatpush1.bf16.msra.mxu0 %v742
      %763 = vmatprep.subr.bf16.mxu0 0
      %764 = vmatpush1.bf16.msra.mxu0 %v741
      %765 = vmatprep.subr.bf16.mxu0 0
      %766 = vmatpush2.bf16.msra.mxu0 0
      %767 = vmatprep.subr.bf16.mxu0 0
      %768 = vmatpush2.bf16.msra.mxu0 0
      %769 = vmatprep.subr.bf16.mxu0 0
      %770 = vmatpush2.bf16.msra.mxu0 0
      %771 = vmatprep.subr.bf16.mxu0 0
      %772 = vmatpush2.bf16.msra.mxu0 0
      %773 = vmatprep.subr.bf16.mxu0 0
      %774 = vmatpush2.bf16.msra.mxu0 0
      %775 = vmatprep.subr.bf16.mxu0 0
      %776 = vmatpush2.bf16.msra.mxu0 0
      %777 = vmatprep.subr.bf16.mxu0 0
      %778 = vmatpush2.bf16.msra.mxu0 0
      %779 = vmatprep.subr.bf16.mxu0 0
      %780 = vmatpush2.bf16.msra.mxu0 0
      %781 = vmatprep.mubr.bf16.mxu0 0
      %782 = vmatmul.mubr.bf16.gmra.mxu0 %v747
      %v783 = vpop.f32.mrf.mxu0
      %v784 = vadd.f32 %v731, %v783
      %v785 = vpop.f32.mrf.mxu0
      %v786 = vpop.f32.mrf.mxu0
      %v787 = vpop.f32.mrf.mxu0
      %788 = vdwg.mxu0
      %v789 = vld [vmem:[%s4] sm:$0xf]
      %v790 = vld [vmem:[%s4 + $0x4] sm:$0xf]
      %v791 = vld [vmem:[%s4 + $0x8] sm:$0xf]
      %v792 = vld [vmem:[%s4 + $0xc] sm:$0xf]
      %v793 = vld [vmem:[%s5] sm:$0x1]
      %v795 = vlaneseq
      %v796 = vshrl.u32 %v795, 7
      %v797 = vsub.s32 0, %v796
      %v798 = vrot.slane %v793, %v797
      %v804 = vunpack.c.l.b16 %v789
      %v805 = vunpack.c.l.b16 %v790
      %v806 = vunpack.c.l.b16 %v791
      %v807 = vunpack.c.l.b16 %v792
      %v808 = vpack.c.b16 %v805, %v804
      %v809 = vpack.c.b16 %v807, %v806
      %812 = vmatprep.subr.bf16.mxu0 0
      %813 = vmatpush1.bf16.msra.mxu0 0
      %814 = vmatprep.subr.bf16.mxu0 0
      %815 = vmatpush1.bf16.msra.mxu0 0
      %816 = vmatprep.subr.bf16.mxu0 0
      %817 = vmatpush1.bf16.msra.mxu0 0
      %818 = vmatprep.subr.bf16.mxu0 0
      %819 = vmatpush1.bf16.msra.mxu0 0
      %820 = vmatprep.subr.bf16.mxu0 0
      %821 = vmatpush1.bf16.msra.mxu0 0
      %822 = vmatprep.subr.bf16.mxu0 0
      %823 = vmatpush1.bf16.msra.mxu0 0
      %824 = vmatprep.subr.bf16.mxu0 0
      %825 = vmatpush1.bf16.msra.mxu0 %v809
      %826 = vmatprep.subr.bf16.mxu0 0
      %827 = vmatpush1.bf16.msra.mxu0 %v808
      %828 = vmatprep.subr.bf16.mxu0 0
      %829 = vmatpush2.bf16.msra.mxu0 0
      %830 = vmatprep.subr.bf16.mxu0 0
      %831 = vmatpush2.bf16.msra.mxu0 0
      %832 = vmatprep.subr.bf16.mxu0 0
      %833 = vmatpush2.bf16.msra.mxu0 0
      %834 = vmatprep.subr.bf16.mxu0 0
      %835 = vmatpush2.bf16.msra.mxu0 0
      %836 = vmatprep.subr.bf16.mxu0 0
      %837 = vmatpush2.bf16.msra.mxu0 0
      %838 = vmatprep.subr.bf16.mxu0 0
      %839 = vmatpush2.bf16.msra.mxu0 0
      %840 = vmatprep.subr.bf16.mxu0 0
      %841 = vmatpush2.bf16.msra.mxu0 0
      %842 = vmatprep.subr.bf16.mxu0 0
      %843 = vmatpush2.bf16.msra.mxu0 0
      %844 = vmatprep.mubr.bf16.mxu0 0
      %845 = vmatmul.mubr.bf16.gmra.mxu0 %v747
      %v846 = vpop.f32.mrf.mxu0
      %v847 = vadd.f32 %v798, %v846
      %v848 = vpop.f32.mrf.mxu0
      %v849 = vpop.f32.mrf.mxu0
      %v850 = vpop.f32.mrf.mxu0
      %851 = vdwg.mxu0
      %v852 = vld [vmem:[%s6] sm:$0xf]
      %v853 = vld [vmem:[%s6 + $0x4] sm:$0xf]
      %v854 = vld [vmem:[%s6 + $0x8] sm:$0xf]
      %v855 = vld [vmem:[%s6 + $0xc] sm:$0xf]
      %v856 = vld [vmem:[%s7] sm:$0x1]
      %v858 = vlaneseq
      %v859 = vshrl.u32 %v858, 7
      %v860 = vsub.s32 0, %v859
      %v861 = vrot.slane %v856, %v860
      %v867 = vunpack.c.l.b16 %v852
      %v868 = vunpack.c.l.b16 %v853
      %v869 = vunpack.c.l.b16 %v854
      %v870 = vunpack.c.l.b16 %v855
      %v871 = vpack.c.b16 %v868, %v867
      %v872 = vpack.c.b16 %v870, %v869
      %875 = vmatprep.subr.bf16.mxu0 0
      %876 = vmatpush1.bf16.msra.mxu0 0
      %877 = vmatprep.subr.bf16.mxu0 0
      %878 = vmatpush1.bf16.msra.mxu0 0
      %879 = vmatprep.subr.bf16.mxu0 0
      %880 = vmatpush1.bf16.msra.mxu0 0
      %881 = vmatprep.subr.bf16.mxu0 0
      %882 = vmatpush1.bf16.msra.mxu0 0
      %883 = vmatprep.subr.bf16.mxu0 0
      %884 = vmatpush1.bf16.msra.mxu0 0
      %885 = vmatprep.subr.bf16.mxu0 0
      %886 = vmatpush1.bf16.msra.mxu0 0
      %887 = vmatprep.subr.bf16.mxu0 0
      %888 = vmatpush1.bf16.msra.mxu0 %v872
      %889 = vmatprep.subr.bf16.mxu0 0
      %890 = vmatpush1.bf16.msra.mxu0 %v871
      %891 = vmatprep.subr.bf16.mxu0 0
      %892 = vmatpush2.bf16.msra.mxu0 0
      %893 = vmatprep.subr.bf16.mxu0 0
      %894 = vmatpush2.bf16.msra.mxu0 0
      %895 = vmatprep.subr.bf16.mxu0 0
      %896 = vmatpush2.bf16.msra.mxu0 0
      %897 = vmatprep.subr.bf16.mxu0 0
      %898 = vmatpush2.bf16.msra.mxu0 0
      %899 = vmatprep.subr.bf16.mxu0 0
      %900 = vmatpush2.bf16.msra.mxu0 0
      %901 = vmatprep.subr.bf16.mxu0 0
      %902 = vmatpush2.bf16.msra.mxu0 0
      %903 = vmatprep.subr.bf16.mxu0 0
      %904 = vmatpush2.bf16.msra.mxu0 0
      %905 = vmatprep.subr.bf16.mxu0 0
      %906 = vmatpush2.bf16.msra.mxu0 0
      %907 = vmatprep.mubr.bf16.mxu0 0
      %908 = vmatmul.mubr.bf16.gmra.mxu0 %v747
      %v909 = vpop.f32.mrf.mxu0
      %v910 = vadd.f32 %v861, %v909
      %v911 = vpop.f32.mrf.mxu0
      %v912 = vpop.f32.mrf.mxu0
      %v913 = vpop.f32.mrf.mxu0
      %914 = vdwg.mxu0
      %v915 = vpack.c.bf16 %v784, %v784
      %v916 = vpack.c.bf16 %v847, %v847
      %v917 = vpack.c.bf16 %v910, %v910
      %vm918 = vcmask 64512
      %v920 = vsel %vm918, %v915, 0
      %v923 = vsel %vm918, %v916, 0
      %925 = vmatprep.subr.bf16.mxu0 0
      %926 = vmatpush1.bf16.xpose.msra.mxu0 0
      %927 = vmatprep.subr.bf16.mxu0 0
      %928 = vmatpush1.bf16.xpose.msra.mxu0 0
      %929 = vmatprep.subr.bf16.mxu0 0
      %930 = vmatpush1.bf16.xpose.msra.mxu0 0
      %931 = vmatprep.subr.bf16.mxu0 0
      %932 = vmatpush1.bf16.xpose.msra.mxu0 0
      %933 = vmatprep.subr.bf16.mxu0 0
      %934 = vmatpush1.bf16.xpose.msra.mxu0 0
      %935 = vmatprep.subr.bf16.mxu0 0
      %936 = vmatpush1.bf16.xpose.msra.mxu0 0
      %937 = vmatprep.subr.bf16.mxu0 0
      %938 = vmatpush1.bf16.xpose.msra.mxu0 0
      %939 = vmatprep.subr.bf16.mxu0 0
      %940 = vmatpush1.bf16.xpose.msra.mxu0 %v923
      %941 = vmatprep.subr.bf16.mxu0 0
      %942 = vmatpush2.bf16.xpose.msra.mxu0 0
      %943 = vmatprep.subr.bf16.mxu0 0
      %944 = vmatpush2.bf16.xpose.msra.mxu0 0
      %945 = vmatprep.subr.bf16.mxu0 0
      %946 = vmatpush2.bf16.xpose.msra.mxu0 0
      %947 = vmatprep.subr.bf16.mxu0 0
      %948 = vmatpush2.bf16.xpose.msra.mxu0 0
      %949 = vmatprep.subr.bf16.mxu0 0
      %950 = vmatpush2.bf16.xpose.msra.mxu0 0
      %951 = vmatprep.subr.bf16.mxu0 0
      %952 = vmatpush2.bf16.xpose.msra.mxu0 0
      %953 = vmatprep.subr.bf16.mxu0 0
      %954 = vmatpush2.bf16.xpose.msra.mxu0 0
      %955 = vmatprep.subr.bf16.mxu0 0
      %956 = vmatpush2.bf16.xpose.msra.mxu0 0
      %957 = vmatprep.mubr.bf16.mxu0 0
      %958 = vmatmul.mubr.bf16.gmra.mxu0 %v920
      %v959 = vpop.f32.mrf.mxu0
      %v960 = vadd.f32 0.0, %v959
      %v961 = vpop.f32.mrf.mxu0
      %v962 = vpop.f32.mrf.mxu0
      %v963 = vpop.f32.mrf.mxu0
      %964 = vdwg.mxu0
      %v965 = vsel %vm918, %v960, -inf
      %966 = vmax.xlane.f32.xlu0 %v965
      %v967 = vpop.xlane.xlu0 %966
      %v968 = vsub.f32 %v960, %v967
      %v969 = vmul.f32 %v968, 1.442695
      %v970 = vpow.pop %v969
      %v971 = vsel %vm918, %v970, 0.0
      %972 = vadd.xlane.f32.xlu0 %v971
      %v973 = vpop.xlane.xlu0 %972
      %v974 = vrcp.pop %v973
      %v975 = vmul.f32 %v970, %v974
      %v976 = vpack.c.bf16 %v975, %v975
      %v978 = vsel %vm918, %v976, 0
      %vm980 = vcmask 1043456
      %v982 = vsel %vm980, %v917, 0
      %984 = vmatprep.subr.bf16.mxu0 0
      %985 = vmatpush1.bf16.msra.mxu0 0
      %986 = vmatprep.subr.bf16.mxu0 0
      %987 = vmatpush1.bf16.msra.mxu0 0
      %988 = vmatprep.subr.bf16.mxu0 0
      %989 = vmatpush1.bf16.msra.mxu0 0
      %990 = vmatprep.subr.bf16.mxu0 0
      %991 = vmatpush1.bf16.msra.mxu0 0
      %992 = vmatprep.subr.bf16.mxu0 0
      %993 = vmatpush1.bf16.msra.mxu0 0
      %994 = vmatprep.subr.bf16.mxu0 0
      %995 = vmatpush1.bf16.msra.mxu0 0
      %996 = vmatprep.subr.bf16.mxu0 0
      %997 = vmatpush1.bf16.msra.mxu0 0
      %998 = vmatprep.subr.bf16.mxu0 0
      %999 = vmatpush1.bf16.msra.mxu0 %v982
      %1000 = vmatprep.subr.bf16.mxu0 0
      %1001 = vmatpush2.bf16.msra.mxu0 0
      %1002 = vmatprep.subr.bf16.mxu0 0
      %1003 = vmatpush2.bf16.msra.mxu0 0
      %1004 = vmatprep.subr.bf16.mxu0 0
      %1005 = vmatpush2.bf16.msra.mxu0 0
      %1006 = vmatprep.subr.bf16.mxu0 0
      %1007 = vmatpush2.bf16.msra.mxu0 0
      %1008 = vmatprep.subr.bf16.mxu0 0
      %1009 = vmatpush2.bf16.msra.mxu0 0
      %1010 = vmatprep.subr.bf16.mxu0 0
      %1011 = vmatpush2.bf16.msra.mxu0 0
      %1012 = vmatprep.subr.bf16.mxu0 0
      %1013 = vmatpush2.bf16.msra.mxu0 0
      %1014 = vmatprep.subr.bf16.mxu0 0
      %1015 = vmatpush2.bf16.msra.mxu0 0
      %1016 = vmatprep.mubr.bf16.mxu0 0
      %1017 = vmatmul.mubr.bf16.gmra.mxu0 %v978
      %v1018 = vpop.f32.mrf.mxu0
      %v1019 = vadd.f32 0.0, %v1018
      %v1020 = vpop.f32.mrf.mxu0
      %v1021 = vpop.f32.mrf.mxu0
      %v1022 = vpop.f32.mrf.mxu0
      %1023 = vdwg.mxu0
      %v1024 = vpack.c.bf16 %v1019, %v1019
      %vm1025 = vcmask 60416
      %1026 = vst.msk [vmem:[#allocation2] sm:$0xf] %vm1025, %v1024
      %1028 = vrot.lane.b32.xlu0 %v915, 120
      %v1029 = vpop.permute.xlu0 %1028
      %1031 = vrot.lane.b32.xlu0 %v916, 120
      %v1032 = vpop.permute.xlu0 %1031
      %v1034 = vsel %vm918, %v1029, 0
      %v1037 = vsel %vm918, %v1032, 0
      %1039 = vmatprep.subr.bf16.mxu0 0
      %1040 = vmatpush1.bf16.xpose.msra.mxu0 0
      %1041 = vmatprep.subr.bf16.mxu0 0
      %1042 = vmatpush1.bf16.xpose.msra.mxu0 0
      %1043 = vmatprep.subr.bf16.mxu0 0
      %1044 = vmatpush1.bf16.xpose.msra.mxu0 0
      %1045 = vmatprep.subr.bf16.mxu0 0
      %1046 = vmatpush1.bf16.xpose.msra.mxu0 0
      %1047 = vmatprep.subr.bf16.mxu0 0
      %1048 = vmatpush1.bf16.xpose.msra.mxu0 0
      %1049 = vmatprep.subr.bf16.mxu0 0
      %1050 = vmatpush1.bf16.xpose.msra.mxu0 0
      %1051 = vmatprep.subr.bf16.mxu0 0
      %1052 = vmatpush1.bf16.xpose.msra.mxu0 0
      %1053 = vmatprep.subr.bf16.mxu0 0
      %1054 = vmatpush1.bf16.xpose.msra.mxu0 %v1037
      %1055 = vmatprep.subr.bf16.mxu0 0
      %1056 = vmatpush2.bf16.xpose.msra.mxu0 0
      %1057 = vmatprep.subr.bf16.mxu0 0
      %1058 = vmatpush2.bf16.xpose.msra.mxu0 0
      %1059 = vmatprep.subr.bf16.mxu0 0
      %1060 = vmatpush2.bf16.xpose.msra.mxu0 0
      %1061 = vmatprep.subr.bf16.mxu0 0
      %1062 = vmatpush2.bf16.xpose.msra.mxu0 0
      %1063 = vmatprep.subr.bf16.mxu0 0
      %1064 = vmatpush2.bf16.xpose.msra.mxu0 0
      %1065 = vmatprep.subr.bf16.mxu0 0
      %1066 = vmatpush2.bf16.xpose.msra.mxu0 0
      %1067 = vmatprep.subr.bf16.mxu0 0
      %1068 = vmatpush2.bf16.xpose.msra.mxu0 0
      %1069 = vmatprep.subr.bf16.mxu0 0
      %1070 = vmatpush2.bf16.xpose.msra.mxu0 0
      %1071 = vmatprep.mubr.bf16.mxu0 0
      %1072 = vmatmul.mubr.bf16.gmra.mxu0 %v1034
      %v1073 = vpop.f32.mrf.mxu0
      %v1074 = vadd.f32 0.0, %v1073
      %v1075 = vpop.f32.mrf.mxu0
      %v1076 = vpop.f32.mrf.mxu0
      %v1077 = vpop.f32.mrf.mxu0
      %1078 = vdwg.mxu0
      %v1079 = vsel %vm918, %v1074, -inf
      %1080 = vmax.xlane.f32.xlu0 %v1079
      %v1081 = vpop.xlane.xlu0 %1080
      %v1082 = vsub.f32 %v1074, %v1081
      %v1083 = vmul.f32 %v1082, 1.442695
      %v1084 = vpow.pop %v1083
      %v1085 = vsel %vm918, %v1084, 0.0
      %1086 = vadd.xlane.f32.xlu0 %v1085
      %v1087 = vpop.xlane.xlu0 %1086
      %v1088 = vrcp.pop %v1087
      %v1089 = vmul.f32 %v1084, %v1088
      %v1090 = vpack.c.bf16 %v1089, %v1089
      %1092 = vrot.lane.b32.xlu0 %v917, 120
      %v1093 = vpop.permute.xlu0 %1092
      %v1095 = vsel %vm918, %v1090, 0
      %v1098 = vsel %vm980, %v1093, 0
      %1100 = vmatprep.subr.bf16.mxu0 0
      %1101 = vmatpush1.bf16.msra.mxu0 0
      %1102 = vmatprep.subr.bf16.mxu0 0
      %1103 = vmatpush1.bf16.msra.mxu0 0
      %1104 = vmatprep.subr.bf16.mxu0 0
      %1105 = vmatpush1.bf16.msra.mxu0 0
      %1106 = vmatprep.subr.bf16.mxu0 0
      %1107 = vmatpush1.bf16.msra.mxu0 0
      %1108 = vmatprep.subr.bf16.mxu0 0
      %1109 = vmatpush1.bf16.msra.mxu0 0
      %1110 = vmatprep.subr.bf16.mxu0 0
      %1111 = vmatpush1.bf16.msra.mxu0 0
      %1112 = vmatprep.subr.bf16.mxu0 0
      %1113 = vmatpush1.bf16.msra.mxu0 0
      %1114 = vmatprep.subr.bf16.mxu0 0
      %1115 = vmatpush1.bf16.msra.mxu0 %v1098
      %1116 = vmatprep.subr.bf16.mxu0 0
      %1117 = vmatpush2.bf16.msra.mxu0 0
      %1118 = vmatprep.subr.bf16.mxu0 0
      %1119 = vmatpush2.bf16.msra.mxu0 0
      %1120 = vmatprep.subr.bf16.mxu0 0
      %1121 = vmatpush2.bf16.msra.mxu0 0
      %1122 = vmatprep.subr.bf16.mxu0 0
      %1123 = vmatpush2.bf16.msra.mxu0 0
      %1124 = vmatprep.subr.bf16.mxu0 0
      %1125 = vmatpush2.bf16.msra.mxu0 0
      %1126 = vmatprep.subr.bf16.mxu0 0
      %1127 = vmatpush2.bf16.msra.mxu0 0
      %1128 = vmatprep.subr.bf16.mxu0 0
      %1129 = vmatpush2.bf16.msra.mxu0 0
      %1130 = vmatprep.subr.bf16.mxu0 0
      %1131 = vmatpush2.bf16.msra.mxu0 0
      %1132 = vmatprep.mubr.bf16.mxu0 0
      %1133 = vmatmul.mubr.bf16.gmra.mxu0 %v1095
      %v1134 = vpop.f32.mrf.mxu0
      %v1135 = vadd.f32 0.0, %v1134
      %v1136 = vpop.f32.mrf.mxu0
      %v1137 = vpop.f32.mrf.mxu0
      %v1138 = vpop.f32.mrf.mxu0
      %1139 = vdwg.mxu0
      %v1140 = vpack.c.bf16 %v1135, %v1135
      %v1142 = vunpack.c.l.b16 %v1140
      %v1143 = vpack.c.b16 %v1142, %v1142
      %1144 = vrot.lane.b32.xlu0 %v1143, 8
      %v1145 = vpop.permute.xlu0 %1144
      %vm1147 = vcmask 126016
      %1148 = vst.msk [vmem:[#allocation2] sm:$0xf] %vm1147, %v1145
      %1149 = vrot.lane.b32.xlu0 %v915, 112
      %v1150 = vpop.permute.xlu0 %1149
      %1151 = vrot.lane.b32.xlu0 %v916, 112
      %v1152 = vpop.permute.xlu0 %1151
      %v1154 = vsel %vm918, %v1150, 0
      %v1157 = vsel %vm918, %v1152, 0
      %1159 = vmatprep.subr.bf16.mxu0 0
      %1160 = vmatpush1.bf16.xpose.msra.mxu0 0
      %1161 = vmatprep.subr.bf16.mxu0 0
      %1162 = vmatpush1.bf16.xpose.msra.mxu0 0
      %1163 = vmatprep.subr.bf16.mxu0 0
      %1164 = vmatpush1.bf16.xpose.msra.mxu0 0
      %1165 = vmatprep.subr.bf16.mxu0 0
      %1166 = vmatpush1.bf16.xpose.msra.mxu0 0
      %1167 = vmatprep.subr.bf16.mxu0 0
      %1168 = vmatpush1.bf16.xpose.msra.mxu0 0
      %1169 = vmatprep.subr.bf16.mxu0 0
      %1170 = vmatpush1.bf16.xpose.msra.mxu0 0
      %1171 = vmatprep.subr.bf16.mxu0 0
      %1172 = vmatpush1.bf16.xpose.msra.mxu0 0
      %1173 = vmatprep.subr.bf16.mxu0 0
      %1174 = vmatpush1.bf16.xpose.msra.mxu0 %v1157
      %1175 = vmatprep.subr.bf16.mxu0 0
      %1176 = vmatpush2.bf16.xpose.msra.mxu0 0
      %1177 = vmatprep.subr.bf16.mxu0 0
      %1178 = vmatpush2.bf16.xpose.msra.mxu0 0
      %1179 = vmatprep.subr.bf16.mxu0 0
      %1180 = vmatpush2.bf16.xpose.msra.mxu0 0
      %1181 = vmatprep.subr.bf16.mxu0 0
      %1182 = vmatpush2.bf16.xpose.msra.mxu0 0
      %1183 = vmatprep.subr.bf16.mxu0 0
      %1184 = vmatpush2.bf16.xpose.msra.mxu0 0
      %1185 = vmatprep.subr.bf16.mxu0 0
      %1186 = vmatpush2.bf16.xpose.msra.mxu0 0
      %1187 = vmatprep.subr.bf16.mxu0 0
      %1188 = vmatpush2.bf16.xpose.msra.mxu0 0
      %1189 = vmatprep.subr.bf16.mxu0 0
      %1190 = vmatpush2.bf16.xpose.msra.mxu0 0
      %1191 = vmatprep.mubr.bf16.mxu0 0
      %1192 = vmatmul.mubr.bf16.gmra.mxu0 %v1154
      %v1193 = vpop.f32.mrf.mxu0
      %v1194 = vadd.f32 0.0, %v1193
      %v1195 = vpop.f32.mrf.mxu0
      %v1196 = vpop.f32.mrf.mxu0
      %v1197 = vpop.f32.mrf.mxu0
      %1198 = vdwg.mxu0
      %v1199 = vsel %vm918, %v1194, -inf
      %1200 = vmax.xlane.f32.xlu0 %v1199
      %v1201 = vpop.xlane.xlu0 %1200
      %v1202 = vsub.f32 %v1194, %v1201
      %v1203 = vmul.f32 %v1202, 1.442695
      %v1204 = vpow.pop %v1203
      %v1205 = vsel %vm918, %v1204, 0.0
      %1206 = vadd.xlane.f32.xlu0 %v1205
      %v1207 = vpop.xlane.xlu0 %1206
      %v1208 = vrcp.pop %v1207
      %v1209 = vmul.f32 %v1204, %v1208
      %v1210 = vpack.c.bf16 %v1209, %v1209
      %1211 = vrot.lane.b32.xlu0 %v917, 112
      %v1212 = vpop.permute.xlu0 %1211
      %v1214 = vsel %vm918, %v1210, 0
      %v1217 = vsel %vm980, %v1212, 0
      %1219 = vmatprep.subr.bf16.mxu0 0
      %1220 = vmatpush1.bf16.msra.mxu0 0
      %1221 = vmatprep.subr.bf16.mxu0 0
      %1222 = vmatpush1.bf16.msra.mxu0 0
      %1223 = vmatprep.subr.bf16.mxu0 0
      %1224 = vmatpush1.bf16.msra.mxu0 0
      %1225 = vmatprep.subr.bf16.mxu0 0
      %1226 = vmatpush1.bf16.msra.mxu0 0
      %1227 = vmatprep.subr.bf16.mxu0 0
      %1228 = vmatpush1.bf16.msra.mxu0 0
      %1229 = vmatprep.subr.bf16.mxu0 0
      %1230 = vmatpush1.bf16.msra.mxu0 0
      %1231 = vmatprep.subr.bf16.mxu0 0
      %1232 = vmatpush1.bf16.msra.mxu0 0
      %1233 = vmatprep.subr.bf16.mxu0 0
      %1234 = vmatpush1.bf16.msra.mxu0 %v1217
      %1235 = vmatprep.subr.bf16.mxu0 0
      %1236 = vmatpush2.bf16.msra.mxu0 0
      %1237 = vmatprep.subr.bf16.mxu0 0
      %1238 = vmatpush2.bf16.msra.mxu0 0
      %1239 = vmatprep.subr.bf16.mxu0 0
      %1240 = vmatpush2.bf16.msra.mxu0 0
      %1241 = vmatprep.subr.bf16.mxu0 0
      %1242 = vmatpush2.bf16.msra.mxu0 0
      %1243 = vmatprep.subr.bf16.mxu0 0
      %1244 = vmatpush2.bf16.msra.mxu0 0
      %1245 = vmatprep.subr.bf16.mxu0 0
      %1246 = vmatpush2.bf16.msra.mxu0 0
      %1247 = vmatprep.subr.bf16.mxu0 0
      %1248 = vmatpush2.bf16.msra.mxu0 0
      %1249 = vmatprep.subr.bf16.mxu0 0
      %1250 = vmatpush2.bf16.msra.mxu0 0
      %1251 = vmatprep.mubr.bf16.mxu0 0
      %1252 = vmatmul.mubr.bf16.gmra.mxu0 %v1214
      %v1253 = vpop.f32.mrf.mxu0
      %v1254 = vadd.f32 0.0, %v1253
      %v1255 = vpop.f32.mrf.mxu0
      %v1256 = vpop.f32.mrf.mxu0
      %v1257 = vpop.f32.mrf.mxu0
      %1258 = vdwg.mxu0
      %v1259 = vpack.c.bf16 %v1254, %v1254
      %v1261 = vunpack.c.l.b16 %v1259
      %v1262 = vpack.c.b16 %v1261, %v1261
      %1263 = vrot.lane.b32.xlu0 %v1262, 16
      %v1264 = vpop.permute.xlu0 %1263
      %vm1266 = vcmask 191616
      %1267 = vst.msk [vmem:[#allocation2] sm:$0xf] %vm1266, %v1264
      %1268 = vrot.lane.b32.xlu0 %v915, 104
      %v1269 = vpop.permute.xlu0 %1268
      %1270 = vrot.lane.b32.xlu0 %v916, 104
      %v1271 = vpop.permute.xlu0 %1270
      %v1273 = vsel %vm918, %v1269, 0
      %v1276 = vsel %vm918, %v1271, 0
      %1278 = vmatprep.subr.bf16.mxu0 0
      %1279 = vmatpush1.bf16.xpose.msra.mxu0 0
      %1280 = vmatprep.subr.bf16.mxu0 0
      %1281 = vmatpush1.bf16.xpose.msra.mxu0 0
      %1282 = vmatprep.subr.bf16.mxu0 0
      %1283 = vmatpush1.bf16.xpose.msra.mxu0 0
      %1284 = vmatprep.subr.bf16.mxu0 0
      %1285 = vmatpush1.bf16.xpose.msra.mxu0 0
      %1286 = vmatprep.subr.bf16.mxu0 0
      %1287 = vmatpush1.bf16.xpose.msra.mxu0 0
      %1288 = vmatprep.subr.bf16.mxu0 0
      %1289 = vmatpush1.bf16.xpose.msra.mxu0 0
      %1290 = vmatprep.subr.bf16.mxu0 0
      %1291 = vmatpush1.bf16.xpose.msra.mxu0 0
      %1292 = vmatprep.subr.bf16.mxu0 0
      %1293 = vmatpush1.bf16.xpose.msra.mxu0 %v1276
      %1294 = vmatprep.subr.bf16.mxu0 0
      %1295 = vmatpush2.bf16.xpose.msra.mxu0 0
      %1296 = vmatprep.subr.bf16.mxu0 0
      %1297 = vmatpush2.bf16.xpose.msra.mxu0 0
      %1298 = vmatprep.subr.bf16.mxu0 0
      %1299 = vmatpush2.bf16.xpose.msra.mxu0 0
      %1300 = vmatprep.subr.bf16.mxu0 0
      %1301 = vmatpush2.bf16.xpose.msra.mxu0 0
      %1302 = vmatprep.subr.bf16.mxu0 0
      %1303 = vmatpush2.bf16.xpose.msra.mxu0 0
      %1304 = vmatprep.subr.bf16.mxu0 0
      %1305 = vmatpush2.bf16.xpose.msra.mxu0 0
      %1306 = vmatprep.subr.bf16.mxu0 0
      %1307 = vmatpush2.bf16.xpose.msra.mxu0 0
      %1308 = vmatprep.subr.bf16.mxu0 0
      %1309 = vmatpush2.bf16.xpose.msra.mxu0 0
      %1310 = vmatprep.mubr.bf16.mxu0 0
      %1311 = vmatmul.mubr.bf16.gmra.mxu0 %v1273
      %v1312 = vpop.f32.mrf.mxu0
      %v1313 = vadd.f32 0.0, %v1312
      %v1314 = vpop.f32.mrf.mxu0
      %v1315 = vpop.f32.mrf.mxu0
      %v1316 = vpop.f32.mrf.mxu0
      %1317 = vdwg.mxu0
      %v1318 = vsel %vm918, %v1313, -inf
      %1319 = vmax.xlane.f32.xlu0 %v1318
      %v1320 = vpop.xlane.xlu0 %1319
      %v1321 = vsub.f32 %v1313, %v1320
      %v1322 = vmul.f32 %v1321, 1.442695
      %v1323 = vpow.pop %v1322
      %v1324 = vsel %vm918, %v1323, 0.0
      %1325 = vadd.xlane.f32.xlu0 %v1324
      %v1326 = vpop.xlane.xlu0 %1325
      %v1327 = vrcp.pop %v1326
      %v1328 = vmul.f32 %v1323, %v1327
      %v1329 = vpack.c.bf16 %v1328, %v1328
      %1330 = vrot.lane.b32.xlu0 %v917, 104
      %v1331 = vpop.permute.xlu0 %1330
      %v1333 = vsel %vm918, %v1329, 0
      %v1336 = vsel %vm980, %v1331, 0
      %1338 = vmatprep.subr.bf16.mxu0 0
      %1339 = vmatpush1.bf16.msra.mxu0 0
      %1340 = vmatprep.subr.bf16.mxu0 0
      %1341 = vmatpush1.bf16.msra.mxu0 0
      %1342 = vmatprep.subr.bf16.mxu0 0
      %1343 = vmatpush1.bf16.msra.mxu0 0
      %1344 = vmatprep.subr.bf16.mxu0 0
      %1345 = vmatpush1.bf16.msra.mxu0 0
      %1346 = vmatprep.subr.bf16.mxu0 0
      %1347 = vmatpush1.bf16.msra.mxu0 0
      %1348 = vmatprep.subr.bf16.mxu0 0
      %1349 = vmatpush1.bf16.msra.mxu0 0
      %1350 = vmatprep.subr.bf16.mxu0 0
      %1351 = vmatpush1.bf16.msra.mxu0 0
      %1352 = vmatprep.subr.bf16.mxu0 0
      %1353 = vmatpush1.bf16.msra.mxu0 %v1336
      %1354 = vmatprep.subr.bf16.mxu0 0
      %1355 = vmatpush2.bf16.msra.mxu0 0
      %1356 = vmatprep.subr.bf16.mxu0 0
      %1357 = vmatpush2.bf16.msra.mxu0 0
      %1358 = vmatprep.subr.bf16.mxu0 0
      %1359 = vmatpush2.bf16.msra.mxu0 0
      %1360 = vmatprep.subr.bf16.mxu0 0
      %1361 = vmatpush2.bf16.msra.mxu0 0
      %1362 = vmatprep.subr.bf16.mxu0 0
      %1363 = vmatpush2.bf16.msra.mxu0 0
      %1364 = vmatprep.subr.bf16.mxu0 0
      %1365 = vmatpush2.bf16.msra.mxu0 0
      %1366 = vmatprep.subr.bf16.mxu0 0
      %1367 = vmatpush2.bf16.msra.mxu0 0
      %1368 = vmatprep.subr.bf16.mxu0 0
      %1369 = vmatpush2.bf16.msra.mxu0 0
      %1370 = vmatprep.mubr.bf16.mxu0 0
      %1371 = vmatmul.mubr.bf16.gmra.mxu0 %v1333
      %v1372 = vpop.f32.mrf.mxu0
      %v1373 = vadd.f32 0.0, %v1372
      %v1374 = vpop.f32.mrf.mxu0
      %v1375 = vpop.f32.mrf.mxu0
      %v1376 = vpop.f32.mrf.mxu0
      %1377 = vdwg.mxu0
      %v1378 = vpack.c.bf16 %v1373, %v1373
      %v1380 = vunpack.c.l.b16 %v1378
      %v1381 = vpack.c.b16 %v1380, %v1380
      %1382 = vrot.lane.b32.xlu0 %v1381, 24
      %v1383 = vpop.permute.xlu0 %1382
      %vm1385 = vcmask 257216
      %1386 = vst.msk [vmem:[#allocation2] sm:$0xf] %vm1385, %v1383
      %v1387 = vld [vmem:[#allocation2] sm:$0xf]
      %v1388 = vld [vmem:[%s8] sm:$0xf]
      %v1389 = vld [vmem:[%s8 + $0x4] sm:$0xf]
      %v1390 = vld [vmem:[%s8 + $0x8] sm:$0xf]
      %v1391 = vld [vmem:[%s8 + $0xc] sm:$0xf]
      %v1392 = vld [vmem:[%s9] sm:$0x1]
      %v1394 = vlaneseq
      %v1395 = vshrl.u32 %v1394, 7
      %v1396 = vsub.s32 0, %v1395
      %v1397 = vrot.slane %v1392, %v1396
      %v1403 = vunpack.c.l.b16 %v1388
      %v1404 = vunpack.c.l.b16 %v1389
      %v1405 = vunpack.c.l.b16 %v1390
      %v1406 = vunpack.c.l.b16 %v1391
      %v1407 = vpack.c.b16 %v1404, %v1403
      %v1408 = vpack.c.b16 %v1406, %v1405
      %v1412 = vsel %vm745, %v1387, 0
      %1414 = vmatprep.subr.bf16.mxu0 0
      %1415 = vmatpush1.bf16.msra.mxu0 0
      %1416 = vmatprep.subr.bf16.mxu0 0
      %1417 = vmatpush1.bf16.msra.mxu0 0
      %1418 = vmatprep.subr.bf16.mxu0 0
      %1419 = vmatpush1.bf16.msra.mxu0 0
      %1420 = vmatprep.subr.bf16.mxu0 0
      %1421 = vmatpush1.bf16.msra.mxu0 0
      %1422 = vmatprep.subr.bf16.mxu0 0
      %1423 = vmatpush1.bf16.msra.mxu0 0
      %1424 = vmatprep.subr.bf16.mxu0 0
      %1425 = vmatpush1.bf16.msra.mxu0 0
      %1426 = vmatprep.subr.bf16.mxu0 0
      %1427 = vmatpush1.bf16.msra.mxu0 %v1408
      %1428 = vmatprep.subr.bf16.mxu0 0
      %1429 = vmatpush1.bf16.msra.mxu0 %v1407
      %1430 = vmatprep.subr.bf16.mxu0 0
      %1431 = vmatpush2.bf16.msra.mxu0 0
      %1432 = vmatprep.subr.bf16.mxu0 0
      %1433 = vmatpush2.bf16.msra.mxu0 0
      %1434 = vmatprep.subr.bf16.mxu0 0
      %1435 = vmatpush2.bf16.msra.mxu0 0
      %1436 = vmatprep.subr.bf16.mxu0 0
      %1437 = vmatpush2.bf16.msra.mxu0 0
      %1438 = vmatprep.subr.bf16.mxu0 0
      %1439 = vmatpush2.bf16.msra.mxu0 0
      %1440 = vmatprep.subr.bf16.mxu0 0
      %1441 = vmatpush2.bf16.msra.mxu0 0
      %1442 = vmatprep.subr.bf16.mxu0 0
      %1443 = vmatpush2.bf16.msra.mxu0 0
      %1444 = vmatprep.subr.bf16.mxu0 0
      %1445 = vmatpush2.bf16.msra.mxu0 0
      %1446 = vmatprep.mubr.bf16.mxu0 0
      %1447 = vmatmul.mubr.bf16.gmra.mxu0 %v1412
      %v1448 = vpop.f32.mrf.mxu0
      %v1449 = vadd.f32 %v1397, %v1448
      %v1450 = vpop.f32.mrf.mxu0
      %v1451 = vpop.f32.mrf.mxu0
      %v1452 = vpop.f32.mrf.mxu0
      %1453 = vdwg.mxu0
      %v1454 = vadd.f32 %v721, %v1449
      %v1455 = vld [vmem:[%s10] sm:$0x1]
      %v1456 = vld [vmem:[%s11] sm:$0x1]
      %v1457 = vsel %vm745, %v1454, 0.0
      %1458 = vadd.xlane.f32.xlu0 %v1457
      %v1459 = vpop.xlane.xlu0 %1458
      %v1460 = vrcp.pop 32.0
      %v1461 = vmul.f32 %v1459, %v1460
      %v1462 = vsub.f32 %v1454, %v1461
      %v1463 = vmul.f32 %v1462, %v1462
      %v1464 = vsel %vm745, %v1463, 0.0
      %1465 = vadd.xlane.f32.xlu0 %v1464
      %v1466 = vpop.xlane.xlu0 %1465
      %v1467 = vmul.f32 %v1466, %v1460
      %v1468 = vadd.f32 %v1467, 1e-12
      %v1469 = vrsqrt.pop %v1468
      %v1470 = vmul.f32 %v1462, %v1469
      %v1472 = vlaneseq
      %v1473 = vshrl.u32 %v1472, 7
      %v1474 = vsub.s32 0, %v1473
      %v1475 = vrot.slane %v1455, %v1474
      %v1477 = vmul.f32 %v1470, %v1475
      %v1479 = vlaneseq
      %v1480 = vshrl.u32 %v1479, 7
      %v1481 = vsub.s32 0, %v1480
      %v1482 = vrot.slane %v1456, %v1481
      %v1484 = vadd.f32 %v1477, %v1482
      %v1485 = vpack.c.bf16 %v1484, %v1484
      %v1486 = vld [vmem:[%s12] sm:$0xf]
      %v1487 = vld [vmem:[%s12 + $0x4] sm:$0xf]
      %v1488 = vld [vmem:[%s12 + $0x8] sm:$0xf]
      %v1489 = vld [vmem:[%s12 + $0xc] sm:$0xf]
      %v1490 = vld [vmem:[%s13] sm:$0x1]
      %v1492 = vlaneseq
      %v1493 = vshrl.u32 %v1492, 7
      %v1494 = vsub.s32 0, %v1493
      %v1495 = vrot.slane %v1490, %v1494
      %v1501 = vunpack.c.l.b16 %v1486
      %v1502 = vunpack.c.l.b16 %v1487
      %v1503 = vunpack.c.l.b16 %v1488
      %v1504 = vunpack.c.l.b16 %v1489
      %v1505 = vpack.c.b16 %v1502, %v1501
      %v1506 = vpack.c.b16 %v1504, %v1503
      %v1510 = vsel %vm745, %v1485, 0
      %1512 = vmatprep.subr.bf16.mxu0 0
      %1513 = vmatpush1.bf16.msra.mxu0 0
      %1514 = vmatprep.subr.bf16.mxu0 0
      %1515 = vmatpush1.bf16.msra.mxu0 0
      %1516 = vmatprep.subr.bf16.mxu0 0
      %1517 = vmatpush1.bf16.msra.mxu0 0
      %1518 = vmatprep.subr.bf16.mxu0 0
      %1519 = vmatpush1.bf16.msra.mxu0 0
      %1520 = vmatprep.subr.bf16.mxu0 0
      %1521 = vmatpush1.bf16.msra.mxu0 0
      %1522 = vmatprep.subr.bf16.mxu0 0
      %1523 = vmatpush1.bf16.msra.mxu0 0
      %1524 = vmatprep.subr.bf16.mxu0 0
      %1525 = vmatpush1.bf16.msra.mxu0 %v1506
      %1526 = vmatprep.subr.bf16.mxu0 0
      %1527 = vmatpush1.bf16.msra.mxu0 %v1505
      %1528 = vmatprep.subr.bf16.mxu0 0
      %1529 = vmatpush2.bf16.msra.mxu0 0
      %1530 = vmatprep.subr.bf16.mxu0 0
      %1531 = vmatpush2.bf16.msra.mxu0 0
      %1532 = vmatprep.subr.bf16.mxu0 0
      %1533 = vmatpush2.bf16.msra.mxu0 0
      %1534 = vmatprep.subr.bf16.mxu0 0
      %1535 = vmatpush2.bf16.msra.mxu0 0
      %1536 = vmatprep.subr.bf16.mxu0 0
      %1537 = vmatpush2.bf16.msra.mxu0 0
      %1538 = vmatprep.subr.bf16.mxu0 0
      %1539 = vmatpush2.bf16.msra.mxu0 0
      %1540 = vmatprep.subr.bf16.mxu0 0
      %1541 = vmatpush2.bf16.msra.mxu0 0
      %1542 = vmatprep.subr.bf16.mxu0 0
      %1543 = vmatpush2.bf16.msra.mxu0 0
      %1544 = vmatprep.mubr.bf16.mxu0 0
      %1545 = vmatmul.mubr.bf16.gmra.mxu0 %v1510
      %v1546 = vpop.f32.mrf.mxu0
      %v1547 = vadd.f32 %v1495, %v1546
      %v1548 = vpop.f32.mrf.mxu0
      %v1549 = vpop.f32.mrf.mxu0
      %v1550 = vpop.f32.mrf.mxu0
      %1551 = vdwg.mxu0
      %v1552 = vmul.f32 %v1547, 0.5
      %v1553 = vmul.f32 %v1547, 0.044715
      %v1554 = vmul.f32 %v1553, %v1547
      %v1555 = vmul.f32 %v1554, %v1547
      %v1556 = vadd.f32 %v1547, %v1555
      %v1557 = vmul.f32 %v1556, 0.7978846
      %v1558 = vtanh.pop %v1557
      %v1559 = vadd.f32 %v1558, 1.0
      %v1560 = vmul.f32 %v1552, %v1559
      %v1561 = vpack.c.bf16 %v1560, %v1560
      %v1562 = vld [vmem:[%s14] sm:$0xf]
      %v1563 = vld [vmem:[%s14 + $0x4] sm:$0xf]
      %v1564 = vld [vmem:[%s14 + $0x8] sm:$0xf]
      %v1565 = vld [vmem:[%s14 + $0xc] sm:$0xf]
      %v1566 = vld [vmem:[%s14 + $0x10] sm:$0xf]
      %v1567 = vld [vmem:[%s14 + $0x14] sm:$0xf]
      %v1568 = vld [vmem:[%s14 + $0x18] sm:$0xf]
      %v1569 = vld [vmem:[%s14 + $0x1c] sm:$0xf]
      %v1570 = vld [vmem:[%s15] sm:$0x1]
      %v1572 = vlaneseq
      %v1573 = vshrl.u32 %v1572, 7
      %v1574 = vsub.s32 0, %v1573
      %v1575 = vrot.slane %v1570, %v1574
      %v1585 = vunpack.c.l.b16 %v1562
      %v1586 = vunpack.c.l.b16 %v1563
      %v1587 = vunpack.c.l.b16 %v1564
      %v1588 = vunpack.c.l.b16 %v1565
      %v1589 = vunpack.c.l.b16 %v1566
      %v1590 = vunpack.c.l.b16 %v1567
      %v1591 = vunpack.c.l.b16 %v1568
      %v1592 = vunpack.c.l.b16 %v1569
      %v1593 = vpack.c.b16 %v1586, %v1585
      %v1594 = vpack.c.b16 %v1588, %v1587
      %v1595 = vpack.c.b16 %v1590, %v1589
      %v1596 = vpack.c.b16 %v1592, %v1591
      %vm1601 = vcmask 523264
      %v1603 = vsel %vm1601, %v1561, 0
      %1605 = vmatprep.subr.bf16.mxu0 0
      %1606 = vmatpush1.bf16.msra.mxu0 0
      %1607 = vmatprep.subr.bf16.mxu0 0
      %1608 = vmatpush1.bf16.msra.mxu0 0
      %1609 = vmatprep.subr.bf16.mxu0 0
      %1610 = vmatpush1.bf16.msra.mxu0 0
      %1611 = vmatprep.subr.bf16.mxu0 0
      %1612 = vmatpush1.bf16.msra.mxu0 0
      %1613 = vmatprep.subr.bf16.mxu0 0
      %1614 = vmatpush1.bf16.msra.mxu0 %v1596
      %1615 = vmatprep.subr.bf16.mxu0 0
      %1616 = vmatpush1.bf16.msra.mxu0 %v1595
      %1617 = vmatprep.subr.bf16.mxu0 0
      %1618 = vmatpush1.bf16.msra.mxu0 %v1594
      %1619 = vmatprep.subr.bf16.mxu0 0
      %1620 = vmatpush1.bf16.msra.mxu0 %v1593
      %1621 = vmatprep.subr.bf16.mxu0 0
      %1622 = vmatpush2.bf16.msra.mxu0 0
      %1623 = vmatprep.subr.bf16.mxu0 0
      %1624 = vmatpush2.bf16.msra.mxu0 0
      %1625 = vmatprep.subr.bf16.mxu0 0
      %1626 = vmatpush2.bf16.msra.mxu0 0
      %1627 = vmatprep.subr.bf16.mxu0 0
      %1628 = vmatpush2.bf16.msra.mxu0 0
      %1629 = vmatprep.subr.bf16.mxu0 0
      %1630 = vmatpush2.bf16.msra.mxu0 0
      %1631 = vmatprep.subr.bf16.mxu0 0
      %1632 = vmatpush2.bf16.msra.mxu0 0
      %1633 = vmatprep.subr.bf16.mxu0 0
      %1634 = vmatpush2.bf16.msra.mxu0 0
      %1635 = vmatprep.subr.bf16.mxu0 0
      %1636 = vmatpush2.bf16.msra.mxu0 0
      %1637 = vmatprep.mubr.bf16.mxu0 0
      %1638 = vmatmul.mubr.bf16.gmra.mxu0 %v1603
      %v1639 = vpop.f32.mrf.mxu0
      %v1640 = vadd.f32 %v1575, %v1639
      %v1641 = vpop.f32.mrf.mxu0
      %v1642 = vpop.f32.mrf.mxu0
      %v1643 = vpop.f32.mrf.mxu0
      %1644 = vdwg.mxu0
      %v1645 = vadd.f32 %v1484, %v1640
      %v1646 = vld [vmem:[%s16] sm:$0x1]
      %v1647 = vld [vmem:[%s17] sm:$0x1]
      %v1648 = vsel %vm745, %v1645, 0.0
      %1649 = vadd.xlane.f32.xlu0 %v1648
      %v1650 = vpop.xlane.xlu0 %1649
      %v1651 = vmul.f32 %v1650, %v1460
      %v1652 = vsub.f32 %v1645, %v1651
      %v1653 = vmul.f32 %v1652, %v1652
      %v1654 = vsel %vm745, %v1653, 0.0
      %1655 = vadd.xlane.f32.xlu0 %v1654
      %v1656 = vpop.xlane.xlu0 %1655
      %v1657 = vmul.f32 %v1656, %v1460
      %v1658 = vadd.f32 %v1657, 1e-12
      %v1659 = vrsqrt.pop %v1658
      %v1660 = vmul.f32 %v1652, %v1659
      %v1662 = vlaneseq
      %v1663 = vshrl.u32 %v1662, 7
      %v1664 = vsub.s32 0, %v1663
      %v1665 = vrot.slane %v1646, %v1664
      %v1667 = vmul.f32 %v1660, %v1665
      %v1669 = vlaneseq
      %v1670 = vshrl.u32 %v1669, 7
      %v1671 = vsub.s32 0, %v1670
      %v1672 = vrot.slane %v1647, %v1671
      %v1674 = vadd.f32 %v1667, %v1672
      %v1675 = vpack.c.bf16 %v1674, %v1674
      %vm1676 = vcmask 257024
      %1677 = vst.msk [vmem:[%s711] sm:$0xf] %vm1676, %v1675
      %v1678 = vld [vmem:[%s704] sm:$0xff]
      %v1679 = vadd.f32 %v1678, %v1674
      %1680 = vst.msk [vmem:[%s718] sm:$0xff] %vm745, %v1679
      %p1681 = scmp.lt.s32.totalorder %s37, 1
      %s1682 = scalar_select %p1681, %s37, 1
      %p1683 = scmp.lt.s32.totalorder %s38, 0
      %s1684 = scalar_select %p1683, %s38, 0
      %s1685 = sadd.s32 %s1684, %s1682
      %s1686 = smul.addr %s1685, 4
      %s1687 = scalar_lea.vmem %s20, %s1686
      %p1688 = scmp.lt.s32.totalorder %s37, 1
      %s1689 = scalar_select %p1688, %s37, 1
      %p1690 = scmp.lt.s32.totalorder %s38, 0
      %s1691 = scalar_select %p1690, %s38, 0
      %s1692 = sadd.s32 %s1691, %s1689
      %s1693 = smul.addr %s1692, 8
      %s1694 = scalar_lea.vmem %s21, %s1693
      // Predicated region
      $region101: #{bert_embeddings_forward.5} parent=99 // pred_check
        %p1695 = pneg %p497
      $region102: #{bert_embeddings_forward.5} parent=99 // pred_check_branch
        %1697 = sbr.rel (%p1695) target = $region104
      $region103: #{bert_embeddings_forward.5} parent=99 // pred_region
        _
      $region104: #{bert_embeddings_forward.5} parent=99 // pred_fallthru
        _
      // Predicated region
      $region105: #{bert_embeddings_forward.5} parent=99 // pred_check
        %p1698 = pneg %p525
      $region106: #{bert_embeddings_forward.5} parent=99 // pred_check_branch
        %1700 = sbr.rel (%p1698) target = $region108
      $region107: #{bert_embeddings_forward.5} parent=99 // pred_region
        _
      $region108: #{bert_embeddings_forward.5} parent=99 // pred_fallthru
        _
    $region100: #{bert_embeddings_forward.5} parent=5 // pred_fallthru
      _
    %p1701 = scmp.le.s32.totalorder 2, %s28
    // Predicated region
    $region109: #{bert_embeddings_forward.5} parent=5 // pred_check
      %p1702 = pneg %p1701
    $region110: #{bert_embeddings_forward.5} parent=5 // pred_check_branch
      %1704 = sbr.rel (%p1702) target = $region112
    $region111: #{bert_embeddings_forward.5} parent=5 // pred_region
      %s1705 = ssub.s32 %s28, 2
      // Predicated region
      $region113: #{bert_embeddings_forward.5} parent=111 // pred_check
        %p1706 = pneg %p503
      $region114: #{bert_embeddings_forward.5} parent=111 // pred_check_branch
        %1708 = sbr.rel (%p1706) target = $region116
      $region115: #{bert_embeddings_forward.5} parent=111 // pred_region
        %p1709 = scmp.lt.s32.totalorder %s39, 1
        %s1710 = scalar_select %p1709, %s39, 1
        %p1711 = scmp.lt.s32.totalorder %s40, 0
        %s1712 = scalar_select %p1711, %s40, 0
        %s1713 = sadd.s32 %s1712, %s1710
        %s1714 = smul.addr %s1713, 4
        %s1715 = scalar_lea.vmem %s20, %s1714
      $region116: #{bert_embeddings_forward.5} parent=111 // pred_fallthru
        _
      // Predicated region
      $region117: #{bert_embeddings_forward.5} parent=111 // pred_check
        %p1716 = pneg %p531
      $region118: #{bert_embeddings_forward.5} parent=111 // pred_check_branch
        %1718 = sbr.rel (%p1716) target = $region120
      $region119: #{bert_embeddings_forward.5} parent=111 // pred_region
        %p1719 = scmp.lt.s32.totalorder %s39, 1
        %s1720 = scalar_select %p1719, %s39, 1
        %p1721 = scmp.lt.s32.totalorder %s40, 0
        %s1722 = scalar_select %p1721, %s40, 0
        %s1723 = sadd.s32 %s1722, %s1720
        %s1724 = smul.addr %s1723, 8
        %s1725 = scalar_lea.vmem %s21, %s1724
      $region120: #{bert_embeddings_forward.5} parent=111 // pred_fallthru
        _
    $region112: #{bert_embeddings_forward.5} parent=5 // pred_fallthru
      _
  $region6: #{bert_embeddings_forward.5} parent=0 // loop_footer
    %s32 = sadd.s32 1, %s28
  $region7: #{bert_embeddings_forward.5} parent=0 // loop_footer_branch
    %27 = sbr.rel target = $region3
  $region8: #{bert_embeddings_forward.5} parent=0 // loop_exit
    _

</llo_original>
